<compile_context>
chip_gen: v6e
topology: v6e:2x2x1
jax: 0.10.0
libtpu: 0.0.40
codegen_flags: <defaults>
</compile_context>

<pallas_src>
import math

import jax
import jax.numpy as jnp
import numpy as np
from jax.experimental import pallas as pl
from jax.experimental.pallas import tpu as pltpu


def _emb_heads_kernel(x_ref, w1_ref, b1_ref, w2_ref, b2_ref, w3_ref, b3_ref,
                      apos_ref, aang_ref, out_ref):
    # shuffle_emb: three 1x1 convs + ReLU == three channel matmuls + ReLU.
    # bf16 operands, f32 accumulation on the MXU.
    x = x_ref[...]                                                      # (bm, 2048) bf16
    h = jnp.dot(x, w1_ref[...], preferred_element_type=jnp.float32) + b1_ref[...]
    h = jnp.maximum(h, 0.0).astype(jnp.bfloat16)                        # (bm, 512)
    h = jnp.dot(h, w2_ref[...], preferred_element_type=jnp.float32) + b2_ref[...]
    h = jnp.maximum(h, 0.0).astype(jnp.bfloat16)                        # (bm, 128)
    h = jnp.dot(h, w3_ref[...], preferred_element_type=jnp.float32) + b3_ref[...]
    h = jnp.maximum(h, 0.0)                                             # (bm, 32) f32

    # shuffle_pos / shuffle_ang heads, per-row partial sums: weighted channel
    # sums (VPU mul + XLU lane reduce, off the MXU critical path).  The Q-group
    # sum + bias happen in the wrapper -- no selector matmul, no tiny-N pushes.
    vpos = jnp.sum(h * apos_ref[...], axis=-1, keepdims=True)           # (bm, 1)
    vang = jnp.sum(h * aang_ref[...], axis=-1, keepdims=True)           # (bm, 1)
    lane = jax.lax.broadcasted_iota(jnp.int32, (vpos.shape[0], 2), 1)
    out_ref[...] = jnp.where(lane == 0, vpos, vang)                     # one (bm, 2) store


def _round_up(v, m):
    return ((v + m - 1) // m) * m


def _tpu_tiling_params():
    """(mxu_rows, max_block_rows) per TPU generation; safe defaults otherwise."""
    try:
        kind = jax.devices()[0].device_kind.lower()
    except Exception:
        kind = ""
    if "v5 lite" in kind or "v5e" in kind:
        return 128, 1024               # 128-row MXU, 16 MiB default scoped VMEM
    if "v6" in kind:
        return 256, 2048               # 256-row MXU, 128 MiB VMEM -> bigger tiles
    return 256, 1024                   # v7x (64 MiB VMEM) / unknown


def _pick_block_m(M, Q, mxu_rows, max_rows):
    """Rows per grid block.  Multiple of lcm(8, Q) (sublane + head-pattern
    aligned).  Never splits M below the MXU row height just to create extra
    grid steps; for large M prefers a divisor of M in [mxu_rows, max_rows],
    otherwise the wrapper pads M up to a multiple of the block."""
    unit = 8 * Q // math.gcd(8, Q)
    max_rows = max(unit, (max_rows // unit) * unit)
    if M <= max_rows:
        return _round_up(M, unit)      # single block (demo: 128 rows)
    lo = max(unit, min(_round_up(mxu_rows, unit), max_rows))
    d = max_rows
    while d >= lo:
        if M % d == 0:
            return d
        d -= unit
    return max_rows                    # no aligned divisor: pad in the wrapper


def _vmem_limit_bytes(block_m, C):
    """Scoped-VMEM request sized from the actual buffers plus headroom, clamped
    well below v7x's 64 MiB physical VMEM.  Mostly matters on v5e (16 MiB
    default scoped limit) once block_m >= ~512."""
    x_tiles = 2 * block_m * C * 2                        # bf16 input, double buffered
    weights = 2 * (C * 512 + 512 * 128 + 128 * 32) * 2   # bf16, worst case 2 buffers
    biases_heads = 2 * ((512 + 128 + 32) * 4 + 2 * block_m * 32 * 4)
    interm = block_m * (512 + 128 + 32 + 64) * 4         # f32 temporaries
    out = 2 * block_m * 2 * 4
    est = x_tiles + weights + biases_heads + interm + out
    return int(min(max(32 << 20, est + (8 << 20)), 56 << 20))


def _heads_pallas(x, w1, b1, w2, b2, w3, b3, apos, aang, block_m):
    M, C = x.shape
    n_blocks = M // block_m
    params = pltpu.CompilerParams(
        dimension_semantics=("parallel",),
        vmem_limit_bytes=_vmem_limit_bytes(block_m, C))

    def build(single_buffer_weights):
        def const_spec(a):
            if single_buffer_weights:
                # Constant-index blocks do not need double buffering.
                return pl.BlockSpec(a.shape, lambda i: (0, 0),
                                    pipeline_mode=pl.Buffered(1))
            return pl.BlockSpec(a.shape, lambda i: (0, 0))

        return pl.pallas_call(
            _emb_heads_kernel,
            grid=(n_blocks,),
            in_specs=[pl.BlockSpec((block_m, C), lambda i: (i, 0)),
                      const_spec(w1), const_spec(b1),
                      const_spec(w2), const_spec(b2),
                      const_spec(w3), const_spec(b3),
                      const_spec(apos), const_spec(aang)],
            out_specs=pl.BlockSpec((block_m, 2), lambda i: (i, 0)),
            out_shape=jax.ShapeDtypeStruct((M, 2), jnp.float32),
            compiler_params=params)

    args = (x, w1, b1, w2, b2, w3, b3, apos, aang)
    try:
        return build(True)(*args)
    except Exception:
        # pipeline_mode=Buffered(1) not honored on this JAX build for top-level
        # pallas_call: fall back to default double buffering (same results).
        return build(False)(*args)


def init_params(key, Q):
    """Deterministic parameters with the same shapes as SwapLayer.init_layers()."""
    ks = jax.random.split(key, 10)
    fc_dim = 32 * Q  # == 128 for Q == 4 (as in the PyTorch module)

    def rnd(k, shape, fan_in):
        return jax.random.normal(k, shape, jnp.float32) / np.sqrt(fan_in)

    return dict(
        conv1_w=rnd(ks[0], (512, 2048), 2048), conv1_b=rnd(ks[1], (512,), 2048),
        conv2_w=rnd(ks[2], (128, 512), 512),   conv2_b=rnd(ks[3], (128,), 512),
        conv3_w=rnd(ks[4], (32, 128), 128),    conv3_b=rnd(ks[5], (32,), 128),
        pos_w=rnd(ks[6], (fc_dim,), fc_dim),   pos_b=rnd(ks[7], (1,), fc_dim),
        ang_w=rnd(ks[8], (fc_dim,), fc_dim),   ang_b=rnd(ks[9], (1,), fc_dim),
    )


def swap_layer_forward_pallas(feat, swap_map, prm, map_size):
    bs, ch, W, H = feat.shape
    ms0, ms1 = map_size
    assert W % ms0 == 0 and H % ms1 == 0
    hs, vs = W // ms0, H // ms1
    P, Q = ms0 * ms1, hs * vs

    # NCHW -> (bs, ch, P, Q) block layout (== torch .view/.transpose(3,4)/.view)
    reshape_feat = jnp.transpose(feat.reshape(bs, ch, ms0, hs, ms1, vs),
                                 (0, 1, 2, 4, 3, 5)).reshape(bs, ch, P, Q)

    # First output: patch gather of the feature map (f32, exact).
    idx = swap_map.astype(jnp.int32)[:, None, :, None]                  # (bs,1,P,1)
    shuffle_feat = jnp.take_along_axis(reshape_feat, idx, axis=2)       # (bs,ch,P,Q)
    out_feat = shuffle_feat.reshape(bs, ch, W, H)

    # Kernel input: NORMAL branch only.  Cast to bf16 BEFORE the NHWC transpose
    # so the transpose round-trip moves half the bytes.
    M = bs * P * Q
    x = jnp.transpose(reshape_feat.astype(jnp.bfloat16),
                      (0, 2, 3, 1)).reshape(M, ch)

    # Conv weights (Cout, Cin) -> matmul weights (Cin, Cout) in bf16; biases f32.
    w1, b1 = prm['conv1_w'].T.astype(jnp.bfloat16), prm['conv1_b'][None, :]
    w2, b2 = prm['conv2_w'].T.astype(jnp.bfloat16), prm['conv2_b'][None, :]
    w3, b3 = prm['conv3_w'].T.astype(jnp.bfloat16), prm['conv3_b'][None, :]

    mxu_rows, max_rows = _tpu_tiling_params()
    block_m = _pick_block_m(M, Q, mxu_rows, max_rows)
    M_pad = _round_up(M, block_m)
    if M_pad != M:                      # padding path instead of alignment asserts
        x = jnp.pad(x, ((0, M_pad - M), (0, 0)))

    # Head weights: fc index = c*Q + q -> per-row (q, c) pattern, tiled to the
    # block height (pattern period Q, block_m % Q == 0, so one tile serves all
    # grid blocks; padded tail rows are discarded below).
    apos = jnp.tile(prm['pos_w'].reshape(32, Q).T, (block_m // Q, 1))   # (block_m, 32)
    aang = jnp.tile(prm['ang_w'].reshape(32, Q).T, (block_m // Q, 1))   # (block_m, 32)

    rows = _heads_pallas(x, w1, b1, w2, b2, w3, b3, apos, aang, block_m)  # (M_pad, 2)
    grp = rows[:M].reshape(bs, P, Q, 2).sum(axis=2)                     # Q-group sum
    npos_out = grp[..., 0] + prm['pos_b'][0]
    nang_out = grp[..., 1] + prm['ang_b'][0]

    # Shuffled branch == swap_map gather of the normal branch over P (the 1x1
    # conv stack and per-patch heads are permutation-equivariant over patches).
    sm = swap_map.astype(jnp.int32)
    pos_out = jnp.take_along_axis(npos_out, sm, axis=1)
    ang_out = jnp.take_along_axis(nang_out, sm, axis=1)
    return out_feat, pos_out, ang_out, npos_out, nang_out


def swap_layer_forward_ref(feat, swap_map, prm, map_size):
    """Pure-JAX f32 reference mirroring the PyTorch forward (both branches)."""
    bs, ch, W, H = feat.shape
    ms0, ms1 = map_size
    hs, vs = W // ms0, H // ms1
    P, Q = ms0 * ms1, hs * vs
    reshape_feat = jnp.transpose(feat.reshape(bs, ch, ms0, hs, ms1, vs),
                                 (0, 1, 2, 4, 3, 5)).reshape(bs, ch, P, Q)
    idx = swap_map.astype(jnp.int32)[:, None, :, None]
    shuffle_feat = jnp.take_along_axis(reshape_feat, idx, axis=2)

    def emb_and_heads(t):
        x = jnp.transpose(t, (0, 2, 3, 1))                              # (bs,P,Q,ch)
        h = jax.nn.relu(jnp.einsum('bpqc,oc->bpqo', x, prm['conv1_w']) + prm['conv1_b'])
        h = jax.nn.relu(jnp.einsum('bpqc,oc->bpqo', h, prm['conv2_w']) + prm['conv2_b'])
        h = jax.nn.relu(jnp.einsum('bpqc,oc->bpqo', h, prm['conv3_w']) + prm['conv3_b'])
        re = jnp.transpose(h, (0, 1, 3, 2)).reshape(bs, P, 32 * Q)      # (c,q) order
        return re @ prm['pos_w'] + prm['pos_b'][0], re @ prm['ang_w'] + prm['ang_b'][0]

    pos_out, ang_out = emb_and_heads(shuffle_feat)
    npos_out, nang_out = emb_and_heads(reshape_feat)
    return shuffle_feat.reshape(bs, ch, W, H), pos_out, ang_out, npos_out, nang_out


if __name__ == "__main__":
    key = jax.random.PRNGKey(0)
    k_feat, k_perm, k_prm = jax.random.split(key, 3)

    bs, ch = 2, 2048                 # channel count fixed by the module (1x1 conv 2048->512)
    map_size = (4, 4)
    W = H = 8                        # -> hor_step = ver_step = 2, Q = 4, fc_dim = 128
    P = map_size[0] * map_size[1]
    Q = (W // map_size[0]) * (H // map_size[1])

    feat = jax.random.normal(k_feat, (bs, ch, W, H), jnp.float32)
    swap_map = jnp.stack([jax.random.permutation(k, P)
                          for k in jax.random.split(k_perm, bs)]).astype(jnp.int32)

    prm = init_params(k_prm, Q)

    outs = swap_layer_forward_pallas(feat, swap_map, prm, map_size)
    outs = jax.block_until_ready(outs)

    refs = swap_layer_forward_ref(feat, swap_map, prm, map_size)
    refs = jax.block_until_ready(refs)

    # First output is a pure gather/reshape -> exact.
    np.testing.assert_allclose(np.asarray(outs[0]), np.asarray(refs[0]), rtol=1e-5, atol=1e-5)
    # Head outputs use bf16 matmuls (f32 accumulation) -> small numeric slack.
    for o, r in zip(outs[1:], refs[1:]):
        np.testing.assert_allclose(np.asarray(o), np.asarray(r), rtol=5e-2, atol=5e-2)

    print("KERNEL_OK")
</pallas_src>

<mosaic_0001>
module attributes {stable_mosaic.version = 11 : i64} {
  func.func @_emb_heads_kernel(%arg0: i32, %arg1: memref<128x2048xbf16, #tpu.memory_space<vmem>>, %arg2: memref<2048x512xbf16, #tpu.memory_space<vmem>>, %arg3: memref<1x512xf32, #tpu.memory_space<vmem>>, %arg4: memref<512x128xbf16, #tpu.memory_space<vmem>>, %arg5: memref<1x128xf32, #tpu.memory_space<vmem>>, %arg6: memref<128x32xbf16, #tpu.memory_space<vmem>>, %arg7: memref<1x32xf32, #tpu.memory_space<vmem>>, %arg8: memref<128x32xf32, #tpu.memory_space<vmem>>, %arg9: memref<128x32xf32, #tpu.memory_space<vmem>>, %arg10: memref<128x2xf32, #tpu.memory_space<vmem>>) attributes {dimension_semantics = [#tpu.dimension_semantics<parallel>], iteration_bounds = array<i64: 1>, scalar_prefetch = 0 : i64, scratch_operands = 0 : i64, tpu.core_type = #tpu.core_type<tc>, window_params = [{transform_indices = @transform_0, window_bounds = array<i64: 128, 2048>}, {pipeline_mode = #tpu.pipeline_mode<synchronous>, transform_indices = @transform_1, window_bounds = array<i64: 2048, 512>}, {pipeline_mode = #tpu.pipeline_mode<synchronous>, transform_indices = @transform_2, window_bounds = array<i64: 1, 512>}, {pipeline_mode = #tpu.pipeline_mode<synchronous>, transform_indices = @transform_3, window_bounds = array<i64: 512, 128>}, {pipeline_mode = #tpu.pipeline_mode<synchronous>, transform_indices = @transform_4, window_bounds = array<i64: 1, 128>}, {pipeline_mode = #tpu.pipeline_mode<synchronous>, transform_indices = @transform_5, window_bounds = array<i64: 128, 32>}, {pipeline_mode = #tpu.pipeline_mode<synchronous>, transform_indices = @transform_6, window_bounds = array<i64: 1, 32>}, {pipeline_mode = #tpu.pipeline_mode<synchronous>, transform_indices = @transform_7, window_bounds = array<i64: 128, 32>}, {pipeline_mode = #tpu.pipeline_mode<synchronous>, transform_indices = @transform_8, window_bounds = array<i64: 128, 32>}, {transform_indices = @transform_9, window_bounds = array<i64: 128, 2>}]} {
    %c0 = arith.constant 0 : index
    %c0_0 = arith.constant 0 : index
    %0 = vector.load %arg1[%c0, %c0_0] : memref<128x2048xbf16, #tpu.memory_space<vmem>>, vector<128x2048xbf16>
    %c0_1 = arith.constant 0 : index
    %c0_2 = arith.constant 0 : index
    %1 = vector.load %arg2[%c0_1, %c0_2] : memref<2048x512xbf16, #tpu.memory_space<vmem>>, vector<2048x512xbf16>
    %cst = arith.constant dense<0.000000e+00> : vector<128x512xf32>
    %2 = tpu.matmul %0, %1, %cst {dimension_numbers = #tpu.dot_dimension_numbers<[1], [0], [0], [1], [0, 0, 1, 1], [], []>} : vector<128x2048xbf16>, vector<2048x512xbf16>, vector<128x512xf32> -> vector<128x512xf32>
    %c0_3 = arith.constant 0 : index
    %c0_4 = arith.constant 0 : index
    %3 = vector.load %arg3[%c0_3, %c0_4] : memref<1x512xf32, #tpu.memory_space<vmem>>, vector<1x512xf32>
    %4 = vector.broadcast %3 : vector<1x512xf32> to vector<128x512xf32>
    %5 = arith.addf %2, %4 : vector<128x512xf32>
    %cst_5 = arith.constant 0.000000e+00 : f32
    %6 = vector.broadcast %cst_5 : f32 to vector<128x512xf32>
    %7 = arith.maximumf %5, %6 : vector<128x512xf32>
    %8 = arith.truncf %7 : vector<128x512xf32> to vector<128x512xbf16>
    %c0_6 = arith.constant 0 : index
    %c0_7 = arith.constant 0 : index
    %9 = vector.load %arg4[%c0_6, %c0_7] : memref<512x128xbf16, #tpu.memory_space<vmem>>, vector<512x128xbf16>
    %cst_8 = arith.constant dense<0.000000e+00> : vector<128x128xf32>
    %10 = tpu.matmul %8, %9, %cst_8 {dimension_numbers = #tpu.dot_dimension_numbers<[1], [0], [0], [1], [0, 0, 1, 1], [], []>} : vector<128x512xbf16>, vector<512x128xbf16>, vector<128x128xf32> -> vector<128x128xf32>
    %c0_9 = arith.constant 0 : index
    %c0_10 = arith.constant 0 : index
    %11 = vector.load %arg5[%c0_9, %c0_10] : memref<1x128xf32, #tpu.memory_space<vmem>>, vector<1x128xf32>
    %12 = vector.broadcast %11 : vector<1x128xf32> to vector<128x128xf32>
    %13 = arith.addf %10, %12 : vector<128x128xf32>
    %cst_11 = arith.constant 0.000000e+00 : f32
    %14 = vector.broadcast %cst_11 : f32 to vector<128x128xf32>
    %15 = arith.maximumf %13, %14 : vector<128x128xf32>
    %16 = arith.truncf %15 : vector<128x128xf32> to vector<128x128xbf16>
    %c0_12 = arith.constant 0 : index
    %c0_13 = arith.constant 0 : index
    %17 = vector.load %arg6[%c0_12, %c0_13] : memref<128x32xbf16, #tpu.memory_space<vmem>>, vector<128x32xbf16>
    %cst_14 = arith.constant dense<0.000000e+00> : vector<128x32xf32>
    %18 = tpu.matmul %16, %17, %cst_14 {dimension_numbers = #tpu.dot_dimension_numbers<[1], [0], [0], [1], [0, 0, 1, 1], [], []>} : vector<128x128xbf16>, vector<128x32xbf16>, vector<128x32xf32> -> vector<128x32xf32>
    %c0_15 = arith.constant 0 : index
    %c0_16 = arith.constant 0 : index
    %19 = vector.load %arg7[%c0_15, %c0_16] : memref<1x32xf32, #tpu.memory_space<vmem>>, vector<1x32xf32>
    %20 = vector.broadcast %19 : vector<1x32xf32> to vector<128x32xf32>
    %21 = arith.addf %18, %20 : vector<128x32xf32>
    %cst_17 = arith.constant 0.000000e+00 : f32
    %22 = vector.broadcast %cst_17 : f32 to vector<128x32xf32>
    %23 = arith.maximumf %21, %22 : vector<128x32xf32>
    %c0_18 = arith.constant 0 : index
    %c0_19 = arith.constant 0 : index
    %24 = vector.load %arg8[%c0_18, %c0_19] : memref<128x32xf32, #tpu.memory_space<vmem>>, vector<128x32xf32>
    %25 = arith.mulf %23, %24 : vector<128x32xf32>
    %cst_20 = arith.constant dense<0.000000e+00> : vector<128xf32>
    %26 = vector.multi_reduction <add>, %25, %cst_20 [1] : vector<128x32xf32> to vector<128xf32>
    %27 = vector.shape_cast %26 : vector<128xf32> to vector<128x1xf32>
    %c0_21 = arith.constant 0 : index
    %c0_22 = arith.constant 0 : index
    %28 = vector.load %arg9[%c0_21, %c0_22] : memref<128x32xf32, #tpu.memory_space<vmem>>, vector<128x32xf32>
    %29 = arith.mulf %23, %28 : vector<128x32xf32>
    %cst_23 = arith.constant dense<0.000000e+00> : vector<128xf32>
    %30 = vector.multi_reduction <add>, %29, %cst_23 [1] : vector<128x32xf32> to vector<128xf32>
    %31 = vector.shape_cast %30 : vector<128xf32> to vector<128x1xf32>
    %32 = tpu.iota {dimensions = array<i32: 1>} : vector<128x2xi32>
    %c0_i32 = arith.constant 0 : i32
    %33 = vector.broadcast %c0_i32 : i32 to vector<128x2xi32>
    %34 = arith.cmpi eq, %32, %33 : vector<128x2xi32>
    %35 = vector.shape_cast %27 : vector<128x1xf32> to vector<128x1xf32>
    %36 = vector.broadcast %35 : vector<128x1xf32> to vector<128x2xf32>
    %37 = vector.shape_cast %31 : vector<128x1xf32> to vector<128x1xf32>
    %38 = vector.broadcast %37 : vector<128x1xf32> to vector<128x2xf32>
    %39 = arith.select %34, %36, %38 : vector<128x2xi1>, vector<128x2xf32>
    %c0_24 = arith.constant 0 : index
    %c0_25 = arith.constant 0 : index
    %40 = vector.load %arg10[%c0_24, %c0_25] : memref<128x2xf32, #tpu.memory_space<vmem>>, vector<128x2xf32>
    tpu.vector_store %arg10[%c0_24, %c0_25], %39 {strides = array<i32>} : memref<128x2xf32, #tpu.memory_space<vmem>>, vector<128x2xf32>,
    return
  }
  func.func @transform_0(%arg0: i32) -> (i32, i32) {
    %c0_i32 = arith.constant 0 : i32
    %c0_i32_0 = arith.constant 0 : i32
    return %arg0, %c0_i32 : i32, i32
  }
  func.func @transform_1(%arg0: i32) -> (i32, i32) {
    %c0_i32 = arith.constant 0 : i32
    %c0_i32_0 = arith.constant 0 : i32
    %c0_i32_1 = arith.constant 0 : i32
    return %c0_i32, %c0_i32_0 : i32, i32
  }
  func.func @transform_2(%arg0: i32) -> (i32, i32) {
    %c0_i32 = arith.constant 0 : i32
    %c0_i32_0 = arith.constant 0 : i32
    %c0_i32_1 = arith.constant 0 : i32
    return %c0_i32, %c0_i32_0 : i32, i32
  }
  func.func @transform_3(%arg0: i32) -> (i32, i32) {
    %c0_i32 = arith.constant 0 : i32
    %c0_i32_0 = arith.constant 0 : i32
    %c0_i32_1 = arith.constant 0 : i32
    return %c0_i32, %c0_i32_0 : i32, i32
  }
  func.func @transform_4(%arg0: i32) -> (i32, i32) {
    %c0_i32 = arith.constant 0 : i32
    %c0_i32_0 = arith.constant 0 : i32
    %c0_i32_1 = arith.constant 0 : i32
    return %c0_i32, %c0_i32_0 : i32, i32
  }
  func.func @transform_5(%arg0: i32) -> (i32, i32) {
    %c0_i32 = arith.constant 0 : i32
    %c0_i32_0 = arith.constant 0 : i32
    %c0_i32_1 = arith.constant 0 : i32
    return %c0_i32, %c0_i32_0 : i32, i32
  }
  func.func @transform_6(%arg0: i32) -> (i32, i32) {
    %c0_i32 = arith.constant 0 : i32
    %c0_i32_0 = arith.constant 0 : i32
    %c0_i32_1 = arith.constant 0 : i32
    return %c0_i32, %c0_i32_0 : i32, i32
  }
  func.func @transform_7(%arg0: i32) -> (i32, i32) {
    %c0_i32 = arith.constant 0 : i32
    %c0_i32_0 = arith.constant 0 : i32
    %c0_i32_1 = arith.constant 0 : i32
    return %c0_i32, %c0_i32_0 : i32, i32
  }
  func.func @transform_8(%arg0: i32) -> (i32, i32) {
    %c0_i32 = arith.constant 0 : i32
    %c0_i32_0 = arith.constant 0 : i32
    %c0_i32_1 = arith.constant 0 : i32
    return %c0_i32, %c0_i32_0 : i32, i32
  }
  func.func @transform_9(%arg0: i32) -> (i32, i32) {
    %c0_i32 = arith.constant 0 : i32
    %c0_i32_0 = arith.constant 0 : i32
    return %arg0, %c0_i32 : i32, i32
  }
}

module attributes {stable_mosaic.version = 11 : i64} {
  func.func @_emb_heads_kernel(%arg0: i32, %arg1: memref<128x2048xbf16, #tpu.memory_space<vmem>>, %arg2: memref<2048x512xbf16, #tpu.memory_space<vmem>>, %arg3: memref<1x512xf32, #tpu.memory_space<vmem>>, %arg4: memref<512x128xbf16, #tpu.memory_space<vmem>>, %arg5: memref<1x128xf32, #tpu.memory_space<vmem>>, %arg6: memref<128x32xbf16, #tpu.memory_space<vmem>>, %arg7: memref<1x32xf32, #tpu.memory_space<vmem>>, %arg8: memref<128x32xf32, #tpu.memory_space<vmem>>, %arg9: memref<128x32xf32, #tpu.memory_space<vmem>>, %arg10: memref<128x2xf32, #tpu.memory_space<vmem>>) attributes {dimension_semantics = [#tpu.dimension_semantics<parallel>], iteration_bounds = array<i64: 1>, scalar_prefetch = 0 : i64, scratch_operands = 0 : i64, tpu.core_type = #tpu.core_type<tc>, window_params = [{transform_indices = @transform_0, window_bounds = array<i64: 128, 2048>}, {pipeline_mode = #tpu.pipeline_mode<synchronous>, transform_indices = @transform_1, window_bounds = array<i64: 2048, 512>}, {pipeline_mode = #tpu.pipeline_mode<synchronous>, transform_indices = @transform_2, window_bounds = array<i64: 1, 512>}, {pipeline_mode = #tpu.pipeline_mode<synchronous>, transform_indices = @transform_3, window_bounds = array<i64: 512, 128>}, {pipeline_mode = #tpu.pipeline_mode<synchronous>, transform_indices = @transform_4, window_bounds = array<i64: 1, 128>}, {pipeline_mode = #tpu.pipeline_mode<synchronous>, transform_indices = @transform_5, window_bounds = array<i64: 128, 32>}, {pipeline_mode = #tpu.pipeline_mode<synchronous>, transform_indices = @transform_6, window_bounds = array<i64: 1, 32>}, {pipeline_mode = #tpu.pipeline_mode<synchronous>, transform_indices = @transform_7, window_bounds = array<i64: 128, 32>}, {pipeline_mode = #tpu.pipeline_mode<synchronous>, transform_indices = @transform_8, window_bounds = array<i64: 128, 32>}, {transform_indices = @transform_9, window_bounds = array<i64: 128, 2>}]} {
    %c0 = arith.constant 0 : index
    %c0_0 = arith.constant 0 : index
    %0 = vector.load %arg1[%c0, %c0_0] : memref<128x2048xbf16, #tpu.memory_space<vmem>>, vector<128x2048xbf16>
    %c0_1 = arith.constant 0 : index
    %c0_2 = arith.constant 0 : index
    %1 = vector.load %arg2[%c0_1, %c0_2] : memref<2048x512xbf16, #tpu.memory_space<vmem>>, vector<2048x512xbf16>
    %cst = arith.constant dense<0.000000e+00> : vector<128x512xf32>
    %2 = tpu.matmul %0, %1, %cst {dimension_numbers = #tpu.dot_dimension_numbers<[1], [0], [0], [1], [0, 0, 1, 1], [], []>} : vector<128x2048xbf16>, vector<2048x512xbf16>, vector<128x512xf32> -> vector<128x512xf32>
    %c0_3 = arith.constant 0 : index
    %c0_4 = arith.constant 0 : index
    %3 = vector.load %arg3[%c0_3, %c0_4] : memref<1x512xf32, #tpu.memory_space<vmem>>, vector<1x512xf32>
    %4 = vector.broadcast %3 : vector<1x512xf32> to vector<128x512xf32>
    %5 = arith.addf %2, %4 : vector<128x512xf32>
    %cst_5 = arith.constant 0.000000e+00 : f32
    %6 = vector.broadcast %cst_5 : f32 to vector<128x512xf32>
    %7 = arith.maximumf %5, %6 : vector<128x512xf32>
    %8 = arith.truncf %7 : vector<128x512xf32> to vector<128x512xbf16>
    %c0_6 = arith.constant 0 : index
    %c0_7 = arith.constant 0 : index
    %9 = vector.load %arg4[%c0_6, %c0_7] : memref<512x128xbf16, #tpu.memory_space<vmem>>, vector<512x128xbf16>
    %cst_8 = arith.constant dense<0.000000e+00> : vector<128x128xf32>
    %10 = tpu.matmul %8, %9, %cst_8 {dimension_numbers = #tpu.dot_dimension_numbers<[1], [0], [0], [1], [0, 0, 1, 1], [], []>} : vector<128x512xbf16>, vector<512x128xbf16>, vector<128x128xf32> -> vector<128x128xf32>
    %c0_9 = arith.constant 0 : index
    %c0_10 = arith.constant 0 : index
    %11 = vector.load %arg5[%c0_9, %c0_10] : memref<1x128xf32, #tpu.memory_space<vmem>>, vector<1x128xf32>
    %12 = vector.broadcast %11 : vector<1x128xf32> to vector<128x128xf32>
    %13 = arith.addf %10, %12 : vector<128x128xf32>
    %cst_11 = arith.constant 0.000000e+00 : f32
    %14 = vector.broadcast %cst_11 : f32 to vector<128x128xf32>
    %15 = arith.maximumf %13, %14 : vector<128x128xf32>
    %16 = arith.truncf %15 : vector<128x128xf32> to vector<128x128xbf16>
    %c0_12 = arith.constant 0 : index
    %c0_13 = arith.constant 0 : index
    %17 = vector.load %arg6[%c0_12, %c0_13] : memref<128x32xbf16, #tpu.memory_space<vmem>>, vector<128x32xbf16>
    %cst_14 = arith.constant dense<0.000000e+00> : vector<128x32xf32>
    %18 = tpu.matmul %16, %17, %cst_14 {dimension_numbers = #tpu.dot_dimension_numbers<[1], [0], [0], [1], [0, 0, 1, 1], [], []>} : vector<128x128xbf16>, vector<128x32xbf16>, vector<128x32xf32> -> vector<128x32xf32>
    %c0_15 = arith.constant 0 : index
    %c0_16 = arith.constant 0 : index
    %19 = vector.load %arg7[%c0_15, %c0_16] : memref<1x32xf32, #tpu.memory_space<vmem>>, vector<1x32xf32>
    %20 = vector.broadcast %19 : vector<1x32xf32> to vector<128x32xf32>
    %21 = arith.addf %18, %20 : vector<128x32xf32>
    %cst_17 = arith.constant 0.000000e+00 : f32
    %22 = vector.broadcast %cst_17 : f32 to vector<128x32xf32>
    %23 = arith.maximumf %21, %22 : vector<128x32xf32>
    %c0_18 = arith.constant 0 : index
    %c0_19 = arith.constant 0 : index
    %24 = vector.load %arg8[%c0_18, %c0_19] : memref<128x32xf32, #tpu.memory_space<vmem>>, vector<128x32xf32>
    %25 = arith.mulf %23, %24 : vector<128x32xf32>
    %cst_20 = arith.constant dense<0.000000e+00> : vector<128xf32>
    %26 = vector.multi_reduction <add>, %25, %cst_20 [1] : vector<128x32xf32> to vector<128xf32>
    %27 = vector.shape_cast %26 : vector<128xf32> to vector<128x1xf32>
    %c0_21 = arith.constant 0 : index
    %c0_22 = arith.constant 0 : index
    %28 = vector.load %arg9[%c0_21, %c0_22] : memref<128x32xf32, #tpu.memory_space<vmem>>, vector<128x32xf32>
    %29 = arith.mulf %23, %28 : vector<128x32xf32>
    %cst_23 = arith.constant dense<0.000000e+00> : vector<128xf32>
    %30 = vector.multi_reduction <add>, %29, %cst_23 [1] : vector<128x32xf32> to vector<128xf32>
    %31 = vector.shape_cast %30 : vector<128xf32> to vector<128x1xf32>
    %32 = tpu.iota {dimensions = array<i32: 1>} : vector<128x2xi32>
    %c0_i32 = arith.constant 0 : i32
    %33 = vector.broadcast %c0_i32 : i32 to vector<128x2xi32>
    %34 = arith.cmpi eq, %32, %33 : vector<128x2xi32>
    %35 = vector.shape_cast %27 : vector<128x1xf32> to vector<128x1xf32>
    %36 = vector.broadcast %35 : vector<128x1xf32> to vector<128x2xf32>
    %37 = vector.shape_cast %31 : vector<128x1xf32> to vector<128x1xf32>
    %38 = vector.broadcast %37 : vector<128x1xf32> to vector<128x2xf32>
    %39 = arith.select %34, %36, %38 : vector<128x2xi1>, vector<128x2xf32>
    %c0_24 = arith.constant 0 : index
    %c0_25 = arith.constant 0 : index
    %40 = vector.load %arg10[%c0_24, %c0_25] : memref<128x2xf32, #tpu.memory_space<vmem>>, vector<128x2xf32>
    tpu.vector_store %arg10[%c0_24, %c0_25], %39 {strides = array<i32>} : memref<128x2xf32, #tpu.memory_space<vmem>>, vector<128x2xf32>,
    return
  }
  func.func @transform_0(%arg0: i32) -> (i32, i32) {
    %c0_i32 = arith.constant 0 : i32
    %c0_i32_0 = arith.constant 0 : i32
    return %arg0, %c0_i32 : i32, i32
  }
  func.func @transform_1(%arg0: i32) -> (i32, i32) {
    %c0_i32 = arith.constant 0 : i32
    %c0_i32_0 = arith.constant 0 : i32
    %c0_i32_1 = arith.constant 0 : i32
    return %c0_i32, %c0_i32_0 : i32, i32
  }
  func.func @transform_2(%arg0: i32) -> (i32, i32) {
    %c0_i32 = arith.constant 0 : i32
    %c0_i32_0 = arith.constant 0 : i32
    %c0_i32_1 = arith.constant 0 : i32
    return %c0_i32, %c0_i32_0 : i32, i32
  }
  func.func @transform_3(%arg0: i32) -> (i32, i32) {
    %c0_i32 = arith.constant 0 : i32
    %c0_i32_0 = arith.constant 0 : i32
    %c0_i32_1 = arith.constant 0 : i32
    return %c0_i32, %c0_i32_0 : i32, i32
  }
  func.func @transform_4(%arg0: i32) -> (i32, i32) {
    %c0_i32 = arith.constant 0 : i32
    %c0_i32_0 = arith.constant 0 : i32
    %c0_i32_1 = arith.constant 0 : i32
    return %c0_i32, %c0_i32_0 : i32, i32
  }
  func.func @transform_5(%arg0: i32) -> (i32, i32) {
    %c0_i32 = arith.constant 0 : i32
    %c0_i32_0 = arith.constant 0 : i32
    %c0_i32_1 = arith.constant 0 : i32
    return %c0_i32, %c0_i32_0 : i32, i32
  }
  func.func @transform_6(%arg0: i32) -> (i32, i32) {
    %c0_i32 = arith.constant 0 : i32
    %c0_i32_0 = arith.constant 0 : i32
    %c0_i32_1 = arith.constant 0 : i32
    return %c0_i32, %c0_i32_0 : i32, i32
  }
  func.func @transform_7(%arg0: i32) -> (i32, i32) {
    %c0_i32 = arith.constant 0 : i32
    %c0_i32_0 = arith.constant 0 : i32
    %c0_i32_1 = arith.constant 0 : i32
    return %c0_i32, %c0_i32_0 : i32, i32
  }
  func.func @transform_8(%arg0: i32) -> (i32, i32) {
    %c0_i32 = arith.constant 0 : i32
    %c0_i32_0 = arith.constant 0 : i32
    %c0_i32_1 = arith.constant 0 : i32
    return %c0_i32, %c0_i32_0 : i32, i32
  }
  func.func @transform_9(%arg0: i32) -> (i32, i32) {
    %c0_i32 = arith.constant 0 : i32
    %c0_i32_0 = arith.constant 0 : i32
    return %arg0, %c0_i32 : i32, i32
  }
}

</mosaic_0001>

<llo_original>
// kernel: tpu_custom_call.1
$region0: #{tpu_custom_call.1}
  #allocation0 [shape = 'u32[]', space=smem, size = 0x4, offset = 0x4, fixed_abs, tag = 'smem constant byte address 0x4 - core index']
  #allocation1 [shape = 'u32[144,128]{1,0:T(1,128)}', space=vmem, size = 0x12000, scoped, tag = 'internal scratch']
  %s0 = inlined_call_operand.hbm [shape: bf16[128,2048], index: 0, kind: input, shape index: {}]
  %s1 = inlined_call_operand.hbm [shape: bf16[2048,512], index: 1, kind: input, shape index: {}]
  %s2 = inlined_call_operand.hbm [shape: f32[1,512], index: 2, kind: input, shape index: {}]
  %s3 = inlined_call_operand.hbm [shape: bf16[512,128], index: 3, kind: input, shape index: {}]
  %s4 = inlined_call_operand.hbm [shape: f32[1,128], index: 4, kind: input, shape index: {}]
  %s5 = inlined_call_operand.vmem [shape: bf16[128,32], index: 5, kind: input, shape index: {}]
  %s6 = inlined_call_operand.hbm [shape: f32[1,32], index: 6, kind: input, shape index: {}]
  %s7 = inlined_call_operand.vmem [shape: f32[128,32], index: 7, kind: input, shape index: {}]
  %s8 = inlined_call_operand.vmem [shape: f32[128,32], index: 8, kind: input, shape index: {}]
  %s9 = inlined_call_operand.vmem [shape: f32[128,2], index: 9, kind: output, shape index: {}]
  %s10 = sld [smem:[#allocation0]]
  $region70: #{tpu_custom_call.1} parent=0
    _
  %s12 = ssub.s32 1, %s10
  %s13 = scalar_select 0, %s12, %s10
  $region1: #{tpu_custom_call.1} parent=0
    #allocation2 [shape = 'u8[524288]{0}', space=vmem, size = 0x80000, scoped, tag = 'input window, operand 0, single buffered']
    #allocation3 [shape = 's32[1]{0}', space=sflag, size = 0x4, scoped, tag = 'scoped memory for tpu_custom_call.1']
    #allocation4 [shape = 'u8[2097152]{0}', space=vmem, size = 0x200000, scoped, tag = 'input window, operand 1, single buffered']
    #allocation5 [shape = 's32[1]{0}', space=sflag, size = 0x4, scoped, tag = 'scoped memory for tpu_custom_call.1']
    #allocation6 [shape = 'u8[2048]{0}', space=vmem, size = 0x800, scoped, tag = 'input window, operand 2, single buffered']
    #allocation7 [shape = 'u8[131072]{0}', space=vmem, size = 0x20000, scoped, tag = 'input window, operand 3, single buffered']
    #allocation8 [shape = 's32[1]{0}', space=sflag, size = 0x4, scoped, tag = 'scoped memory for tpu_custom_call.1']
    #allocation9 [shape = 'u8[512]{0}', space=vmem, size = 0x400, scoped, tag = 'input window, operand 4, single buffered']
    #allocation10 [shape = 'u8[512]{0}', space=vmem, size = 0x400, scoped, tag = 'input window, operand 6, single buffered']
    #allocation11 [shape = 's32[1]{0}', space=sflag, size = 0x4, scoped, tag = 'scoped memory for tpu_custom_call.1']
    %14 = vsyncpa [#allocation3], 0
    %15 = vsyncpa [#allocation5], 0
    %16 = vsyncpa [#allocation8], 0
    %17 = vsyncpa [#allocation11], 0
    // Predicated region
    $region2: #{tpu_custom_call.1} parent=1 // pred_check
      _
    $region3: #{tpu_custom_call.1} parent=1 // pred_check_branch
      %19 = sbr.rel (0) target = $region5
    $region4: #{tpu_custom_call.1} parent=1 // pred_region
      %s21 = ssub.s32 16384, 16384
      %22 = vsyncadd [#allocation3], %s21
      %s23 = sshll.u32 [#allocation2], 4
      %s24 = int_to_ptr.vmem [resolvable:$true] %s23
      %29 = dma.hbm_to_vmem [thread:$0]  %s0, 16384, %s24, [#allocation3], 1024, 1024, 64
    $region5: #{tpu_custom_call.1} parent=1 // pred_fallthru
      _
    // Predicated region
    $region6: #{tpu_custom_call.1} parent=1 // pred_check
      _
    $region7: #{tpu_custom_call.1} parent=1 // pred_check_branch
      %31 = sbr.rel (0) target = $region9
    $region8: #{tpu_custom_call.1} parent=1 // pred_region
      %s33 = ssub.s32 65536, 65536
      %34 = vsyncadd [#allocation5], %s33
      %s35 = sshll.u32 [#allocation4], 4
      %s36 = int_to_ptr.vmem [resolvable:$true] %s35
      %41 = dma.hbm_to_vmem [thread:$0]  %s1, 65536, %s36, [#allocation5], 256, 256, 16
    $region9: #{tpu_custom_call.1} parent=1 // pred_fallthru
      _
    // Predicated region
    $region10: #{tpu_custom_call.1} parent=1 // pred_check
      _
    $region11: #{tpu_custom_call.1} parent=1 // pred_check_branch
      %43 = sbr.rel (0) target = $region13
    $region12: #{tpu_custom_call.1} parent=1 // pred_region
      %s45 = ssub.s32 64, 64
      %46 = vsyncadd [#allocation5], %s45
      %s48 = sshll.u32 [#allocation6], 4
      %s49 = int_to_ptr.vmem [resolvable:$true] %s48
      %51 = dma.hbm_to_vmem [thread:$0]  %s2, 64, %s49, [#allocation5]
    $region13: #{tpu_custom_call.1} parent=1 // pred_fallthru
      _
    // Predicated region
    $region14: #{tpu_custom_call.1} parent=1 // pred_check
      _
    $region15: #{tpu_custom_call.1} parent=1 // pred_check_branch
      %53 = sbr.rel (0) target = $region17
    $region16: #{tpu_custom_call.1} parent=1 // pred_region
      %s55 = ssub.s32 4096, 4096
      %56 = vsyncadd [#allocation8], %s55
      %s57 = sshll.u32 [#allocation7], 4
      %s58 = int_to_ptr.vmem [resolvable:$true] %s57
      %63 = dma.hbm_to_vmem [thread:$0]  %s3, 4096, %s58, [#allocation8], 64, 64, 4
    $region17: #{tpu_custom_call.1} parent=1 // pred_fallthru
      _
    // Predicated region
    $region18: #{tpu_custom_call.1} parent=1 // pred_check
      _
    $region19: #{tpu_custom_call.1} parent=1 // pred_check_branch
      %65 = sbr.rel (0) target = $region21
    $region20: #{tpu_custom_call.1} parent=1 // pred_region
      %s67 = ssub.s32 16, 16
      %68 = vsyncadd [#allocation8], %s67
      %s70 = sshll.u32 [#allocation9], 4
      %s71 = int_to_ptr.vmem [resolvable:$true] %s70
      %73 = dma.hbm_to_vmem [thread:$0]  %s4, 16, %s71, [#allocation8]
    $region21: #{tpu_custom_call.1} parent=1 // pred_fallthru
      _
    // Predicated region
    $region22: #{tpu_custom_call.1} parent=1 // pred_check
      _
    $region23: #{tpu_custom_call.1} parent=1 // pred_check_branch
      %75 = sbr.rel (0) target = $region25
    $region24: #{tpu_custom_call.1} parent=1 // pred_region
      _
    $region25: #{tpu_custom_call.1} parent=1 // pred_fallthru
      _
    // Predicated region
    $region26: #{tpu_custom_call.1} parent=1 // pred_check
      _
    $region27: #{tpu_custom_call.1} parent=1 // pred_check_branch
      %77 = sbr.rel (0) target = $region29
    $region28: #{tpu_custom_call.1} parent=1 // pred_region
      %s79 = ssub.s32 16, 16
      %80 = vsyncadd [#allocation11], %s79
      %s82 = sshll.u32 [#allocation10], 4
      %s83 = int_to_ptr.vmem [resolvable:$true] %s82
      %85 = dma.hbm_to_vmem [thread:$0]  %s6, 16, %s83, [#allocation11]
    $region29: #{tpu_custom_call.1} parent=1 // pred_fallthru
      _
    // Predicated region
    $region30: #{tpu_custom_call.1} parent=1 // pred_check
      _
    $region31: #{tpu_custom_call.1} parent=1 // pred_check_branch
      %87 = sbr.rel (0) target = $region33
    $region32: #{tpu_custom_call.1} parent=1 // pred_region
      _
    $region33: #{tpu_custom_call.1} parent=1 // pred_fallthru
      _
    // Predicated region
    $region34: #{tpu_custom_call.1} parent=1 // pred_check
      _
    $region35: #{tpu_custom_call.1} parent=1 // pred_check_branch
      %89 = sbr.rel (0) target = $region37
    $region36: #{tpu_custom_call.1} parent=1 // pred_region
      _
    $region37: #{tpu_custom_call.1} parent=1 // pred_fallthru
      _
    // Predicated region
    $region38: #{tpu_custom_call.1} parent=1 // pred_check
      _
    $region39: #{tpu_custom_call.1} parent=1 // pred_check_branch
      %91 = sbr.rel (0) target = $region41
    $region40: #{tpu_custom_call.1} parent=1 // pred_region
      %92 = dma.done [#allocation3], 16384
    $region41: #{tpu_custom_call.1} parent=1 // pred_fallthru
      _
    // Predicated region
    $region42: #{tpu_custom_call.1} parent=1 // pred_check
      _
    $region43: #{tpu_custom_call.1} parent=1 // pred_check_branch
      %94 = sbr.rel (0) target = $region45
    $region44: #{tpu_custom_call.1} parent=1 // pred_region
      %95 = dma.done [#allocation5], 65536
    $region45: #{tpu_custom_call.1} parent=1 // pred_fallthru
      _
    // Predicated region
    $region46: #{tpu_custom_call.1} parent=1 // pred_check
      _
    $region47: #{tpu_custom_call.1} parent=1 // pred_check_branch
      %97 = sbr.rel (0) target = $region49
    $region48: #{tpu_custom_call.1} parent=1 // pred_region
      %98 = dma.done [#allocation5], 64
    $region49: #{tpu_custom_call.1} parent=1 // pred_fallthru
      _
    // Predicated region
    $region50: #{tpu_custom_call.1} parent=1 // pred_check
      _
    $region51: #{tpu_custom_call.1} parent=1 // pred_check_branch
      %100 = sbr.rel (0) target = $region53
    $region52: #{tpu_custom_call.1} parent=1 // pred_region
      %101 = dma.done [#allocation8], 4096
    $region53: #{tpu_custom_call.1} parent=1 // pred_fallthru
      _
    // Predicated region
    $region54: #{tpu_custom_call.1} parent=1 // pred_check
      _
    $region55: #{tpu_custom_call.1} parent=1 // pred_check_branch
      %103 = sbr.rel (0) target = $region57
    $region56: #{tpu_custom_call.1} parent=1 // pred_region
      %104 = dma.done [#allocation8], 16
    $region57: #{tpu_custom_call.1} parent=1 // pred_fallthru
      _
    // Predicated region
    $region58: #{tpu_custom_call.1} parent=1 // pred_check
      _
    $region59: #{tpu_custom_call.1} parent=1 // pred_check_branch
      %106 = sbr.rel (0) target = $region61
    $region60: #{tpu_custom_call.1} parent=1 // pred_region
      %107 = dma.done [#allocation11], 16
    $region61: #{tpu_custom_call.1} parent=1 // pred_fallthru
      _
    %v109 = vld [vmem:[#allocation2] sm:$0xff]
    %v110 = vld [vmem:[#allocation2 + $0x8] sm:$0xff]
    %v111 = vld [vmem:[#allocation2 + $0x10] sm:$0xff]
    %v112 = vld [vmem:[#allocation2 + $0x18] sm:$0xff]
    %v113 = vld [vmem:[#allocation2 + $0x20] sm:$0xff]
    %v114 = vld [vmem:[#allocation2 + $0x28] sm:$0xff]
    %v115 = vld [vmem:[#allocation2 + $0x30] sm:$0xff]
    %v116 = vld [vmem:[#allocation2 + $0x38] sm:$0xff]
    %v117 = vld [vmem:[#allocation2 + $0x40] sm:$0xff]
    %v118 = vld [vmem:[#allocation2 + $0x48] sm:$0xff]
    %v119 = vld [vmem:[#allocation2 + $0x50] sm:$0xff]
    %v120 = vld [vmem:[#allocation2 + $0x58] sm:$0xff]
    %v121 = vld [vmem:[#allocation2 + $0x60] sm:$0xff]
    %v122 = vld [vmem:[#allocation2 + $0x68] sm:$0xff]
    %v123 = vld [vmem:[#allocation2 + $0x70] sm:$0xff]
    %v124 = vld [vmem:[#allocation2 + $0x78] sm:$0xff]
    %v125 = vld [vmem:[#allocation2 + $0x80] sm:$0xff]
    %v126 = vld [vmem:[#allocation2 + $0x88] sm:$0xff]
    %v127 = vld [vmem:[#allocation2 + $0x90] sm:$0xff]
    %v128 = vld [vmem:[#allocation2 + $0x98] sm:$0xff]
    %v129 = vld [vmem:[#allocation2 + $0xa0] sm:$0xff]
    %v130 = vld [vmem:[#allocation2 + $0xa8] sm:$0xff]
    %v131 = vld [vmem:[#allocation2 + $0xb0] sm:$0xff]
    %v132 = vld [vmem:[#allocation2 + $0xb8] sm:$0xff]
    %v133 = vld [vmem:[#allocation2 + $0xc0] sm:$0xff]
    %v134 = vld [vmem:[#allocation2 + $0xc8] sm:$0xff]
    %v135 = vld [vmem:[#allocation2 + $0xd0] sm:$0xff]
    %v136 = vld [vmem:[#allocation2 + $0xd8] sm:$0xff]
    %v137 = vld [vmem:[#allocation2 + $0xe0] sm:$0xff]
    %v138 = vld [vmem:[#allocation2 + $0xe8] sm:$0xff]
    %v139 = vld [vmem:[#allocation2 + $0xf0] sm:$0xff]
    %v140 = vld [vmem:[#allocation2 + $0xf8] sm:$0xff]
    %v141 = vld [vmem:[#allocation2 + $0x100] sm:$0xff]
    %v142 = vld [vmem:[#allocation2 + $0x108] sm:$0xff]
    %v143 = vld [vmem:[#allocation2 + $0x110] sm:$0xff]
    %v144 = vld [vmem:[#allocation2 + $0x118] sm:$0xff]
    %v145 = vld [vmem:[#allocation2 + $0x120] sm:$0xff]
    %v146 = vld [vmem:[#allocation2 + $0x128] sm:$0xff]
    %v147 = vld [vmem:[#allocation2 + $0x130] sm:$0xff]
    %v148 = vld [vmem:[#allocation2 + $0x138] sm:$0xff]
    %v149 = vld [vmem:[#allocation2 + $0x140] sm:$0xff]
    %v150 = vld [vmem:[#allocation2 + $0x148] sm:$0xff]
    %v151 = vld [vmem:[#allocation2 + $0x150] sm:$0xff]
    %v152 = vld [vmem:[#allocation2 + $0x158] sm:$0xff]
    %v153 = vld [vmem:[#allocation2 + $0x160] sm:$0xff]
    %v154 = vld [vmem:[#allocation2 + $0x168] sm:$0xff]
    %v155 = vld [vmem:[#allocation2 + $0x170] sm:$0xff]
    %v156 = vld [vmem:[#allocation2 + $0x178] sm:$0xff]
    %v157 = vld [vmem:[#allocation2 + $0x180] sm:$0xff]
    %v158 = vld [vmem:[#allocation2 + $0x188] sm:$0xff]
    %v159 = vld [vmem:[#allocation2 + $0x190] sm:$0xff]
    %v160 = vld [vmem:[#allocation2 + $0x198] sm:$0xff]
    %v161 = vld [vmem:[#allocation2 + $0x1a0] sm:$0xff]
    %v162 = vld [vmem:[#allocation2 + $0x1a8] sm:$0xff]
    %v163 = vld [vmem:[#allocation2 + $0x1b0] sm:$0xff]
    %v164 = vld [vmem:[#allocation2 + $0x1b8] sm:$0xff]
    %v165 = vld [vmem:[#allocation2 + $0x1c0] sm:$0xff]
    %v166 = vld [vmem:[#allocation2 + $0x1c8] sm:$0xff]
    %v167 = vld [vmem:[#allocation2 + $0x1d0] sm:$0xff]
    %v168 = vld [vmem:[#allocation2 + $0x1d8] sm:$0xff]
    %v169 = vld [vmem:[#allocation2 + $0x1e0] sm:$0xff]
    %v170 = vld [vmem:[#allocation2 + $0x1e8] sm:$0xff]
    %v171 = vld [vmem:[#allocation2 + $0x1f0] sm:$0xff]
    %v172 = vld [vmem:[#allocation2 + $0x1f8] sm:$0xff]
    %v173 = vld [vmem:[#allocation2 + $0x200] sm:$0xff]
    %v174 = vld [vmem:[#allocation2 + $0x208] sm:$0xff]
    %v175 = vld [vmem:[#allocation2 + $0x210] sm:$0xff]
    %v176 = vld [vmem:[#allocation2 + $0x218] sm:$0xff]
    %v177 = vld [vmem:[#allocation2 + $0x220] sm:$0xff]
    %v178 = vld [vmem:[#allocation2 + $0x228] sm:$0xff]
    %v179 = vld [vmem:[#allocation2 + $0x230] sm:$0xff]
    %v180 = vld [vmem:[#allocation2 + $0x238] sm:$0xff]
    %v181 = vld [vmem:[#allocation2 + $0x240] sm:$0xff]
    %v182 = vld [vmem:[#allocation2 + $0x248] sm:$0xff]
    %v183 = vld [vmem:[#allocation2 + $0x250] sm:$0xff]
    %v184 = vld [vmem:[#allocation2 + $0x258] sm:$0xff]
    %v185 = vld [vmem:[#allocation2 + $0x260] sm:$0xff]
    %v186 = vld [vmem:[#allocation2 + $0x268] sm:$0xff]
    %v187 = vld [vmem:[#allocation2 + $0x270] sm:$0xff]
    %v188 = vld [vmem:[#allocation2 + $0x278] sm:$0xff]
    %v189 = vld [vmem:[#allocation2 + $0x280] sm:$0xff]
    %v190 = vld [vmem:[#allocation2 + $0x288] sm:$0xff]
    %v191 = vld [vmem:[#allocation2 + $0x290] sm:$0xff]
    %v192 = vld [vmem:[#allocation2 + $0x298] sm:$0xff]
    %v193 = vld [vmem:[#allocation2 + $0x2a0] sm:$0xff]
    %v194 = vld [vmem:[#allocation2 + $0x2a8] sm:$0xff]
    %v195 = vld [vmem:[#allocation2 + $0x2b0] sm:$0xff]
    %v196 = vld [vmem:[#allocation2 + $0x2b8] sm:$0xff]
    %v197 = vld [vmem:[#allocation2 + $0x2c0] sm:$0xff]
    %v198 = vld [vmem:[#allocation2 + $0x2c8] sm:$0xff]
    %v199 = vld [vmem:[#allocation2 + $0x2d0] sm:$0xff]
    %v200 = vld [vmem:[#allocation2 + $0x2d8] sm:$0xff]
    %v201 = vld [vmem:[#allocation2 + $0x2e0] sm:$0xff]
    %v202 = vld [vmem:[#allocation2 + $0x2e8] sm:$0xff]
    %v203 = vld [vmem:[#allocation2 + $0x2f0] sm:$0xff]
    %v204 = vld [vmem:[#allocation2 + $0x2f8] sm:$0xff]
    %v205 = vld [vmem:[#allocation2 + $0x300] sm:$0xff]
    %v206 = vld [vmem:[#allocation2 + $0x308] sm:$0xff]
    %v207 = vld [vmem:[#allocation2 + $0x310] sm:$0xff]
    %v208 = vld [vmem:[#allocation2 + $0x318] sm:$0xff]
    %v209 = vld [vmem:[#allocation2 + $0x320] sm:$0xff]
    %v210 = vld [vmem:[#allocation2 + $0x328] sm:$0xff]
    %v211 = vld [vmem:[#allocation2 + $0x330] sm:$0xff]
    %v212 = vld [vmem:[#allocation2 + $0x338] sm:$0xff]
    %v213 = vld [vmem:[#allocation2 + $0x340] sm:$0xff]
    %v214 = vld [vmem:[#allocation2 + $0x348] sm:$0xff]
    %v215 = vld [vmem:[#allocation2 + $0x350] sm:$0xff]
    %v216 = vld [vmem:[#allocation2 + $0x358] sm:$0xff]
    %v217 = vld [vmem:[#allocation2 + $0x360] sm:$0xff]
    %v218 = vld [vmem:[#allocation2 + $0x368] sm:$0xff]
    %v219 = vld [vmem:[#allocation2 + $0x370] sm:$0xff]
    %v220 = vld [vmem:[#allocation2 + $0x378] sm:$0xff]
    %v221 = vld [vmem:[#allocation2 + $0x380] sm:$0xff]
    %v222 = vld [vmem:[#allocation2 + $0x388] sm:$0xff]
    %v223 = vld [vmem:[#allocation2 + $0x390] sm:$0xff]
    %v224 = vld [vmem:[#allocation2 + $0x398] sm:$0xff]
    %v225 = vld [vmem:[#allocation2 + $0x3a0] sm:$0xff]
    %v226 = vld [vmem:[#allocation2 + $0x3a8] sm:$0xff]
    %v227 = vld [vmem:[#allocation2 + $0x3b0] sm:$0xff]
    %v228 = vld [vmem:[#allocation2 + $0x3b8] sm:$0xff]
    %v229 = vld [vmem:[#allocation2 + $0x3c0] sm:$0xff]
    %v230 = vld [vmem:[#allocation2 + $0x3c8] sm:$0xff]
    %v231 = vld [vmem:[#allocation2 + $0x3d0] sm:$0xff]
    %v232 = vld [vmem:[#allocation2 + $0x3d8] sm:$0xff]
    %v233 = vld [vmem:[#allocation2 + $0x3e0] sm:$0xff]
    %v234 = vld [vmem:[#allocation2 + $0x3e8] sm:$0xff]
    %v235 = vld [vmem:[#allocation2 + $0x3f0] sm:$0xff]
    %v236 = vld [vmem:[#allocation2 + $0x3f8] sm:$0xff]
    %v237 = vld [vmem:[#allocation4] sm:$0xff]
    %v238 = vld [vmem:[#allocation4 + $0x8] sm:$0xff]
    %v239 = vld [vmem:[#allocation4 + $0x10] sm:$0xff]
    %v240 = vld [vmem:[#allocation4 + $0x18] sm:$0xff]
    %v241 = vld [vmem:[#allocation4 + $0x20] sm:$0xff]
    %v242 = vld [vmem:[#allocation4 + $0x28] sm:$0xff]
    %v243 = vld [vmem:[#allocation4 + $0x30] sm:$0xff]
    %v244 = vld [vmem:[#allocation4 + $0x38] sm:$0xff]
    %v245 = vld [vmem:[#allocation4 + $0x40] sm:$0xff]
    %v246 = vld [vmem:[#allocation4 + $0x48] sm:$0xff]
    %v247 = vld [vmem:[#allocation4 + $0x50] sm:$0xff]
    %v248 = vld [vmem:[#allocation4 + $0x58] sm:$0xff]
    %v249 = vld [vmem:[#allocation4 + $0x60] sm:$0xff]
    %v250 = vld [vmem:[#allocation4 + $0x68] sm:$0xff]
    %v251 = vld [vmem:[#allocation4 + $0x70] sm:$0xff]
    %v252 = vld [vmem:[#allocation4 + $0x78] sm:$0xff]
    %v253 = vld [vmem:[#allocation4 + $0x80] sm:$0xff]
    %v254 = vld [vmem:[#allocation4 + $0x88] sm:$0xff]
    %v255 = vld [vmem:[#allocation4 + $0x90] sm:$0xff]
    %v256 = vld [vmem:[#allocation4 + $0x98] sm:$0xff]
    %v257 = vld [vmem:[#allocation4 + $0xa0] sm:$0xff]
    %v258 = vld [vmem:[#allocation4 + $0xa8] sm:$0xff]
    %v259 = vld [vmem:[#allocation4 + $0xb0] sm:$0xff]
    %v260 = vld [vmem:[#allocation4 + $0xb8] sm:$0xff]
    %v261 = vld [vmem:[#allocation4 + $0xc0] sm:$0xff]
    %v262 = vld [vmem:[#allocation4 + $0xc8] sm:$0xff]
    %v263 = vld [vmem:[#allocation4 + $0xd0] sm:$0xff]
    %v264 = vld [vmem:[#allocation4 + $0xd8] sm:$0xff]
    %v265 = vld [vmem:[#allocation4 + $0xe0] sm:$0xff]
    %v266 = vld [vmem:[#allocation4 + $0xe8] sm:$0xff]
    %v267 = vld [vmem:[#allocation4 + $0xf0] sm:$0xff]
    %v268 = vld [vmem:[#allocation4 + $0xf8] sm:$0xff]
    %v269 = vld [vmem:[#allocation4 + $0x100] sm:$0xff]
    %v270 = vld [vmem:[#allocation4 + $0x108] sm:$0xff]
    %v271 = vld [vmem:[#allocation4 + $0x110] sm:$0xff]
    %v272 = vld [vmem:[#allocation4 + $0x118] sm:$0xff]
    %v273 = vld [vmem:[#allocation4 + $0x120] sm:$0xff]
    %v274 = vld [vmem:[#allocation4 + $0x128] sm:$0xff]
    %v275 = vld [vmem:[#allocation4 + $0x130] sm:$0xff]
    %v276 = vld [vmem:[#allocation4 + $0x138] sm:$0xff]
    %v277 = vld [vmem:[#allocation4 + $0x140] sm:$0xff]
    %v278 = vld [vmem:[#allocation4 + $0x148] sm:$0xff]
    %v279 = vld [vmem:[#allocation4 + $0x150] sm:$0xff]
    %v280 = vld [vmem:[#allocation4 + $0x158] sm:$0xff]
    %v281 = vld [vmem:[#allocation4 + $0x160] sm:$0xff]
    %v282 = vld [vmem:[#allocation4 + $0x168] sm:$0xff]
    %v283 = vld [vmem:[#allocation4 + $0x170] sm:$0xff]
    %v284 = vld [vmem:[#allocation4 + $0x178] sm:$0xff]
    %v285 = vld [vmem:[#allocation4 + $0x180] sm:$0xff]
    %v286 = vld [vmem:[#allocation4 + $0x188] sm:$0xff]
    %v287 = vld [vmem:[#allocation4 + $0x190] sm:$0xff]
    %v288 = vld [vmem:[#allocation4 + $0x198] sm:$0xff]
    %v289 = vld [vmem:[#allocation4 + $0x1a0] sm:$0xff]
    %v290 = vld [vmem:[#allocation4 + $0x1a8] sm:$0xff]
    %v291 = vld [vmem:[#allocation4 + $0x1b0] sm:$0xff]
    %v292 = vld [vmem:[#allocation4 + $0x1b8] sm:$0xff]
    %v293 = vld [vmem:[#allocation4 + $0x1c0] sm:$0xff]
    %v294 = vld [vmem:[#allocation4 + $0x1c8] sm:$0xff]
    %v295 = vld [vmem:[#allocation4 + $0x1d0] sm:$0xff]
    %v296 = vld [vmem:[#allocation4 + $0x1d8] sm:$0xff]
    %v297 = vld [vmem:[#allocation4 + $0x1e0] sm:$0xff]
    %v298 = vld [vmem:[#allocation4 + $0x1e8] sm:$0xff]
    %v299 = vld [vmem:[#allocation4 + $0x1f0] sm:$0xff]
    %v300 = vld [vmem:[#allocation4 + $0x1f8] sm:$0xff]
    %v301 = vld [vmem:[#allocation4 + $0x200] sm:$0xff]
    %v302 = vld [vmem:[#allocation4 + $0x208] sm:$0xff]
    %v303 = vld [vmem:[#allocation4 + $0x210] sm:$0xff]
    %v304 = vld [vmem:[#allocation4 + $0x218] sm:$0xff]
    %v305 = vld [vmem:[#allocation4 + $0x220] sm:$0xff]
    %v306 = vld [vmem:[#allocation4 + $0x228] sm:$0xff]
    %v307 = vld [vmem:[#allocation4 + $0x230] sm:$0xff]
    %v308 = vld [vmem:[#allocation4 + $0x238] sm:$0xff]
    %v309 = vld [vmem:[#allocation4 + $0x240] sm:$0xff]
    %v310 = vld [vmem:[#allocation4 + $0x248] sm:$0xff]
    %v311 = vld [vmem:[#allocation4 + $0x250] sm:$0xff]
    %v312 = vld [vmem:[#allocation4 + $0x258] sm:$0xff]
    %v313 = vld [vmem:[#allocation4 + $0x260] sm:$0xff]
    %v314 = vld [vmem:[#allocation4 + $0x268] sm:$0xff]
    %v315 = vld [vmem:[#allocation4 + $0x270] sm:$0xff]
    %v316 = vld [vmem:[#allocation4 + $0x278] sm:$0xff]
    %v317 = vld [vmem:[#allocation4 + $0x280] sm:$0xff]
    %v318 = vld [vmem:[#allocation4 + $0x288] sm:$0xff]
    %v319 = vld [vmem:[#allocation4 + $0x290] sm:$0xff]
    %v320 = vld [vmem:[#allocation4 + $0x298] sm:$0xff]
    %v321 = vld [vmem:[#allocation4 + $0x2a0] sm:$0xff]
    %v322 = vld [vmem:[#allocation4 + $0x2a8] sm:$0xff]
    %v323 = vld [vmem:[#allocation4 + $0x2b0] sm:$0xff]
    %v324 = vld [vmem:[#allocation4 + $0x2b8] sm:$0xff]
    %v325 = vld [vmem:[#allocation4 + $0x2c0] sm:$0xff]
    %v326 = vld [vmem:[#allocation4 + $0x2c8] sm:$0xff]
    %v327 = vld [vmem:[#allocation4 + $0x2d0] sm:$0xff]
    %v328 = vld [vmem:[#allocation4 + $0x2d8] sm:$0xff]
    %v329 = vld [vmem:[#allocation4 + $0x2e0] sm:$0xff]
    %v330 = vld [vmem:[#allocation4 + $0x2e8] sm:$0xff]
    %v331 = vld [vmem:[#allocation4 + $0x2f0] sm:$0xff]
    %v332 = vld [vmem:[#allocation4 + $0x2f8] sm:$0xff]
    %v333 = vld [vmem:[#allocation4 + $0x300] sm:$0xff]
    %v334 = vld [vmem:[#allocation4 + $0x308] sm:$0xff]
    %v335 = vld [vmem:[#allocation4 + $0x310] sm:$0xff]
    %v336 = vld [vmem:[#allocation4 + $0x318] sm:$0xff]
    %v337 = vld [vmem:[#allocation4 + $0x320] sm:$0xff]
    %v338 = vld [vmem:[#allocation4 + $0x328] sm:$0xff]
    %v339 = vld [vmem:[#allocation4 + $0x330] sm:$0xff]
    %v340 = vld [vmem:[#allocation4 + $0x338] sm:$0xff]
    %v341 = vld [vmem:[#allocation4 + $0x340] sm:$0xff]
    %v342 = vld [vmem:[#allocation4 + $0x348] sm:$0xff]
    %v343 = vld [vmem:[#allocation4 + $0x350] sm:$0xff]
    %v344 = vld [vmem:[#allocation4 + $0x358] sm:$0xff]
    %v345 = vld [vmem:[#allocation4 + $0x360] sm:$0xff]
    %v346 = vld [vmem:[#allocation4 + $0x368] sm:$0xff]
    %v347 = vld [vmem:[#allocation4 + $0x370] sm:$0xff]
    %v348 = vld [vmem:[#allocation4 + $0x378] sm:$0xff]
    %v349 = vld [vmem:[#allocation4 + $0x380] sm:$0xff]
    %v350 = vld [vmem:[#allocation4 + $0x388] sm:$0xff]
    %v351 = vld [vmem:[#allocation4 + $0x390] sm:$0xff]
    %v352 = vld [vmem:[#allocation4 + $0x398] sm:$0xff]
    %v353 = vld [vmem:[#allocation4 + $0x3a0] sm:$0xff]
    %v354 = vld [vmem:[#allocation4 + $0x3a8] sm:$0xff]
    %v355 = vld [vmem:[#allocation4 + $0x3b0] sm:$0xff]
    %v356 = vld [vmem:[#allocation4 + $0x3b8] sm:$0xff]
    %v357 = vld [vmem:[#allocation4 + $0x3c0] sm:$0xff]
    %v358 = vld [vmem:[#allocation4 + $0x3c8] sm:$0xff]
    %v359 = vld [vmem:[#allocation4 + $0x3d0] sm:$0xff]
    %v360 = vld [vmem:[#allocation4 + $0x3d8] sm:$0xff]
    %v361 = vld [vmem:[#allocation4 + $0x3e0] sm:$0xff]
    %v362 = vld [vmem:[#allocation4 + $0x3e8] sm:$0xff]
    %v363 = vld [vmem:[#allocation4 + $0x3f0] sm:$0xff]
    %v364 = vld [vmem:[#allocation4 + $0x3f8] sm:$0xff]
    %v365 = vld [vmem:[#allocation4 + $0x400] sm:$0xff]
    %v366 = vld [vmem:[#allocation4 + $0x408] sm:$0xff]
    %v367 = vld [vmem:[#allocation4 + $0x410] sm:$0xff]
    %v368 = vld [vmem:[#allocation4 + $0x418] sm:$0xff]
    %v369 = vld [vmem:[#allocation4 + $0x420] sm:$0xff]
    %v370 = vld [vmem:[#allocation4 + $0x428] sm:$0xff]
    %v371 = vld [vmem:[#allocation4 + $0x430] sm:$0xff]
    %v372 = vld [vmem:[#allocation4 + $0x438] sm:$0xff]
    %v373 = vld [vmem:[#allocation4 + $0x440] sm:$0xff]
    %v374 = vld [vmem:[#allocation4 + $0x448] sm:$0xff]
    %v375 = vld [vmem:[#allocation4 + $0x450] sm:$0xff]
    %v376 = vld [vmem:[#allocation4 + $0x458] sm:$0xff]
    %v377 = vld [vmem:[#allocation4 + $0x460] sm:$0xff]
    %v378 = vld [vmem:[#allocation4 + $0x468] sm:$0xff]
    %v379 = vld [vmem:[#allocation4 + $0x470] sm:$0xff]
    %v380 = vld [vmem:[#allocation4 + $0x478] sm:$0xff]
    %v381 = vld [vmem:[#allocation4 + $0x480] sm:$0xff]
    %v382 = vld [vmem:[#allocation4 + $0x488] sm:$0xff]
    %v383 = vld [vmem:[#allocation4 + $0x490] sm:$0xff]
    %v384 = vld [vmem:[#allocation4 + $0x498] sm:$0xff]
    %v385 = vld [vmem:[#allocation4 + $0x4a0] sm:$0xff]
    %v386 = vld [vmem:[#allocation4 + $0x4a8] sm:$0xff]
    %v387 = vld [vmem:[#allocation4 + $0x4b0] sm:$0xff]
    %v388 = vld [vmem:[#allocation4 + $0x4b8] sm:$0xff]
    %v389 = vld [vmem:[#allocation4 + $0x4c0] sm:$0xff]
    %v390 = vld [vmem:[#allocation4 + $0x4c8] sm:$0xff]
    %v391 = vld [vmem:[#allocation4 + $0x4d0] sm:$0xff]
    %v392 = vld [vmem:[#allocation4 + $0x4d8] sm:$0xff]
    %v393 = vld [vmem:[#allocation4 + $0x4e0] sm:$0xff]
    %v394 = vld [vmem:[#allocation4 + $0x4e8] sm:$0xff]
    %v395 = vld [vmem:[#allocation4 + $0x4f0] sm:$0xff]
    %v396 = vld [vmem:[#allocation4 + $0x4f8] sm:$0xff]
    %v397 = vld [vmem:[#allocation4 + $0x500] sm:$0xff]
    %v398 = vld [vmem:[#allocation4 + $0x508] sm:$0xff]
    %v399 = vld [vmem:[#allocation4 + $0x510] sm:$0xff]
    %v400 = vld [vmem:[#allocation4 + $0x518] sm:$0xff]
    %v401 = vld [vmem:[#allocation4 + $0x520] sm:$0xff]
    %v402 = vld [vmem:[#allocation4 + $0x528] sm:$0xff]
    %v403 = vld [vmem:[#allocation4 + $0x530] sm:$0xff]
    %v404 = vld [vmem:[#allocation4 + $0x538] sm:$0xff]
    %v405 = vld [vmem:[#allocation4 + $0x540] sm:$0xff]
    %v406 = vld [vmem:[#allocation4 + $0x548] sm:$0xff]
    %v407 = vld [vmem:[#allocation4 + $0x550] sm:$0xff]
    %v408 = vld [vmem:[#allocation4 + $0x558] sm:$0xff]
    %v409 = vld [vmem:[#allocation4 + $0x560] sm:$0xff]
    %v410 = vld [vmem:[#allocation4 + $0x568] sm:$0xff]
    %v411 = vld [vmem:[#allocation4 + $0x570] sm:$0xff]
    %v412 = vld [vmem:[#allocation4 + $0x578] sm:$0xff]
    %v413 = vld [vmem:[#allocation4 + $0x580] sm:$0xff]
    %v414 = vld [vmem:[#allocation4 + $0x588] sm:$0xff]
    %v415 = vld [vmem:[#allocation4 + $0x590] sm:$0xff]
    %v416 = vld [vmem:[#allocation4 + $0x598] sm:$0xff]
    %v417 = vld [vmem:[#allocation4 + $0x5a0] sm:$0xff]
    %v418 = vld [vmem:[#allocation4 + $0x5a8] sm:$0xff]
    %v419 = vld [vmem:[#allocation4 + $0x5b0] sm:$0xff]
    %v420 = vld [vmem:[#allocation4 + $0x5b8] sm:$0xff]
    %v421 = vld [vmem:[#allocation4 + $0x5c0] sm:$0xff]
    %v422 = vld [vmem:[#allocation4 + $0x5c8] sm:$0xff]
    %v423 = vld [vmem:[#allocation4 + $0x5d0] sm:$0xff]
    %v424 = vld [vmem:[#allocation4 + $0x5d8] sm:$0xff]
    %v425 = vld [vmem:[#allocation4 + $0x5e0] sm:$0xff]
    %v426 = vld [vmem:[#allocation4 + $0x5e8] sm:$0xff]
    %v427 = vld [vmem:[#allocation4 + $0x5f0] sm:$0xff]
    %v428 = vld [vmem:[#allocation4 + $0x5f8] sm:$0xff]
    %v429 = vld [vmem:[#allocation4 + $0x600] sm:$0xff]
    %v430 = vld [vmem:[#allocation4 + $0x608] sm:$0xff]
    %v431 = vld [vmem:[#allocation4 + $0x610] sm:$0xff]
    %v432 = vld [vmem:[#allocation4 + $0x618] sm:$0xff]
    %v433 = vld [vmem:[#allocation4 + $0x620] sm:$0xff]
    %v434 = vld [vmem:[#allocation4 + $0x628] sm:$0xff]
    %v435 = vld [vmem:[#allocation4 + $0x630] sm:$0xff]
    %v436 = vld [vmem:[#allocation4 + $0x638] sm:$0xff]
    %v437 = vld [vmem:[#allocation4 + $0x640] sm:$0xff]
    %v438 = vld [vmem:[#allocation4 + $0x648] sm:$0xff]
    %v439 = vld [vmem:[#allocation4 + $0x650] sm:$0xff]
    %v440 = vld [vmem:[#allocation4 + $0x658] sm:$0xff]
    %v441 = vld [vmem:[#allocation4 + $0x660] sm:$0xff]
    %v442 = vld [vmem:[#allocation4 + $0x668] sm:$0xff]
    %v443 = vld [vmem:[#allocation4 + $0x670] sm:$0xff]
    %v444 = vld [vmem:[#allocation4 + $0x678] sm:$0xff]
    %v445 = vld [vmem:[#allocation4 + $0x680] sm:$0xff]
    %v446 = vld [vmem:[#allocation4 + $0x688] sm:$0xff]
    %v447 = vld [vmem:[#allocation4 + $0x690] sm:$0xff]
    %v448 = vld [vmem:[#allocation4 + $0x698] sm:$0xff]
    %v449 = vld [vmem:[#allocation4 + $0x6a0] sm:$0xff]
    %v450 = vld [vmem:[#allocation4 + $0x6a8] sm:$0xff]
    %v451 = vld [vmem:[#allocation4 + $0x6b0] sm:$0xff]
    %v452 = vld [vmem:[#allocation4 + $0x6b8] sm:$0xff]
    %v453 = vld [vmem:[#allocation4 + $0x6c0] sm:$0xff]
    %v454 = vld [vmem:[#allocation4 + $0x6c8] sm:$0xff]
    %v455 = vld [vmem:[#allocation4 + $0x6d0] sm:$0xff]
    %v456 = vld [vmem:[#allocation4 + $0x6d8] sm:$0xff]
    %v457 = vld [vmem:[#allocation4 + $0x6e0] sm:$0xff]
    %v458 = vld [vmem:[#allocation4 + $0x6e8] sm:$0xff]
    %v459 = vld [vmem:[#allocation4 + $0x6f0] sm:$0xff]
    %v460 = vld [vmem:[#allocation4 + $0x6f8] sm:$0xff]
    %v461 = vld [vmem:[#allocation4 + $0x700] sm:$0xff]
    %v462 = vld [vmem:[#allocation4 + $0x708] sm:$0xff]
    %v463 = vld [vmem:[#allocation4 + $0x710] sm:$0xff]
    %v464 = vld [vmem:[#allocation4 + $0x718] sm:$0xff]
    %v465 = vld [vmem:[#allocation4 + $0x720] sm:$0xff]
    %v466 = vld [vmem:[#allocation4 + $0x728] sm:$0xff]
    %v467 = vld [vmem:[#allocation4 + $0x730] sm:$0xff]
    %v468 = vld [vmem:[#allocation4 + $0x738] sm:$0xff]
    %v469 = vld [vmem:[#allocation4 + $0x740] sm:$0xff]
    %v470 = vld [vmem:[#allocation4 + $0x748] sm:$0xff]
    %v471 = vld [vmem:[#allocation4 + $0x750] sm:$0xff]
    %v472 = vld [vmem:[#allocation4 + $0x758] sm:$0xff]
    %v473 = vld [vmem:[#allocation4 + $0x760] sm:$0xff]
    %v474 = vld [vmem:[#allocation4 + $0x768] sm:$0xff]
    %v475 = vld [vmem:[#allocation4 + $0x770] sm:$0xff]
    %v476 = vld [vmem:[#allocation4 + $0x778] sm:$0xff]
    %v477 = vld [vmem:[#allocation4 + $0x780] sm:$0xff]
    %v478 = vld [vmem:[#allocation4 + $0x788] sm:$0xff]
    %v479 = vld [vmem:[#allocation4 + $0x790] sm:$0xff]
    %v480 = vld [vmem:[#allocation4 + $0x798] sm:$0xff]
    %v481 = vld [vmem:[#allocation4 + $0x7a0] sm:$0xff]
    %v482 = vld [vmem:[#allocation4 + $0x7a8] sm:$0xff]
    %v483 = vld [vmem:[#allocation4 + $0x7b0] sm:$0xff]
    %v484 = vld [vmem:[#allocation4 + $0x7b8] sm:$0xff]
    %v485 = vld [vmem:[#allocation4 + $0x7c0] sm:$0xff]
    %v486 = vld [vmem:[#allocation4 + $0x7c8] sm:$0xff]
    %v487 = vld [vmem:[#allocation4 + $0x7d0] sm:$0xff]
    %v488 = vld [vmem:[#allocation4 + $0x7d8] sm:$0xff]
    %v489 = vld [vmem:[#allocation4 + $0x7e0] sm:$0xff]
    %v490 = vld [vmem:[#allocation4 + $0x7e8] sm:$0xff]
    %v491 = vld [vmem:[#allocation4 + $0x7f0] sm:$0xff]
    %v492 = vld [vmem:[#allocation4 + $0x7f8] sm:$0xff]
    %v493 = vld [vmem:[#allocation4 + $0x800] sm:$0xff]
    %v494 = vld [vmem:[#allocation4 + $0x808] sm:$0xff]
    %v495 = vld [vmem:[#allocation4 + $0x810] sm:$0xff]
    %v496 = vld [vmem:[#allocation4 + $0x818] sm:$0xff]
    %v497 = vld [vmem:[#allocation4 + $0x820] sm:$0xff]
    %v498 = vld [vmem:[#allocation4 + $0x828] sm:$0xff]
    %v499 = vld [vmem:[#allocation4 + $0x830] sm:$0xff]
    %v500 = vld [vmem:[#allocation4 + $0x838] sm:$0xff]
    %v501 = vld [vmem:[#allocation4 + $0x840] sm:$0xff]
    %v502 = vld [vmem:[#allocation4 + $0x848] sm:$0xff]
    %v503 = vld [vmem:[#allocation4 + $0x850] sm:$0xff]
    %v504 = vld [vmem:[#allocation4 + $0x858] sm:$0xff]
    %v505 = vld [vmem:[#allocation4 + $0x860] sm:$0xff]
    %v506 = vld [vmem:[#allocation4 + $0x868] sm:$0xff]
    %v507 = vld [vmem:[#allocation4 + $0x870] sm:$0xff]
    %v508 = vld [vmem:[#allocation4 + $0x878] sm:$0xff]
    %v509 = vld [vmem:[#allocation4 + $0x880] sm:$0xff]
    %v510 = vld [vmem:[#allocation4 + $0x888] sm:$0xff]
    %v511 = vld [vmem:[#allocation4 + $0x890] sm:$0xff]
    %v512 = vld [vmem:[#allocation4 + $0x898] sm:$0xff]
    %v513 = vld [vmem:[#allocation4 + $0x8a0] sm:$0xff]
    %v514 = vld [vmem:[#allocation4 + $0x8a8] sm:$0xff]
    %v515 = vld [vmem:[#allocation4 + $0x8b0] sm:$0xff]
    %v516 = vld [vmem:[#allocation4 + $0x8b8] sm:$0xff]
    %v517 = vld [vmem:[#allocation4 + $0x8c0] sm:$0xff]
    %v518 = vld [vmem:[#allocation4 + $0x8c8] sm:$0xff]
    %v519 = vld [vmem:[#allocation4 + $0x8d0] sm:$0xff]
    %v520 = vld [vmem:[#allocation4 + $0x8d8] sm:$0xff]
    %v521 = vld [vmem:[#allocation4 + $0x8e0] sm:$0xff]
    %v522 = vld [vmem:[#allocation4 + $0x8e8] sm:$0xff]
    %v523 = vld [vmem:[#allocation4 + $0x8f0] sm:$0xff]
    %v524 = vld [vmem:[#allocation4 + $0x8f8] sm:$0xff]
    %v525 = vld [vmem:[#allocation4 + $0x900] sm:$0xff]
    %v526 = vld [vmem:[#allocation4 + $0x908] sm:$0xff]
    %v527 = vld [vmem:[#allocation4 + $0x910] sm:$0xff]
    %v528 = vld [vmem:[#allocation4 + $0x918] sm:$0xff]
    %v529 = vld [vmem:[#allocation4 + $0x920] sm:$0xff]
    %v530 = vld [vmem:[#allocation4 + $0x928] sm:$0xff]
    %v531 = vld [vmem:[#allocation4 + $0x930] sm:$0xff]
    %v532 = vld [vmem:[#allocation4 + $0x938] sm:$0xff]
    %v533 = vld [vmem:[#allocation4 + $0x940] sm:$0xff]
    %v534 = vld [vmem:[#allocation4 + $0x948] sm:$0xff]
    %v535 = vld [vmem:[#allocation4 + $0x950] sm:$0xff]
    %v536 = vld [vmem:[#allocation4 + $0x958] sm:$0xff]
    %v537 = vld [vmem:[#allocation4 + $0x960] sm:$0xff]
    %v538 = vld [vmem:[#allocation4 + $0x968] sm:$0xff]
    %v539 = vld [vmem:[#allocation4 + $0x970] sm:$0xff]
    %v540 = vld [vmem:[#allocation4 + $0x978] sm:$0xff]
    %v541 = vld [vmem:[#allocation4 + $0x980] sm:$0xff]
    %v542 = vld [vmem:[#allocation4 + $0x988] sm:$0xff]
    %v543 = vld [vmem:[#allocation4 + $0x990] sm:$0xff]
    %v544 = vld [vmem:[#allocation4 + $0x998] sm:$0xff]
    %v545 = vld [vmem:[#allocation4 + $0x9a0] sm:$0xff]
    %v546 = vld [vmem:[#allocation4 + $0x9a8] sm:$0xff]
    %v547 = vld [vmem:[#allocation4 + $0x9b0] sm:$0xff]
    %v548 = vld [vmem:[#allocation4 + $0x9b8] sm:$0xff]
    %v549 = vld [vmem:[#allocation4 + $0x9c0] sm:$0xff]
    %v550 = vld [vmem:[#allocation4 + $0x9c8] sm:$0xff]
    %v551 = vld [vmem:[#allocation4 + $0x9d0] sm:$0xff]
    %v552 = vld [vmem:[#allocation4 + $0x9d8] sm:$0xff]
    %v553 = vld [vmem:[#allocation4 + $0x9e0] sm:$0xff]
    %v554 = vld [vmem:[#allocation4 + $0x9e8] sm:$0xff]
    %v555 = vld [vmem:[#allocation4 + $0x9f0] sm:$0xff]
    %v556 = vld [vmem:[#allocation4 + $0x9f8] sm:$0xff]
    %v557 = vld [vmem:[#allocation4 + $0xa00] sm:$0xff]
    %v558 = vld [vmem:[#allocation4 + $0xa08] sm:$0xff]
    %v559 = vld [vmem:[#allocation4 + $0xa10] sm:$0xff]
    %v560 = vld [vmem:[#allocation4 + $0xa18] sm:$0xff]
    %v561 = vld [vmem:[#allocation4 + $0xa20] sm:$0xff]
    %v562 = vld [vmem:[#allocation4 + $0xa28] sm:$0xff]
    %v563 = vld [vmem:[#allocation4 + $0xa30] sm:$0xff]
    %v564 = vld [vmem:[#allocation4 + $0xa38] sm:$0xff]
    %v565 = vld [vmem:[#allocation4 + $0xa40] sm:$0xff]
    %v566 = vld [vmem:[#allocation4 + $0xa48] sm:$0xff]
    %v567 = vld [vmem:[#allocation4 + $0xa50] sm:$0xff]
    %v568 = vld [vmem:[#allocation4 + $0xa58] sm:$0xff]
    %v569 = vld [vmem:[#allocation4 + $0xa60] sm:$0xff]
    %v570 = vld [vmem:[#allocation4 + $0xa68] sm:$0xff]
    %v571 = vld [vmem:[#allocation4 + $0xa70] sm:$0xff]
    %v572 = vld [vmem:[#allocation4 + $0xa78] sm:$0xff]
    %v573 = vld [vmem:[#allocation4 + $0xa80] sm:$0xff]
    %v574 = vld [vmem:[#allocation4 + $0xa88] sm:$0xff]
    %v575 = vld [vmem:[#allocation4 + $0xa90] sm:$0xff]
    %v576 = vld [vmem:[#allocation4 + $0xa98] sm:$0xff]
    %v577 = vld [vmem:[#allocation4 + $0xaa0] sm:$0xff]
    %v578 = vld [vmem:[#allocation4 + $0xaa8] sm:$0xff]
    %v579 = vld [vmem:[#allocation4 + $0xab0] sm:$0xff]
    %v580 = vld [vmem:[#allocation4 + $0xab8] sm:$0xff]
    %v581 = vld [vmem:[#allocation4 + $0xac0] sm:$0xff]
    %v582 = vld [vmem:[#allocation4 + $0xac8] sm:$0xff]
    %v583 = vld [vmem:[#allocation4 + $0xad0] sm:$0xff]
    %v584 = vld [vmem:[#allocation4 + $0xad8] sm:$0xff]
    %v585 = vld [vmem:[#allocation4 + $0xae0] sm:$0xff]
    %v586 = vld [vmem:[#allocation4 + $0xae8] sm:$0xff]
    %v587 = vld [vmem:[#allocation4 + $0xaf0] sm:$0xff]
    %v588 = vld [vmem:[#allocation4 + $0xaf8] sm:$0xff]
    %v589 = vld [vmem:[#allocation4 + $0xb00] sm:$0xff]
    %v590 = vld [vmem:[#allocation4 + $0xb08] sm:$0xff]
    %v591 = vld [vmem:[#allocation4 + $0xb10] sm:$0xff]
    %v592 = vld [vmem:[#allocation4 + $0xb18] sm:$0xff]
    %v593 = vld [vmem:[#allocation4 + $0xb20] sm:$0xff]
    %v594 = vld [vmem:[#allocation4 + $0xb28] sm:$0xff]
    %v595 = vld [vmem:[#allocation4 + $0xb30] sm:$0xff]
    %v596 = vld [vmem:[#allocation4 + $0xb38] sm:$0xff]
    %v597 = vld [vmem:[#allocation4 + $0xb40] sm:$0xff]
    %v598 = vld [vmem:[#allocation4 + $0xb48] sm:$0xff]
    %v599 = vld [vmem:[#allocation4 + $0xb50] sm:$0xff]
    %v600 = vld [vmem:[#allocation4 + $0xb58] sm:$0xff]
    %v601 = vld [vmem:[#allocation4 + $0xb60] sm:$0xff]
    %v602 = vld [vmem:[#allocation4 + $0xb68] sm:$0xff]
    %v603 = vld [vmem:[#allocation4 + $0xb70] sm:$0xff]
    %v604 = vld [vmem:[#allocation4 + $0xb78] sm:$0xff]
    %v605 = vld [vmem:[#allocation4 + $0xb80] sm:$0xff]
    %v606 = vld [vmem:[#allocation4 + $0xb88] sm:$0xff]
    %v607 = vld [vmem:[#allocation4 + $0xb90] sm:$0xff]
    %v608 = vld [vmem:[#allocation4 + $0xb98] sm:$0xff]
    %v609 = vld [vmem:[#allocation4 + $0xba0] sm:$0xff]
    %v610 = vld [vmem:[#allocation4 + $0xba8] sm:$0xff]
    %v611 = vld [vmem:[#allocation4 + $0xbb0] sm:$0xff]
    %v612 = vld [vmem:[#allocation4 + $0xbb8] sm:$0xff]
    %v613 = vld [vmem:[#allocation4 + $0xbc0] sm:$0xff]
    %v614 = vld [vmem:[#allocation4 + $0xbc8] sm:$0xff]
    %v615 = vld [vmem:[#allocation4 + $0xbd0] sm:$0xff]
    %v616 = vld [vmem:[#allocation4 + $0xbd8] sm:$0xff]
    %v617 = vld [vmem:[#allocation4 + $0xbe0] sm:$0xff]
    %v618 = vld [vmem:[#allocation4 + $0xbe8] sm:$0xff]
    %v619 = vld [vmem:[#allocation4 + $0xbf0] sm:$0xff]
    %v620 = vld [vmem:[#allocation4 + $0xbf8] sm:$0xff]
    %v621 = vld [vmem:[#allocation4 + $0xc00] sm:$0xff]
    %v622 = vld [vmem:[#allocation4 + $0xc08] sm:$0xff]
    %v623 = vld [vmem:[#allocation4 + $0xc10] sm:$0xff]
    %v624 = vld [vmem:[#allocation4 + $0xc18] sm:$0xff]
    %v625 = vld [vmem:[#allocation4 + $0xc20] sm:$0xff]
    %v626 = vld [vmem:[#allocation4 + $0xc28] sm:$0xff]
    %v627 = vld [vmem:[#allocation4 + $0xc30] sm:$0xff]
    %v628 = vld [vmem:[#allocation4 + $0xc38] sm:$0xff]
    %v629 = vld [vmem:[#allocation4 + $0xc40] sm:$0xff]
    %v630 = vld [vmem:[#allocation4 + $0xc48] sm:$0xff]
    %v631 = vld [vmem:[#allocation4 + $0xc50] sm:$0xff]
    %v632 = vld [vmem:[#allocation4 + $0xc58] sm:$0xff]
    %v633 = vld [vmem:[#allocation4 + $0xc60] sm:$0xff]
    %v634 = vld [vmem:[#allocation4 + $0xc68] sm:$0xff]
    %v635 = vld [vmem:[#allocation4 + $0xc70] sm:$0xff]
    %v636 = vld [vmem:[#allocation4 + $0xc78] sm:$0xff]
    %v637 = vld [vmem:[#allocation4 + $0xc80] sm:$0xff]
    %v638 = vld [vmem:[#allocation4 + $0xc88] sm:$0xff]
    %v639 = vld [vmem:[#allocation4 + $0xc90] sm:$0xff]
    %v640 = vld [vmem:[#allocation4 + $0xc98] sm:$0xff]
    %v641 = vld [vmem:[#allocation4 + $0xca0] sm:$0xff]
    %v642 = vld [vmem:[#allocation4 + $0xca8] sm:$0xff]
    %v643 = vld [vmem:[#allocation4 + $0xcb0] sm:$0xff]
    %v644 = vld [vmem:[#allocation4 + $0xcb8] sm:$0xff]
    %v645 = vld [vmem:[#allocation4 + $0xcc0] sm:$0xff]
    %v646 = vld [vmem:[#allocation4 + $0xcc8] sm:$0xff]
    %v647 = vld [vmem:[#allocation4 + $0xcd0] sm:$0xff]
    %v648 = vld [vmem:[#allocation4 + $0xcd8] sm:$0xff]
    %v649 = vld [vmem:[#allocation4 + $0xce0] sm:$0xff]
    %v650 = vld [vmem:[#allocation4 + $0xce8] sm:$0xff]
    %v651 = vld [vmem:[#allocation4 + $0xcf0] sm:$0xff]
    %v652 = vld [vmem:[#allocation4 + $0xcf8] sm:$0xff]
    %v653 = vld [vmem:[#allocation4 + $0xd00] sm:$0xff]
    %v654 = vld [vmem:[#allocation4 + $0xd08] sm:$0xff]
    %v655 = vld [vmem:[#allocation4 + $0xd10] sm:$0xff]
    %v656 = vld [vmem:[#allocation4 + $0xd18] sm:$0xff]
    %v657 = vld [vmem:[#allocation4 + $0xd20] sm:$0xff]
    %v658 = vld [vmem:[#allocation4 + $0xd28] sm:$0xff]
    %v659 = vld [vmem:[#allocation4 + $0xd30] sm:$0xff]
    %v660 = vld [vmem:[#allocation4 + $0xd38] sm:$0xff]
    %v661 = vld [vmem:[#allocation4 + $0xd40] sm:$0xff]
    %v662 = vld [vmem:[#allocation4 + $0xd48] sm:$0xff]
    %v663 = vld [vmem:[#allocation4 + $0xd50] sm:$0xff]
    %v664 = vld [vmem:[#allocation4 + $0xd58] sm:$0xff]
    %v665 = vld [vmem:[#allocation4 + $0xd60] sm:$0xff]
    %v666 = vld [vmem:[#allocation4 + $0xd68] sm:$0xff]
    %v667 = vld [vmem:[#allocation4 + $0xd70] sm:$0xff]
    %v668 = vld [vmem:[#allocation4 + $0xd78] sm:$0xff]
    %v669 = vld [vmem:[#allocation4 + $0xd80] sm:$0xff]
    %v670 = vld [vmem:[#allocation4 + $0xd88] sm:$0xff]
    %v671 = vld [vmem:[#allocation4 + $0xd90] sm:$0xff]
    %v672 = vld [vmem:[#allocation4 + $0xd98] sm:$0xff]
    %v673 = vld [vmem:[#allocation4 + $0xda0] sm:$0xff]
    %v674 = vld [vmem:[#allocation4 + $0xda8] sm:$0xff]
    %v675 = vld [vmem:[#allocation4 + $0xdb0] sm:$0xff]
    %v676 = vld [vmem:[#allocation4 + $0xdb8] sm:$0xff]
    %v677 = vld [vmem:[#allocation4 + $0xdc0] sm:$0xff]
    %v678 = vld [vmem:[#allocation4 + $0xdc8] sm:$0xff]
    %v679 = vld [vmem:[#allocation4 + $0xdd0] sm:$0xff]
    %v680 = vld [vmem:[#allocation4 + $0xdd8] sm:$0xff]
    %v681 = vld [vmem:[#allocation4 + $0xde0] sm:$0xff]
    %v682 = vld [vmem:[#allocation4 + $0xde8] sm:$0xff]
    %v683 = vld [vmem:[#allocation4 + $0xdf0] sm:$0xff]
    %v684 = vld [vmem:[#allocation4 + $0xdf8] sm:$0xff]
    %v685 = vld [vmem:[#allocation4 + $0xe00] sm:$0xff]
    %v686 = vld [vmem:[#allocation4 + $0xe08] sm:$0xff]
    %v687 = vld [vmem:[#allocation4 + $0xe10] sm:$0xff]
    %v688 = vld [vmem:[#allocation4 + $0xe18] sm:$0xff]
    %v689 = vld [vmem:[#allocation4 + $0xe20] sm:$0xff]
    %v690 = vld [vmem:[#allocation4 + $0xe28] sm:$0xff]
    %v691 = vld [vmem:[#allocation4 + $0xe30] sm:$0xff]
    %v692 = vld [vmem:[#allocation4 + $0xe38] sm:$0xff]
    %v693 = vld [vmem:[#allocation4 + $0xe40] sm:$0xff]
    %v694 = vld [vmem:[#allocation4 + $0xe48] sm:$0xff]
    %v695 = vld [vmem:[#allocation4 + $0xe50] sm:$0xff]
    %v696 = vld [vmem:[#allocation4 + $0xe58] sm:$0xff]
    %v697 = vld [vmem:[#allocation4 + $0xe60] sm:$0xff]
    %v698 = vld [vmem:[#allocation4 + $0xe68] sm:$0xff]
    %v699 = vld [vmem:[#allocation4 + $0xe70] sm:$0xff]
    %v700 = vld [vmem:[#allocation4 + $0xe78] sm:$0xff]
    %v701 = vld [vmem:[#allocation4 + $0xe80] sm:$0xff]
    %v702 = vld [vmem:[#allocation4 + $0xe88] sm:$0xff]
    %v703 = vld [vmem:[#allocation4 + $0xe90] sm:$0xff]
    %v704 = vld [vmem:[#allocation4 + $0xe98] sm:$0xff]
    %v705 = vld [vmem:[#allocation4 + $0xea0] sm:$0xff]
    %v706 = vld [vmem:[#allocation4 + $0xea8] sm:$0xff]
    %v707 = vld [vmem:[#allocation4 + $0xeb0] sm:$0xff]
    %v708 = vld [vmem:[#allocation4 + $0xeb8] sm:$0xff]
    %v709 = vld [vmem:[#allocation4 + $0xec0] sm:$0xff]
    %v710 = vld [vmem:[#allocation4 + $0xec8] sm:$0xff]
    %v711 = vld [vmem:[#allocation4 + $0xed0] sm:$0xff]
    %v712 = vld [vmem:[#allocation4 + $0xed8] sm:$0xff]
    %v713 = vld [vmem:[#allocation4 + $0xee0] sm:$0xff]
    %v714 = vld [vmem:[#allocation4 + $0xee8] sm:$0xff]
    %v715 = vld [vmem:[#allocation4 + $0xef0] sm:$0xff]
    %v716 = vld [vmem:[#allocation4 + $0xef8] sm:$0xff]
    %v717 = vld [vmem:[#allocation4 + $0xf00] sm:$0xff]
    %v718 = vld [vmem:[#allocation4 + $0xf08] sm:$0xff]
    %v719 = vld [vmem:[#allocation4 + $0xf10] sm:$0xff]
    %v720 = vld [vmem:[#allocation4 + $0xf18] sm:$0xff]
    %v721 = vld [vmem:[#allocation4 + $0xf20] sm:$0xff]
    %v722 = vld [vmem:[#allocation4 + $0xf28] sm:$0xff]
    %v723 = vld [vmem:[#allocation4 + $0xf30] sm:$0xff]
    %v724 = vld [vmem:[#allocation4 + $0xf38] sm:$0xff]
    %v725 = vld [vmem:[#allocation4 + $0xf40] sm:$0xff]
    %v726 = vld [vmem:[#allocation4 + $0xf48] sm:$0xff]
    %v727 = vld [vmem:[#allocation4 + $0xf50] sm:$0xff]
    %v728 = vld [vmem:[#allocation4 + $0xf58] sm:$0xff]
    %v729 = vld [vmem:[#allocation4 + $0xf60] sm:$0xff]
    %v730 = vld [vmem:[#allocation4 + $0xf68] sm:$0xff]
    %v731 = vld [vmem:[#allocation4 + $0xf70] sm:$0xff]
    %v732 = vld [vmem:[#allocation4 + $0xf78] sm:$0xff]
    %v733 = vld [vmem:[#allocation4 + $0xf80] sm:$0xff]
    %v734 = vld [vmem:[#allocation4 + $0xf88] sm:$0xff]
    %v735 = vld [vmem:[#allocation4 + $0xf90] sm:$0xff]
    %v736 = vld [vmem:[#allocation4 + $0xf98] sm:$0xff]
    %v737 = vld [vmem:[#allocation4 + $0xfa0] sm:$0xff]
    %v738 = vld [vmem:[#allocation4 + $0xfa8] sm:$0xff]
    %v739 = vld [vmem:[#allocation4 + $0xfb0] sm:$0xff]
    %v740 = vld [vmem:[#allocation4 + $0xfb8] sm:$0xff]
    %v741 = vld [vmem:[#allocation4 + $0xfc0] sm:$0xff]
    %v742 = vld [vmem:[#allocation4 + $0xfc8] sm:$0xff]
    %v743 = vld [vmem:[#allocation4 + $0xfd0] sm:$0xff]
    %v744 = vld [vmem:[#allocation4 + $0xfd8] sm:$0xff]
    %v745 = vld [vmem:[#allocation4 + $0xfe0] sm:$0xff]
    %v746 = vld [vmem:[#allocation4 + $0xfe8] sm:$0xff]
    %v747 = vld [vmem:[#allocation4 + $0xff0] sm:$0xff]
    %v748 = vld [vmem:[#allocation4 + $0xff8] sm:$0xff]
    %v749 = vld [vmem:[#allocation6] sm:$0xf]
    %v751 = vlaneseq
    %v752 = vshrl.u32 %v751, 7
    %v753 = vsub.s32 0, %v752
    %v754 = vrot.slane %v749, %v753
    %v755 = vlaneseq
    %v756 = vshrl.u32 %v755, 7
    %v757 = vsub.s32 1, %v756
    %v758 = vrot.slane %v749, %v757
    %v759 = vlaneseq
    %v760 = vshrl.u32 %v759, 7
    %v761 = vsub.s32 2, %v760
    %v762 = vrot.slane %v749, %v761
    %v763 = vlaneseq
    %v764 = vshrl.u32 %v763, 7
    %v765 = vsub.s32 3, %v764
    %v766 = vrot.slane %v749, %v765
    %v899 = vunpack.c.l.b16 %v109
    %v900 = vunpack.c.h.b16 %v109
    %v901 = vunpack.c.l.b16 %v110
    %v902 = vunpack.c.h.b16 %v110
    %v903 = vunpack.c.l.b16 %v111
    %v904 = vunpack.c.h.b16 %v111
    %v905 = vunpack.c.l.b16 %v112
    %v906 = vunpack.c.h.b16 %v112
    %v907 = vunpack.c.l.b16 %v113
    %v908 = vunpack.c.h.b16 %v113
    %v909 = vunpack.c.l.b16 %v114
    %v910 = vunpack.c.h.b16 %v114
    %v911 = vunpack.c.l.b16 %v115
    %v912 = vunpack.c.h.b16 %v115
    %v913 = vunpack.c.l.b16 %v116
    %v914 = vunpack.c.h.b16 %v116
    %v915 = vunpack.c.l.b16 %v117
    %v916 = vunpack.c.h.b16 %v117
    %v917 = vunpack.c.l.b16 %v118
    %v918 = vunpack.c.h.b16 %v118
    %v919 = vunpack.c.l.b16 %v119
    %v920 = vunpack.c.h.b16 %v119
    %v921 = vunpack.c.l.b16 %v120
    %v922 = vunpack.c.h.b16 %v120
    %v923 = vunpack.c.l.b16 %v121
    %v924 = vunpack.c.h.b16 %v121
    %v925 = vunpack.c.l.b16 %v122
    %v926 = vunpack.c.h.b16 %v122
    %v927 = vunpack.c.l.b16 %v123
    %v928 = vunpack.c.h.b16 %v123
    %v929 = vunpack.c.l.b16 %v124
    %v930 = vunpack.c.h.b16 %v124
    %v931 = vunpack.c.l.b16 %v125
    %v932 = vunpack.c.h.b16 %v125
    %v933 = vunpack.c.l.b16 %v126
    %v934 = vunpack.c.h.b16 %v126
    %v935 = vunpack.c.l.b16 %v127
    %v936 = vunpack.c.h.b16 %v127
    %v937 = vunpack.c.l.b16 %v128
    %v938 = vunpack.c.h.b16 %v128
    %v939 = vunpack.c.l.b16 %v129
    %v940 = vunpack.c.h.b16 %v129
    %v941 = vunpack.c.l.b16 %v130
    %v942 = vunpack.c.h.b16 %v130
    %v943 = vunpack.c.l.b16 %v131
    %v944 = vunpack.c.h.b16 %v131
    %v945 = vunpack.c.l.b16 %v132
    %v946 = vunpack.c.h.b16 %v132
    %v947 = vunpack.c.l.b16 %v133
    %v948 = vunpack.c.h.b16 %v133
    %v949 = vunpack.c.l.b16 %v134
    %v950 = vunpack.c.h.b16 %v134
    %v951 = vunpack.c.l.b16 %v135
    %v952 = vunpack.c.h.b16 %v135
    %v953 = vunpack.c.l.b16 %v136
    %v954 = vunpack.c.h.b16 %v136
    %v955 = vunpack.c.l.b16 %v137
    %v956 = vunpack.c.h.b16 %v137
    %v957 = vunpack.c.l.b16 %v138
    %v958 = vunpack.c.h.b16 %v138
    %v959 = vunpack.c.l.b16 %v139
    %v960 = vunpack.c.h.b16 %v139
    %v961 = vunpack.c.l.b16 %v140
    %v962 = vunpack.c.h.b16 %v140
    %v963 = vunpack.c.l.b16 %v141
    %v964 = vunpack.c.h.b16 %v141
    %v965 = vunpack.c.l.b16 %v142
    %v966 = vunpack.c.h.b16 %v142
    %v967 = vunpack.c.l.b16 %v143
    %v968 = vunpack.c.h.b16 %v143
    %v969 = vunpack.c.l.b16 %v144
    %v970 = vunpack.c.h.b16 %v144
    %v971 = vunpack.c.l.b16 %v145
    %v972 = vunpack.c.h.b16 %v145
    %v973 = vunpack.c.l.b16 %v146
    %v974 = vunpack.c.h.b16 %v146
    %v975 = vunpack.c.l.b16 %v147
    %v976 = vunpack.c.h.b16 %v147
    %v977 = vunpack.c.l.b16 %v148
    %v978 = vunpack.c.h.b16 %v148
    %v979 = vunpack.c.l.b16 %v149
    %v980 = vunpack.c.h.b16 %v149
    %v981 = vunpack.c.l.b16 %v150
    %v982 = vunpack.c.h.b16 %v150
    %v983 = vunpack.c.l.b16 %v151
    %v984 = vunpack.c.h.b16 %v151
    %v985 = vunpack.c.l.b16 %v152
    %v986 = vunpack.c.h.b16 %v152
    %v987 = vunpack.c.l.b16 %v153
    %v988 = vunpack.c.h.b16 %v153
    %v989 = vunpack.c.l.b16 %v154
    %v990 = vunpack.c.h.b16 %v154
    %v991 = vunpack.c.l.b16 %v155
    %v992 = vunpack.c.h.b16 %v155
    %v993 = vunpack.c.l.b16 %v156
    %v994 = vunpack.c.h.b16 %v156
    %v995 = vunpack.c.l.b16 %v157
    %v996 = vunpack.c.h.b16 %v157
    %v997 = vunpack.c.l.b16 %v158
    %v998 = vunpack.c.h.b16 %v158
    %v999 = vunpack.c.l.b16 %v159
    %v1000 = vunpack.c.h.b16 %v159
    %v1001 = vunpack.c.l.b16 %v160
    %v1002 = vunpack.c.h.b16 %v160
    %v1003 = vunpack.c.l.b16 %v161
    %v1004 = vunpack.c.h.b16 %v161
    %v1005 = vunpack.c.l.b16 %v162
    %v1006 = vunpack.c.h.b16 %v162
    %v1007 = vunpack.c.l.b16 %v163
    %v1008 = vunpack.c.h.b16 %v163
    %v1009 = vunpack.c.l.b16 %v164
    %v1010 = vunpack.c.h.b16 %v164
    %v1011 = vunpack.c.l.b16 %v165
    %v1012 = vunpack.c.h.b16 %v165
    %v1013 = vunpack.c.l.b16 %v166
    %v1014 = vunpack.c.h.b16 %v166
    %v1015 = vunpack.c.l.b16 %v167
    %v1016 = vunpack.c.h.b16 %v167
    %v1017 = vunpack.c.l.b16 %v168
    %v1018 = vunpack.c.h.b16 %v168
    %v1019 = vunpack.c.l.b16 %v169
    %v1020 = vunpack.c.h.b16 %v169
    %v1021 = vunpack.c.l.b16 %v170
    %v1022 = vunpack.c.h.b16 %v170
    %v1023 = vunpack.c.l.b16 %v171
    %v1024 = vunpack.c.h.b16 %v171
    %v1025 = vunpack.c.l.b16 %v172
    %v1026 = vunpack.c.h.b16 %v172
    %v1027 = vunpack.c.l.b16 %v173
    %v1028 = vunpack.c.h.b16 %v173
    %v1029 = vunpack.c.l.b16 %v174
    %v1030 = vunpack.c.h.b16 %v174
    %v1031 = vunpack.c.l.b16 %v175
    %v1032 = vunpack.c.h.b16 %v175
    %v1033 = vunpack.c.l.b16 %v176
    %v1034 = vunpack.c.h.b16 %v176
    %v1035 = vunpack.c.l.b16 %v177
    %v1036 = vunpack.c.h.b16 %v177
    %v1037 = vunpack.c.l.b16 %v178
    %v1038 = vunpack.c.h.b16 %v178
    %v1039 = vunpack.c.l.b16 %v179
    %v1040 = vunpack.c.h.b16 %v179
    %v1041 = vunpack.c.l.b16 %v180
    %v1042 = vunpack.c.h.b16 %v180
    %v1043 = vunpack.c.l.b16 %v181
    %v1044 = vunpack.c.h.b16 %v181
    %v1045 = vunpack.c.l.b16 %v182
    %v1046 = vunpack.c.h.b16 %v182
    %v1047 = vunpack.c.l.b16 %v183
    %v1048 = vunpack.c.h.b16 %v183
    %v1049 = vunpack.c.l.b16 %v184
    %v1050 = vunpack.c.h.b16 %v184
    %v1051 = vunpack.c.l.b16 %v185
    %v1052 = vunpack.c.h.b16 %v185
    %v1053 = vunpack.c.l.b16 %v186
    %v1054 = vunpack.c.h.b16 %v186
    %v1055 = vunpack.c.l.b16 %v187
    %v1056 = vunpack.c.h.b16 %v187
    %v1057 = vunpack.c.l.b16 %v188
    %v1058 = vunpack.c.h.b16 %v188
    %v1059 = vunpack.c.l.b16 %v189
    %v1060 = vunpack.c.h.b16 %v189
    %v1061 = vunpack.c.l.b16 %v190
    %v1062 = vunpack.c.h.b16 %v190
    %v1063 = vunpack.c.l.b16 %v191
    %v1064 = vunpack.c.h.b16 %v191
    %v1065 = vunpack.c.l.b16 %v192
    %v1066 = vunpack.c.h.b16 %v192
    %v1067 = vunpack.c.l.b16 %v193
    %v1068 = vunpack.c.h.b16 %v193
    %v1069 = vunpack.c.l.b16 %v194
    %v1070 = vunpack.c.h.b16 %v194
    %v1071 = vunpack.c.l.b16 %v195
    %v1072 = vunpack.c.h.b16 %v195
    %v1073 = vunpack.c.l.b16 %v196
    %v1074 = vunpack.c.h.b16 %v196
    %v1075 = vunpack.c.l.b16 %v197
    %v1076 = vunpack.c.h.b16 %v197
    %v1077 = vunpack.c.l.b16 %v198
    %v1078 = vunpack.c.h.b16 %v198
    %v1079 = vunpack.c.l.b16 %v199
    %v1080 = vunpack.c.h.b16 %v199
    %v1081 = vunpack.c.l.b16 %v200
    %v1082 = vunpack.c.h.b16 %v200
    %v1083 = vunpack.c.l.b16 %v201
    %v1084 = vunpack.c.h.b16 %v201
    %v1085 = vunpack.c.l.b16 %v202
    %v1086 = vunpack.c.h.b16 %v202
    %v1087 = vunpack.c.l.b16 %v203
    %v1088 = vunpack.c.h.b16 %v203
    %v1089 = vunpack.c.l.b16 %v204
    %v1090 = vunpack.c.h.b16 %v204
    %v1091 = vunpack.c.l.b16 %v205
    %v1092 = vunpack.c.h.b16 %v205
    %v1093 = vunpack.c.l.b16 %v206
    %v1094 = vunpack.c.h.b16 %v206
    %v1095 = vunpack.c.l.b16 %v207
    %v1096 = vunpack.c.h.b16 %v207
    %v1097 = vunpack.c.l.b16 %v208
    %v1098 = vunpack.c.h.b16 %v208
    %v1099 = vunpack.c.l.b16 %v209
    %v1100 = vunpack.c.h.b16 %v209
    %v1101 = vunpack.c.l.b16 %v210
    %v1102 = vunpack.c.h.b16 %v210
    %v1103 = vunpack.c.l.b16 %v211
    %v1104 = vunpack.c.h.b16 %v211
    %v1105 = vunpack.c.l.b16 %v212
    %v1106 = vunpack.c.h.b16 %v212
    %v1107 = vunpack.c.l.b16 %v213
    %v1108 = vunpack.c.h.b16 %v213
    %v1109 = vunpack.c.l.b16 %v214
    %v1110 = vunpack.c.h.b16 %v214
    %v1111 = vunpack.c.l.b16 %v215
    %v1112 = vunpack.c.h.b16 %v215
    %v1113 = vunpack.c.l.b16 %v216
    %v1114 = vunpack.c.h.b16 %v216
    %v1115 = vunpack.c.l.b16 %v217
    %v1116 = vunpack.c.h.b16 %v217
    %v1117 = vunpack.c.l.b16 %v218
    %v1118 = vunpack.c.h.b16 %v218
    %v1119 = vunpack.c.l.b16 %v219
    %v1120 = vunpack.c.h.b16 %v219
    %v1121 = vunpack.c.l.b16 %v220
    %v1122 = vunpack.c.h.b16 %v220
    %v1123 = vunpack.c.l.b16 %v221
    %v1124 = vunpack.c.h.b16 %v221
    %v1125 = vunpack.c.l.b16 %v222
    %v1126 = vunpack.c.h.b16 %v222
    %v1127 = vunpack.c.l.b16 %v223
    %v1128 = vunpack.c.h.b16 %v223
    %v1129 = vunpack.c.l.b16 %v224
    %v1130 = vunpack.c.h.b16 %v224
    %v1131 = vunpack.c.l.b16 %v225
    %v1132 = vunpack.c.h.b16 %v225
    %v1133 = vunpack.c.l.b16 %v226
    %v1134 = vunpack.c.h.b16 %v226
    %v1135 = vunpack.c.l.b16 %v227
    %v1136 = vunpack.c.h.b16 %v227
    %v1137 = vunpack.c.l.b16 %v228
    %v1138 = vunpack.c.h.b16 %v228
    %v1139 = vunpack.c.l.b16 %v229
    %v1140 = vunpack.c.h.b16 %v229
    %v1141 = vunpack.c.l.b16 %v230
    %v1142 = vunpack.c.h.b16 %v230
    %v1143 = vunpack.c.l.b16 %v231
    %v1144 = vunpack.c.h.b16 %v231
    %v1145 = vunpack.c.l.b16 %v232
    %v1146 = vunpack.c.h.b16 %v232
    %v1147 = vunpack.c.l.b16 %v233
    %v1148 = vunpack.c.h.b16 %v233
    %v1149 = vunpack.c.l.b16 %v234
    %v1150 = vunpack.c.h.b16 %v234
    %v1151 = vunpack.c.l.b16 %v235
    %v1152 = vunpack.c.h.b16 %v235
    %v1153 = vunpack.c.l.b16 %v236
    %v1154 = vunpack.c.h.b16 %v236
    %v1155 = vpack.c.b16 %v915, %v899
    %v1156 = vpack.c.b16 %v916, %v900
    %v1157 = vpack.c.b16 %v917, %v901
    %v1158 = vpack.c.b16 %v918, %v902
    %v1159 = vpack.c.b16 %v919, %v903
    %v1160 = vpack.c.b16 %v920, %v904
    %v1161 = vpack.c.b16 %v921, %v905
    %v1162 = vpack.c.b16 %v922, %v906
    %v1163 = vpack.c.b16 %v923, %v907
    %v1164 = vpack.c.b16 %v924, %v908
    %v1165 = vpack.c.b16 %v925, %v909
    %v1166 = vpack.c.b16 %v926, %v910
    %v1167 = vpack.c.b16 %v927, %v911
    %v1168 = vpack.c.b16 %v928, %v912
    %v1169 = vpack.c.b16 %v929, %v913
    %v1170 = vpack.c.b16 %v930, %v914
    %v1171 = vpack.c.b16 %v947, %v931
    %v1172 = vpack.c.b16 %v948, %v932
    %v1173 = vpack.c.b16 %v949, %v933
    %v1174 = vpack.c.b16 %v950, %v934
    %v1175 = vpack.c.b16 %v951, %v935
    %v1176 = vpack.c.b16 %v952, %v936
    %v1177 = vpack.c.b16 %v953, %v937
    %v1178 = vpack.c.b16 %v954, %v938
    %v1179 = vpack.c.b16 %v955, %v939
    %v1180 = vpack.c.b16 %v956, %v940
    %v1181 = vpack.c.b16 %v957, %v941
    %v1182 = vpack.c.b16 %v958, %v942
    %v1183 = vpack.c.b16 %v959, %v943
    %v1184 = vpack.c.b16 %v960, %v944
    %v1185 = vpack.c.b16 %v961, %v945
    %v1186 = vpack.c.b16 %v962, %v946
    %v1187 = vpack.c.b16 %v979, %v963
    %v1188 = vpack.c.b16 %v980, %v964
    %v1189 = vpack.c.b16 %v981, %v965
    %v1190 = vpack.c.b16 %v982, %v966
    %v1191 = vpack.c.b16 %v983, %v967
    %v1192 = vpack.c.b16 %v984, %v968
    %v1193 = vpack.c.b16 %v985, %v969
    %v1194 = vpack.c.b16 %v986, %v970
    %v1195 = vpack.c.b16 %v987, %v971
    %v1196 = vpack.c.b16 %v988, %v972
    %v1197 = vpack.c.b16 %v989, %v973
    %v1198 = vpack.c.b16 %v990, %v974
    %v1199 = vpack.c.b16 %v991, %v975
    %v1200 = vpack.c.b16 %v992, %v976
    %v1201 = vpack.c.b16 %v993, %v977
    %v1202 = vpack.c.b16 %v994, %v978
    %v1203 = vpack.c.b16 %v1011, %v995
    %v1204 = vpack.c.b16 %v1012, %v996
    %v1205 = vpack.c.b16 %v1013, %v997
    %v1206 = vpack.c.b16 %v1014, %v998
    %v1207 = vpack.c.b16 %v1015, %v999
    %v1208 = vpack.c.b16 %v1016, %v1000
    %v1209 = vpack.c.b16 %v1017, %v1001
    %v1210 = vpack.c.b16 %v1018, %v1002
    %v1211 = vpack.c.b16 %v1019, %v1003
    %v1212 = vpack.c.b16 %v1020, %v1004
    %v1213 = vpack.c.b16 %v1021, %v1005
    %v1214 = vpack.c.b16 %v1022, %v1006
    %v1215 = vpack.c.b16 %v1023, %v1007
    %v1216 = vpack.c.b16 %v1024, %v1008
    %v1217 = vpack.c.b16 %v1025, %v1009
    %v1218 = vpack.c.b16 %v1026, %v1010
    %v1219 = vpack.c.b16 %v1043, %v1027
    %v1220 = vpack.c.b16 %v1044, %v1028
    %v1221 = vpack.c.b16 %v1045, %v1029
    %v1222 = vpack.c.b16 %v1046, %v1030
    %v1223 = vpack.c.b16 %v1047, %v1031
    %v1224 = vpack.c.b16 %v1048, %v1032
    %v1225 = vpack.c.b16 %v1049, %v1033
    %v1226 = vpack.c.b16 %v1050, %v1034
    %v1227 = vpack.c.b16 %v1051, %v1035
    %v1228 = vpack.c.b16 %v1052, %v1036
    %v1229 = vpack.c.b16 %v1053, %v1037
    %v1230 = vpack.c.b16 %v1054, %v1038
    %v1231 = vpack.c.b16 %v1055, %v1039
    %v1232 = vpack.c.b16 %v1056, %v1040
    %v1233 = vpack.c.b16 %v1057, %v1041
    %v1234 = vpack.c.b16 %v1058, %v1042
    %v1235 = vpack.c.b16 %v1075, %v1059
    %v1236 = vpack.c.b16 %v1076, %v1060
    %v1237 = vpack.c.b16 %v1077, %v1061
    %v1238 = vpack.c.b16 %v1078, %v1062
    %v1239 = vpack.c.b16 %v1079, %v1063
    %v1240 = vpack.c.b16 %v1080, %v1064
    %v1241 = vpack.c.b16 %v1081, %v1065
    %v1242 = vpack.c.b16 %v1082, %v1066
    %v1243 = vpack.c.b16 %v1083, %v1067
    %v1244 = vpack.c.b16 %v1084, %v1068
    %v1245 = vpack.c.b16 %v1085, %v1069
    %v1246 = vpack.c.b16 %v1086, %v1070
    %v1247 = vpack.c.b16 %v1087, %v1071
    %v1248 = vpack.c.b16 %v1088, %v1072
    %v1249 = vpack.c.b16 %v1089, %v1073
    %v1250 = vpack.c.b16 %v1090, %v1074
    %v1251 = vpack.c.b16 %v1107, %v1091
    %v1252 = vpack.c.b16 %v1108, %v1092
    %v1253 = vpack.c.b16 %v1109, %v1093
    %v1254 = vpack.c.b16 %v1110, %v1094
    %v1255 = vpack.c.b16 %v1111, %v1095
    %v1256 = vpack.c.b16 %v1112, %v1096
    %v1257 = vpack.c.b16 %v1113, %v1097
    %v1258 = vpack.c.b16 %v1114, %v1098
    %v1259 = vpack.c.b16 %v1115, %v1099
    %v1260 = vpack.c.b16 %v1116, %v1100
    %v1261 = vpack.c.b16 %v1117, %v1101
    %v1262 = vpack.c.b16 %v1118, %v1102
    %v1263 = vpack.c.b16 %v1119, %v1103
    %v1264 = vpack.c.b16 %v1120, %v1104
    %v1265 = vpack.c.b16 %v1121, %v1105
    %v1266 = vpack.c.b16 %v1122, %v1106
    %v1267 = vpack.c.b16 %v1139, %v1123
    %v1268 = vpack.c.b16 %v1140, %v1124
    %v1269 = vpack.c.b16 %v1141, %v1125
    %v1270 = vpack.c.b16 %v1142, %v1126
    %v1271 = vpack.c.b16 %v1143, %v1127
    %v1272 = vpack.c.b16 %v1144, %v1128
    %v1273 = vpack.c.b16 %v1145, %v1129
    %v1274 = vpack.c.b16 %v1146, %v1130
    %v1275 = vpack.c.b16 %v1147, %v1131
    %v1276 = vpack.c.b16 %v1148, %v1132
    %v1277 = vpack.c.b16 %v1149, %v1133
    %v1278 = vpack.c.b16 %v1150, %v1134
    %v1279 = vpack.c.b16 %v1151, %v1135
    %v1280 = vpack.c.b16 %v1152, %v1136
    %v1281 = vpack.c.b16 %v1153, %v1137
    %v1282 = vpack.c.b16 %v1154, %v1138
    %v1923 = vunpack.c.l.b16 %v237
    %v1924 = vunpack.c.h.b16 %v237
    %v1925 = vunpack.c.l.b16 %v238
    %v1926 = vunpack.c.h.b16 %v238
    %v1927 = vunpack.c.l.b16 %v239
    %v1928 = vunpack.c.h.b16 %v239
    %v1929 = vunpack.c.l.b16 %v240
    %v1930 = vunpack.c.h.b16 %v240
    %v1931 = vunpack.c.l.b16 %v241
    %v1932 = vunpack.c.h.b16 %v241
    %v1933 = vunpack.c.l.b16 %v242
    %v1934 = vunpack.c.h.b16 %v242
    %v1935 = vunpack.c.l.b16 %v243
    %v1936 = vunpack.c.h.b16 %v243
    %v1937 = vunpack.c.l.b16 %v244
    %v1938 = vunpack.c.h.b16 %v244
    %v1939 = vunpack.c.l.b16 %v245
    %v1940 = vunpack.c.h.b16 %v245
    %v1941 = vunpack.c.l.b16 %v246
    %v1942 = vunpack.c.h.b16 %v246
    %v1943 = vunpack.c.l.b16 %v247
    %v1944 = vunpack.c.h.b16 %v247
    %v1945 = vunpack.c.l.b16 %v248
    %v1946 = vunpack.c.h.b16 %v248
    %v1947 = vunpack.c.l.b16 %v249
    %v1948 = vunpack.c.h.b16 %v249
    %v1949 = vunpack.c.l.b16 %v250
    %v1950 = vunpack.c.h.b16 %v250
    %v1951 = vunpack.c.l.b16 %v251
    %v1952 = vunpack.c.h.b16 %v251
    %v1953 = vunpack.c.l.b16 %v252
    %v1954 = vunpack.c.h.b16 %v252
    %v1955 = vunpack.c.l.b16 %v253
    %v1956 = vunpack.c.h.b16 %v253
    %v1957 = vunpack.c.l.b16 %v254
    %v1958 = vunpack.c.h.b16 %v254
    %v1959 = vunpack.c.l.b16 %v255
    %v1960 = vunpack.c.h.b16 %v255
    %v1961 = vunpack.c.l.b16 %v256
    %v1962 = vunpack.c.h.b16 %v256
    %v1963 = vunpack.c.l.b16 %v257
    %v1964 = vunpack.c.h.b16 %v257
    %v1965 = vunpack.c.l.b16 %v258
    %v1966 = vunpack.c.h.b16 %v258
    %v1967 = vunpack.c.l.b16 %v259
    %v1968 = vunpack.c.h.b16 %v259
    %v1969 = vunpack.c.l.b16 %v260
    %v1970 = vunpack.c.h.b16 %v260
    %v1971 = vunpack.c.l.b16 %v261
    %v1972 = vunpack.c.h.b16 %v261
    %v1973 = vunpack.c.l.b16 %v262
    %v1974 = vunpack.c.h.b16 %v262
    %v1975 = vunpack.c.l.b16 %v263
    %v1976 = vunpack.c.h.b16 %v263
    %v1977 = vunpack.c.l.b16 %v264
    %v1978 = vunpack.c.h.b16 %v264
    %v1979 = vunpack.c.l.b16 %v265
    %v1980 = vunpack.c.h.b16 %v265
    %v1981 = vunpack.c.l.b16 %v266
    %v1982 = vunpack.c.h.b16 %v266
    %v1983 = vunpack.c.l.b16 %v267
    %v1984 = vunpack.c.h.b16 %v267
    %v1985 = vunpack.c.l.b16 %v268
    %v1986 = vunpack.c.h.b16 %v268
    %v1987 = vunpack.c.l.b16 %v269
    %v1988 = vunpack.c.h.b16 %v269
    %v1989 = vunpack.c.l.b16 %v270
    %v1990 = vunpack.c.h.b16 %v270
    %v1991 = vunpack.c.l.b16 %v271
    %v1992 = vunpack.c.h.b16 %v271
    %v1993 = vunpack.c.l.b16 %v272
    %v1994 = vunpack.c.h.b16 %v272
    %v1995 = vunpack.c.l.b16 %v273
    %v1996 = vunpack.c.h.b16 %v273
    %v1997 = vunpack.c.l.b16 %v274
    %v1998 = vunpack.c.h.b16 %v274
    %v1999 = vunpack.c.l.b16 %v275
    %v2000 = vunpack.c.h.b16 %v275
    %v2001 = vunpack.c.l.b16 %v276
    %v2002 = vunpack.c.h.b16 %v276
    %v2003 = vunpack.c.l.b16 %v277
    %v2004 = vunpack.c.h.b16 %v277
    %v2005 = vunpack.c.l.b16 %v278
    %v2006 = vunpack.c.h.b16 %v278
    %v2007 = vunpack.c.l.b16 %v279
    %v2008 = vunpack.c.h.b16 %v279
    %v2009 = vunpack.c.l.b16 %v280
    %v2010 = vunpack.c.h.b16 %v280
    %v2011 = vunpack.c.l.b16 %v281
    %v2012 = vunpack.c.h.b16 %v281
    %v2013 = vunpack.c.l.b16 %v282
    %v2014 = vunpack.c.h.b16 %v282
    %v2015 = vunpack.c.l.b16 %v283
    %v2016 = vunpack.c.h.b16 %v283
    %v2017 = vunpack.c.l.b16 %v284
    %v2018 = vunpack.c.h.b16 %v284
    %v2019 = vunpack.c.l.b16 %v285
    %v2020 = vunpack.c.h.b16 %v285
    %v2021 = vunpack.c.l.b16 %v286
    %v2022 = vunpack.c.h.b16 %v286
    %v2023 = vunpack.c.l.b16 %v287
    %v2024 = vunpack.c.h.b16 %v287
    %v2025 = vunpack.c.l.b16 %v288
    %v2026 = vunpack.c.h.b16 %v288
    %v2027 = vunpack.c.l.b16 %v289
    %v2028 = vunpack.c.h.b16 %v289
    %v2029 = vunpack.c.l.b16 %v290
    %v2030 = vunpack.c.h.b16 %v290
    %v2031 = vunpack.c.l.b16 %v291
    %v2032 = vunpack.c.h.b16 %v291
    %v2033 = vunpack.c.l.b16 %v292
    %v2034 = vunpack.c.h.b16 %v292
    %v2035 = vunpack.c.l.b16 %v293
    %v2036 = vunpack.c.h.b16 %v293
    %v2037 = vunpack.c.l.b16 %v294
    %v2038 = vunpack.c.h.b16 %v294
    %v2039 = vunpack.c.l.b16 %v295
    %v2040 = vunpack.c.h.b16 %v295
    %v2041 = vunpack.c.l.b16 %v296
    %v2042 = vunpack.c.h.b16 %v296
    %v2043 = vunpack.c.l.b16 %v297
    %v2044 = vunpack.c.h.b16 %v297
    %v2045 = vunpack.c.l.b16 %v298
    %v2046 = vunpack.c.h.b16 %v298
    %v2047 = vunpack.c.l.b16 %v299
    %v2048 = vunpack.c.h.b16 %v299
    %v2049 = vunpack.c.l.b16 %v300
    %v2050 = vunpack.c.h.b16 %v300
    %v2051 = vunpack.c.l.b16 %v301
    %v2052 = vunpack.c.h.b16 %v301
    %v2053 = vunpack.c.l.b16 %v302
    %v2054 = vunpack.c.h.b16 %v302
    %v2055 = vunpack.c.l.b16 %v303
    %v2056 = vunpack.c.h.b16 %v303
    %v2057 = vunpack.c.l.b16 %v304
    %v2058 = vunpack.c.h.b16 %v304
    %v2059 = vunpack.c.l.b16 %v305
    %v2060 = vunpack.c.h.b16 %v305
    %v2061 = vunpack.c.l.b16 %v306
    %v2062 = vunpack.c.h.b16 %v306
    %v2063 = vunpack.c.l.b16 %v307
    %v2064 = vunpack.c.h.b16 %v307
    %v2065 = vunpack.c.l.b16 %v308
    %v2066 = vunpack.c.h.b16 %v308
    %v2067 = vunpack.c.l.b16 %v309
    %v2068 = vunpack.c.h.b16 %v309
    %v2069 = vunpack.c.l.b16 %v310
    %v2070 = vunpack.c.h.b16 %v310
    %v2071 = vunpack.c.l.b16 %v311
    %v2072 = vunpack.c.h.b16 %v311
    %v2073 = vunpack.c.l.b16 %v312
    %v2074 = vunpack.c.h.b16 %v312
    %v2075 = vunpack.c.l.b16 %v313
    %v2076 = vunpack.c.h.b16 %v313
    %v2077 = vunpack.c.l.b16 %v314
    %v2078 = vunpack.c.h.b16 %v314
    %v2079 = vunpack.c.l.b16 %v315
    %v2080 = vunpack.c.h.b16 %v315
    %v2081 = vunpack.c.l.b16 %v316
    %v2082 = vunpack.c.h.b16 %v316
    %v2083 = vunpack.c.l.b16 %v317
    %v2084 = vunpack.c.h.b16 %v317
    %v2085 = vunpack.c.l.b16 %v318
    %v2086 = vunpack.c.h.b16 %v318
    %v2087 = vunpack.c.l.b16 %v319
    %v2088 = vunpack.c.h.b16 %v319
    %v2089 = vunpack.c.l.b16 %v320
    %v2090 = vunpack.c.h.b16 %v320
    %v2091 = vunpack.c.l.b16 %v321
    %v2092 = vunpack.c.h.b16 %v321
    %v2093 = vunpack.c.l.b16 %v322
    %v2094 = vunpack.c.h.b16 %v322
    %v2095 = vunpack.c.l.b16 %v323
    %v2096 = vunpack.c.h.b16 %v323
    %v2097 = vunpack.c.l.b16 %v324
    %v2098 = vunpack.c.h.b16 %v324
    %v2099 = vunpack.c.l.b16 %v325
    %v2100 = vunpack.c.h.b16 %v325
    %v2101 = vunpack.c.l.b16 %v326
    %v2102 = vunpack.c.h.b16 %v326
    %v2103 = vunpack.c.l.b16 %v327
    %v2104 = vunpack.c.h.b16 %v327
    %v2105 = vunpack.c.l.b16 %v328
    %v2106 = vunpack.c.h.b16 %v328
    %v2107 = vunpack.c.l.b16 %v329
    %v2108 = vunpack.c.h.b16 %v329
    %v2109 = vunpack.c.l.b16 %v330
    %v2110 = vunpack.c.h.b16 %v330
    %v2111 = vunpack.c.l.b16 %v331
    %v2112 = vunpack.c.h.b16 %v331
    %v2113 = vunpack.c.l.b16 %v332
    %v2114 = vunpack.c.h.b16 %v332
    %v2115 = vunpack.c.l.b16 %v333
    %v2116 = vunpack.c.h.b16 %v333
    %v2117 = vunpack.c.l.b16 %v334
    %v2118 = vunpack.c.h.b16 %v334
    %v2119 = vunpack.c.l.b16 %v335
    %v2120 = vunpack.c.h.b16 %v335
    %v2121 = vunpack.c.l.b16 %v336
    %v2122 = vunpack.c.h.b16 %v336
    %v2123 = vunpack.c.l.b16 %v337
    %v2124 = vunpack.c.h.b16 %v337
    %v2125 = vunpack.c.l.b16 %v338
    %v2126 = vunpack.c.h.b16 %v338
    %v2127 = vunpack.c.l.b16 %v339
    %v2128 = vunpack.c.h.b16 %v339
    %v2129 = vunpack.c.l.b16 %v340
    %v2130 = vunpack.c.h.b16 %v340
    %v2131 = vunpack.c.l.b16 %v341
    %v2132 = vunpack.c.h.b16 %v341
    %v2133 = vunpack.c.l.b16 %v342
    %v2134 = vunpack.c.h.b16 %v342
    %v2135 = vunpack.c.l.b16 %v343
    %v2136 = vunpack.c.h.b16 %v343
    %v2137 = vunpack.c.l.b16 %v344
    %v2138 = vunpack.c.h.b16 %v344
    %v2139 = vunpack.c.l.b16 %v345
    %v2140 = vunpack.c.h.b16 %v345
    %v2141 = vunpack.c.l.b16 %v346
    %v2142 = vunpack.c.h.b16 %v346
    %v2143 = vunpack.c.l.b16 %v347
    %v2144 = vunpack.c.h.b16 %v347
    %v2145 = vunpack.c.l.b16 %v348
    %v2146 = vunpack.c.h.b16 %v348
    %v2147 = vunpack.c.l.b16 %v349
    %v2148 = vunpack.c.h.b16 %v349
    %v2149 = vunpack.c.l.b16 %v350
    %v2150 = vunpack.c.h.b16 %v350
    %v2151 = vunpack.c.l.b16 %v351
    %v2152 = vunpack.c.h.b16 %v351
    %v2153 = vunpack.c.l.b16 %v352
    %v2154 = vunpack.c.h.b16 %v352
    %v2155 = vunpack.c.l.b16 %v353
    %v2156 = vunpack.c.h.b16 %v353
    %v2157 = vunpack.c.l.b16 %v354
    %v2158 = vunpack.c.h.b16 %v354
    %v2159 = vunpack.c.l.b16 %v355
    %v2160 = vunpack.c.h.b16 %v355
    %v2161 = vunpack.c.l.b16 %v356
    %v2162 = vunpack.c.h.b16 %v356
    %v2163 = vunpack.c.l.b16 %v357
    %v2164 = vunpack.c.h.b16 %v357
    %v2165 = vunpack.c.l.b16 %v358
    %v2166 = vunpack.c.h.b16 %v358
    %v2167 = vunpack.c.l.b16 %v359
    %v2168 = vunpack.c.h.b16 %v359
    %v2169 = vunpack.c.l.b16 %v360
    %v2170 = vunpack.c.h.b16 %v360
    %v2171 = vunpack.c.l.b16 %v361
    %v2172 = vunpack.c.h.b16 %v361
    %v2173 = vunpack.c.l.b16 %v362
    %v2174 = vunpack.c.h.b16 %v362
    %v2175 = vunpack.c.l.b16 %v363
    %v2176 = vunpack.c.h.b16 %v363
    %v2177 = vunpack.c.l.b16 %v364
    %v2178 = vunpack.c.h.b16 %v364
    %v2179 = vunpack.c.l.b16 %v365
    %v2180 = vunpack.c.h.b16 %v365
    %v2181 = vunpack.c.l.b16 %v366
    %v2182 = vunpack.c.h.b16 %v366
    %v2183 = vunpack.c.l.b16 %v367
    %v2184 = vunpack.c.h.b16 %v367
    %v2185 = vunpack.c.l.b16 %v368
    %v2186 = vunpack.c.h.b16 %v368
    %v2187 = vunpack.c.l.b16 %v369
    %v2188 = vunpack.c.h.b16 %v369
    %v2189 = vunpack.c.l.b16 %v370
    %v2190 = vunpack.c.h.b16 %v370
    %v2191 = vunpack.c.l.b16 %v371
    %v2192 = vunpack.c.h.b16 %v371
    %v2193 = vunpack.c.l.b16 %v372
    %v2194 = vunpack.c.h.b16 %v372
    %v2195 = vunpack.c.l.b16 %v373
    %v2196 = vunpack.c.h.b16 %v373
    %v2197 = vunpack.c.l.b16 %v374
    %v2198 = vunpack.c.h.b16 %v374
    %v2199 = vunpack.c.l.b16 %v375
    %v2200 = vunpack.c.h.b16 %v375
    %v2201 = vunpack.c.l.b16 %v376
    %v2202 = vunpack.c.h.b16 %v376
    %v2203 = vunpack.c.l.b16 %v377
    %v2204 = vunpack.c.h.b16 %v377
    %v2205 = vunpack.c.l.b16 %v378
    %v2206 = vunpack.c.h.b16 %v378
    %v2207 = vunpack.c.l.b16 %v379
    %v2208 = vunpack.c.h.b16 %v379
    %v2209 = vunpack.c.l.b16 %v380
    %v2210 = vunpack.c.h.b16 %v380
    %v2211 = vunpack.c.l.b16 %v381
    %v2212 = vunpack.c.h.b16 %v381
    %v2213 = vunpack.c.l.b16 %v382
    %v2214 = vunpack.c.h.b16 %v382
    %v2215 = vunpack.c.l.b16 %v383
    %v2216 = vunpack.c.h.b16 %v383
    %v2217 = vunpack.c.l.b16 %v384
    %v2218 = vunpack.c.h.b16 %v384
    %v2219 = vunpack.c.l.b16 %v385
    %v2220 = vunpack.c.h.b16 %v385
    %v2221 = vunpack.c.l.b16 %v386
    %v2222 = vunpack.c.h.b16 %v386
    %v2223 = vunpack.c.l.b16 %v387
    %v2224 = vunpack.c.h.b16 %v387
    %v2225 = vunpack.c.l.b16 %v388
    %v2226 = vunpack.c.h.b16 %v388
    %v2227 = vunpack.c.l.b16 %v389
    %v2228 = vunpack.c.h.b16 %v389
    %v2229 = vunpack.c.l.b16 %v390
    %v2230 = vunpack.c.h.b16 %v390
    %v2231 = vunpack.c.l.b16 %v391
    %v2232 = vunpack.c.h.b16 %v391
    %v2233 = vunpack.c.l.b16 %v392
    %v2234 = vunpack.c.h.b16 %v392
    %v2235 = vunpack.c.l.b16 %v393
    %v2236 = vunpack.c.h.b16 %v393
    %v2237 = vunpack.c.l.b16 %v394
    %v2238 = vunpack.c.h.b16 %v394
    %v2239 = vunpack.c.l.b16 %v395
    %v2240 = vunpack.c.h.b16 %v395
    %v2241 = vunpack.c.l.b16 %v396
    %v2242 = vunpack.c.h.b16 %v396
    %v2243 = vunpack.c.l.b16 %v397
    %v2244 = vunpack.c.h.b16 %v397
    %v2245 = vunpack.c.l.b16 %v398
    %v2246 = vunpack.c.h.b16 %v398
    %v2247 = vunpack.c.l.b16 %v399
    %v2248 = vunpack.c.h.b16 %v399
    %v2249 = vunpack.c.l.b16 %v400
    %v2250 = vunpack.c.h.b16 %v400
    %v2251 = vunpack.c.l.b16 %v401
    %v2252 = vunpack.c.h.b16 %v401
    %v2253 = vunpack.c.l.b16 %v402
    %v2254 = vunpack.c.h.b16 %v402
    %v2255 = vunpack.c.l.b16 %v403
    %v2256 = vunpack.c.h.b16 %v403
    %v2257 = vunpack.c.l.b16 %v404
    %v2258 = vunpack.c.h.b16 %v404
    %v2259 = vunpack.c.l.b16 %v405
    %v2260 = vunpack.c.h.b16 %v405
    %v2261 = vunpack.c.l.b16 %v406
    %v2262 = vunpack.c.h.b16 %v406
    %v2263 = vunpack.c.l.b16 %v407
    %v2264 = vunpack.c.h.b16 %v407
    %v2265 = vunpack.c.l.b16 %v408
    %v2266 = vunpack.c.h.b16 %v408
    %v2267 = vunpack.c.l.b16 %v409
    %v2268 = vunpack.c.h.b16 %v409
    %v2269 = vunpack.c.l.b16 %v410
    %v2270 = vunpack.c.h.b16 %v410
    %v2271 = vunpack.c.l.b16 %v411
    %v2272 = vunpack.c.h.b16 %v411
    %v2273 = vunpack.c.l.b16 %v412
    %v2274 = vunpack.c.h.b16 %v412
    %v2275 = vunpack.c.l.b16 %v413
    %v2276 = vunpack.c.h.b16 %v413
    %v2277 = vunpack.c.l.b16 %v414
    %v2278 = vunpack.c.h.b16 %v414
    %v2279 = vunpack.c.l.b16 %v415
    %v2280 = vunpack.c.h.b16 %v415
    %v2281 = vunpack.c.l.b16 %v416
    %v2282 = vunpack.c.h.b16 %v416
    %v2283 = vunpack.c.l.b16 %v417
    %v2284 = vunpack.c.h.b16 %v417
    %v2285 = vunpack.c.l.b16 %v418
    %v2286 = vunpack.c.h.b16 %v418
    %v2287 = vunpack.c.l.b16 %v419
    %v2288 = vunpack.c.h.b16 %v419
    %v2289 = vunpack.c.l.b16 %v420
    %v2290 = vunpack.c.h.b16 %v420
    %v2291 = vunpack.c.l.b16 %v421
    %v2292 = vunpack.c.h.b16 %v421
    %v2293 = vunpack.c.l.b16 %v422
    %v2294 = vunpack.c.h.b16 %v422
    %v2295 = vunpack.c.l.b16 %v423
    %v2296 = vunpack.c.h.b16 %v423
    %v2297 = vunpack.c.l.b16 %v424
    %v2298 = vunpack.c.h.b16 %v424
    %v2299 = vunpack.c.l.b16 %v425
    %v2300 = vunpack.c.h.b16 %v425
    %v2301 = vunpack.c.l.b16 %v426
    %v2302 = vunpack.c.h.b16 %v426
    %v2303 = vunpack.c.l.b16 %v427
    %v2304 = vunpack.c.h.b16 %v427
    %v2305 = vunpack.c.l.b16 %v428
    %v2306 = vunpack.c.h.b16 %v428
    %v2307 = vunpack.c.l.b16 %v429
    %v2308 = vunpack.c.h.b16 %v429
    %v2309 = vunpack.c.l.b16 %v430
    %v2310 = vunpack.c.h.b16 %v430
    %v2311 = vunpack.c.l.b16 %v431
    %v2312 = vunpack.c.h.b16 %v431
    %v2313 = vunpack.c.l.b16 %v432
    %v2314 = vunpack.c.h.b16 %v432
    %v2315 = vunpack.c.l.b16 %v433
    %v2316 = vunpack.c.h.b16 %v433
    %v2317 = vunpack.c.l.b16 %v434
    %v2318 = vunpack.c.h.b16 %v434
    %v2319 = vunpack.c.l.b16 %v435
    %v2320 = vunpack.c.h.b16 %v435
    %v2321 = vunpack.c.l.b16 %v436
    %v2322 = vunpack.c.h.b16 %v436
    %v2323 = vunpack.c.l.b16 %v437
    %v2324 = vunpack.c.h.b16 %v437
    %v2325 = vunpack.c.l.b16 %v438
    %v2326 = vunpack.c.h.b16 %v438
    %v2327 = vunpack.c.l.b16 %v439
    %v2328 = vunpack.c.h.b16 %v439
    %v2329 = vunpack.c.l.b16 %v440
    %v2330 = vunpack.c.h.b16 %v440
    %v2331 = vunpack.c.l.b16 %v441
    %v2332 = vunpack.c.h.b16 %v441
    %v2333 = vunpack.c.l.b16 %v442
    %v2334 = vunpack.c.h.b16 %v442
    %v2335 = vunpack.c.l.b16 %v443
    %v2336 = vunpack.c.h.b16 %v443
    %v2337 = vunpack.c.l.b16 %v444
    %v2338 = vunpack.c.h.b16 %v444
    %v2339 = vunpack.c.l.b16 %v445
    %v2340 = vunpack.c.h.b16 %v445
    %v2341 = vunpack.c.l.b16 %v446
    %v2342 = vunpack.c.h.b16 %v446
    %v2343 = vunpack.c.l.b16 %v447
    %v2344 = vunpack.c.h.b16 %v447
    %v2345 = vunpack.c.l.b16 %v448
    %v2346 = vunpack.c.h.b16 %v448
    %v2347 = vunpack.c.l.b16 %v449
    %v2348 = vunpack.c.h.b16 %v449
    %v2349 = vunpack.c.l.b16 %v450
    %v2350 = vunpack.c.h.b16 %v450
    %v2351 = vunpack.c.l.b16 %v451
    %v2352 = vunpack.c.h.b16 %v451
    %v2353 = vunpack.c.l.b16 %v452
    %v2354 = vunpack.c.h.b16 %v452
    %v2355 = vunpack.c.l.b16 %v453
    %v2356 = vunpack.c.h.b16 %v453
    %v2357 = vunpack.c.l.b16 %v454
    %v2358 = vunpack.c.h.b16 %v454
    %v2359 = vunpack.c.l.b16 %v455
    %v2360 = vunpack.c.h.b16 %v455
    %v2361 = vunpack.c.l.b16 %v456
    %v2362 = vunpack.c.h.b16 %v456
    %v2363 = vunpack.c.l.b16 %v457
    %v2364 = vunpack.c.h.b16 %v457
    %v2365 = vunpack.c.l.b16 %v458
    %v2366 = vunpack.c.h.b16 %v458
    %v2367 = vunpack.c.l.b16 %v459
    %v2368 = vunpack.c.h.b16 %v459
    %v2369 = vunpack.c.l.b16 %v460
    %v2370 = vunpack.c.h.b16 %v460
    %v2371 = vunpack.c.l.b16 %v461
    %v2372 = vunpack.c.h.b16 %v461
    %v2373 = vunpack.c.l.b16 %v462
    %v2374 = vunpack.c.h.b16 %v462
    %v2375 = vunpack.c.l.b16 %v463
    %v2376 = vunpack.c.h.b16 %v463
    %v2377 = vunpack.c.l.b16 %v464
    %v2378 = vunpack.c.h.b16 %v464
    %v2379 = vunpack.c.l.b16 %v465
    %v2380 = vunpack.c.h.b16 %v465
    %v2381 = vunpack.c.l.b16 %v466
    %v2382 = vunpack.c.h.b16 %v466
    %v2383 = vunpack.c.l.b16 %v467
    %v2384 = vunpack.c.h.b16 %v467
    %v2385 = vunpack.c.l.b16 %v468
    %v2386 = vunpack.c.h.b16 %v468
    %v2387 = vunpack.c.l.b16 %v469
    %v2388 = vunpack.c.h.b16 %v469
    %v2389 = vunpack.c.l.b16 %v470
    %v2390 = vunpack.c.h.b16 %v470
    %v2391 = vunpack.c.l.b16 %v471
    %v2392 = vunpack.c.h.b16 %v471
    %v2393 = vunpack.c.l.b16 %v472
    %v2394 = vunpack.c.h.b16 %v472
    %v2395 = vunpack.c.l.b16 %v473
    %v2396 = vunpack.c.h.b16 %v473
    %v2397 = vunpack.c.l.b16 %v474
    %v2398 = vunpack.c.h.b16 %v474
    %v2399 = vunpack.c.l.b16 %v475
    %v2400 = vunpack.c.h.b16 %v475
    %v2401 = vunpack.c.l.b16 %v476
    %v2402 = vunpack.c.h.b16 %v476
    %v2403 = vunpack.c.l.b16 %v477
    %v2404 = vunpack.c.h.b16 %v477
    %v2405 = vunpack.c.l.b16 %v478
    %v2406 = vunpack.c.h.b16 %v478
    %v2407 = vunpack.c.l.b16 %v479
    %v2408 = vunpack.c.h.b16 %v479
    %v2409 = vunpack.c.l.b16 %v480
    %v2410 = vunpack.c.h.b16 %v480
    %v2411 = vunpack.c.l.b16 %v481
    %v2412 = vunpack.c.h.b16 %v481
    %v2413 = vunpack.c.l.b16 %v482
    %v2414 = vunpack.c.h.b16 %v482
    %v2415 = vunpack.c.l.b16 %v483
    %v2416 = vunpack.c.h.b16 %v483
    %v2417 = vunpack.c.l.b16 %v484
    %v2418 = vunpack.c.h.b16 %v484
    %v2419 = vunpack.c.l.b16 %v485
    %v2420 = vunpack.c.h.b16 %v485
    %v2421 = vunpack.c.l.b16 %v486
    %v2422 = vunpack.c.h.b16 %v486
    %v2423 = vunpack.c.l.b16 %v487
    %v2424 = vunpack.c.h.b16 %v487
    %v2425 = vunpack.c.l.b16 %v488
    %v2426 = vunpack.c.h.b16 %v488
    %v2427 = vunpack.c.l.b16 %v489
    %v2428 = vunpack.c.h.b16 %v489
    %v2429 = vunpack.c.l.b16 %v490
    %v2430 = vunpack.c.h.b16 %v490
    %v2431 = vunpack.c.l.b16 %v491
    %v2432 = vunpack.c.h.b16 %v491
    %v2433 = vunpack.c.l.b16 %v492
    %v2434 = vunpack.c.h.b16 %v492
    %v2435 = vunpack.c.l.b16 %v493
    %v2436 = vunpack.c.h.b16 %v493
    %v2437 = vunpack.c.l.b16 %v494
    %v2438 = vunpack.c.h.b16 %v494
    %v2439 = vunpack.c.l.b16 %v495
    %v2440 = vunpack.c.h.b16 %v495
    %v2441 = vunpack.c.l.b16 %v496
    %v2442 = vunpack.c.h.b16 %v496
    %v2443 = vunpack.c.l.b16 %v497
    %v2444 = vunpack.c.h.b16 %v497
    %v2445 = vunpack.c.l.b16 %v498
    %v2446 = vunpack.c.h.b16 %v498
    %v2447 = vunpack.c.l.b16 %v499
    %v2448 = vunpack.c.h.b16 %v499
    %v2449 = vunpack.c.l.b16 %v500
    %v2450 = vunpack.c.h.b16 %v500
    %v2451 = vunpack.c.l.b16 %v501
    %v2452 = vunpack.c.h.b16 %v501
    %v2453 = vunpack.c.l.b16 %v502
    %v2454 = vunpack.c.h.b16 %v502
    %v2455 = vunpack.c.l.b16 %v503
    %v2456 = vunpack.c.h.b16 %v503
    %v2457 = vunpack.c.l.b16 %v504
    %v2458 = vunpack.c.h.b16 %v504
    %v2459 = vunpack.c.l.b16 %v505
    %v2460 = vunpack.c.h.b16 %v505
    %v2461 = vunpack.c.l.b16 %v506
    %v2462 = vunpack.c.h.b16 %v506
    %v2463 = vunpack.c.l.b16 %v507
    %v2464 = vunpack.c.h.b16 %v507
    %v2465 = vunpack.c.l.b16 %v508
    %v2466 = vunpack.c.h.b16 %v508
    %v2467 = vunpack.c.l.b16 %v509
    %v2468 = vunpack.c.h.b16 %v509
    %v2469 = vunpack.c.l.b16 %v510
    %v2470 = vunpack.c.h.b16 %v510
    %v2471 = vunpack.c.l.b16 %v511
    %v2472 = vunpack.c.h.b16 %v511
    %v2473 = vunpack.c.l.b16 %v512
    %v2474 = vunpack.c.h.b16 %v512
    %v2475 = vunpack.c.l.b16 %v513
    %v2476 = vunpack.c.h.b16 %v513
    %v2477 = vunpack.c.l.b16 %v514
    %v2478 = vunpack.c.h.b16 %v514
    %v2479 = vunpack.c.l.b16 %v515
    %v2480 = vunpack.c.h.b16 %v515
    %v2481 = vunpack.c.l.b16 %v516
    %v2482 = vunpack.c.h.b16 %v516
    %v2483 = vunpack.c.l.b16 %v517
    %v2484 = vunpack.c.h.b16 %v517
    %v2485 = vunpack.c.l.b16 %v518
    %v2486 = vunpack.c.h.b16 %v518
    %v2487 = vunpack.c.l.b16 %v519
    %v2488 = vunpack.c.h.b16 %v519
    %v2489 = vunpack.c.l.b16 %v520
    %v2490 = vunpack.c.h.b16 %v520
    %v2491 = vunpack.c.l.b16 %v521
    %v2492 = vunpack.c.h.b16 %v521
    %v2493 = vunpack.c.l.b16 %v522
    %v2494 = vunpack.c.h.b16 %v522
    %v2495 = vunpack.c.l.b16 %v523
    %v2496 = vunpack.c.h.b16 %v523
    %v2497 = vunpack.c.l.b16 %v524
    %v2498 = vunpack.c.h.b16 %v524
    %v2499 = vunpack.c.l.b16 %v525
    %v2500 = vunpack.c.h.b16 %v525
    %v2501 = vunpack.c.l.b16 %v526
    %v2502 = vunpack.c.h.b16 %v526
    %v2503 = vunpack.c.l.b16 %v527
    %v2504 = vunpack.c.h.b16 %v527
    %v2505 = vunpack.c.l.b16 %v528
    %v2506 = vunpack.c.h.b16 %v528
    %v2507 = vunpack.c.l.b16 %v529
    %v2508 = vunpack.c.h.b16 %v529
    %v2509 = vunpack.c.l.b16 %v530
    %v2510 = vunpack.c.h.b16 %v530
    %v2511 = vunpack.c.l.b16 %v531
    %v2512 = vunpack.c.h.b16 %v531
    %v2513 = vunpack.c.l.b16 %v532
    %v2514 = vunpack.c.h.b16 %v532
    %v2515 = vunpack.c.l.b16 %v533
    %v2516 = vunpack.c.h.b16 %v533
    %v2517 = vunpack.c.l.b16 %v534
    %v2518 = vunpack.c.h.b16 %v534
    %v2519 = vunpack.c.l.b16 %v535
    %v2520 = vunpack.c.h.b16 %v535
    %v2521 = vunpack.c.l.b16 %v536
    %v2522 = vunpack.c.h.b16 %v536
    %v2523 = vunpack.c.l.b16 %v537
    %v2524 = vunpack.c.h.b16 %v537
    %v2525 = vunpack.c.l.b16 %v538
    %v2526 = vunpack.c.h.b16 %v538
    %v2527 = vunpack.c.l.b16 %v539
    %v2528 = vunpack.c.h.b16 %v539
    %v2529 = vunpack.c.l.b16 %v540
    %v2530 = vunpack.c.h.b16 %v540
    %v2531 = vunpack.c.l.b16 %v541
    %v2532 = vunpack.c.h.b16 %v541
    %v2533 = vunpack.c.l.b16 %v542
    %v2534 = vunpack.c.h.b16 %v542
    %v2535 = vunpack.c.l.b16 %v543
    %v2536 = vunpack.c.h.b16 %v543
    %v2537 = vunpack.c.l.b16 %v544
    %v2538 = vunpack.c.h.b16 %v544
    %v2539 = vunpack.c.l.b16 %v545
    %v2540 = vunpack.c.h.b16 %v545
    %v2541 = vunpack.c.l.b16 %v546
    %v2542 = vunpack.c.h.b16 %v546
    %v2543 = vunpack.c.l.b16 %v547
    %v2544 = vunpack.c.h.b16 %v547
    %v2545 = vunpack.c.l.b16 %v548
    %v2546 = vunpack.c.h.b16 %v548
    %v2547 = vunpack.c.l.b16 %v549
    %v2548 = vunpack.c.h.b16 %v549
    %v2549 = vunpack.c.l.b16 %v550
    %v2550 = vunpack.c.h.b16 %v550
    %v2551 = vunpack.c.l.b16 %v551
    %v2552 = vunpack.c.h.b16 %v551
    %v2553 = vunpack.c.l.b16 %v552
    %v2554 = vunpack.c.h.b16 %v552
    %v2555 = vunpack.c.l.b16 %v553
    %v2556 = vunpack.c.h.b16 %v553
    %v2557 = vunpack.c.l.b16 %v554
    %v2558 = vunpack.c.h.b16 %v554
    %v2559 = vunpack.c.l.b16 %v555
    %v2560 = vunpack.c.h.b16 %v555
    %v2561 = vunpack.c.l.b16 %v556
    %v2562 = vunpack.c.h.b16 %v556
    %v2563 = vunpack.c.l.b16 %v557
    %v2564 = vunpack.c.h.b16 %v557
    %v2565 = vunpack.c.l.b16 %v558
    %v2566 = vunpack.c.h.b16 %v558
    %v2567 = vunpack.c.l.b16 %v559
    %v2568 = vunpack.c.h.b16 %v559
    %v2569 = vunpack.c.l.b16 %v560
    %v2570 = vunpack.c.h.b16 %v560
    %v2571 = vunpack.c.l.b16 %v561
    %v2572 = vunpack.c.h.b16 %v561
    %v2573 = vunpack.c.l.b16 %v562
    %v2574 = vunpack.c.h.b16 %v562
    %v2575 = vunpack.c.l.b16 %v563
    %v2576 = vunpack.c.h.b16 %v563
    %v2577 = vunpack.c.l.b16 %v564
    %v2578 = vunpack.c.h.b16 %v564
    %v2579 = vunpack.c.l.b16 %v565
    %v2580 = vunpack.c.h.b16 %v565
    %v2581 = vunpack.c.l.b16 %v566
    %v2582 = vunpack.c.h.b16 %v566
    %v2583 = vunpack.c.l.b16 %v567
    %v2584 = vunpack.c.h.b16 %v567
    %v2585 = vunpack.c.l.b16 %v568
    %v2586 = vunpack.c.h.b16 %v568
    %v2587 = vunpack.c.l.b16 %v569
    %v2588 = vunpack.c.h.b16 %v569
    %v2589 = vunpack.c.l.b16 %v570
    %v2590 = vunpack.c.h.b16 %v570
    %v2591 = vunpack.c.l.b16 %v571
    %v2592 = vunpack.c.h.b16 %v571
    %v2593 = vunpack.c.l.b16 %v572
    %v2594 = vunpack.c.h.b16 %v572
    %v2595 = vunpack.c.l.b16 %v573
    %v2596 = vunpack.c.h.b16 %v573
    %v2597 = vunpack.c.l.b16 %v574
    %v2598 = vunpack.c.h.b16 %v574
    %v2599 = vunpack.c.l.b16 %v575
    %v2600 = vunpack.c.h.b16 %v575
    %v2601 = vunpack.c.l.b16 %v576
    %v2602 = vunpack.c.h.b16 %v576
    %v2603 = vunpack.c.l.b16 %v577
    %v2604 = vunpack.c.h.b16 %v577
    %v2605 = vunpack.c.l.b16 %v578
    %v2606 = vunpack.c.h.b16 %v578
    %v2607 = vunpack.c.l.b16 %v579
    %v2608 = vunpack.c.h.b16 %v579
    %v2609 = vunpack.c.l.b16 %v580
    %v2610 = vunpack.c.h.b16 %v580
    %v2611 = vunpack.c.l.b16 %v581
    %v2612 = vunpack.c.h.b16 %v581
    %v2613 = vunpack.c.l.b16 %v582
    %v2614 = vunpack.c.h.b16 %v582
    %v2615 = vunpack.c.l.b16 %v583
    %v2616 = vunpack.c.h.b16 %v583
    %v2617 = vunpack.c.l.b16 %v584
    %v2618 = vunpack.c.h.b16 %v584
    %v2619 = vunpack.c.l.b16 %v585
    %v2620 = vunpack.c.h.b16 %v585
    %v2621 = vunpack.c.l.b16 %v586
    %v2622 = vunpack.c.h.b16 %v586
    %v2623 = vunpack.c.l.b16 %v587
    %v2624 = vunpack.c.h.b16 %v587
    %v2625 = vunpack.c.l.b16 %v588
    %v2626 = vunpack.c.h.b16 %v588
    %v2627 = vunpack.c.l.b16 %v589
    %v2628 = vunpack.c.h.b16 %v589
    %v2629 = vunpack.c.l.b16 %v590
    %v2630 = vunpack.c.h.b16 %v590
    %v2631 = vunpack.c.l.b16 %v591
    %v2632 = vunpack.c.h.b16 %v591
    %v2633 = vunpack.c.l.b16 %v592
    %v2634 = vunpack.c.h.b16 %v592
    %v2635 = vunpack.c.l.b16 %v593
    %v2636 = vunpack.c.h.b16 %v593
    %v2637 = vunpack.c.l.b16 %v594
    %v2638 = vunpack.c.h.b16 %v594
    %v2639 = vunpack.c.l.b16 %v595
    %v2640 = vunpack.c.h.b16 %v595
    %v2641 = vunpack.c.l.b16 %v596
    %v2642 = vunpack.c.h.b16 %v596
    %v2643 = vunpack.c.l.b16 %v597
    %v2644 = vunpack.c.h.b16 %v597
    %v2645 = vunpack.c.l.b16 %v598
    %v2646 = vunpack.c.h.b16 %v598
    %v2647 = vunpack.c.l.b16 %v599
    %v2648 = vunpack.c.h.b16 %v599
    %v2649 = vunpack.c.l.b16 %v600
    %v2650 = vunpack.c.h.b16 %v600
    %v2651 = vunpack.c.l.b16 %v601
    %v2652 = vunpack.c.h.b16 %v601
    %v2653 = vunpack.c.l.b16 %v602
    %v2654 = vunpack.c.h.b16 %v602
    %v2655 = vunpack.c.l.b16 %v603
    %v2656 = vunpack.c.h.b16 %v603
    %v2657 = vunpack.c.l.b16 %v604
    %v2658 = vunpack.c.h.b16 %v604
    %v2659 = vunpack.c.l.b16 %v605
    %v2660 = vunpack.c.h.b16 %v605
    %v2661 = vunpack.c.l.b16 %v606
    %v2662 = vunpack.c.h.b16 %v606
    %v2663 = vunpack.c.l.b16 %v607
    %v2664 = vunpack.c.h.b16 %v607
    %v2665 = vunpack.c.l.b16 %v608
    %v2666 = vunpack.c.h.b16 %v608
    %v2667 = vunpack.c.l.b16 %v609
    %v2668 = vunpack.c.h.b16 %v609
    %v2669 = vunpack.c.l.b16 %v610
    %v2670 = vunpack.c.h.b16 %v610
    %v2671 = vunpack.c.l.b16 %v611
    %v2672 = vunpack.c.h.b16 %v611
    %v2673 = vunpack.c.l.b16 %v612
    %v2674 = vunpack.c.h.b16 %v612
    %v2675 = vunpack.c.l.b16 %v613
    %v2676 = vunpack.c.h.b16 %v613
    %v2677 = vunpack.c.l.b16 %v614
    %v2678 = vunpack.c.h.b16 %v614
    %v2679 = vunpack.c.l.b16 %v615
    %v2680 = vunpack.c.h.b16 %v615
    %v2681 = vunpack.c.l.b16 %v616
    %v2682 = vunpack.c.h.b16 %v616
    %v2683 = vunpack.c.l.b16 %v617
    %v2684 = vunpack.c.h.b16 %v617
    %v2685 = vunpack.c.l.b16 %v618
    %v2686 = vunpack.c.h.b16 %v618
    %v2687 = vunpack.c.l.b16 %v619
    %v2688 = vunpack.c.h.b16 %v619
    %v2689 = vunpack.c.l.b16 %v620
    %v2690 = vunpack.c.h.b16 %v620
    %v2691 = vunpack.c.l.b16 %v621
    %v2692 = vunpack.c.h.b16 %v621
    %v2693 = vunpack.c.l.b16 %v622
    %v2694 = vunpack.c.h.b16 %v622
    %v2695 = vunpack.c.l.b16 %v623
    %v2696 = vunpack.c.h.b16 %v623
    %v2697 = vunpack.c.l.b16 %v624
    %v2698 = vunpack.c.h.b16 %v624
    %v2699 = vunpack.c.l.b16 %v625
    %v2700 = vunpack.c.h.b16 %v625
    %v2701 = vunpack.c.l.b16 %v626
    %v2702 = vunpack.c.h.b16 %v626
    %v2703 = vunpack.c.l.b16 %v627
    %v2704 = vunpack.c.h.b16 %v627
    %v2705 = vunpack.c.l.b16 %v628
    %v2706 = vunpack.c.h.b16 %v628
    %v2707 = vunpack.c.l.b16 %v629
    %v2708 = vunpack.c.h.b16 %v629
    %v2709 = vunpack.c.l.b16 %v630
    %v2710 = vunpack.c.h.b16 %v630
    %v2711 = vunpack.c.l.b16 %v631
    %v2712 = vunpack.c.h.b16 %v631
    %v2713 = vunpack.c.l.b16 %v632
    %v2714 = vunpack.c.h.b16 %v632
    %v2715 = vunpack.c.l.b16 %v633
    %v2716 = vunpack.c.h.b16 %v633
    %v2717 = vunpack.c.l.b16 %v634
    %v2718 = vunpack.c.h.b16 %v634
    %v2719 = vunpack.c.l.b16 %v635
    %v2720 = vunpack.c.h.b16 %v635
    %v2721 = vunpack.c.l.b16 %v636
    %v2722 = vunpack.c.h.b16 %v636
    %v2723 = vunpack.c.l.b16 %v637
    %v2724 = vunpack.c.h.b16 %v637
    %v2725 = vunpack.c.l.b16 %v638
    %v2726 = vunpack.c.h.b16 %v638
    %v2727 = vunpack.c.l.b16 %v639
    %v2728 = vunpack.c.h.b16 %v639
    %v2729 = vunpack.c.l.b16 %v640
    %v2730 = vunpack.c.h.b16 %v640
    %v2731 = vunpack.c.l.b16 %v641
    %v2732 = vunpack.c.h.b16 %v641
    %v2733 = vunpack.c.l.b16 %v642
    %v2734 = vunpack.c.h.b16 %v642
    %v2735 = vunpack.c.l.b16 %v643
    %v2736 = vunpack.c.h.b16 %v643
    %v2737 = vunpack.c.l.b16 %v644
    %v2738 = vunpack.c.h.b16 %v644
    %v2739 = vunpack.c.l.b16 %v645
    %v2740 = vunpack.c.h.b16 %v645
    %v2741 = vunpack.c.l.b16 %v646
    %v2742 = vunpack.c.h.b16 %v646
    %v2743 = vunpack.c.l.b16 %v647
    %v2744 = vunpack.c.h.b16 %v647
    %v2745 = vunpack.c.l.b16 %v648
    %v2746 = vunpack.c.h.b16 %v648
    %v2747 = vunpack.c.l.b16 %v649
    %v2748 = vunpack.c.h.b16 %v649
    %v2749 = vunpack.c.l.b16 %v650
    %v2750 = vunpack.c.h.b16 %v650
    %v2751 = vunpack.c.l.b16 %v651
    %v2752 = vunpack.c.h.b16 %v651
    %v2753 = vunpack.c.l.b16 %v652
    %v2754 = vunpack.c.h.b16 %v652
    %v2755 = vunpack.c.l.b16 %v653
    %v2756 = vunpack.c.h.b16 %v653
    %v2757 = vunpack.c.l.b16 %v654
    %v2758 = vunpack.c.h.b16 %v654
    %v2759 = vunpack.c.l.b16 %v655
    %v2760 = vunpack.c.h.b16 %v655
    %v2761 = vunpack.c.l.b16 %v656
    %v2762 = vunpack.c.h.b16 %v656
    %v2763 = vunpack.c.l.b16 %v657
    %v2764 = vunpack.c.h.b16 %v657
    %v2765 = vunpack.c.l.b16 %v658
    %v2766 = vunpack.c.h.b16 %v658
    %v2767 = vunpack.c.l.b16 %v659
    %v2768 = vunpack.c.h.b16 %v659
    %v2769 = vunpack.c.l.b16 %v660
    %v2770 = vunpack.c.h.b16 %v660
    %v2771 = vunpack.c.l.b16 %v661
    %v2772 = vunpack.c.h.b16 %v661
    %v2773 = vunpack.c.l.b16 %v662
    %v2774 = vunpack.c.h.b16 %v662
    %v2775 = vunpack.c.l.b16 %v663
    %v2776 = vunpack.c.h.b16 %v663
    %v2777 = vunpack.c.l.b16 %v664
    %v2778 = vunpack.c.h.b16 %v664
    %v2779 = vunpack.c.l.b16 %v665
    %v2780 = vunpack.c.h.b16 %v665
    %v2781 = vunpack.c.l.b16 %v666
    %v2782 = vunpack.c.h.b16 %v666
    %v2783 = vunpack.c.l.b16 %v667
    %v2784 = vunpack.c.h.b16 %v667
    %v2785 = vunpack.c.l.b16 %v668
    %v2786 = vunpack.c.h.b16 %v668
    %v2787 = vunpack.c.l.b16 %v669
    %v2788 = vunpack.c.h.b16 %v669
    %v2789 = vunpack.c.l.b16 %v670
    %v2790 = vunpack.c.h.b16 %v670
    %v2791 = vunpack.c.l.b16 %v671
    %v2792 = vunpack.c.h.b16 %v671
    %v2793 = vunpack.c.l.b16 %v672
    %v2794 = vunpack.c.h.b16 %v672
    %v2795 = vunpack.c.l.b16 %v673
    %v2796 = vunpack.c.h.b16 %v673
    %v2797 = vunpack.c.l.b16 %v674
    %v2798 = vunpack.c.h.b16 %v674
    %v2799 = vunpack.c.l.b16 %v675
    %v2800 = vunpack.c.h.b16 %v675
    %v2801 = vunpack.c.l.b16 %v676
    %v2802 = vunpack.c.h.b16 %v676
    %v2803 = vunpack.c.l.b16 %v677
    %v2804 = vunpack.c.h.b16 %v677
    %v2805 = vunpack.c.l.b16 %v678
    %v2806 = vunpack.c.h.b16 %v678
    %v2807 = vunpack.c.l.b16 %v679
    %v2808 = vunpack.c.h.b16 %v679
    %v2809 = vunpack.c.l.b16 %v680
    %v2810 = vunpack.c.h.b16 %v680
    %v2811 = vunpack.c.l.b16 %v681
    %v2812 = vunpack.c.h.b16 %v681
    %v2813 = vunpack.c.l.b16 %v682
    %v2814 = vunpack.c.h.b16 %v682
    %v2815 = vunpack.c.l.b16 %v683
    %v2816 = vunpack.c.h.b16 %v683
    %v2817 = vunpack.c.l.b16 %v684
    %v2818 = vunpack.c.h.b16 %v684
    %v2819 = vunpack.c.l.b16 %v685
    %v2820 = vunpack.c.h.b16 %v685
    %v2821 = vunpack.c.l.b16 %v686
    %v2822 = vunpack.c.h.b16 %v686
    %v2823 = vunpack.c.l.b16 %v687
    %v2824 = vunpack.c.h.b16 %v687
    %v2825 = vunpack.c.l.b16 %v688
    %v2826 = vunpack.c.h.b16 %v688
    %v2827 = vunpack.c.l.b16 %v689
    %v2828 = vunpack.c.h.b16 %v689
    %v2829 = vunpack.c.l.b16 %v690
    %v2830 = vunpack.c.h.b16 %v690
    %v2831 = vunpack.c.l.b16 %v691
    %v2832 = vunpack.c.h.b16 %v691
    %v2833 = vunpack.c.l.b16 %v692
    %v2834 = vunpack.c.h.b16 %v692
    %v2835 = vunpack.c.l.b16 %v693
    %v2836 = vunpack.c.h.b16 %v693
    %v2837 = vunpack.c.l.b16 %v694
    %v2838 = vunpack.c.h.b16 %v694
    %v2839 = vunpack.c.l.b16 %v695
    %v2840 = vunpack.c.h.b16 %v695
    %v2841 = vunpack.c.l.b16 %v696
    %v2842 = vunpack.c.h.b16 %v696
    %v2843 = vunpack.c.l.b16 %v697
    %v2844 = vunpack.c.h.b16 %v697
    %v2845 = vunpack.c.l.b16 %v698
    %v2846 = vunpack.c.h.b16 %v698
    %v2847 = vunpack.c.l.b16 %v699
    %v2848 = vunpack.c.h.b16 %v699
    %v2849 = vunpack.c.l.b16 %v700
    %v2850 = vunpack.c.h.b16 %v700
    %v2851 = vunpack.c.l.b16 %v701
    %v2852 = vunpack.c.h.b16 %v701
    %v2853 = vunpack.c.l.b16 %v702
    %v2854 = vunpack.c.h.b16 %v702
    %v2855 = vunpack.c.l.b16 %v703
    %v2856 = vunpack.c.h.b16 %v703
    %v2857 = vunpack.c.l.b16 %v704
    %v2858 = vunpack.c.h.b16 %v704
    %v2859 = vunpack.c.l.b16 %v705
    %v2860 = vunpack.c.h.b16 %v705
    %v2861 = vunpack.c.l.b16 %v706
    %v2862 = vunpack.c.h.b16 %v706
    %v2863 = vunpack.c.l.b16 %v707
    %v2864 = vunpack.c.h.b16 %v707
    %v2865 = vunpack.c.l.b16 %v708
    %v2866 = vunpack.c.h.b16 %v708
    %v2867 = vunpack.c.l.b16 %v709
    %v2868 = vunpack.c.h.b16 %v709
    %v2869 = vunpack.c.l.b16 %v710
    %v2870 = vunpack.c.h.b16 %v710
    %v2871 = vunpack.c.l.b16 %v711
    %v2872 = vunpack.c.h.b16 %v711
    %v2873 = vunpack.c.l.b16 %v712
    %v2874 = vunpack.c.h.b16 %v712
    %v2875 = vunpack.c.l.b16 %v713
    %v2876 = vunpack.c.h.b16 %v713
    %v2877 = vunpack.c.l.b16 %v714
    %v2878 = vunpack.c.h.b16 %v714
    %v2879 = vunpack.c.l.b16 %v715
    %v2880 = vunpack.c.h.b16 %v715
    %v2881 = vunpack.c.l.b16 %v716
    %v2882 = vunpack.c.h.b16 %v716
    %v2883 = vunpack.c.l.b16 %v717
    %v2884 = vunpack.c.h.b16 %v717
    %v2885 = vunpack.c.l.b16 %v718
    %v2886 = vunpack.c.h.b16 %v718
    %v2887 = vunpack.c.l.b16 %v719
    %v2888 = vunpack.c.h.b16 %v719
    %v2889 = vunpack.c.l.b16 %v720
    %v2890 = vunpack.c.h.b16 %v720
    %v2891 = vunpack.c.l.b16 %v721
    %v2892 = vunpack.c.h.b16 %v721
    %v2893 = vunpack.c.l.b16 %v722
    %v2894 = vunpack.c.h.b16 %v722
    %v2895 = vunpack.c.l.b16 %v723
    %v2896 = vunpack.c.h.b16 %v723
    %v2897 = vunpack.c.l.b16 %v724
    %v2898 = vunpack.c.h.b16 %v724
    %v2899 = vunpack.c.l.b16 %v725
    %v2900 = vunpack.c.h.b16 %v725
    %v2901 = vunpack.c.l.b16 %v726
    %v2902 = vunpack.c.h.b16 %v726
    %v2903 = vunpack.c.l.b16 %v727
    %v2904 = vunpack.c.h.b16 %v727
    %v2905 = vunpack.c.l.b16 %v728
    %v2906 = vunpack.c.h.b16 %v728
    %v2907 = vunpack.c.l.b16 %v729
    %v2908 = vunpack.c.h.b16 %v729
    %v2909 = vunpack.c.l.b16 %v730
    %v2910 = vunpack.c.h.b16 %v730
    %v2911 = vunpack.c.l.b16 %v731
    %v2912 = vunpack.c.h.b16 %v731
    %v2913 = vunpack.c.l.b16 %v732
    %v2914 = vunpack.c.h.b16 %v732
    %v2915 = vunpack.c.l.b16 %v733
    %v2916 = vunpack.c.h.b16 %v733
    %v2917 = vunpack.c.l.b16 %v734
    %v2918 = vunpack.c.h.b16 %v734
    %v2919 = vunpack.c.l.b16 %v735
    %v2920 = vunpack.c.h.b16 %v735
    %v2921 = vunpack.c.l.b16 %v736
    %v2922 = vunpack.c.h.b16 %v736
    %v2923 = vunpack.c.l.b16 %v737
    %v2924 = vunpack.c.h.b16 %v737
    %v2925 = vunpack.c.l.b16 %v738
    %v2926 = vunpack.c.h.b16 %v738
    %v2927 = vunpack.c.l.b16 %v739
    %v2928 = vunpack.c.h.b16 %v739
    %v2929 = vunpack.c.l.b16 %v740
    %v2930 = vunpack.c.h.b16 %v740
    %v2931 = vunpack.c.l.b16 %v741
    %v2932 = vunpack.c.h.b16 %v741
    %v2933 = vunpack.c.l.b16 %v742
    %v2934 = vunpack.c.h.b16 %v742
    %v2935 = vunpack.c.l.b16 %v743
    %v2936 = vunpack.c.h.b16 %v743
    %v2937 = vunpack.c.l.b16 %v744
    %v2938 = vunpack.c.h.b16 %v744
    %v2939 = vunpack.c.l.b16 %v745
    %v2940 = vunpack.c.h.b16 %v745
    %v2941 = vunpack.c.l.b16 %v746
    %v2942 = vunpack.c.h.b16 %v746
    %v2943 = vunpack.c.l.b16 %v747
    %v2944 = vunpack.c.h.b16 %v747
    %v2945 = vunpack.c.l.b16 %v748
    %v2946 = vunpack.c.h.b16 %v748
    %v2947 = vpack.c.b16 %v1927, %v1923
    %v2948 = vpack.c.b16 %v1928, %v1924
    %v2949 = vpack.c.b16 %v1929, %v1925
    %v2950 = vpack.c.b16 %v1930, %v1926
    %v2951 = vpack.c.b16 %v1935, %v1931
    %v2952 = vpack.c.b16 %v1936, %v1932
    %v2953 = vpack.c.b16 %v1937, %v1933
    %v2954 = vpack.c.b16 %v1938, %v1934
    %v2955 = vpack.c.b16 %v1943, %v1939
    %v2956 = vpack.c.b16 %v1944, %v1940
    %v2957 = vpack.c.b16 %v1945, %v1941
    %v2958 = vpack.c.b16 %v1946, %v1942
    %v2959 = vpack.c.b16 %v1951, %v1947
    %v2960 = vpack.c.b16 %v1952, %v1948
    %v2961 = vpack.c.b16 %v1953, %v1949
    %v2962 = vpack.c.b16 %v1954, %v1950
    %v2963 = vpack.c.b16 %v1959, %v1955
    %v2964 = vpack.c.b16 %v1960, %v1956
    %v2965 = vpack.c.b16 %v1961, %v1957
    %v2966 = vpack.c.b16 %v1962, %v1958
    %v2967 = vpack.c.b16 %v1967, %v1963
    %v2968 = vpack.c.b16 %v1968, %v1964
    %v2969 = vpack.c.b16 %v1969, %v1965
    %v2970 = vpack.c.b16 %v1970, %v1966
    %v2971 = vpack.c.b16 %v1975, %v1971
    %v2972 = vpack.c.b16 %v1976, %v1972
    %v2973 = vpack.c.b16 %v1977, %v1973
    %v2974 = vpack.c.b16 %v1978, %v1974
    %v2975 = vpack.c.b16 %v1983, %v1979
    %v2976 = vpack.c.b16 %v1984, %v1980
    %v2977 = vpack.c.b16 %v1985, %v1981
    %v2978 = vpack.c.b16 %v1986, %v1982
    %v2979 = vpack.c.b16 %v1991, %v1987
    %v2980 = vpack.c.b16 %v1992, %v1988
    %v2981 = vpack.c.b16 %v1993, %v1989
    %v2982 = vpack.c.b16 %v1994, %v1990
    %v2983 = vpack.c.b16 %v1999, %v1995
    %v2984 = vpack.c.b16 %v2000, %v1996
    %v2985 = vpack.c.b16 %v2001, %v1997
    %v2986 = vpack.c.b16 %v2002, %v1998
    %v2987 = vpack.c.b16 %v2007, %v2003
    %v2988 = vpack.c.b16 %v2008, %v2004
    %v2989 = vpack.c.b16 %v2009, %v2005
    %v2990 = vpack.c.b16 %v2010, %v2006
    %v2991 = vpack.c.b16 %v2015, %v2011
    %v2992 = vpack.c.b16 %v2016, %v2012
    %v2993 = vpack.c.b16 %v2017, %v2013
    %v2994 = vpack.c.b16 %v2018, %v2014
    %v2995 = vpack.c.b16 %v2023, %v2019
    %v2996 = vpack.c.b16 %v2024, %v2020
    %v2997 = vpack.c.b16 %v2025, %v2021
    %v2998 = vpack.c.b16 %v2026, %v2022
    %v2999 = vpack.c.b16 %v2031, %v2027
    %v3000 = vpack.c.b16 %v2032, %v2028
    %v3001 = vpack.c.b16 %v2033, %v2029
    %v3002 = vpack.c.b16 %v2034, %v2030
    %v3003 = vpack.c.b16 %v2039, %v2035
    %v3004 = vpack.c.b16 %v2040, %v2036
    %v3005 = vpack.c.b16 %v2041, %v2037
    %v3006 = vpack.c.b16 %v2042, %v2038
    %v3007 = vpack.c.b16 %v2047, %v2043
    %v3008 = vpack.c.b16 %v2048, %v2044
    %v3009 = vpack.c.b16 %v2049, %v2045
    %v3010 = vpack.c.b16 %v2050, %v2046
    %v3011 = vpack.c.b16 %v2055, %v2051
    %v3012 = vpack.c.b16 %v2056, %v2052
    %v3013 = vpack.c.b16 %v2057, %v2053
    %v3014 = vpack.c.b16 %v2058, %v2054
    %v3015 = vpack.c.b16 %v2063, %v2059
    %v3016 = vpack.c.b16 %v2064, %v2060
    %v3017 = vpack.c.b16 %v2065, %v2061
    %v3018 = vpack.c.b16 %v2066, %v2062
    %v3019 = vpack.c.b16 %v2071, %v2067
    %v3020 = vpack.c.b16 %v2072, %v2068
    %v3021 = vpack.c.b16 %v2073, %v2069
    %v3022 = vpack.c.b16 %v2074, %v2070
    %v3023 = vpack.c.b16 %v2079, %v2075
    %v3024 = vpack.c.b16 %v2080, %v2076
    %v3025 = vpack.c.b16 %v2081, %v2077
    %v3026 = vpack.c.b16 %v2082, %v2078
    %v3027 = vpack.c.b16 %v2087, %v2083
    %v3028 = vpack.c.b16 %v2088, %v2084
    %v3029 = vpack.c.b16 %v2089, %v2085
    %v3030 = vpack.c.b16 %v2090, %v2086
    %v3031 = vpack.c.b16 %v2095, %v2091
    %v3032 = vpack.c.b16 %v2096, %v2092
    %v3033 = vpack.c.b16 %v2097, %v2093
    %v3034 = vpack.c.b16 %v2098, %v2094
    %v3035 = vpack.c.b16 %v2103, %v2099
    %v3036 = vpack.c.b16 %v2104, %v2100
    %v3037 = vpack.c.b16 %v2105, %v2101
    %v3038 = vpack.c.b16 %v2106, %v2102
    %v3039 = vpack.c.b16 %v2111, %v2107
    %v3040 = vpack.c.b16 %v2112, %v2108
    %v3041 = vpack.c.b16 %v2113, %v2109
    %v3042 = vpack.c.b16 %v2114, %v2110
    %v3043 = vpack.c.b16 %v2119, %v2115
    %v3044 = vpack.c.b16 %v2120, %v2116
    %v3045 = vpack.c.b16 %v2121, %v2117
    %v3046 = vpack.c.b16 %v2122, %v2118
    %v3047 = vpack.c.b16 %v2127, %v2123
    %v3048 = vpack.c.b16 %v2128, %v2124
    %v3049 = vpack.c.b16 %v2129, %v2125
    %v3050 = vpack.c.b16 %v2130, %v2126
    %v3051 = vpack.c.b16 %v2135, %v2131
    %v3052 = vpack.c.b16 %v2136, %v2132
    %v3053 = vpack.c.b16 %v2137, %v2133
    %v3054 = vpack.c.b16 %v2138, %v2134
    %v3055 = vpack.c.b16 %v2143, %v2139
    %v3056 = vpack.c.b16 %v2144, %v2140
    %v3057 = vpack.c.b16 %v2145, %v2141
    %v3058 = vpack.c.b16 %v2146, %v2142
    %v3059 = vpack.c.b16 %v2151, %v2147
    %v3060 = vpack.c.b16 %v2152, %v2148
    %v3061 = vpack.c.b16 %v2153, %v2149
    %v3062 = vpack.c.b16 %v2154, %v2150
    %v3063 = vpack.c.b16 %v2159, %v2155
    %v3064 = vpack.c.b16 %v2160, %v2156
    %v3065 = vpack.c.b16 %v2161, %v2157
    %v3066 = vpack.c.b16 %v2162, %v2158
    %v3067 = vpack.c.b16 %v2167, %v2163
    %v3068 = vpack.c.b16 %v2168, %v2164
    %v3069 = vpack.c.b16 %v2169, %v2165
    %v3070 = vpack.c.b16 %v2170, %v2166
    %v3071 = vpack.c.b16 %v2175, %v2171
    %v3072 = vpack.c.b16 %v2176, %v2172
    %v3073 = vpack.c.b16 %v2177, %v2173
    %v3074 = vpack.c.b16 %v2178, %v2174
    %v3075 = vpack.c.b16 %v2183, %v2179
    %v3076 = vpack.c.b16 %v2184, %v2180
    %v3077 = vpack.c.b16 %v2185, %v2181
    %v3078 = vpack.c.b16 %v2186, %v2182
    %v3079 = vpack.c.b16 %v2191, %v2187
    %v3080 = vpack.c.b16 %v2192, %v2188
    %v3081 = vpack.c.b16 %v2193, %v2189
    %v3082 = vpack.c.b16 %v2194, %v2190
    %v3083 = vpack.c.b16 %v2199, %v2195
    %v3084 = vpack.c.b16 %v2200, %v2196
    %v3085 = vpack.c.b16 %v2201, %v2197
    %v3086 = vpack.c.b16 %v2202, %v2198
    %v3087 = vpack.c.b16 %v2207, %v2203
    %v3088 = vpack.c.b16 %v2208, %v2204
    %v3089 = vpack.c.b16 %v2209, %v2205
    %v3090 = vpack.c.b16 %v2210, %v2206
    %v3091 = vpack.c.b16 %v2215, %v2211
    %v3092 = vpack.c.b16 %v2216, %v2212
    %v3093 = vpack.c.b16 %v2217, %v2213
    %v3094 = vpack.c.b16 %v2218, %v2214
    %v3095 = vpack.c.b16 %v2223, %v2219
    %v3096 = vpack.c.b16 %v2224, %v2220
    %v3097 = vpack.c.b16 %v2225, %v2221
    %v3098 = vpack.c.b16 %v2226, %v2222
    %v3099 = vpack.c.b16 %v2231, %v2227
    %v3100 = vpack.c.b16 %v2232, %v2228
    %v3101 = vpack.c.b16 %v2233, %v2229
    %v3102 = vpack.c.b16 %v2234, %v2230
    %v3103 = vpack.c.b16 %v2239, %v2235
    %v3104 = vpack.c.b16 %v2240, %v2236
    %v3105 = vpack.c.b16 %v2241, %v2237
    %v3106 = vpack.c.b16 %v2242, %v2238
    %v3107 = vpack.c.b16 %v2247, %v2243
    %v3108 = vpack.c.b16 %v2248, %v2244
    %v3109 = vpack.c.b16 %v2249, %v2245
    %v3110 = vpack.c.b16 %v2250, %v2246
    %v3111 = vpack.c.b16 %v2255, %v2251
    %v3112 = vpack.c.b16 %v2256, %v2252
    %v3113 = vpack.c.b16 %v2257, %v2253
    %v3114 = vpack.c.b16 %v2258, %v2254
    %v3115 = vpack.c.b16 %v2263, %v2259
    %v3116 = vpack.c.b16 %v2264, %v2260
    %v3117 = vpack.c.b16 %v2265, %v2261
    %v3118 = vpack.c.b16 %v2266, %v2262
    %v3119 = vpack.c.b16 %v2271, %v2267
    %v3120 = vpack.c.b16 %v2272, %v2268
    %v3121 = vpack.c.b16 %v2273, %v2269
    %v3122 = vpack.c.b16 %v2274, %v2270
    %v3123 = vpack.c.b16 %v2279, %v2275
    %v3124 = vpack.c.b16 %v2280, %v2276
    %v3125 = vpack.c.b16 %v2281, %v2277
    %v3126 = vpack.c.b16 %v2282, %v2278
    %v3127 = vpack.c.b16 %v2287, %v2283
    %v3128 = vpack.c.b16 %v2288, %v2284
    %v3129 = vpack.c.b16 %v2289, %v2285
    %v3130 = vpack.c.b16 %v2290, %v2286
    %v3131 = vpack.c.b16 %v2295, %v2291
    %v3132 = vpack.c.b16 %v2296, %v2292
    %v3133 = vpack.c.b16 %v2297, %v2293
    %v3134 = vpack.c.b16 %v2298, %v2294
    %v3135 = vpack.c.b16 %v2303, %v2299
    %v3136 = vpack.c.b16 %v2304, %v2300
    %v3137 = vpack.c.b16 %v2305, %v2301
    %v3138 = vpack.c.b16 %v2306, %v2302
    %v3139 = vpack.c.b16 %v2311, %v2307
    %v3140 = vpack.c.b16 %v2312, %v2308
    %v3141 = vpack.c.b16 %v2313, %v2309
    %v3142 = vpack.c.b16 %v2314, %v2310
    %v3143 = vpack.c.b16 %v2319, %v2315
    %v3144 = vpack.c.b16 %v2320, %v2316
    %v3145 = vpack.c.b16 %v2321, %v2317
    %v3146 = vpack.c.b16 %v2322, %v2318
    %v3147 = vpack.c.b16 %v2327, %v2323
    %v3148 = vpack.c.b16 %v2328, %v2324
    %v3149 = vpack.c.b16 %v2329, %v2325
    %v3150 = vpack.c.b16 %v2330, %v2326
    %v3151 = vpack.c.b16 %v2335, %v2331
    %v3152 = vpack.c.b16 %v2336, %v2332
    %v3153 = vpack.c.b16 %v2337, %v2333
    %v3154 = vpack.c.b16 %v2338, %v2334
    %v3155 = vpack.c.b16 %v2343, %v2339
    %v3156 = vpack.c.b16 %v2344, %v2340
    %v3157 = vpack.c.b16 %v2345, %v2341
    %v3158 = vpack.c.b16 %v2346, %v2342
    %v3159 = vpack.c.b16 %v2351, %v2347
    %v3160 = vpack.c.b16 %v2352, %v2348
    %v3161 = vpack.c.b16 %v2353, %v2349
    %v3162 = vpack.c.b16 %v2354, %v2350
    %v3163 = vpack.c.b16 %v2359, %v2355
    %v3164 = vpack.c.b16 %v2360, %v2356
    %v3165 = vpack.c.b16 %v2361, %v2357
    %v3166 = vpack.c.b16 %v2362, %v2358
    %v3167 = vpack.c.b16 %v2367, %v2363
    %v3168 = vpack.c.b16 %v2368, %v2364
    %v3169 = vpack.c.b16 %v2369, %v2365
    %v3170 = vpack.c.b16 %v2370, %v2366
    %v3171 = vpack.c.b16 %v2375, %v2371
    %v3172 = vpack.c.b16 %v2376, %v2372
    %v3173 = vpack.c.b16 %v2377, %v2373
    %v3174 = vpack.c.b16 %v2378, %v2374
    %v3175 = vpack.c.b16 %v2383, %v2379
    %v3176 = vpack.c.b16 %v2384, %v2380
    %v3177 = vpack.c.b16 %v2385, %v2381
    %v3178 = vpack.c.b16 %v2386, %v2382
    %v3179 = vpack.c.b16 %v2391, %v2387
    %v3180 = vpack.c.b16 %v2392, %v2388
    %v3181 = vpack.c.b16 %v2393, %v2389
    %v3182 = vpack.c.b16 %v2394, %v2390
    %v3183 = vpack.c.b16 %v2399, %v2395
    %v3184 = vpack.c.b16 %v2400, %v2396
    %v3185 = vpack.c.b16 %v2401, %v2397
    %v3186 = vpack.c.b16 %v2402, %v2398
    %v3187 = vpack.c.b16 %v2407, %v2403
    %v3188 = vpack.c.b16 %v2408, %v2404
    %v3189 = vpack.c.b16 %v2409, %v2405
    %v3190 = vpack.c.b16 %v2410, %v2406
    %v3191 = vpack.c.b16 %v2415, %v2411
    %v3192 = vpack.c.b16 %v2416, %v2412
    %v3193 = vpack.c.b16 %v2417, %v2413
    %v3194 = vpack.c.b16 %v2418, %v2414
    %v3195 = vpack.c.b16 %v2423, %v2419
    %v3196 = vpack.c.b16 %v2424, %v2420
    %v3197 = vpack.c.b16 %v2425, %v2421
    %v3198 = vpack.c.b16 %v2426, %v2422
    %v3199 = vpack.c.b16 %v2431, %v2427
    %v3200 = vpack.c.b16 %v2432, %v2428
    %v3201 = vpack.c.b16 %v2433, %v2429
    %v3202 = vpack.c.b16 %v2434, %v2430
    %v3203 = vpack.c.b16 %v2439, %v2435
    %v3204 = vpack.c.b16 %v2440, %v2436
    %v3205 = vpack.c.b16 %v2441, %v2437
    %v3206 = vpack.c.b16 %v2442, %v2438
    %v3207 = vpack.c.b16 %v2447, %v2443
    %v3208 = vpack.c.b16 %v2448, %v2444
    %v3209 = vpack.c.b16 %v2449, %v2445
    %v3210 = vpack.c.b16 %v2450, %v2446
    %v3211 = vpack.c.b16 %v2455, %v2451
    %v3212 = vpack.c.b16 %v2456, %v2452
    %v3213 = vpack.c.b16 %v2457, %v2453
    %v3214 = vpack.c.b16 %v2458, %v2454
    %v3215 = vpack.c.b16 %v2463, %v2459
    %v3216 = vpack.c.b16 %v2464, %v2460
    %v3217 = vpack.c.b16 %v2465, %v2461
    %v3218 = vpack.c.b16 %v2466, %v2462
    %v3219 = vpack.c.b16 %v2471, %v2467
    %v3220 = vpack.c.b16 %v2472, %v2468
    %v3221 = vpack.c.b16 %v2473, %v2469
    %v3222 = vpack.c.b16 %v2474, %v2470
    %v3223 = vpack.c.b16 %v2479, %v2475
    %v3224 = vpack.c.b16 %v2480, %v2476
    %v3225 = vpack.c.b16 %v2481, %v2477
    %v3226 = vpack.c.b16 %v2482, %v2478
    %v3227 = vpack.c.b16 %v2487, %v2483
    %v3228 = vpack.c.b16 %v2488, %v2484
    %v3229 = vpack.c.b16 %v2489, %v2485
    %v3230 = vpack.c.b16 %v2490, %v2486
    %v3231 = vpack.c.b16 %v2495, %v2491
    %v3232 = vpack.c.b16 %v2496, %v2492
    %v3233 = vpack.c.b16 %v2497, %v2493
    %v3234 = vpack.c.b16 %v2498, %v2494
    %v3235 = vpack.c.b16 %v2503, %v2499
    %v3236 = vpack.c.b16 %v2504, %v2500
    %v3237 = vpack.c.b16 %v2505, %v2501
    %v3238 = vpack.c.b16 %v2506, %v2502
    %v3239 = vpack.c.b16 %v2511, %v2507
    %v3240 = vpack.c.b16 %v2512, %v2508
    %v3241 = vpack.c.b16 %v2513, %v2509
    %v3242 = vpack.c.b16 %v2514, %v2510
    %v3243 = vpack.c.b16 %v2519, %v2515
    %v3244 = vpack.c.b16 %v2520, %v2516
    %v3245 = vpack.c.b16 %v2521, %v2517
    %v3246 = vpack.c.b16 %v2522, %v2518
    %v3247 = vpack.c.b16 %v2527, %v2523
    %v3248 = vpack.c.b16 %v2528, %v2524
    %v3249 = vpack.c.b16 %v2529, %v2525
    %v3250 = vpack.c.b16 %v2530, %v2526
    %v3251 = vpack.c.b16 %v2535, %v2531
    %v3252 = vpack.c.b16 %v2536, %v2532
    %v3253 = vpack.c.b16 %v2537, %v2533
    %v3254 = vpack.c.b16 %v2538, %v2534
    %v3255 = vpack.c.b16 %v2543, %v2539
    %v3256 = vpack.c.b16 %v2544, %v2540
    %v3257 = vpack.c.b16 %v2545, %v2541
    %v3258 = vpack.c.b16 %v2546, %v2542
    %v3259 = vpack.c.b16 %v2551, %v2547
    %v3260 = vpack.c.b16 %v2552, %v2548
    %v3261 = vpack.c.b16 %v2553, %v2549
    %v3262 = vpack.c.b16 %v2554, %v2550
    %v3263 = vpack.c.b16 %v2559, %v2555
    %v3264 = vpack.c.b16 %v2560, %v2556
    %v3265 = vpack.c.b16 %v2561, %v2557
    %v3266 = vpack.c.b16 %v2562, %v2558
    %v3267 = vpack.c.b16 %v2567, %v2563
    %v3268 = vpack.c.b16 %v2568, %v2564
    %v3269 = vpack.c.b16 %v2569, %v2565
    %v3270 = vpack.c.b16 %v2570, %v2566
    %v3271 = vpack.c.b16 %v2575, %v2571
    %v3272 = vpack.c.b16 %v2576, %v2572
    %v3273 = vpack.c.b16 %v2577, %v2573
    %v3274 = vpack.c.b16 %v2578, %v2574
    %v3275 = vpack.c.b16 %v2583, %v2579
    %v3276 = vpack.c.b16 %v2584, %v2580
    %v3277 = vpack.c.b16 %v2585, %v2581
    %v3278 = vpack.c.b16 %v2586, %v2582
    %v3279 = vpack.c.b16 %v2591, %v2587
    %v3280 = vpack.c.b16 %v2592, %v2588
    %v3281 = vpack.c.b16 %v2593, %v2589
    %v3282 = vpack.c.b16 %v2594, %v2590
    %v3283 = vpack.c.b16 %v2599, %v2595
    %v3284 = vpack.c.b16 %v2600, %v2596
    %v3285 = vpack.c.b16 %v2601, %v2597
    %v3286 = vpack.c.b16 %v2602, %v2598
    %v3287 = vpack.c.b16 %v2607, %v2603
    %v3288 = vpack.c.b16 %v2608, %v2604
    %v3289 = vpack.c.b16 %v2609, %v2605
    %v3290 = vpack.c.b16 %v2610, %v2606
    %v3291 = vpack.c.b16 %v2615, %v2611
    %v3292 = vpack.c.b16 %v2616, %v2612
    %v3293 = vpack.c.b16 %v2617, %v2613
    %v3294 = vpack.c.b16 %v2618, %v2614
    %v3295 = vpack.c.b16 %v2623, %v2619
    %v3296 = vpack.c.b16 %v2624, %v2620
    %v3297 = vpack.c.b16 %v2625, %v2621
    %v3298 = vpack.c.b16 %v2626, %v2622
    %v3299 = vpack.c.b16 %v2631, %v2627
    %v3300 = vpack.c.b16 %v2632, %v2628
    %v3301 = vpack.c.b16 %v2633, %v2629
    %v3302 = vpack.c.b16 %v2634, %v2630
    %v3303 = vpack.c.b16 %v2639, %v2635
    %v3304 = vpack.c.b16 %v2640, %v2636
    %v3305 = vpack.c.b16 %v2641, %v2637
    %v3306 = vpack.c.b16 %v2642, %v2638
    %v3307 = vpack.c.b16 %v2647, %v2643
    %v3308 = vpack.c.b16 %v2648, %v2644
    %v3309 = vpack.c.b16 %v2649, %v2645
    %v3310 = vpack.c.b16 %v2650, %v2646
    %v3311 = vpack.c.b16 %v2655, %v2651
    %v3312 = vpack.c.b16 %v2656, %v2652
    %v3313 = vpack.c.b16 %v2657, %v2653
    %v3314 = vpack.c.b16 %v2658, %v2654
    %v3315 = vpack.c.b16 %v2663, %v2659
    %v3316 = vpack.c.b16 %v2664, %v2660
    %v3317 = vpack.c.b16 %v2665, %v2661
    %v3318 = vpack.c.b16 %v2666, %v2662
    %v3319 = vpack.c.b16 %v2671, %v2667
    %v3320 = vpack.c.b16 %v2672, %v2668
    %v3321 = vpack.c.b16 %v2673, %v2669
    %v3322 = vpack.c.b16 %v2674, %v2670
    %v3323 = vpack.c.b16 %v2679, %v2675
    %v3324 = vpack.c.b16 %v2680, %v2676
    %v3325 = vpack.c.b16 %v2681, %v2677
    %v3326 = vpack.c.b16 %v2682, %v2678
    %v3327 = vpack.c.b16 %v2687, %v2683
    %v3328 = vpack.c.b16 %v2688, %v2684
    %v3329 = vpack.c.b16 %v2689, %v2685
    %v3330 = vpack.c.b16 %v2690, %v2686
    %v3331 = vpack.c.b16 %v2695, %v2691
    %v3332 = vpack.c.b16 %v2696, %v2692
    %v3333 = vpack.c.b16 %v2697, %v2693
    %v3334 = vpack.c.b16 %v2698, %v2694
    %v3335 = vpack.c.b16 %v2703, %v2699
    %v3336 = vpack.c.b16 %v2704, %v2700
    %v3337 = vpack.c.b16 %v2705, %v2701
    %v3338 = vpack.c.b16 %v2706, %v2702
    %v3339 = vpack.c.b16 %v2711, %v2707
    %v3340 = vpack.c.b16 %v2712, %v2708
    %v3341 = vpack.c.b16 %v2713, %v2709
    %v3342 = vpack.c.b16 %v2714, %v2710
    %v3343 = vpack.c.b16 %v2719, %v2715
    %v3344 = vpack.c.b16 %v2720, %v2716
    %v3345 = vpack.c.b16 %v2721, %v2717
    %v3346 = vpack.c.b16 %v2722, %v2718
    %v3347 = vpack.c.b16 %v2727, %v2723
    %v3348 = vpack.c.b16 %v2728, %v2724
    %v3349 = vpack.c.b16 %v2729, %v2725
    %v3350 = vpack.c.b16 %v2730, %v2726
    %v3351 = vpack.c.b16 %v2735, %v2731
    %v3352 = vpack.c.b16 %v2736, %v2732
    %v3353 = vpack.c.b16 %v2737, %v2733
    %v3354 = vpack.c.b16 %v2738, %v2734
    %v3355 = vpack.c.b16 %v2743, %v2739
    %v3356 = vpack.c.b16 %v2744, %v2740
    %v3357 = vpack.c.b16 %v2745, %v2741
    %v3358 = vpack.c.b16 %v2746, %v2742
    %v3359 = vpack.c.b16 %v2751, %v2747
    %v3360 = vpack.c.b16 %v2752, %v2748
    %v3361 = vpack.c.b16 %v2753, %v2749
    %v3362 = vpack.c.b16 %v2754, %v2750
    %v3363 = vpack.c.b16 %v2759, %v2755
    %v3364 = vpack.c.b16 %v2760, %v2756
    %v3365 = vpack.c.b16 %v2761, %v2757
    %v3366 = vpack.c.b16 %v2762, %v2758
    %v3367 = vpack.c.b16 %v2767, %v2763
    %v3368 = vpack.c.b16 %v2768, %v2764
    %v3369 = vpack.c.b16 %v2769, %v2765
    %v3370 = vpack.c.b16 %v2770, %v2766
    %v3371 = vpack.c.b16 %v2775, %v2771
    %v3372 = vpack.c.b16 %v2776, %v2772
    %v3373 = vpack.c.b16 %v2777, %v2773
    %v3374 = vpack.c.b16 %v2778, %v2774
    %v3375 = vpack.c.b16 %v2783, %v2779
    %v3376 = vpack.c.b16 %v2784, %v2780
    %v3377 = vpack.c.b16 %v2785, %v2781
    %v3378 = vpack.c.b16 %v2786, %v2782
    %v3379 = vpack.c.b16 %v2791, %v2787
    %v3380 = vpack.c.b16 %v2792, %v2788
    %v3381 = vpack.c.b16 %v2793, %v2789
    %v3382 = vpack.c.b16 %v2794, %v2790
    %v3383 = vpack.c.b16 %v2799, %v2795
    %v3384 = vpack.c.b16 %v2800, %v2796
    %v3385 = vpack.c.b16 %v2801, %v2797
    %v3386 = vpack.c.b16 %v2802, %v2798
    %v3387 = vpack.c.b16 %v2807, %v2803
    %v3388 = vpack.c.b16 %v2808, %v2804
    %v3389 = vpack.c.b16 %v2809, %v2805
    %v3390 = vpack.c.b16 %v2810, %v2806
    %v3391 = vpack.c.b16 %v2815, %v2811
    %v3392 = vpack.c.b16 %v2816, %v2812
    %v3393 = vpack.c.b16 %v2817, %v2813
    %v3394 = vpack.c.b16 %v2818, %v2814
    %v3395 = vpack.c.b16 %v2823, %v2819
    %v3396 = vpack.c.b16 %v2824, %v2820
    %v3397 = vpack.c.b16 %v2825, %v2821
    %v3398 = vpack.c.b16 %v2826, %v2822
    %v3399 = vpack.c.b16 %v2831, %v2827
    %v3400 = vpack.c.b16 %v2832, %v2828
    %v3401 = vpack.c.b16 %v2833, %v2829
    %v3402 = vpack.c.b16 %v2834, %v2830
    %v3403 = vpack.c.b16 %v2839, %v2835
    %v3404 = vpack.c.b16 %v2840, %v2836
    %v3405 = vpack.c.b16 %v2841, %v2837
    %v3406 = vpack.c.b16 %v2842, %v2838
    %v3407 = vpack.c.b16 %v2847, %v2843
    %v3408 = vpack.c.b16 %v2848, %v2844
    %v3409 = vpack.c.b16 %v2849, %v2845
    %v3410 = vpack.c.b16 %v2850, %v2846
    %v3411 = vpack.c.b16 %v2855, %v2851
    %v3412 = vpack.c.b16 %v2856, %v2852
    %v3413 = vpack.c.b16 %v2857, %v2853
    %v3414 = vpack.c.b16 %v2858, %v2854
    %v3415 = vpack.c.b16 %v2863, %v2859
    %v3416 = vpack.c.b16 %v2864, %v2860
    %v3417 = vpack.c.b16 %v2865, %v2861
    %v3418 = vpack.c.b16 %v2866, %v2862
    %v3419 = vpack.c.b16 %v2871, %v2867
    %v3420 = vpack.c.b16 %v2872, %v2868
    %v3421 = vpack.c.b16 %v2873, %v2869
    %v3422 = vpack.c.b16 %v2874, %v2870
    %v3423 = vpack.c.b16 %v2879, %v2875
    %v3424 = vpack.c.b16 %v2880, %v2876
    %v3425 = vpack.c.b16 %v2881, %v2877
    %v3426 = vpack.c.b16 %v2882, %v2878
    %v3427 = vpack.c.b16 %v2887, %v2883
    %v3428 = vpack.c.b16 %v2888, %v2884
    %v3429 = vpack.c.b16 %v2889, %v2885
    %v3430 = vpack.c.b16 %v2890, %v2886
    %v3431 = vpack.c.b16 %v2895, %v2891
    %v3432 = vpack.c.b16 %v2896, %v2892
    %v3433 = vpack.c.b16 %v2897, %v2893
    %v3434 = vpack.c.b16 %v2898, %v2894
    %v3435 = vpack.c.b16 %v2903, %v2899
    %v3436 = vpack.c.b16 %v2904, %v2900
    %v3437 = vpack.c.b16 %v2905, %v2901
    %v3438 = vpack.c.b16 %v2906, %v2902
    %v3439 = vpack.c.b16 %v2911, %v2907
    %v3440 = vpack.c.b16 %v2912, %v2908
    %v3441 = vpack.c.b16 %v2913, %v2909
    %v3442 = vpack.c.b16 %v2914, %v2910
    %v3443 = vpack.c.b16 %v2919, %v2915
    %v3444 = vpack.c.b16 %v2920, %v2916
    %v3445 = vpack.c.b16 %v2921, %v2917
    %v3446 = vpack.c.b16 %v2922, %v2918
    %v3447 = vpack.c.b16 %v2927, %v2923
    %v3448 = vpack.c.b16 %v2928, %v2924
    %v3449 = vpack.c.b16 %v2929, %v2925
    %v3450 = vpack.c.b16 %v2930, %v2926
    %v3451 = vpack.c.b16 %v2935, %v2931
    %v3452 = vpack.c.b16 %v2936, %v2932
    %v3453 = vpack.c.b16 %v2937, %v2933
    %v3454 = vpack.c.b16 %v2938, %v2934
    %v3455 = vpack.c.b16 %v2943, %v2939
    %v3456 = vpack.c.b16 %v2944, %v2940
    %v3457 = vpack.c.b16 %v2945, %v2941
    %v3458 = vpack.c.b16 %v2946, %v2942
    %3971 = vmatprep.subr.bf16.mxu0 %v2976
    %3972 = vmatpush1.bf16.msra.mxu0 %v2975
    %3973 = vmatprep.subr.bf16.mxu0 %v2972
    %3974 = vmatpush1.bf16.msra.mxu0 %v2971
    %3975 = vmatprep.subr.bf16.mxu0 %v2968
    %3976 = vmatpush1.bf16.msra.mxu0 %v2967
    %3977 = vmatprep.subr.bf16.mxu0 %v2964
    %3978 = vmatpush1.bf16.msra.mxu0 %v2963
    %3979 = vmatprep.subr.bf16.mxu0 %v2960
    %3980 = vmatpush1.bf16.msra.mxu0 %v2959
    %3981 = vmatprep.subr.bf16.mxu0 %v2956
    %3982 = vmatpush1.bf16.msra.mxu0 %v2955
    %3983 = vmatprep.subr.bf16.mxu0 %v2952
    %3984 = vmatpush1.bf16.msra.mxu0 %v2951
    %3985 = vmatprep.subr.bf16.mxu0 %v2948
    %3986 = vmatpush1.bf16.msra.mxu0 %v2947
    %3987 = vmatprep.subr.bf16.mxu0 %v3008
    %3988 = vmatpush2.bf16.msra.mxu0 %v3007
    %3989 = vmatprep.subr.bf16.mxu0 %v3004
    %3990 = vmatpush2.bf16.msra.mxu0 %v3003
    %3991 = vmatprep.subr.bf16.mxu0 %v3000
    %3992 = vmatpush2.bf16.msra.mxu0 %v2999
    %3993 = vmatprep.subr.bf16.mxu0 %v2996
    %3994 = vmatpush2.bf16.msra.mxu0 %v2995
    %3995 = vmatprep.subr.bf16.mxu0 %v2992
    %3996 = vmatpush2.bf16.msra.mxu0 %v2991
    %3997 = vmatprep.subr.bf16.mxu0 %v2988
    %3998 = vmatpush2.bf16.msra.mxu0 %v2987
    %3999 = vmatprep.subr.bf16.mxu0 %v2984
    %4000 = vmatpush2.bf16.msra.mxu0 %v2983
    %4001 = vmatprep.subr.bf16.mxu0 %v2980
    %4002 = vmatpush2.bf16.msra.mxu0 %v2979
    %4003 = vmatprep.mubr.bf16.mxu0 %v1156
    %4004 = vmatmul.mubr.bf16.gmra.mxu0 %v1155
    %v4005 = vpop.f32.mrf.mxu0
    %v4006 = vadd.f32 %v754, %v4005
    %v4007 = vpop.f32.mrf.mxu0
    %v4008 = vadd.f32 %v758, %v4007
    %v4009 = vpop.f32.mrf.mxu0
    %v4010 = vadd.f32 %v754, %v4009
    %v4011 = vpop.f32.mrf.mxu0
    %v4012 = vadd.f32 %v758, %v4011
    %4013 = vmatprep.mubr.bf16.mxu0 %v1172
    %4014 = vmatmul.mubr.bf16.gmra.mxu0 %v1171
    %v4015 = vpop.f32.mrf.mxu0
    %v4016 = vadd.f32 %v754, %v4015
    %v4017 = vpop.f32.mrf.mxu0
    %v4018 = vadd.f32 %v758, %v4017
    %v4019 = vpop.f32.mrf.mxu0
    %v4020 = vadd.f32 %v754, %v4019
    %v4021 = vpop.f32.mrf.mxu0
    %v4022 = vadd.f32 %v758, %v4021
    %4023 = vmatprep.mubr.bf16.mxu0 %v1188
    %4024 = vmatmul.mubr.bf16.gmra.mxu0 %v1187
    %v4025 = vpop.f32.mrf.mxu0
    %v4026 = vadd.f32 %v754, %v4025
    %v4027 = vpop.f32.mrf.mxu0
    %v4028 = vadd.f32 %v758, %v4027
    %v4029 = vpop.f32.mrf.mxu0
    %v4030 = vadd.f32 %v754, %v4029
    %v4031 = vpop.f32.mrf.mxu0
    %v4032 = vadd.f32 %v758, %v4031
    %4033 = vmatprep.mubr.bf16.mxu0 %v1204
    %4034 = vmatmul.mubr.bf16.gmra.mxu0 %v1203
    %v4035 = vpop.f32.mrf.mxu0
    %v4036 = vadd.f32 %v754, %v4035
    %v4037 = vpop.f32.mrf.mxu0
    %v4038 = vadd.f32 %v758, %v4037
    %v4039 = vpop.f32.mrf.mxu0
    %v4040 = vadd.f32 %v754, %v4039
    %v4041 = vpop.f32.mrf.mxu0
    %v4042 = vadd.f32 %v758, %v4041
    %4043 = vmatprep.mubr.bf16.mxu0 %v1220
    %4044 = vmatmul.mubr.bf16.gmra.mxu0 %v1219
    %v4045 = vpop.f32.mrf.mxu0
    %v4046 = vadd.f32 %v754, %v4045
    %v4047 = vpop.f32.mrf.mxu0
    %v4048 = vadd.f32 %v758, %v4047
    %v4049 = vpop.f32.mrf.mxu0
    %v4050 = vadd.f32 %v754, %v4049
    %v4051 = vpop.f32.mrf.mxu0
    %v4052 = vadd.f32 %v758, %v4051
    %4053 = vmatprep.mubr.bf16.mxu0 %v1236
    %4054 = vmatmul.mubr.bf16.gmra.mxu0 %v1235
    %v4055 = vpop.f32.mrf.mxu0
    %v4056 = vadd.f32 %v754, %v4055
    %v4057 = vpop.f32.mrf.mxu0
    %v4058 = vadd.f32 %v758, %v4057
    %v4059 = vpop.f32.mrf.mxu0
    %v4060 = vadd.f32 %v754, %v4059
    %v4061 = vpop.f32.mrf.mxu0
    %v4062 = vadd.f32 %v758, %v4061
    %4063 = vmatprep.mubr.bf16.mxu0 %v1252
    %4064 = vmatmul.mubr.bf16.gmra.mxu0 %v1251
    %v4065 = vpop.f32.mrf.mxu0
    %v4066 = vadd.f32 %v754, %v4065
    %v4067 = vpop.f32.mrf.mxu0
    %v4068 = vadd.f32 %v758, %v4067
    %v4069 = vpop.f32.mrf.mxu0
    %v4070 = vadd.f32 %v754, %v4069
    %v4071 = vpop.f32.mrf.mxu0
    %v4072 = vadd.f32 %v758, %v4071
    %4073 = vmatprep.mubr.bf16.mxu0 %v1268
    %4074 = vmatmul.mubr.bf16.gmra.mxu0 %v1267
    %v4075 = vpop.f32.mrf.mxu0
    %v4076 = vadd.f32 %v754, %v4075
    %v4077 = vpop.f32.mrf.mxu0
    %v4078 = vadd.f32 %v758, %v4077
    %v4079 = vpop.f32.mrf.mxu0
    %v4080 = vadd.f32 %v754, %v4079
    %v4081 = vpop.f32.mrf.mxu0
    %v4082 = vadd.f32 %v758, %v4081
    %4083 = vdwg.mxu0
    %4084 = vmatprep.subr.bf16.mxu0 %v3040
    %4085 = vmatpush1.bf16.msra.mxu0 %v3039
    %4086 = vmatprep.subr.bf16.mxu0 %v3036
    %4087 = vmatpush1.bf16.msra.mxu0 %v3035
    %4088 = vmatprep.subr.bf16.mxu0 %v3032
    %4089 = vmatpush1.bf16.msra.mxu0 %v3031
    %4090 = vmatprep.subr.bf16.mxu0 %v3028
    %4091 = vmatpush1.bf16.msra.mxu0 %v3027
    %4092 = vmatprep.subr.bf16.mxu0 %v3024
    %4093 = vmatpush1.bf16.msra.mxu0 %v3023
    %4094 = vmatprep.subr.bf16.mxu0 %v3020
    %4095 = vmatpush1.bf16.msra.mxu0 %v3019
    %4096 = vmatprep.subr.bf16.mxu0 %v3016
    %4097 = vmatpush1.bf16.msra.mxu0 %v3015
    %4098 = vmatprep.subr.bf16.mxu0 %v3012
    %4099 = vmatpush1.bf16.msra.mxu0 %v3011
    %4100 = vmatprep.subr.bf16.mxu0 %v3072
    %4101 = vmatpush2.bf16.msra.mxu0 %v3071
    %4102 = vmatprep.subr.bf16.mxu0 %v3068
    %4103 = vmatpush2.bf16.msra.mxu0 %v3067
    %4104 = vmatprep.subr.bf16.mxu0 %v3064
    %4105 = vmatpush2.bf16.msra.mxu0 %v3063
    %4106 = vmatprep.subr.bf16.mxu0 %v3060
    %4107 = vmatpush2.bf16.msra.mxu0 %v3059
    %4108 = vmatprep.subr.bf16.mxu0 %v3056
    %4109 = vmatpush2.bf16.msra.mxu0 %v3055
    %4110 = vmatprep.subr.bf16.mxu0 %v3052
    %4111 = vmatpush2.bf16.msra.mxu0 %v3051
    %4112 = vmatprep.subr.bf16.mxu0 %v3048
    %4113 = vmatpush2.bf16.msra.mxu0 %v3047
    %4114 = vmatprep.subr.bf16.mxu0 %v3044
    %4115 = vmatpush2.bf16.msra.mxu0 %v3043
    %4116 = vmatprep.mubr.bf16.mxu0 %v1158
    %4117 = vmatmul.mubr.bf16.gmra.mxu0 %v1157
    %v4118 = vpop.f32.mrf.mxu0
    %v4119 = vadd.f32 %v4006, %v4118
    %v4120 = vpop.f32.mrf.mxu0
    %v4121 = vadd.f32 %v4008, %v4120
    %v4122 = vpop.f32.mrf.mxu0
    %v4123 = vadd.f32 %v4010, %v4122
    %v4124 = vpop.f32.mrf.mxu0
    %v4125 = vadd.f32 %v4012, %v4124
    %4126 = vmatprep.mubr.bf16.mxu0 %v1174
    %4127 = vmatmul.mubr.bf16.gmra.mxu0 %v1173
    %v4128 = vpop.f32.mrf.mxu0
    %v4129 = vadd.f32 %v4016, %v4128
    %v4130 = vpop.f32.mrf.mxu0
    %v4131 = vadd.f32 %v4018, %v4130
    %v4132 = vpop.f32.mrf.mxu0
    %v4133 = vadd.f32 %v4020, %v4132
    %v4134 = vpop.f32.mrf.mxu0
    %v4135 = vadd.f32 %v4022, %v4134
    %4136 = vmatprep.mubr.bf16.mxu0 %v1190
    %4137 = vmatmul.mubr.bf16.gmra.mxu0 %v1189
    %v4138 = vpop.f32.mrf.mxu0
    %v4139 = vadd.f32 %v4026, %v4138
    %v4140 = vpop.f32.mrf.mxu0
    %v4141 = vadd.f32 %v4028, %v4140
    %v4142 = vpop.f32.mrf.mxu0
    %v4143 = vadd.f32 %v4030, %v4142
    %v4144 = vpop.f32.mrf.mxu0
    %v4145 = vadd.f32 %v4032, %v4144
    %4146 = vmatprep.mubr.bf16.mxu0 %v1206
    %4147 = vmatmul.mubr.bf16.gmra.mxu0 %v1205
    %v4148 = vpop.f32.mrf.mxu0
    %v4149 = vadd.f32 %v4036, %v4148
    %v4150 = vpop.f32.mrf.mxu0
    %v4151 = vadd.f32 %v4038, %v4150
    %v4152 = vpop.f32.mrf.mxu0
    %v4153 = vadd.f32 %v4040, %v4152
    %v4154 = vpop.f32.mrf.mxu0
    %v4155 = vadd.f32 %v4042, %v4154
    %4156 = vmatprep.mubr.bf16.mxu0 %v1222
    %4157 = vmatmul.mubr.bf16.gmra.mxu0 %v1221
    %v4158 = vpop.f32.mrf.mxu0
    %v4159 = vadd.f32 %v4046, %v4158
    %v4160 = vpop.f32.mrf.mxu0
    %v4161 = vadd.f32 %v4048, %v4160
    %v4162 = vpop.f32.mrf.mxu0
    %v4163 = vadd.f32 %v4050, %v4162
    %v4164 = vpop.f32.mrf.mxu0
    %v4165 = vadd.f32 %v4052, %v4164
    %4166 = vmatprep.mubr.bf16.mxu0 %v1238
    %4167 = vmatmul.mubr.bf16.gmra.mxu0 %v1237
    %v4168 = vpop.f32.mrf.mxu0
    %v4169 = vadd.f32 %v4056, %v4168
    %v4170 = vpop.f32.mrf.mxu0
    %v4171 = vadd.f32 %v4058, %v4170
    %v4172 = vpop.f32.mrf.mxu0
    %v4173 = vadd.f32 %v4060, %v4172
    %v4174 = vpop.f32.mrf.mxu0
    %v4175 = vadd.f32 %v4062, %v4174
    %4176 = vmatprep.mubr.bf16.mxu0 %v1254
    %4177 = vmatmul.mubr.bf16.gmra.mxu0 %v1253
    %v4178 = vpop.f32.mrf.mxu0
    %v4179 = vadd.f32 %v4066, %v4178
    %v4180 = vpop.f32.mrf.mxu0
    %v4181 = vadd.f32 %v4068, %v4180
    %v4182 = vpop.f32.mrf.mxu0
    %v4183 = vadd.f32 %v4070, %v4182
    %v4184 = vpop.f32.mrf.mxu0
    %v4185 = vadd.f32 %v4072, %v4184
    %4186 = vmatprep.mubr.bf16.mxu0 %v1270
    %4187 = vmatmul.mubr.bf16.gmra.mxu0 %v1269
    %v4188 = vpop.f32.mrf.mxu0
    %v4189 = vadd.f32 %v4076, %v4188
    %v4190 = vpop.f32.mrf.mxu0
    %v4191 = vadd.f32 %v4078, %v4190
    %v4192 = vpop.f32.mrf.mxu0
    %v4193 = vadd.f32 %v4080, %v4192
    %v4194 = vpop.f32.mrf.mxu0
    %v4195 = vadd.f32 %v4082, %v4194
    %4196 = vdwg.mxu0
    %4197 = vmatprep.subr.bf16.mxu0 %v3104
    %4198 = vmatpush1.bf16.msra.mxu0 %v3103
    %4199 = vmatprep.subr.bf16.mxu0 %v3100
    %4200 = vmatpush1.bf16.msra.mxu0 %v3099
    %4201 = vmatprep.subr.bf16.mxu0 %v3096
    %4202 = vmatpush1.bf16.msra.mxu0 %v3095
    %4203 = vmatprep.subr.bf16.mxu0 %v3092
    %4204 = vmatpush1.bf16.msra.mxu0 %v3091
    %4205 = vmatprep.subr.bf16.mxu0 %v3088
    %4206 = vmatpush1.bf16.msra.mxu0 %v3087
    %4207 = vmatprep.subr.bf16.mxu0 %v3084
    %4208 = vmatpush1.bf16.msra.mxu0 %v3083
    %4209 = vmatprep.subr.bf16.mxu0 %v3080
    %4210 = vmatpush1.bf16.msra.mxu0 %v3079
    %4211 = vmatprep.subr.bf16.mxu0 %v3076
    %4212 = vmatpush1.bf16.msra.mxu0 %v3075
    %4213 = vmatprep.subr.bf16.mxu0 %v3136
    %4214 = vmatpush2.bf16.msra.mxu0 %v3135
    %4215 = vmatprep.subr.bf16.mxu0 %v3132
    %4216 = vmatpush2.bf16.msra.mxu0 %v3131
    %4217 = vmatprep.subr.bf16.mxu0 %v3128
    %4218 = vmatpush2.bf16.msra.mxu0 %v3127
    %4219 = vmatprep.subr.bf16.mxu0 %v3124
    %4220 = vmatpush2.bf16.msra.mxu0 %v3123
    %4221 = vmatprep.subr.bf16.mxu0 %v3120
    %4222 = vmatpush2.bf16.msra.mxu0 %v3119
    %4223 = vmatprep.subr.bf16.mxu0 %v3116
    %4224 = vmatpush2.bf16.msra.mxu0 %v3115
    %4225 = vmatprep.subr.bf16.mxu0 %v3112
    %4226 = vmatpush2.bf16.msra.mxu0 %v3111
    %4227 = vmatprep.subr.bf16.mxu0 %v3108
    %4228 = vmatpush2.bf16.msra.mxu0 %v3107
    %4229 = vmatprep.mubr.bf16.mxu0 %v1160
    %4230 = vmatmul.mubr.bf16.gmra.mxu0 %v1159
    %v4231 = vpop.f32.mrf.mxu0
    %v4232 = vadd.f32 %v4119, %v4231
    %v4233 = vpop.f32.mrf.mxu0
    %v4234 = vadd.f32 %v4121, %v4233
    %v4235 = vpop.f32.mrf.mxu0
    %v4236 = vadd.f32 %v4123, %v4235
    %v4237 = vpop.f32.mrf.mxu0
    %v4238 = vadd.f32 %v4125, %v4237
    %4239 = vmatprep.mubr.bf16.mxu0 %v1176
    %4240 = vmatmul.mubr.bf16.gmra.mxu0 %v1175
    %v4241 = vpop.f32.mrf.mxu0
    %v4242 = vadd.f32 %v4129, %v4241
    %v4243 = vpop.f32.mrf.mxu0
    %v4244 = vadd.f32 %v4131, %v4243
    %v4245 = vpop.f32.mrf.mxu0
    %v4246 = vadd.f32 %v4133, %v4245
    %v4247 = vpop.f32.mrf.mxu0
    %v4248 = vadd.f32 %v4135, %v4247
    %4249 = vmatprep.mubr.bf16.mxu0 %v1192
    %4250 = vmatmul.mubr.bf16.gmra.mxu0 %v1191
    %v4251 = vpop.f32.mrf.mxu0
    %v4252 = vadd.f32 %v4139, %v4251
    %v4253 = vpop.f32.mrf.mxu0
    %v4254 = vadd.f32 %v4141, %v4253
    %v4255 = vpop.f32.mrf.mxu0
    %v4256 = vadd.f32 %v4143, %v4255
    %v4257 = vpop.f32.mrf.mxu0
    %v4258 = vadd.f32 %v4145, %v4257
    %4259 = vmatprep.mubr.bf16.mxu0 %v1208
    %4260 = vmatmul.mubr.bf16.gmra.mxu0 %v1207
    %v4261 = vpop.f32.mrf.mxu0
    %v4262 = vadd.f32 %v4149, %v4261
    %v4263 = vpop.f32.mrf.mxu0
    %v4264 = vadd.f32 %v4151, %v4263
    %v4265 = vpop.f32.mrf.mxu0
    %v4266 = vadd.f32 %v4153, %v4265
    %v4267 = vpop.f32.mrf.mxu0
    %v4268 = vadd.f32 %v4155, %v4267
    %4269 = vmatprep.mubr.bf16.mxu0 %v1224
    %4270 = vmatmul.mubr.bf16.gmra.mxu0 %v1223
    %v4271 = vpop.f32.mrf.mxu0
    %v4272 = vadd.f32 %v4159, %v4271
    %v4273 = vpop.f32.mrf.mxu0
    %v4274 = vadd.f32 %v4161, %v4273
    %v4275 = vpop.f32.mrf.mxu0
    %v4276 = vadd.f32 %v4163, %v4275
    %v4277 = vpop.f32.mrf.mxu0
    %v4278 = vadd.f32 %v4165, %v4277
    %4279 = vmatprep.mubr.bf16.mxu0 %v1240
    %4280 = vmatmul.mubr.bf16.gmra.mxu0 %v1239
    %v4281 = vpop.f32.mrf.mxu0
    %v4282 = vadd.f32 %v4169, %v4281
    %v4283 = vpop.f32.mrf.mxu0
    %v4284 = vadd.f32 %v4171, %v4283
    %v4285 = vpop.f32.mrf.mxu0
    %v4286 = vadd.f32 %v4173, %v4285
    %v4287 = vpop.f32.mrf.mxu0
    %v4288 = vadd.f32 %v4175, %v4287
    %4289 = vmatprep.mubr.bf16.mxu0 %v1256
    %4290 = vmatmul.mubr.bf16.gmra.mxu0 %v1255
    %v4291 = vpop.f32.mrf.mxu0
    %v4292 = vadd.f32 %v4179, %v4291
    %v4293 = vpop.f32.mrf.mxu0
    %v4294 = vadd.f32 %v4181, %v4293
    %v4295 = vpop.f32.mrf.mxu0
    %v4296 = vadd.f32 %v4183, %v4295
    %v4297 = vpop.f32.mrf.mxu0
    %v4298 = vadd.f32 %v4185, %v4297
    %4299 = vmatprep.mubr.bf16.mxu0 %v1272
    %4300 = vmatmul.mubr.bf16.gmra.mxu0 %v1271
    %v4301 = vpop.f32.mrf.mxu0
    %v4302 = vadd.f32 %v4189, %v4301
    %v4303 = vpop.f32.mrf.mxu0
    %v4304 = vadd.f32 %v4191, %v4303
    %v4305 = vpop.f32.mrf.mxu0
    %v4306 = vadd.f32 %v4193, %v4305
    %v4307 = vpop.f32.mrf.mxu0
    %v4308 = vadd.f32 %v4195, %v4307
    %4309 = vdwg.mxu0
    %4310 = vmatprep.subr.bf16.mxu0 %v3168
    %4311 = vmatpush1.bf16.msra.mxu0 %v3167
    %4312 = vmatprep.subr.bf16.mxu0 %v3164
    %4313 = vmatpush1.bf16.msra.mxu0 %v3163
    %4314 = vmatprep.subr.bf16.mxu0 %v3160
    %4315 = vmatpush1.bf16.msra.mxu0 %v3159
    %4316 = vmatprep.subr.bf16.mxu0 %v3156
    %4317 = vmatpush1.bf16.msra.mxu0 %v3155
    %4318 = vmatprep.subr.bf16.mxu0 %v3152
    %4319 = vmatpush1.bf16.msra.mxu0 %v3151
    %4320 = vmatprep.subr.bf16.mxu0 %v3148
    %4321 = vmatpush1.bf16.msra.mxu0 %v3147
    %4322 = vmatprep.subr.bf16.mxu0 %v3144
    %4323 = vmatpush1.bf16.msra.mxu0 %v3143
    %4324 = vmatprep.subr.bf16.mxu0 %v3140
    %4325 = vmatpush1.bf16.msra.mxu0 %v3139
    %4326 = vmatprep.subr.bf16.mxu0 %v3200
    %4327 = vmatpush2.bf16.msra.mxu0 %v3199
    %4328 = vmatprep.subr.bf16.mxu0 %v3196
    %4329 = vmatpush2.bf16.msra.mxu0 %v3195
    %4330 = vmatprep.subr.bf16.mxu0 %v3192
    %4331 = vmatpush2.bf16.msra.mxu0 %v3191
    %4332 = vmatprep.subr.bf16.mxu0 %v3188
    %4333 = vmatpush2.bf16.msra.mxu0 %v3187
    %4334 = vmatprep.subr.bf16.mxu0 %v3184
    %4335 = vmatpush2.bf16.msra.mxu0 %v3183
    %4336 = vmatprep.subr.bf16.mxu0 %v3180
    %4337 = vmatpush2.bf16.msra.mxu0 %v3179
    %4338 = vmatprep.subr.bf16.mxu0 %v3176
    %4339 = vmatpush2.bf16.msra.mxu0 %v3175
    %4340 = vmatprep.subr.bf16.mxu0 %v3172
    %4341 = vmatpush2.bf16.msra.mxu0 %v3171
    %4342 = vmatprep.mubr.bf16.mxu0 %v1162
    %4343 = vmatmul.mubr.bf16.gmra.mxu0 %v1161
    %v4344 = vpop.f32.mrf.mxu0
    %v4345 = vadd.f32 %v4232, %v4344
    %v4346 = vpop.f32.mrf.mxu0
    %v4347 = vadd.f32 %v4234, %v4346
    %v4348 = vpop.f32.mrf.mxu0
    %v4349 = vadd.f32 %v4236, %v4348
    %v4350 = vpop.f32.mrf.mxu0
    %v4351 = vadd.f32 %v4238, %v4350
    %4352 = vmatprep.mubr.bf16.mxu0 %v1178
    %4353 = vmatmul.mubr.bf16.gmra.mxu0 %v1177
    %v4354 = vpop.f32.mrf.mxu0
    %v4355 = vadd.f32 %v4242, %v4354
    %v4356 = vpop.f32.mrf.mxu0
    %v4357 = vadd.f32 %v4244, %v4356
    %v4358 = vpop.f32.mrf.mxu0
    %v4359 = vadd.f32 %v4246, %v4358
    %v4360 = vpop.f32.mrf.mxu0
    %v4361 = vadd.f32 %v4248, %v4360
    %4362 = vmatprep.mubr.bf16.mxu0 %v1194
    %4363 = vmatmul.mubr.bf16.gmra.mxu0 %v1193
    %v4364 = vpop.f32.mrf.mxu0
    %v4365 = vadd.f32 %v4252, %v4364
    %v4366 = vpop.f32.mrf.mxu0
    %v4367 = vadd.f32 %v4254, %v4366
    %v4368 = vpop.f32.mrf.mxu0
    %v4369 = vadd.f32 %v4256, %v4368
    %v4370 = vpop.f32.mrf.mxu0
    %v4371 = vadd.f32 %v4258, %v4370
    %4372 = vmatprep.mubr.bf16.mxu0 %v1210
    %4373 = vmatmul.mubr.bf16.gmra.mxu0 %v1209
    %v4374 = vpop.f32.mrf.mxu0
    %v4375 = vadd.f32 %v4262, %v4374
    %v4376 = vpop.f32.mrf.mxu0
    %v4377 = vadd.f32 %v4264, %v4376
    %v4378 = vpop.f32.mrf.mxu0
    %v4379 = vadd.f32 %v4266, %v4378
    %v4380 = vpop.f32.mrf.mxu0
    %v4381 = vadd.f32 %v4268, %v4380
    %4382 = vmatprep.mubr.bf16.mxu0 %v1226
    %4383 = vmatmul.mubr.bf16.gmra.mxu0 %v1225
    %v4384 = vpop.f32.mrf.mxu0
    %v4385 = vadd.f32 %v4272, %v4384
    %v4386 = vpop.f32.mrf.mxu0
    %v4387 = vadd.f32 %v4274, %v4386
    %v4388 = vpop.f32.mrf.mxu0
    %v4389 = vadd.f32 %v4276, %v4388
    %v4390 = vpop.f32.mrf.mxu0
    %v4391 = vadd.f32 %v4278, %v4390
    %4392 = vmatprep.mubr.bf16.mxu0 %v1242
    %4393 = vmatmul.mubr.bf16.gmra.mxu0 %v1241
    %v4394 = vpop.f32.mrf.mxu0
    %v4395 = vadd.f32 %v4282, %v4394
    %v4396 = vpop.f32.mrf.mxu0
    %v4397 = vadd.f32 %v4284, %v4396
    %v4398 = vpop.f32.mrf.mxu0
    %v4399 = vadd.f32 %v4286, %v4398
    %v4400 = vpop.f32.mrf.mxu0
    %v4401 = vadd.f32 %v4288, %v4400
    %4402 = vmatprep.mubr.bf16.mxu0 %v1258
    %4403 = vmatmul.mubr.bf16.gmra.mxu0 %v1257
    %v4404 = vpop.f32.mrf.mxu0
    %v4405 = vadd.f32 %v4292, %v4404
    %v4406 = vpop.f32.mrf.mxu0
    %v4407 = vadd.f32 %v4294, %v4406
    %v4408 = vpop.f32.mrf.mxu0
    %v4409 = vadd.f32 %v4296, %v4408
    %v4410 = vpop.f32.mrf.mxu0
    %v4411 = vadd.f32 %v4298, %v4410
    %4412 = vmatprep.mubr.bf16.mxu0 %v1274
    %4413 = vmatmul.mubr.bf16.gmra.mxu0 %v1273
    %v4414 = vpop.f32.mrf.mxu0
    %v4415 = vadd.f32 %v4302, %v4414
    %v4416 = vpop.f32.mrf.mxu0
    %v4417 = vadd.f32 %v4304, %v4416
    %v4418 = vpop.f32.mrf.mxu0
    %v4419 = vadd.f32 %v4306, %v4418
    %v4420 = vpop.f32.mrf.mxu0
    %v4421 = vadd.f32 %v4308, %v4420
    %4422 = vdwg.mxu0
    %4423 = vmatprep.subr.bf16.mxu0 %v3232
    %4424 = vmatpush1.bf16.msra.mxu0 %v3231
    %4425 = vmatprep.subr.bf16.mxu0 %v3228
    %4426 = vmatpush1.bf16.msra.mxu0 %v3227
    %4427 = vmatprep.subr.bf16.mxu0 %v3224
    %4428 = vmatpush1.bf16.msra.mxu0 %v3223
    %4429 = vmatprep.subr.bf16.mxu0 %v3220
    %4430 = vmatpush1.bf16.msra.mxu0 %v3219
    %4431 = vmatprep.subr.bf16.mxu0 %v3216
    %4432 = vmatpush1.bf16.msra.mxu0 %v3215
    %4433 = vmatprep.subr.bf16.mxu0 %v3212
    %4434 = vmatpush1.bf16.msra.mxu0 %v3211
    %4435 = vmatprep.subr.bf16.mxu0 %v3208
    %4436 = vmatpush1.bf16.msra.mxu0 %v3207
    %4437 = vmatprep.subr.bf16.mxu0 %v3204
    %4438 = vmatpush1.bf16.msra.mxu0 %v3203
    %4439 = vmatprep.subr.bf16.mxu0 %v3264
    %4440 = vmatpush2.bf16.msra.mxu0 %v3263
    %4441 = vmatprep.subr.bf16.mxu0 %v3260
    %4442 = vmatpush2.bf16.msra.mxu0 %v3259
    %4443 = vmatprep.subr.bf16.mxu0 %v3256
    %4444 = vmatpush2.bf16.msra.mxu0 %v3255
    %4445 = vmatprep.subr.bf16.mxu0 %v3252
    %4446 = vmatpush2.bf16.msra.mxu0 %v3251
    %4447 = vmatprep.subr.bf16.mxu0 %v3248
    %4448 = vmatpush2.bf16.msra.mxu0 %v3247
    %4449 = vmatprep.subr.bf16.mxu0 %v3244
    %4450 = vmatpush2.bf16.msra.mxu0 %v3243
    %4451 = vmatprep.subr.bf16.mxu0 %v3240
    %4452 = vmatpush2.bf16.msra.mxu0 %v3239
    %4453 = vmatprep.subr.bf16.mxu0 %v3236
    %4454 = vmatpush2.bf16.msra.mxu0 %v3235
    %4455 = vmatprep.mubr.bf16.mxu0 %v1164
    %4456 = vmatmul.mubr.bf16.gmra.mxu0 %v1163
    %v4457 = vpop.f32.mrf.mxu0
    %v4458 = vadd.f32 %v4345, %v4457
    %v4459 = vpop.f32.mrf.mxu0
    %v4460 = vadd.f32 %v4347, %v4459
    %v4461 = vpop.f32.mrf.mxu0
    %v4462 = vadd.f32 %v4349, %v4461
    %v4463 = vpop.f32.mrf.mxu0
    %v4464 = vadd.f32 %v4351, %v4463
    %4465 = vmatprep.mubr.bf16.mxu0 %v1180
    %4466 = vmatmul.mubr.bf16.gmra.mxu0 %v1179
    %v4467 = vpop.f32.mrf.mxu0
    %v4468 = vadd.f32 %v4355, %v4467
    %v4469 = vpop.f32.mrf.mxu0
    %v4470 = vadd.f32 %v4357, %v4469
    %v4471 = vpop.f32.mrf.mxu0
    %v4472 = vadd.f32 %v4359, %v4471
    %v4473 = vpop.f32.mrf.mxu0
    %v4474 = vadd.f32 %v4361, %v4473
    %4475 = vmatprep.mubr.bf16.mxu0 %v1196
    %4476 = vmatmul.mubr.bf16.gmra.mxu0 %v1195
    %v4477 = vpop.f32.mrf.mxu0
    %v4478 = vadd.f32 %v4365, %v4477
    %v4479 = vpop.f32.mrf.mxu0
    %v4480 = vadd.f32 %v4367, %v4479
    %v4481 = vpop.f32.mrf.mxu0
    %v4482 = vadd.f32 %v4369, %v4481
    %v4483 = vpop.f32.mrf.mxu0
    %v4484 = vadd.f32 %v4371, %v4483
    %4485 = vmatprep.mubr.bf16.mxu0 %v1212
    %4486 = vmatmul.mubr.bf16.gmra.mxu0 %v1211
    %v4487 = vpop.f32.mrf.mxu0
    %v4488 = vadd.f32 %v4375, %v4487
    %v4489 = vpop.f32.mrf.mxu0
    %v4490 = vadd.f32 %v4377, %v4489
    %v4491 = vpop.f32.mrf.mxu0
    %v4492 = vadd.f32 %v4379, %v4491
    %v4493 = vpop.f32.mrf.mxu0
    %v4494 = vadd.f32 %v4381, %v4493
    %4495 = vmatprep.mubr.bf16.mxu0 %v1228
    %4496 = vmatmul.mubr.bf16.gmra.mxu0 %v1227
    %v4497 = vpop.f32.mrf.mxu0
    %v4498 = vadd.f32 %v4385, %v4497
    %v4499 = vpop.f32.mrf.mxu0
    %v4500 = vadd.f32 %v4387, %v4499
    %v4501 = vpop.f32.mrf.mxu0
    %v4502 = vadd.f32 %v4389, %v4501
    %v4503 = vpop.f32.mrf.mxu0
    %v4504 = vadd.f32 %v4391, %v4503
    %4505 = vmatprep.mubr.bf16.mxu0 %v1244
    %4506 = vmatmul.mubr.bf16.gmra.mxu0 %v1243
    %v4507 = vpop.f32.mrf.mxu0
    %v4508 = vadd.f32 %v4395, %v4507
    %v4509 = vpop.f32.mrf.mxu0
    %v4510 = vadd.f32 %v4397, %v4509
    %v4511 = vpop.f32.mrf.mxu0
    %v4512 = vadd.f32 %v4399, %v4511
    %v4513 = vpop.f32.mrf.mxu0
    %v4514 = vadd.f32 %v4401, %v4513
    %4515 = vmatprep.mubr.bf16.mxu0 %v1260
    %4516 = vmatmul.mubr.bf16.gmra.mxu0 %v1259
    %v4517 = vpop.f32.mrf.mxu0
    %v4518 = vadd.f32 %v4405, %v4517
    %v4519 = vpop.f32.mrf.mxu0
    %v4520 = vadd.f32 %v4407, %v4519
    %v4521 = vpop.f32.mrf.mxu0
    %v4522 = vadd.f32 %v4409, %v4521
    %v4523 = vpop.f32.mrf.mxu0
    %v4524 = vadd.f32 %v4411, %v4523
    %4525 = vmatprep.mubr.bf16.mxu0 %v1276
    %4526 = vmatmul.mubr.bf16.gmra.mxu0 %v1275
    %v4527 = vpop.f32.mrf.mxu0
    %v4528 = vadd.f32 %v4415, %v4527
    %v4529 = vpop.f32.mrf.mxu0
    %v4530 = vadd.f32 %v4417, %v4529
    %v4531 = vpop.f32.mrf.mxu0
    %v4532 = vadd.f32 %v4419, %v4531
    %v4533 = vpop.f32.mrf.mxu0
    %v4534 = vadd.f32 %v4421, %v4533
    %4535 = vdwg.mxu0
    %4536 = vmatprep.subr.bf16.mxu0 %v3296
    %4537 = vmatpush1.bf16.msra.mxu0 %v3295
    %4538 = vmatprep.subr.bf16.mxu0 %v3292
    %4539 = vmatpush1.bf16.msra.mxu0 %v3291
    %4540 = vmatprep.subr.bf16.mxu0 %v3288
    %4541 = vmatpush1.bf16.msra.mxu0 %v3287
    %4542 = vmatprep.subr.bf16.mxu0 %v3284
    %4543 = vmatpush1.bf16.msra.mxu0 %v3283
    %4544 = vmatprep.subr.bf16.mxu0 %v3280
    %4545 = vmatpush1.bf16.msra.mxu0 %v3279
    %4546 = vmatprep.subr.bf16.mxu0 %v3276
    %4547 = vmatpush1.bf16.msra.mxu0 %v3275
    %4548 = vmatprep.subr.bf16.mxu0 %v3272
    %4549 = vmatpush1.bf16.msra.mxu0 %v3271
    %4550 = vmatprep.subr.bf16.mxu0 %v3268
    %4551 = vmatpush1.bf16.msra.mxu0 %v3267
    %4552 = vmatprep.subr.bf16.mxu0 %v3328
    %4553 = vmatpush2.bf16.msra.mxu0 %v3327
    %4554 = vmatprep.subr.bf16.mxu0 %v3324
    %4555 = vmatpush2.bf16.msra.mxu0 %v3323
    %4556 = vmatprep.subr.bf16.mxu0 %v3320
    %4557 = vmatpush2.bf16.msra.mxu0 %v3319
    %4558 = vmatprep.subr.bf16.mxu0 %v3316
    %4559 = vmatpush2.bf16.msra.mxu0 %v3315
    %4560 = vmatprep.subr.bf16.mxu0 %v3312
    %4561 = vmatpush2.bf16.msra.mxu0 %v3311
    %4562 = vmatprep.subr.bf16.mxu0 %v3308
    %4563 = vmatpush2.bf16.msra.mxu0 %v3307
    %4564 = vmatprep.subr.bf16.mxu0 %v3304
    %4565 = vmatpush2.bf16.msra.mxu0 %v3303
    %4566 = vmatprep.subr.bf16.mxu0 %v3300
    %4567 = vmatpush2.bf16.msra.mxu0 %v3299
    %4568 = vmatprep.mubr.bf16.mxu0 %v1166
    %4569 = vmatmul.mubr.bf16.gmra.mxu0 %v1165
    %v4570 = vpop.f32.mrf.mxu0
    %v4571 = vadd.f32 %v4458, %v4570
    %v4572 = vpop.f32.mrf.mxu0
    %v4573 = vadd.f32 %v4460, %v4572
    %v4574 = vpop.f32.mrf.mxu0
    %v4575 = vadd.f32 %v4462, %v4574
    %v4576 = vpop.f32.mrf.mxu0
    %v4577 = vadd.f32 %v4464, %v4576
    %4578 = vmatprep.mubr.bf16.mxu0 %v1182
    %4579 = vmatmul.mubr.bf16.gmra.mxu0 %v1181
    %v4580 = vpop.f32.mrf.mxu0
    %v4581 = vadd.f32 %v4468, %v4580
    %v4582 = vpop.f32.mrf.mxu0
    %v4583 = vadd.f32 %v4470, %v4582
    %v4584 = vpop.f32.mrf.mxu0
    %v4585 = vadd.f32 %v4472, %v4584
    %v4586 = vpop.f32.mrf.mxu0
    %v4587 = vadd.f32 %v4474, %v4586
    %4588 = vmatprep.mubr.bf16.mxu0 %v1198
    %4589 = vmatmul.mubr.bf16.gmra.mxu0 %v1197
    %v4590 = vpop.f32.mrf.mxu0
    %v4591 = vadd.f32 %v4478, %v4590
    %v4592 = vpop.f32.mrf.mxu0
    %v4593 = vadd.f32 %v4480, %v4592
    %v4594 = vpop.f32.mrf.mxu0
    %v4595 = vadd.f32 %v4482, %v4594
    %v4596 = vpop.f32.mrf.mxu0
    %v4597 = vadd.f32 %v4484, %v4596
    %4598 = vmatprep.mubr.bf16.mxu0 %v1214
    %4599 = vmatmul.mubr.bf16.gmra.mxu0 %v1213
    %v4600 = vpop.f32.mrf.mxu0
    %v4601 = vadd.f32 %v4488, %v4600
    %v4602 = vpop.f32.mrf.mxu0
    %v4603 = vadd.f32 %v4490, %v4602
    %v4604 = vpop.f32.mrf.mxu0
    %v4605 = vadd.f32 %v4492, %v4604
    %v4606 = vpop.f32.mrf.mxu0
    %v4607 = vadd.f32 %v4494, %v4606
    %4608 = vmatprep.mubr.bf16.mxu0 %v1230
    %4609 = vmatmul.mubr.bf16.gmra.mxu0 %v1229
    %v4610 = vpop.f32.mrf.mxu0
    %v4611 = vadd.f32 %v4498, %v4610
    %v4612 = vpop.f32.mrf.mxu0
    %v4613 = vadd.f32 %v4500, %v4612
    %v4614 = vpop.f32.mrf.mxu0
    %v4615 = vadd.f32 %v4502, %v4614
    %v4616 = vpop.f32.mrf.mxu0
    %v4617 = vadd.f32 %v4504, %v4616
    %4618 = vmatprep.mubr.bf16.mxu0 %v1246
    %4619 = vmatmul.mubr.bf16.gmra.mxu0 %v1245
    %v4620 = vpop.f32.mrf.mxu0
    %v4621 = vadd.f32 %v4508, %v4620
    %v4622 = vpop.f32.mrf.mxu0
    %v4623 = vadd.f32 %v4510, %v4622
    %v4624 = vpop.f32.mrf.mxu0
    %v4625 = vadd.f32 %v4512, %v4624
    %v4626 = vpop.f32.mrf.mxu0
    %v4627 = vadd.f32 %v4514, %v4626
    %4628 = vmatprep.mubr.bf16.mxu0 %v1262
    %4629 = vmatmul.mubr.bf16.gmra.mxu0 %v1261
    %v4630 = vpop.f32.mrf.mxu0
    %v4631 = vadd.f32 %v4518, %v4630
    %v4632 = vpop.f32.mrf.mxu0
    %v4633 = vadd.f32 %v4520, %v4632
    %v4634 = vpop.f32.mrf.mxu0
    %v4635 = vadd.f32 %v4522, %v4634
    %v4636 = vpop.f32.mrf.mxu0
    %v4637 = vadd.f32 %v4524, %v4636
    %4638 = vmatprep.mubr.bf16.mxu0 %v1278
    %4639 = vmatmul.mubr.bf16.gmra.mxu0 %v1277
    %v4640 = vpop.f32.mrf.mxu0
    %v4641 = vadd.f32 %v4528, %v4640
    %v4642 = vpop.f32.mrf.mxu0
    %v4643 = vadd.f32 %v4530, %v4642
    %v4644 = vpop.f32.mrf.mxu0
    %v4645 = vadd.f32 %v4532, %v4644
    %v4646 = vpop.f32.mrf.mxu0
    %v4647 = vadd.f32 %v4534, %v4646
    %4648 = vdwg.mxu0
    %4649 = vmatprep.subr.bf16.mxu0 %v3360
    %4650 = vmatpush1.bf16.msra.mxu0 %v3359
    %4651 = vmatprep.subr.bf16.mxu0 %v3356
    %4652 = vmatpush1.bf16.msra.mxu0 %v3355
    %4653 = vmatprep.subr.bf16.mxu0 %v3352
    %4654 = vmatpush1.bf16.msra.mxu0 %v3351
    %4655 = vmatprep.subr.bf16.mxu0 %v3348
    %4656 = vmatpush1.bf16.msra.mxu0 %v3347
    %4657 = vmatprep.subr.bf16.mxu0 %v3344
    %4658 = vmatpush1.bf16.msra.mxu0 %v3343
    %4659 = vmatprep.subr.bf16.mxu0 %v3340
    %4660 = vmatpush1.bf16.msra.mxu0 %v3339
    %4661 = vmatprep.subr.bf16.mxu0 %v3336
    %4662 = vmatpush1.bf16.msra.mxu0 %v3335
    %4663 = vmatprep.subr.bf16.mxu0 %v3332
    %4664 = vmatpush1.bf16.msra.mxu0 %v3331
    %4665 = vmatprep.subr.bf16.mxu0 %v3392
    %4666 = vmatpush2.bf16.msra.mxu0 %v3391
    %4667 = vmatprep.subr.bf16.mxu0 %v3388
    %4668 = vmatpush2.bf16.msra.mxu0 %v3387
    %4669 = vmatprep.subr.bf16.mxu0 %v3384
    %4670 = vmatpush2.bf16.msra.mxu0 %v3383
    %4671 = vmatprep.subr.bf16.mxu0 %v3380
    %4672 = vmatpush2.bf16.msra.mxu0 %v3379
    %4673 = vmatprep.subr.bf16.mxu0 %v3376
    %4674 = vmatpush2.bf16.msra.mxu0 %v3375
    %4675 = vmatprep.subr.bf16.mxu0 %v3372
    %4676 = vmatpush2.bf16.msra.mxu0 %v3371
    %4677 = vmatprep.subr.bf16.mxu0 %v3368
    %4678 = vmatpush2.bf16.msra.mxu0 %v3367
    %4679 = vmatprep.subr.bf16.mxu0 %v3364
    %4680 = vmatpush2.bf16.msra.mxu0 %v3363
    %4681 = vmatprep.mubr.bf16.mxu0 %v1168
    %4682 = vmatmul.mubr.bf16.gmra.mxu0 %v1167
    %v4683 = vpop.f32.mrf.mxu0
    %v4684 = vadd.f32 %v4571, %v4683
    %v4685 = vpop.f32.mrf.mxu0
    %v4686 = vadd.f32 %v4573, %v4685
    %v4687 = vpop.f32.mrf.mxu0
    %v4688 = vadd.f32 %v4575, %v4687
    %v4689 = vpop.f32.mrf.mxu0
    %v4690 = vadd.f32 %v4577, %v4689
    %4691 = vmatprep.mubr.bf16.mxu0 %v1184
    %4692 = vmatmul.mubr.bf16.gmra.mxu0 %v1183
    %v4693 = vpop.f32.mrf.mxu0
    %v4694 = vadd.f32 %v4581, %v4693
    %v4695 = vpop.f32.mrf.mxu0
    %v4696 = vadd.f32 %v4583, %v4695
    %v4697 = vpop.f32.mrf.mxu0
    %v4698 = vadd.f32 %v4585, %v4697
    %v4699 = vpop.f32.mrf.mxu0
    %v4700 = vadd.f32 %v4587, %v4699
    %4701 = vmatprep.mubr.bf16.mxu0 %v1200
    %4702 = vmatmul.mubr.bf16.gmra.mxu0 %v1199
    %v4703 = vpop.f32.mrf.mxu0
    %v4704 = vadd.f32 %v4591, %v4703
    %v4705 = vpop.f32.mrf.mxu0
    %v4706 = vadd.f32 %v4593, %v4705
    %v4707 = vpop.f32.mrf.mxu0
    %v4708 = vadd.f32 %v4595, %v4707
    %v4709 = vpop.f32.mrf.mxu0
    %v4710 = vadd.f32 %v4597, %v4709
    %4711 = vmatprep.mubr.bf16.mxu0 %v1216
    %4712 = vmatmul.mubr.bf16.gmra.mxu0 %v1215
    %v4713 = vpop.f32.mrf.mxu0
    %v4714 = vadd.f32 %v4601, %v4713
    %v4715 = vpop.f32.mrf.mxu0
    %v4716 = vadd.f32 %v4603, %v4715
    %v4717 = vpop.f32.mrf.mxu0
    %v4718 = vadd.f32 %v4605, %v4717
    %v4719 = vpop.f32.mrf.mxu0
    %v4720 = vadd.f32 %v4607, %v4719
    %4721 = vmatprep.mubr.bf16.mxu0 %v1232
    %4722 = vmatmul.mubr.bf16.gmra.mxu0 %v1231
    %v4723 = vpop.f32.mrf.mxu0
    %v4724 = vadd.f32 %v4611, %v4723
    %v4725 = vpop.f32.mrf.mxu0
    %v4726 = vadd.f32 %v4613, %v4725
    %v4727 = vpop.f32.mrf.mxu0
    %v4728 = vadd.f32 %v4615, %v4727
    %v4729 = vpop.f32.mrf.mxu0
    %v4730 = vadd.f32 %v4617, %v4729
    %4731 = vmatprep.mubr.bf16.mxu0 %v1248
    %4732 = vmatmul.mubr.bf16.gmra.mxu0 %v1247
    %v4733 = vpop.f32.mrf.mxu0
    %v4734 = vadd.f32 %v4621, %v4733
    %v4735 = vpop.f32.mrf.mxu0
    %v4736 = vadd.f32 %v4623, %v4735
    %v4737 = vpop.f32.mrf.mxu0
    %v4738 = vadd.f32 %v4625, %v4737
    %v4739 = vpop.f32.mrf.mxu0
    %v4740 = vadd.f32 %v4627, %v4739
    %4741 = vmatprep.mubr.bf16.mxu0 %v1264
    %4742 = vmatmul.mubr.bf16.gmra.mxu0 %v1263
    %v4743 = vpop.f32.mrf.mxu0
    %v4744 = vadd.f32 %v4631, %v4743
    %v4745 = vpop.f32.mrf.mxu0
    %v4746 = vadd.f32 %v4633, %v4745
    %v4747 = vpop.f32.mrf.mxu0
    %v4748 = vadd.f32 %v4635, %v4747
    %v4749 = vpop.f32.mrf.mxu0
    %v4750 = vadd.f32 %v4637, %v4749
    %4751 = vmatprep.mubr.bf16.mxu0 %v1280
    %4752 = vmatmul.mubr.bf16.gmra.mxu0 %v1279
    %v4753 = vpop.f32.mrf.mxu0
    %v4754 = vadd.f32 %v4641, %v4753
    %v4755 = vpop.f32.mrf.mxu0
    %v4756 = vadd.f32 %v4643, %v4755
    %v4757 = vpop.f32.mrf.mxu0
    %v4758 = vadd.f32 %v4645, %v4757
    %v4759 = vpop.f32.mrf.mxu0
    %v4760 = vadd.f32 %v4647, %v4759
    %4761 = vdwg.mxu0
    %4762 = vmatprep.subr.bf16.mxu0 %v3424
    %4763 = vmatpush1.bf16.msra.mxu0 %v3423
    %4764 = vmatprep.subr.bf16.mxu0 %v3420
    %4765 = vmatpush1.bf16.msra.mxu0 %v3419
    %4766 = vmatprep.subr.bf16.mxu0 %v3416
    %4767 = vmatpush1.bf16.msra.mxu0 %v3415
    %4768 = vmatprep.subr.bf16.mxu0 %v3412
    %4769 = vmatpush1.bf16.msra.mxu0 %v3411
    %4770 = vmatprep.subr.bf16.mxu0 %v3408
    %4771 = vmatpush1.bf16.msra.mxu0 %v3407
    %4772 = vmatprep.subr.bf16.mxu0 %v3404
    %4773 = vmatpush1.bf16.msra.mxu0 %v3403
    %4774 = vmatprep.subr.bf16.mxu0 %v3400
    %4775 = vmatpush1.bf16.msra.mxu0 %v3399
    %4776 = vmatprep.subr.bf16.mxu0 %v3396
    %4777 = vmatpush1.bf16.msra.mxu0 %v3395
    %4778 = vmatprep.subr.bf16.mxu0 %v3456
    %4779 = vmatpush2.bf16.msra.mxu0 %v3455
    %4780 = vmatprep.subr.bf16.mxu0 %v3452
    %4781 = vmatpush2.bf16.msra.mxu0 %v3451
    %4782 = vmatprep.subr.bf16.mxu0 %v3448
    %4783 = vmatpush2.bf16.msra.mxu0 %v3447
    %4784 = vmatprep.subr.bf16.mxu0 %v3444
    %4785 = vmatpush2.bf16.msra.mxu0 %v3443
    %4786 = vmatprep.subr.bf16.mxu0 %v3440
    %4787 = vmatpush2.bf16.msra.mxu0 %v3439
    %4788 = vmatprep.subr.bf16.mxu0 %v3436
    %4789 = vmatpush2.bf16.msra.mxu0 %v3435
    %4790 = vmatprep.subr.bf16.mxu0 %v3432
    %4791 = vmatpush2.bf16.msra.mxu0 %v3431
    %4792 = vmatprep.subr.bf16.mxu0 %v3428
    %4793 = vmatpush2.bf16.msra.mxu0 %v3427
    %4794 = vmatprep.mubr.bf16.mxu0 %v1170
    %4795 = vmatmul.mubr.bf16.gmra.mxu0 %v1169
    %v4796 = vpop.f32.mrf.mxu0
    %v4797 = vadd.f32 %v4684, %v4796
    %v4798 = vpop.f32.mrf.mxu0
    %v4799 = vadd.f32 %v4686, %v4798
    %v4800 = vpop.f32.mrf.mxu0
    %v4801 = vadd.f32 %v4688, %v4800
    %v4802 = vpop.f32.mrf.mxu0
    %v4803 = vadd.f32 %v4690, %v4802
    %4804 = vmatprep.mubr.bf16.mxu0 %v1186
    %4805 = vmatmul.mubr.bf16.gmra.mxu0 %v1185
    %v4806 = vpop.f32.mrf.mxu0
    %v4807 = vadd.f32 %v4694, %v4806
    %v4808 = vpop.f32.mrf.mxu0
    %v4809 = vadd.f32 %v4696, %v4808
    %v4810 = vpop.f32.mrf.mxu0
    %v4811 = vadd.f32 %v4698, %v4810
    %v4812 = vpop.f32.mrf.mxu0
    %v4813 = vadd.f32 %v4700, %v4812
    %4814 = vmatprep.mubr.bf16.mxu0 %v1202
    %4815 = vmatmul.mubr.bf16.gmra.mxu0 %v1201
    %v4816 = vpop.f32.mrf.mxu0
    %v4817 = vadd.f32 %v4704, %v4816
    %v4818 = vpop.f32.mrf.mxu0
    %v4819 = vadd.f32 %v4706, %v4818
    %v4820 = vpop.f32.mrf.mxu0
    %v4821 = vadd.f32 %v4708, %v4820
    %v4822 = vpop.f32.mrf.mxu0
    %v4823 = vadd.f32 %v4710, %v4822
    %4824 = vmatprep.mubr.bf16.mxu0 %v1218
    %4825 = vmatmul.mubr.bf16.gmra.mxu0 %v1217
    %v4826 = vpop.f32.mrf.mxu0
    %v4827 = vadd.f32 %v4714, %v4826
    %v4828 = vpop.f32.mrf.mxu0
    %v4829 = vadd.f32 %v4716, %v4828
    %v4830 = vpop.f32.mrf.mxu0
    %v4831 = vadd.f32 %v4718, %v4830
    %v4832 = vpop.f32.mrf.mxu0
    %v4833 = vadd.f32 %v4720, %v4832
    %4834 = vmatprep.mubr.bf16.mxu0 %v1234
    %4835 = vmatmul.mubr.bf16.gmra.mxu0 %v1233
    %v4836 = vpop.f32.mrf.mxu0
    %v4837 = vadd.f32 %v4724, %v4836
    %v4838 = vpop.f32.mrf.mxu0
    %v4839 = vadd.f32 %v4726, %v4838
    %v4840 = vpop.f32.mrf.mxu0
    %v4841 = vadd.f32 %v4728, %v4840
    %v4842 = vpop.f32.mrf.mxu0
    %v4843 = vadd.f32 %v4730, %v4842
    %4844 = vmatprep.mubr.bf16.mxu0 %v1250
    %4845 = vmatmul.mubr.bf16.gmra.mxu0 %v1249
    %v4846 = vpop.f32.mrf.mxu0
    %v4847 = vadd.f32 %v4734, %v4846
    %v4848 = vpop.f32.mrf.mxu0
    %v4849 = vadd.f32 %v4736, %v4848
    %v4850 = vpop.f32.mrf.mxu0
    %v4851 = vadd.f32 %v4738, %v4850
    %v4852 = vpop.f32.mrf.mxu0
    %v4853 = vadd.f32 %v4740, %v4852
    %4854 = vmatprep.mubr.bf16.mxu0 %v1266
    %4855 = vmatmul.mubr.bf16.gmra.mxu0 %v1265
    %v4856 = vpop.f32.mrf.mxu0
    %v4857 = vadd.f32 %v4744, %v4856
    %v4858 = vpop.f32.mrf.mxu0
    %v4859 = vadd.f32 %v4746, %v4858
    %v4860 = vpop.f32.mrf.mxu0
    %v4861 = vadd.f32 %v4748, %v4860
    %v4862 = vpop.f32.mrf.mxu0
    %v4863 = vadd.f32 %v4750, %v4862
    %4864 = vmatprep.mubr.bf16.mxu0 %v1282
    %4865 = vmatmul.mubr.bf16.gmra.mxu0 %v1281
    %v4866 = vpop.f32.mrf.mxu0
    %v4867 = vadd.f32 %v4754, %v4866
    %v4868 = vpop.f32.mrf.mxu0
    %v4869 = vadd.f32 %v4756, %v4868
    %v4870 = vpop.f32.mrf.mxu0
    %v4871 = vadd.f32 %v4758, %v4870
    %v4872 = vpop.f32.mrf.mxu0
    %v4873 = vadd.f32 %v4760, %v4872
    %4874 = vdwg.mxu0
    %4875 = vmatprep.subr.bf16.mxu0 %v2978
    %4876 = vmatpush1.bf16.msra.mxu0 %v2977
    %4877 = vmatprep.subr.bf16.mxu0 %v2974
    %4878 = vmatpush1.bf16.msra.mxu0 %v2973
    %4879 = vmatprep.subr.bf16.mxu0 %v2970
    %4880 = vmatpush1.bf16.msra.mxu0 %v2969
    %4881 = vmatprep.subr.bf16.mxu0 %v2966
    %4882 = vmatpush1.bf16.msra.mxu0 %v2965
    %4883 = vmatprep.subr.bf16.mxu0 %v2962
    %4884 = vmatpush1.bf16.msra.mxu0 %v2961
    %4885 = vmatprep.subr.bf16.mxu0 %v2958
    %4886 = vmatpush1.bf16.msra.mxu0 %v2957
    %4887 = vmatprep.subr.bf16.mxu0 %v2954
    %4888 = vmatpush1.bf16.msra.mxu0 %v2953
    %4889 = vmatprep.subr.bf16.mxu0 %v2950
    %4890 = vmatpush1.bf16.msra.mxu0 %v2949
    %4891 = vmatprep.subr.bf16.mxu0 %v3010
    %4892 = vmatpush2.bf16.msra.mxu0 %v3009
    %4893 = vmatprep.subr.bf16.mxu0 %v3006
    %4894 = vmatpush2.bf16.msra.mxu0 %v3005
    %4895 = vmatprep.subr.bf16.mxu0 %v3002
    %4896 = vmatpush2.bf16.msra.mxu0 %v3001
    %4897 = vmatprep.subr.bf16.mxu0 %v2998
    %4898 = vmatpush2.bf16.msra.mxu0 %v2997
    %4899 = vmatprep.subr.bf16.mxu0 %v2994
    %4900 = vmatpush2.bf16.msra.mxu0 %v2993
    %4901 = vmatprep.subr.bf16.mxu0 %v2990
    %4902 = vmatpush2.bf16.msra.mxu0 %v2989
    %4903 = vmatprep.subr.bf16.mxu0 %v2986
    %4904 = vmatpush2.bf16.msra.mxu0 %v2985
    %4905 = vmatprep.subr.bf16.mxu0 %v2982
    %4906 = vmatpush2.bf16.msra.mxu0 %v2981
    %4907 = vmatprep.mubr.bf16.mxu0 %v1156
    %4908 = vmatmul.mubr.bf16.gmra.mxu0 %v1155
    %v4909 = vpop.f32.mrf.mxu0
    %v4910 = vadd.f32 %v762, %v4909
    %v4911 = vpop.f32.mrf.mxu0
    %v4912 = vadd.f32 %v766, %v4911
    %v4913 = vpop.f32.mrf.mxu0
    %v4914 = vadd.f32 %v762, %v4913
    %v4915 = vpop.f32.mrf.mxu0
    %v4916 = vadd.f32 %v766, %v4915
    %4917 = vmatprep.mubr.bf16.mxu0 %v1172
    %4918 = vmatmul.mubr.bf16.gmra.mxu0 %v1171
    %v4919 = vpop.f32.mrf.mxu0
    %v4920 = vadd.f32 %v762, %v4919
    %v4921 = vpop.f32.mrf.mxu0
    %v4922 = vadd.f32 %v766, %v4921
    %v4923 = vpop.f32.mrf.mxu0
    %v4924 = vadd.f32 %v762, %v4923
    %v4925 = vpop.f32.mrf.mxu0
    %v4926 = vadd.f32 %v766, %v4925
    %4927 = vmatprep.mubr.bf16.mxu0 %v1188
    %4928 = vmatmul.mubr.bf16.gmra.mxu0 %v1187
    %v4929 = vpop.f32.mrf.mxu0
    %v4930 = vadd.f32 %v762, %v4929
    %v4931 = vpop.f32.mrf.mxu0
    %v4932 = vadd.f32 %v766, %v4931
    %v4933 = vpop.f32.mrf.mxu0
    %v4934 = vadd.f32 %v762, %v4933
    %v4935 = vpop.f32.mrf.mxu0
    %v4936 = vadd.f32 %v766, %v4935
    %4937 = vmatprep.mubr.bf16.mxu0 %v1204
    %4938 = vmatmul.mubr.bf16.gmra.mxu0 %v1203
    %v4939 = vpop.f32.mrf.mxu0
    %v4940 = vadd.f32 %v762, %v4939
    %v4941 = vpop.f32.mrf.mxu0
    %v4942 = vadd.f32 %v766, %v4941
    %v4943 = vpop.f32.mrf.mxu0
    %v4944 = vadd.f32 %v762, %v4943
    %v4945 = vpop.f32.mrf.mxu0
    %v4946 = vadd.f32 %v766, %v4945
    %4947 = vmatprep.mubr.bf16.mxu0 %v1220
    %4948 = vmatmul.mubr.bf16.gmra.mxu0 %v1219
    %v4949 = vpop.f32.mrf.mxu0
    %v4950 = vadd.f32 %v762, %v4949
    %v4951 = vpop.f32.mrf.mxu0
    %v4952 = vadd.f32 %v766, %v4951
    %v4953 = vpop.f32.mrf.mxu0
    %v4954 = vadd.f32 %v762, %v4953
    %v4955 = vpop.f32.mrf.mxu0
    %v4956 = vadd.f32 %v766, %v4955
    %4957 = vmatprep.mubr.bf16.mxu0 %v1236
    %4958 = vmatmul.mubr.bf16.gmra.mxu0 %v1235
    %v4959 = vpop.f32.mrf.mxu0
    %v4960 = vadd.f32 %v762, %v4959
    %v4961 = vpop.f32.mrf.mxu0
    %v4962 = vadd.f32 %v766, %v4961
    %v4963 = vpop.f32.mrf.mxu0
    %v4964 = vadd.f32 %v762, %v4963
    %v4965 = vpop.f32.mrf.mxu0
    %v4966 = vadd.f32 %v766, %v4965
    %4967 = vmatprep.mubr.bf16.mxu0 %v1252
    %4968 = vmatmul.mubr.bf16.gmra.mxu0 %v1251
    %v4969 = vpop.f32.mrf.mxu0
    %v4970 = vadd.f32 %v762, %v4969
    %v4971 = vpop.f32.mrf.mxu0
    %v4972 = vadd.f32 %v766, %v4971
    %v4973 = vpop.f32.mrf.mxu0
    %v4974 = vadd.f32 %v762, %v4973
    %v4975 = vpop.f32.mrf.mxu0
    %v4976 = vadd.f32 %v766, %v4975
    %4977 = vmatprep.mubr.bf16.mxu0 %v1268
    %4978 = vmatmul.mubr.bf16.gmra.mxu0 %v1267
    %v4979 = vpop.f32.mrf.mxu0
    %v4980 = vadd.f32 %v762, %v4979
    %v4981 = vpop.f32.mrf.mxu0
    %v4982 = vadd.f32 %v766, %v4981
    %v4983 = vpop.f32.mrf.mxu0
    %v4984 = vadd.f32 %v762, %v4983
    %v4985 = vpop.f32.mrf.mxu0
    %v4986 = vadd.f32 %v766, %v4985
    %4987 = vdwg.mxu0
    %4988 = vmatprep.subr.bf16.mxu0 %v3042
    %4989 = vmatpush1.bf16.msra.mxu0 %v3041
    %4990 = vmatprep.subr.bf16.mxu0 %v3038
    %4991 = vmatpush1.bf16.msra.mxu0 %v3037
    %4992 = vmatprep.subr.bf16.mxu0 %v3034
    %4993 = vmatpush1.bf16.msra.mxu0 %v3033
    %4994 = vmatprep.subr.bf16.mxu0 %v3030
    %4995 = vmatpush1.bf16.msra.mxu0 %v3029
    %4996 = vmatprep.subr.bf16.mxu0 %v3026
    %4997 = vmatpush1.bf16.msra.mxu0 %v3025
    %4998 = vmatprep.subr.bf16.mxu0 %v3022
    %4999 = vmatpush1.bf16.msra.mxu0 %v3021
    %5000 = vmatprep.subr.bf16.mxu0 %v3018
    %5001 = vmatpush1.bf16.msra.mxu0 %v3017
    %5002 = vmatprep.subr.bf16.mxu0 %v3014
    %5003 = vmatpush1.bf16.msra.mxu0 %v3013
    %5004 = vmatprep.subr.bf16.mxu0 %v3074
    %5005 = vmatpush2.bf16.msra.mxu0 %v3073
    %5006 = vmatprep.subr.bf16.mxu0 %v3070
    %5007 = vmatpush2.bf16.msra.mxu0 %v3069
    %5008 = vmatprep.subr.bf16.mxu0 %v3066
    %5009 = vmatpush2.bf16.msra.mxu0 %v3065
    %5010 = vmatprep.subr.bf16.mxu0 %v3062
    %5011 = vmatpush2.bf16.msra.mxu0 %v3061
    %5012 = vmatprep.subr.bf16.mxu0 %v3058
    %5013 = vmatpush2.bf16.msra.mxu0 %v3057
    %5014 = vmatprep.subr.bf16.mxu0 %v3054
    %5015 = vmatpush2.bf16.msra.mxu0 %v3053
    %5016 = vmatprep.subr.bf16.mxu0 %v3050
    %5017 = vmatpush2.bf16.msra.mxu0 %v3049
    %5018 = vmatprep.subr.bf16.mxu0 %v3046
    %5019 = vmatpush2.bf16.msra.mxu0 %v3045
    %5020 = vmatprep.mubr.bf16.mxu0 %v1158
    %5021 = vmatmul.mubr.bf16.gmra.mxu0 %v1157
    %v5022 = vpop.f32.mrf.mxu0
    %v5023 = vadd.f32 %v4910, %v5022
    %v5024 = vpop.f32.mrf.mxu0
    %v5025 = vadd.f32 %v4912, %v5024
    %v5026 = vpop.f32.mrf.mxu0
    %v5027 = vadd.f32 %v4914, %v5026
    %v5028 = vpop.f32.mrf.mxu0
    %v5029 = vadd.f32 %v4916, %v5028
    %5030 = vmatprep.mubr.bf16.mxu0 %v1174
    %5031 = vmatmul.mubr.bf16.gmra.mxu0 %v1173
    %v5032 = vpop.f32.mrf.mxu0
    %v5033 = vadd.f32 %v4920, %v5032
    %v5034 = vpop.f32.mrf.mxu0
    %v5035 = vadd.f32 %v4922, %v5034
    %v5036 = vpop.f32.mrf.mxu0
    %v5037 = vadd.f32 %v4924, %v5036
    %v5038 = vpop.f32.mrf.mxu0
    %v5039 = vadd.f32 %v4926, %v5038
    %5040 = vmatprep.mubr.bf16.mxu0 %v1190
    %5041 = vmatmul.mubr.bf16.gmra.mxu0 %v1189
    %v5042 = vpop.f32.mrf.mxu0
    %v5043 = vadd.f32 %v4930, %v5042
    %v5044 = vpop.f32.mrf.mxu0
    %v5045 = vadd.f32 %v4932, %v5044
    %v5046 = vpop.f32.mrf.mxu0
    %v5047 = vadd.f32 %v4934, %v5046
    %v5048 = vpop.f32.mrf.mxu0
    %v5049 = vadd.f32 %v4936, %v5048
    %5050 = vmatprep.mubr.bf16.mxu0 %v1206
    %5051 = vmatmul.mubr.bf16.gmra.mxu0 %v1205
    %v5052 = vpop.f32.mrf.mxu0
    %v5053 = vadd.f32 %v4940, %v5052
    %v5054 = vpop.f32.mrf.mxu0
    %v5055 = vadd.f32 %v4942, %v5054
    %v5056 = vpop.f32.mrf.mxu0
    %v5057 = vadd.f32 %v4944, %v5056
    %v5058 = vpop.f32.mrf.mxu0
    %v5059 = vadd.f32 %v4946, %v5058
    %5060 = vmatprep.mubr.bf16.mxu0 %v1222
    %5061 = vmatmul.mubr.bf16.gmra.mxu0 %v1221
    %v5062 = vpop.f32.mrf.mxu0
    %v5063 = vadd.f32 %v4950, %v5062
    %v5064 = vpop.f32.mrf.mxu0
    %v5065 = vadd.f32 %v4952, %v5064
    %v5066 = vpop.f32.mrf.mxu0
    %v5067 = vadd.f32 %v4954, %v5066
    %v5068 = vpop.f32.mrf.mxu0
    %v5069 = vadd.f32 %v4956, %v5068
    %5070 = vmatprep.mubr.bf16.mxu0 %v1238
    %5071 = vmatmul.mubr.bf16.gmra.mxu0 %v1237
    %v5072 = vpop.f32.mrf.mxu0
    %v5073 = vadd.f32 %v4960, %v5072
    %v5074 = vpop.f32.mrf.mxu0
    %v5075 = vadd.f32 %v4962, %v5074
    %v5076 = vpop.f32.mrf.mxu0
    %v5077 = vadd.f32 %v4964, %v5076
    %v5078 = vpop.f32.mrf.mxu0
    %v5079 = vadd.f32 %v4966, %v5078
    %5080 = vmatprep.mubr.bf16.mxu0 %v1254
    %5081 = vmatmul.mubr.bf16.gmra.mxu0 %v1253
    %v5082 = vpop.f32.mrf.mxu0
    %v5083 = vadd.f32 %v4970, %v5082
    %v5084 = vpop.f32.mrf.mxu0
    %v5085 = vadd.f32 %v4972, %v5084
    %v5086 = vpop.f32.mrf.mxu0
    %v5087 = vadd.f32 %v4974, %v5086
    %v5088 = vpop.f32.mrf.mxu0
    %v5089 = vadd.f32 %v4976, %v5088
    %5090 = vmatprep.mubr.bf16.mxu0 %v1270
    %5091 = vmatmul.mubr.bf16.gmra.mxu0 %v1269
    %v5092 = vpop.f32.mrf.mxu0
    %v5093 = vadd.f32 %v4980, %v5092
    %v5094 = vpop.f32.mrf.mxu0
    %v5095 = vadd.f32 %v4982, %v5094
    %v5096 = vpop.f32.mrf.mxu0
    %v5097 = vadd.f32 %v4984, %v5096
    %v5098 = vpop.f32.mrf.mxu0
    %v5099 = vadd.f32 %v4986, %v5098
    %5100 = vdwg.mxu0
    %5101 = vmatprep.subr.bf16.mxu0 %v3106
    %5102 = vmatpush1.bf16.msra.mxu0 %v3105
    %5103 = vmatprep.subr.bf16.mxu0 %v3102
    %5104 = vmatpush1.bf16.msra.mxu0 %v3101
    %5105 = vmatprep.subr.bf16.mxu0 %v3098
    %5106 = vmatpush1.bf16.msra.mxu0 %v3097
    %5107 = vmatprep.subr.bf16.mxu0 %v3094
    %5108 = vmatpush1.bf16.msra.mxu0 %v3093
    %5109 = vmatprep.subr.bf16.mxu0 %v3090
    %5110 = vmatpush1.bf16.msra.mxu0 %v3089
    %5111 = vmatprep.subr.bf16.mxu0 %v3086
    %5112 = vmatpush1.bf16.msra.mxu0 %v3085
    %5113 = vmatprep.subr.bf16.mxu0 %v3082
    %5114 = vmatpush1.bf16.msra.mxu0 %v3081
    %5115 = vmatprep.subr.bf16.mxu0 %v3078
    %5116 = vmatpush1.bf16.msra.mxu0 %v3077
    %5117 = vmatprep.subr.bf16.mxu0 %v3138
    %5118 = vmatpush2.bf16.msra.mxu0 %v3137
    %5119 = vmatprep.subr.bf16.mxu0 %v3134
    %5120 = vmatpush2.bf16.msra.mxu0 %v3133
    %5121 = vmatprep.subr.bf16.mxu0 %v3130
    %5122 = vmatpush2.bf16.msra.mxu0 %v3129
    %5123 = vmatprep.subr.bf16.mxu0 %v3126
    %5124 = vmatpush2.bf16.msra.mxu0 %v3125
    %5125 = vmatprep.subr.bf16.mxu0 %v3122
    %5126 = vmatpush2.bf16.msra.mxu0 %v3121
    %5127 = vmatprep.subr.bf16.mxu0 %v3118
    %5128 = vmatpush2.bf16.msra.mxu0 %v3117
    %5129 = vmatprep.subr.bf16.mxu0 %v3114
    %5130 = vmatpush2.bf16.msra.mxu0 %v3113
    %5131 = vmatprep.subr.bf16.mxu0 %v3110
    %5132 = vmatpush2.bf16.msra.mxu0 %v3109
    %5133 = vmatprep.mubr.bf16.mxu0 %v1160
    %5134 = vmatmul.mubr.bf16.gmra.mxu0 %v1159
    %v5135 = vpop.f32.mrf.mxu0
    %v5136 = vadd.f32 %v5023, %v5135
    %v5137 = vpop.f32.mrf.mxu0
    %v5138 = vadd.f32 %v5025, %v5137
    %v5139 = vpop.f32.mrf.mxu0
    %v5140 = vadd.f32 %v5027, %v5139
    %v5141 = vpop.f32.mrf.mxu0
    %v5142 = vadd.f32 %v5029, %v5141
    %5143 = vmatprep.mubr.bf16.mxu0 %v1176
    %5144 = vmatmul.mubr.bf16.gmra.mxu0 %v1175
    %v5145 = vpop.f32.mrf.mxu0
    %v5146 = vadd.f32 %v5033, %v5145
    %v5147 = vpop.f32.mrf.mxu0
    %v5148 = vadd.f32 %v5035, %v5147
    %v5149 = vpop.f32.mrf.mxu0
    %v5150 = vadd.f32 %v5037, %v5149
    %v5151 = vpop.f32.mrf.mxu0
    %v5152 = vadd.f32 %v5039, %v5151
    %5153 = vmatprep.mubr.bf16.mxu0 %v1192
    %5154 = vmatmul.mubr.bf16.gmra.mxu0 %v1191
    %v5155 = vpop.f32.mrf.mxu0
    %v5156 = vadd.f32 %v5043, %v5155
    %v5157 = vpop.f32.mrf.mxu0
    %v5158 = vadd.f32 %v5045, %v5157
    %v5159 = vpop.f32.mrf.mxu0
    %v5160 = vadd.f32 %v5047, %v5159
    %v5161 = vpop.f32.mrf.mxu0
    %v5162 = vadd.f32 %v5049, %v5161
    %5163 = vmatprep.mubr.bf16.mxu0 %v1208
    %5164 = vmatmul.mubr.bf16.gmra.mxu0 %v1207
    %v5165 = vpop.f32.mrf.mxu0
    %v5166 = vadd.f32 %v5053, %v5165
    %v5167 = vpop.f32.mrf.mxu0
    %v5168 = vadd.f32 %v5055, %v5167
    %v5169 = vpop.f32.mrf.mxu0
    %v5170 = vadd.f32 %v5057, %v5169
    %v5171 = vpop.f32.mrf.mxu0
    %v5172 = vadd.f32 %v5059, %v5171
    %5173 = vmatprep.mubr.bf16.mxu0 %v1224
    %5174 = vmatmul.mubr.bf16.gmra.mxu0 %v1223
    %v5175 = vpop.f32.mrf.mxu0
    %v5176 = vadd.f32 %v5063, %v5175
    %v5177 = vpop.f32.mrf.mxu0
    %v5178 = vadd.f32 %v5065, %v5177
    %v5179 = vpop.f32.mrf.mxu0
    %v5180 = vadd.f32 %v5067, %v5179
    %v5181 = vpop.f32.mrf.mxu0
    %v5182 = vadd.f32 %v5069, %v5181
    %5183 = vmatprep.mubr.bf16.mxu0 %v1240
    %5184 = vmatmul.mubr.bf16.gmra.mxu0 %v1239
    %v5185 = vpop.f32.mrf.mxu0
    %v5186 = vadd.f32 %v5073, %v5185
    %v5187 = vpop.f32.mrf.mxu0
    %v5188 = vadd.f32 %v5075, %v5187
    %v5189 = vpop.f32.mrf.mxu0
    %v5190 = vadd.f32 %v5077, %v5189
    %v5191 = vpop.f32.mrf.mxu0
    %v5192 = vadd.f32 %v5079, %v5191
    %5193 = vmatprep.mubr.bf16.mxu0 %v1256
    %5194 = vmatmul.mubr.bf16.gmra.mxu0 %v1255
    %v5195 = vpop.f32.mrf.mxu0
    %v5196 = vadd.f32 %v5083, %v5195
    %v5197 = vpop.f32.mrf.mxu0
    %v5198 = vadd.f32 %v5085, %v5197
    %v5199 = vpop.f32.mrf.mxu0
    %v5200 = vadd.f32 %v5087, %v5199
    %v5201 = vpop.f32.mrf.mxu0
    %v5202 = vadd.f32 %v5089, %v5201
    %5203 = vmatprep.mubr.bf16.mxu0 %v1272
    %5204 = vmatmul.mubr.bf16.gmra.mxu0 %v1271
    %v5205 = vpop.f32.mrf.mxu0
    %v5206 = vadd.f32 %v5093, %v5205
    %v5207 = vpop.f32.mrf.mxu0
    %v5208 = vadd.f32 %v5095, %v5207
    %v5209 = vpop.f32.mrf.mxu0
    %v5210 = vadd.f32 %v5097, %v5209
    %v5211 = vpop.f32.mrf.mxu0
    %v5212 = vadd.f32 %v5099, %v5211
    %5213 = vdwg.mxu0
    %5214 = vmatprep.subr.bf16.mxu0 %v3170
    %5215 = vmatpush1.bf16.msra.mxu0 %v3169
    %5216 = vmatprep.subr.bf16.mxu0 %v3166
    %5217 = vmatpush1.bf16.msra.mxu0 %v3165
    %5218 = vmatprep.subr.bf16.mxu0 %v3162
    %5219 = vmatpush1.bf16.msra.mxu0 %v3161
    %5220 = vmatprep.subr.bf16.mxu0 %v3158
    %5221 = vmatpush1.bf16.msra.mxu0 %v3157
    %5222 = vmatprep.subr.bf16.mxu0 %v3154
    %5223 = vmatpush1.bf16.msra.mxu0 %v3153
    %5224 = vmatprep.subr.bf16.mxu0 %v3150
    %5225 = vmatpush1.bf16.msra.mxu0 %v3149
    %5226 = vmatprep.subr.bf16.mxu0 %v3146
    %5227 = vmatpush1.bf16.msra.mxu0 %v3145
    %5228 = vmatprep.subr.bf16.mxu0 %v3142
    %5229 = vmatpush1.bf16.msra.mxu0 %v3141
    %5230 = vmatprep.subr.bf16.mxu0 %v3202
    %5231 = vmatpush2.bf16.msra.mxu0 %v3201
    %5232 = vmatprep.subr.bf16.mxu0 %v3198
    %5233 = vmatpush2.bf16.msra.mxu0 %v3197
    %5234 = vmatprep.subr.bf16.mxu0 %v3194
    %5235 = vmatpush2.bf16.msra.mxu0 %v3193
    %5236 = vmatprep.subr.bf16.mxu0 %v3190
    %5237 = vmatpush2.bf16.msra.mxu0 %v3189
    %5238 = vmatprep.subr.bf16.mxu0 %v3186
    %5239 = vmatpush2.bf16.msra.mxu0 %v3185
    %5240 = vmatprep.subr.bf16.mxu0 %v3182
    %5241 = vmatpush2.bf16.msra.mxu0 %v3181
    %5242 = vmatprep.subr.bf16.mxu0 %v3178
    %5243 = vmatpush2.bf16.msra.mxu0 %v3177
    %5244 = vmatprep.subr.bf16.mxu0 %v3174
    %5245 = vmatpush2.bf16.msra.mxu0 %v3173
    %5246 = vmatprep.mubr.bf16.mxu0 %v1162
    %5247 = vmatmul.mubr.bf16.gmra.mxu0 %v1161
    %v5248 = vpop.f32.mrf.mxu0
    %v5249 = vadd.f32 %v5136, %v5248
    %v5250 = vpop.f32.mrf.mxu0
    %v5251 = vadd.f32 %v5138, %v5250
    %v5252 = vpop.f32.mrf.mxu0
    %v5253 = vadd.f32 %v5140, %v5252
    %v5254 = vpop.f32.mrf.mxu0
    %v5255 = vadd.f32 %v5142, %v5254
    %5256 = vmatprep.mubr.bf16.mxu0 %v1178
    %5257 = vmatmul.mubr.bf16.gmra.mxu0 %v1177
    %v5258 = vpop.f32.mrf.mxu0
    %v5259 = vadd.f32 %v5146, %v5258
    %v5260 = vpop.f32.mrf.mxu0
    %v5261 = vadd.f32 %v5148, %v5260
    %v5262 = vpop.f32.mrf.mxu0
    %v5263 = vadd.f32 %v5150, %v5262
    %v5264 = vpop.f32.mrf.mxu0
    %v5265 = vadd.f32 %v5152, %v5264
    %5266 = vmatprep.mubr.bf16.mxu0 %v1194
    %5267 = vmatmul.mubr.bf16.gmra.mxu0 %v1193
    %v5268 = vpop.f32.mrf.mxu0
    %v5269 = vadd.f32 %v5156, %v5268
    %v5270 = vpop.f32.mrf.mxu0
    %v5271 = vadd.f32 %v5158, %v5270
    %v5272 = vpop.f32.mrf.mxu0
    %v5273 = vadd.f32 %v5160, %v5272
    %v5274 = vpop.f32.mrf.mxu0
    %v5275 = vadd.f32 %v5162, %v5274
    %5276 = vmatprep.mubr.bf16.mxu0 %v1210
    %5277 = vmatmul.mubr.bf16.gmra.mxu0 %v1209
    %v5278 = vpop.f32.mrf.mxu0
    %v5279 = vadd.f32 %v5166, %v5278
    %v5280 = vpop.f32.mrf.mxu0
    %v5281 = vadd.f32 %v5168, %v5280
    %v5282 = vpop.f32.mrf.mxu0
    %v5283 = vadd.f32 %v5170, %v5282
    %v5284 = vpop.f32.mrf.mxu0
    %v5285 = vadd.f32 %v5172, %v5284
    %5286 = vmatprep.mubr.bf16.mxu0 %v1226
    %5287 = vmatmul.mubr.bf16.gmra.mxu0 %v1225
    %v5288 = vpop.f32.mrf.mxu0
    %v5289 = vadd.f32 %v5176, %v5288
    %v5290 = vpop.f32.mrf.mxu0
    %v5291 = vadd.f32 %v5178, %v5290
    %v5292 = vpop.f32.mrf.mxu0
    %v5293 = vadd.f32 %v5180, %v5292
    %v5294 = vpop.f32.mrf.mxu0
    %v5295 = vadd.f32 %v5182, %v5294
    %5296 = vmatprep.mubr.bf16.mxu0 %v1242
    %5297 = vmatmul.mubr.bf16.gmra.mxu0 %v1241
    %v5298 = vpop.f32.mrf.mxu0
    %v5299 = vadd.f32 %v5186, %v5298
    %v5300 = vpop.f32.mrf.mxu0
    %v5301 = vadd.f32 %v5188, %v5300
    %v5302 = vpop.f32.mrf.mxu0
    %v5303 = vadd.f32 %v5190, %v5302
    %v5304 = vpop.f32.mrf.mxu0
    %v5305 = vadd.f32 %v5192, %v5304
    %5306 = vmatprep.mubr.bf16.mxu0 %v1258
    %5307 = vmatmul.mubr.bf16.gmra.mxu0 %v1257
    %v5308 = vpop.f32.mrf.mxu0
    %v5309 = vadd.f32 %v5196, %v5308
    %v5310 = vpop.f32.mrf.mxu0
    %v5311 = vadd.f32 %v5198, %v5310
    %v5312 = vpop.f32.mrf.mxu0
    %v5313 = vadd.f32 %v5200, %v5312
    %v5314 = vpop.f32.mrf.mxu0
    %v5315 = vadd.f32 %v5202, %v5314
    %5316 = vmatprep.mubr.bf16.mxu0 %v1274
    %5317 = vmatmul.mubr.bf16.gmra.mxu0 %v1273
    %v5318 = vpop.f32.mrf.mxu0
    %v5319 = vadd.f32 %v5206, %v5318
    %v5320 = vpop.f32.mrf.mxu0
    %v5321 = vadd.f32 %v5208, %v5320
    %v5322 = vpop.f32.mrf.mxu0
    %v5323 = vadd.f32 %v5210, %v5322
    %v5324 = vpop.f32.mrf.mxu0
    %v5325 = vadd.f32 %v5212, %v5324
    %5326 = vdwg.mxu0
    %5327 = vmatprep.subr.bf16.mxu0 %v3234
    %5328 = vmatpush1.bf16.msra.mxu0 %v3233
    %5329 = vmatprep.subr.bf16.mxu0 %v3230
    %5330 = vmatpush1.bf16.msra.mxu0 %v3229
    %5331 = vmatprep.subr.bf16.mxu0 %v3226
    %5332 = vmatpush1.bf16.msra.mxu0 %v3225
    %5333 = vmatprep.subr.bf16.mxu0 %v3222
    %5334 = vmatpush1.bf16.msra.mxu0 %v3221
    %5335 = vmatprep.subr.bf16.mxu0 %v3218
    %5336 = vmatpush1.bf16.msra.mxu0 %v3217
    %5337 = vmatprep.subr.bf16.mxu0 %v3214
    %5338 = vmatpush1.bf16.msra.mxu0 %v3213
    %5339 = vmatprep.subr.bf16.mxu0 %v3210
    %5340 = vmatpush1.bf16.msra.mxu0 %v3209
    %5341 = vmatprep.subr.bf16.mxu0 %v3206
    %5342 = vmatpush1.bf16.msra.mxu0 %v3205
    %5343 = vmatprep.subr.bf16.mxu0 %v3266
    %5344 = vmatpush2.bf16.msra.mxu0 %v3265
    %5345 = vmatprep.subr.bf16.mxu0 %v3262
    %5346 = vmatpush2.bf16.msra.mxu0 %v3261
    %5347 = vmatprep.subr.bf16.mxu0 %v3258
    %5348 = vmatpush2.bf16.msra.mxu0 %v3257
    %5349 = vmatprep.subr.bf16.mxu0 %v3254
    %5350 = vmatpush2.bf16.msra.mxu0 %v3253
    %5351 = vmatprep.subr.bf16.mxu0 %v3250
    %5352 = vmatpush2.bf16.msra.mxu0 %v3249
    %5353 = vmatprep.subr.bf16.mxu0 %v3246
    %5354 = vmatpush2.bf16.msra.mxu0 %v3245
    %5355 = vmatprep.subr.bf16.mxu0 %v3242
    %5356 = vmatpush2.bf16.msra.mxu0 %v3241
    %5357 = vmatprep.subr.bf16.mxu0 %v3238
    %5358 = vmatpush2.bf16.msra.mxu0 %v3237
    %5359 = vmatprep.mubr.bf16.mxu0 %v1164
    %5360 = vmatmul.mubr.bf16.gmra.mxu0 %v1163
    %v5361 = vpop.f32.mrf.mxu0
    %v5362 = vadd.f32 %v5249, %v5361
    %v5363 = vpop.f32.mrf.mxu0
    %v5364 = vadd.f32 %v5251, %v5363
    %v5365 = vpop.f32.mrf.mxu0
    %v5366 = vadd.f32 %v5253, %v5365
    %v5367 = vpop.f32.mrf.mxu0
    %v5368 = vadd.f32 %v5255, %v5367
    %5369 = vmatprep.mubr.bf16.mxu0 %v1180
    %5370 = vmatmul.mubr.bf16.gmra.mxu0 %v1179
    %v5371 = vpop.f32.mrf.mxu0
    %v5372 = vadd.f32 %v5259, %v5371
    %v5373 = vpop.f32.mrf.mxu0
    %v5374 = vadd.f32 %v5261, %v5373
    %v5375 = vpop.f32.mrf.mxu0
    %v5376 = vadd.f32 %v5263, %v5375
    %v5377 = vpop.f32.mrf.mxu0
    %v5378 = vadd.f32 %v5265, %v5377
    %5379 = vmatprep.mubr.bf16.mxu0 %v1196
    %5380 = vmatmul.mubr.bf16.gmra.mxu0 %v1195
    %v5381 = vpop.f32.mrf.mxu0
    %v5382 = vadd.f32 %v5269, %v5381
    %v5383 = vpop.f32.mrf.mxu0
    %v5384 = vadd.f32 %v5271, %v5383
    %v5385 = vpop.f32.mrf.mxu0
    %v5386 = vadd.f32 %v5273, %v5385
    %v5387 = vpop.f32.mrf.mxu0
    %v5388 = vadd.f32 %v5275, %v5387
    %5389 = vmatprep.mubr.bf16.mxu0 %v1212
    %5390 = vmatmul.mubr.bf16.gmra.mxu0 %v1211
    %v5391 = vpop.f32.mrf.mxu0
    %v5392 = vadd.f32 %v5279, %v5391
    %v5393 = vpop.f32.mrf.mxu0
    %v5394 = vadd.f32 %v5281, %v5393
    %v5395 = vpop.f32.mrf.mxu0
    %v5396 = vadd.f32 %v5283, %v5395
    %v5397 = vpop.f32.mrf.mxu0
    %v5398 = vadd.f32 %v5285, %v5397
    %5399 = vmatprep.mubr.bf16.mxu0 %v1228
    %5400 = vmatmul.mubr.bf16.gmra.mxu0 %v1227
    %v5401 = vpop.f32.mrf.mxu0
    %v5402 = vadd.f32 %v5289, %v5401
    %v5403 = vpop.f32.mrf.mxu0
    %v5404 = vadd.f32 %v5291, %v5403
    %v5405 = vpop.f32.mrf.mxu0
    %v5406 = vadd.f32 %v5293, %v5405
    %v5407 = vpop.f32.mrf.mxu0
    %v5408 = vadd.f32 %v5295, %v5407
    %5409 = vmatprep.mubr.bf16.mxu0 %v1244
    %5410 = vmatmul.mubr.bf16.gmra.mxu0 %v1243
    %v5411 = vpop.f32.mrf.mxu0
    %v5412 = vadd.f32 %v5299, %v5411
    %v5413 = vpop.f32.mrf.mxu0
    %v5414 = vadd.f32 %v5301, %v5413
    %v5415 = vpop.f32.mrf.mxu0
    %v5416 = vadd.f32 %v5303, %v5415
    %v5417 = vpop.f32.mrf.mxu0
    %v5418 = vadd.f32 %v5305, %v5417
    %5419 = vmatprep.mubr.bf16.mxu0 %v1260
    %5420 = vmatmul.mubr.bf16.gmra.mxu0 %v1259
    %v5421 = vpop.f32.mrf.mxu0
    %v5422 = vadd.f32 %v5309, %v5421
    %v5423 = vpop.f32.mrf.mxu0
    %v5424 = vadd.f32 %v5311, %v5423
    %v5425 = vpop.f32.mrf.mxu0
    %v5426 = vadd.f32 %v5313, %v5425
    %v5427 = vpop.f32.mrf.mxu0
    %v5428 = vadd.f32 %v5315, %v5427
    %5429 = vmatprep.mubr.bf16.mxu0 %v1276
    %5430 = vmatmul.mubr.bf16.gmra.mxu0 %v1275
    %v5431 = vpop.f32.mrf.mxu0
    %v5432 = vadd.f32 %v5319, %v5431
    %v5433 = vpop.f32.mrf.mxu0
    %v5434 = vadd.f32 %v5321, %v5433
    %v5435 = vpop.f32.mrf.mxu0
    %v5436 = vadd.f32 %v5323, %v5435
    %v5437 = vpop.f32.mrf.mxu0
    %v5438 = vadd.f32 %v5325, %v5437
    %5439 = vdwg.mxu0
    %5440 = vmatprep.subr.bf16.mxu0 %v3298
    %5441 = vmatpush1.bf16.msra.mxu0 %v3297
    %5442 = vmatprep.subr.bf16.mxu0 %v3294
    %5443 = vmatpush1.bf16.msra.mxu0 %v3293
    %5444 = vmatprep.subr.bf16.mxu0 %v3290
    %5445 = vmatpush1.bf16.msra.mxu0 %v3289
    %5446 = vmatprep.subr.bf16.mxu0 %v3286
    %5447 = vmatpush1.bf16.msra.mxu0 %v3285
    %5448 = vmatprep.subr.bf16.mxu0 %v3282
    %5449 = vmatpush1.bf16.msra.mxu0 %v3281
    %5450 = vmatprep.subr.bf16.mxu0 %v3278
    %5451 = vmatpush1.bf16.msra.mxu0 %v3277
    %5452 = vmatprep.subr.bf16.mxu0 %v3274
    %5453 = vmatpush1.bf16.msra.mxu0 %v3273
    %5454 = vmatprep.subr.bf16.mxu0 %v3270
    %5455 = vmatpush1.bf16.msra.mxu0 %v3269
    %5456 = vmatprep.subr.bf16.mxu0 %v3330
    %5457 = vmatpush2.bf16.msra.mxu0 %v3329
    %5458 = vmatprep.subr.bf16.mxu0 %v3326
    %5459 = vmatpush2.bf16.msra.mxu0 %v3325
    %5460 = vmatprep.subr.bf16.mxu0 %v3322
    %5461 = vmatpush2.bf16.msra.mxu0 %v3321
    %5462 = vmatprep.subr.bf16.mxu0 %v3318
    %5463 = vmatpush2.bf16.msra.mxu0 %v3317
    %5464 = vmatprep.subr.bf16.mxu0 %v3314
    %5465 = vmatpush2.bf16.msra.mxu0 %v3313
    %5466 = vmatprep.subr.bf16.mxu0 %v3310
    %5467 = vmatpush2.bf16.msra.mxu0 %v3309
    %5468 = vmatprep.subr.bf16.mxu0 %v3306
    %5469 = vmatpush2.bf16.msra.mxu0 %v3305
    %5470 = vmatprep.subr.bf16.mxu0 %v3302
    %5471 = vmatpush2.bf16.msra.mxu0 %v3301
    %5472 = vmatprep.mubr.bf16.mxu0 %v1166
    %5473 = vmatmul.mubr.bf16.gmra.mxu0 %v1165
    %v5474 = vpop.f32.mrf.mxu0
    %v5475 = vadd.f32 %v5362, %v5474
    %v5476 = vpop.f32.mrf.mxu0
    %v5477 = vadd.f32 %v5364, %v5476
    %v5478 = vpop.f32.mrf.mxu0
    %v5479 = vadd.f32 %v5366, %v5478
    %v5480 = vpop.f32.mrf.mxu0
    %v5481 = vadd.f32 %v5368, %v5480
    %5482 = vmatprep.mubr.bf16.mxu0 %v1182
    %5483 = vmatmul.mubr.bf16.gmra.mxu0 %v1181
    %v5484 = vpop.f32.mrf.mxu0
    %v5485 = vadd.f32 %v5372, %v5484
    %v5486 = vpop.f32.mrf.mxu0
    %v5487 = vadd.f32 %v5374, %v5486
    %v5488 = vpop.f32.mrf.mxu0
    %v5489 = vadd.f32 %v5376, %v5488
    %v5490 = vpop.f32.mrf.mxu0
    %v5491 = vadd.f32 %v5378, %v5490
    %5492 = vmatprep.mubr.bf16.mxu0 %v1198
    %5493 = vmatmul.mubr.bf16.gmra.mxu0 %v1197
    %v5494 = vpop.f32.mrf.mxu0
    %v5495 = vadd.f32 %v5382, %v5494
    %v5496 = vpop.f32.mrf.mxu0
    %v5497 = vadd.f32 %v5384, %v5496
    %v5498 = vpop.f32.mrf.mxu0
    %v5499 = vadd.f32 %v5386, %v5498
    %v5500 = vpop.f32.mrf.mxu0
    %v5501 = vadd.f32 %v5388, %v5500
    %5502 = vmatprep.mubr.bf16.mxu0 %v1214
    %5503 = vmatmul.mubr.bf16.gmra.mxu0 %v1213
    %v5504 = vpop.f32.mrf.mxu0
    %v5505 = vadd.f32 %v5392, %v5504
    %v5506 = vpop.f32.mrf.mxu0
    %v5507 = vadd.f32 %v5394, %v5506
    %v5508 = vpop.f32.mrf.mxu0
    %v5509 = vadd.f32 %v5396, %v5508
    %v5510 = vpop.f32.mrf.mxu0
    %v5511 = vadd.f32 %v5398, %v5510
    %5512 = vmatprep.mubr.bf16.mxu0 %v1230
    %5513 = vmatmul.mubr.bf16.gmra.mxu0 %v1229
    %v5514 = vpop.f32.mrf.mxu0
    %v5515 = vadd.f32 %v5402, %v5514
    %v5516 = vpop.f32.mrf.mxu0
    %v5517 = vadd.f32 %v5404, %v5516
    %v5518 = vpop.f32.mrf.mxu0
    %v5519 = vadd.f32 %v5406, %v5518
    %v5520 = vpop.f32.mrf.mxu0
    %v5521 = vadd.f32 %v5408, %v5520
    %5522 = vmatprep.mubr.bf16.mxu0 %v1246
    %5523 = vmatmul.mubr.bf16.gmra.mxu0 %v1245
    %v5524 = vpop.f32.mrf.mxu0
    %v5525 = vadd.f32 %v5412, %v5524
    %v5526 = vpop.f32.mrf.mxu0
    %v5527 = vadd.f32 %v5414, %v5526
    %v5528 = vpop.f32.mrf.mxu0
    %v5529 = vadd.f32 %v5416, %v5528
    %v5530 = vpop.f32.mrf.mxu0
    %v5531 = vadd.f32 %v5418, %v5530
    %5532 = vmatprep.mubr.bf16.mxu0 %v1262
    %5533 = vmatmul.mubr.bf16.gmra.mxu0 %v1261
    %v5534 = vpop.f32.mrf.mxu0
    %v5535 = vadd.f32 %v5422, %v5534
    %v5536 = vpop.f32.mrf.mxu0
    %v5537 = vadd.f32 %v5424, %v5536
    %v5538 = vpop.f32.mrf.mxu0
    %v5539 = vadd.f32 %v5426, %v5538
    %v5540 = vpop.f32.mrf.mxu0
    %v5541 = vadd.f32 %v5428, %v5540
    %5542 = vmatprep.mubr.bf16.mxu0 %v1278
    %5543 = vmatmul.mubr.bf16.gmra.mxu0 %v1277
    %v5544 = vpop.f32.mrf.mxu0
    %v5545 = vadd.f32 %v5432, %v5544
    %v5546 = vpop.f32.mrf.mxu0
    %v5547 = vadd.f32 %v5434, %v5546
    %v5548 = vpop.f32.mrf.mxu0
    %v5549 = vadd.f32 %v5436, %v5548
    %v5550 = vpop.f32.mrf.mxu0
    %v5551 = vadd.f32 %v5438, %v5550
    %5552 = vdwg.mxu0
    %5553 = vmatprep.subr.bf16.mxu0 %v3362
    %5554 = vmatpush1.bf16.msra.mxu0 %v3361
    %5555 = vmatprep.subr.bf16.mxu0 %v3358
    %5556 = vmatpush1.bf16.msra.mxu0 %v3357
    %5557 = vmatprep.subr.bf16.mxu0 %v3354
    %5558 = vmatpush1.bf16.msra.mxu0 %v3353
    %5559 = vmatprep.subr.bf16.mxu0 %v3350
    %5560 = vmatpush1.bf16.msra.mxu0 %v3349
    %5561 = vmatprep.subr.bf16.mxu0 %v3346
    %5562 = vmatpush1.bf16.msra.mxu0 %v3345
    %5563 = vmatprep.subr.bf16.mxu0 %v3342
    %5564 = vmatpush1.bf16.msra.mxu0 %v3341
    %5565 = vmatprep.subr.bf16.mxu0 %v3338
    %5566 = vmatpush1.bf16.msra.mxu0 %v3337
    %5567 = vmatprep.subr.bf16.mxu0 %v3334
    %5568 = vmatpush1.bf16.msra.mxu0 %v3333
    %5569 = vmatprep.subr.bf16.mxu0 %v3394
    %5570 = vmatpush2.bf16.msra.mxu0 %v3393
    %5571 = vmatprep.subr.bf16.mxu0 %v3390
    %5572 = vmatpush2.bf16.msra.mxu0 %v3389
    %5573 = vmatprep.subr.bf16.mxu0 %v3386
    %5574 = vmatpush2.bf16.msra.mxu0 %v3385
    %5575 = vmatprep.subr.bf16.mxu0 %v3382
    %5576 = vmatpush2.bf16.msra.mxu0 %v3381
    %5577 = vmatprep.subr.bf16.mxu0 %v3378
    %5578 = vmatpush2.bf16.msra.mxu0 %v3377
    %5579 = vmatprep.subr.bf16.mxu0 %v3374
    %5580 = vmatpush2.bf16.msra.mxu0 %v3373
    %5581 = vmatprep.subr.bf16.mxu0 %v3370
    %5582 = vmatpush2.bf16.msra.mxu0 %v3369
    %5583 = vmatprep.subr.bf16.mxu0 %v3366
    %5584 = vmatpush2.bf16.msra.mxu0 %v3365
    %5585 = vmatprep.mubr.bf16.mxu0 %v1168
    %5586 = vmatmul.mubr.bf16.gmra.mxu0 %v1167
    %v5587 = vpop.f32.mrf.mxu0
    %v5588 = vadd.f32 %v5475, %v5587
    %v5589 = vpop.f32.mrf.mxu0
    %v5590 = vadd.f32 %v5477, %v5589
    %v5591 = vpop.f32.mrf.mxu0
    %v5592 = vadd.f32 %v5479, %v5591
    %v5593 = vpop.f32.mrf.mxu0
    %v5594 = vadd.f32 %v5481, %v5593
    %5595 = vmatprep.mubr.bf16.mxu0 %v1184
    %5596 = vmatmul.mubr.bf16.gmra.mxu0 %v1183
    %v5597 = vpop.f32.mrf.mxu0
    %v5598 = vadd.f32 %v5485, %v5597
    %v5599 = vpop.f32.mrf.mxu0
    %v5600 = vadd.f32 %v5487, %v5599
    %v5601 = vpop.f32.mrf.mxu0
    %v5602 = vadd.f32 %v5489, %v5601
    %v5603 = vpop.f32.mrf.mxu0
    %v5604 = vadd.f32 %v5491, %v5603
    %5605 = vmatprep.mubr.bf16.mxu0 %v1200
    %5606 = vmatmul.mubr.bf16.gmra.mxu0 %v1199
    %v5607 = vpop.f32.mrf.mxu0
    %v5608 = vadd.f32 %v5495, %v5607
    %v5609 = vpop.f32.mrf.mxu0
    %v5610 = vadd.f32 %v5497, %v5609
    %v5611 = vpop.f32.mrf.mxu0
    %v5612 = vadd.f32 %v5499, %v5611
    %v5613 = vpop.f32.mrf.mxu0
    %v5614 = vadd.f32 %v5501, %v5613
    %5615 = vmatprep.mubr.bf16.mxu0 %v1216
    %5616 = vmatmul.mubr.bf16.gmra.mxu0 %v1215
    %v5617 = vpop.f32.mrf.mxu0
    %v5618 = vadd.f32 %v5505, %v5617
    %v5619 = vpop.f32.mrf.mxu0
    %v5620 = vadd.f32 %v5507, %v5619
    %v5621 = vpop.f32.mrf.mxu0
    %v5622 = vadd.f32 %v5509, %v5621
    %v5623 = vpop.f32.mrf.mxu0
    %v5624 = vadd.f32 %v5511, %v5623
    %5625 = vmatprep.mubr.bf16.mxu0 %v1232
    %5626 = vmatmul.mubr.bf16.gmra.mxu0 %v1231
    %v5627 = vpop.f32.mrf.mxu0
    %v5628 = vadd.f32 %v5515, %v5627
    %v5629 = vpop.f32.mrf.mxu0
    %v5630 = vadd.f32 %v5517, %v5629
    %v5631 = vpop.f32.mrf.mxu0
    %v5632 = vadd.f32 %v5519, %v5631
    %v5633 = vpop.f32.mrf.mxu0
    %v5634 = vadd.f32 %v5521, %v5633
    %5635 = vmatprep.mubr.bf16.mxu0 %v1248
    %5636 = vmatmul.mubr.bf16.gmra.mxu0 %v1247
    %v5637 = vpop.f32.mrf.mxu0
    %v5638 = vadd.f32 %v5525, %v5637
    %v5639 = vpop.f32.mrf.mxu0
    %v5640 = vadd.f32 %v5527, %v5639
    %v5641 = vpop.f32.mrf.mxu0
    %v5642 = vadd.f32 %v5529, %v5641
    %v5643 = vpop.f32.mrf.mxu0
    %v5644 = vadd.f32 %v5531, %v5643
    %5645 = vmatprep.mubr.bf16.mxu0 %v1264
    %5646 = vmatmul.mubr.bf16.gmra.mxu0 %v1263
    %v5647 = vpop.f32.mrf.mxu0
    %v5648 = vadd.f32 %v5535, %v5647
    %v5649 = vpop.f32.mrf.mxu0
    %v5650 = vadd.f32 %v5537, %v5649
    %v5651 = vpop.f32.mrf.mxu0
    %v5652 = vadd.f32 %v5539, %v5651
    %v5653 = vpop.f32.mrf.mxu0
    %v5654 = vadd.f32 %v5541, %v5653
    %5655 = vmatprep.mubr.bf16.mxu0 %v1280
    %5656 = vmatmul.mubr.bf16.gmra.mxu0 %v1279
    %v5657 = vpop.f32.mrf.mxu0
    %v5658 = vadd.f32 %v5545, %v5657
    %v5659 = vpop.f32.mrf.mxu0
    %v5660 = vadd.f32 %v5547, %v5659
    %v5661 = vpop.f32.mrf.mxu0
    %v5662 = vadd.f32 %v5549, %v5661
    %v5663 = vpop.f32.mrf.mxu0
    %v5664 = vadd.f32 %v5551, %v5663
    %5665 = vdwg.mxu0
    %5666 = vmatprep.subr.bf16.mxu0 %v3426
    %5667 = vmatpush1.bf16.msra.mxu0 %v3425
    %5668 = vmatprep.subr.bf16.mxu0 %v3422
    %5669 = vmatpush1.bf16.msra.mxu0 %v3421
    %5670 = vmatprep.subr.bf16.mxu0 %v3418
    %5671 = vmatpush1.bf16.msra.mxu0 %v3417
    %5672 = vmatprep.subr.bf16.mxu0 %v3414
    %5673 = vmatpush1.bf16.msra.mxu0 %v3413
    %5674 = vmatprep.subr.bf16.mxu0 %v3410
    %5675 = vmatpush1.bf16.msra.mxu0 %v3409
    %5676 = vmatprep.subr.bf16.mxu0 %v3406
    %5677 = vmatpush1.bf16.msra.mxu0 %v3405
    %5678 = vmatprep.subr.bf16.mxu0 %v3402
    %5679 = vmatpush1.bf16.msra.mxu0 %v3401
    %5680 = vmatprep.subr.bf16.mxu0 %v3398
    %5681 = vmatpush1.bf16.msra.mxu0 %v3397
    %5682 = vmatprep.subr.bf16.mxu0 %v3458
    %5683 = vmatpush2.bf16.msra.mxu0 %v3457
    %5684 = vmatprep.subr.bf16.mxu0 %v3454
    %5685 = vmatpush2.bf16.msra.mxu0 %v3453
    %5686 = vmatprep.subr.bf16.mxu0 %v3450
    %5687 = vmatpush2.bf16.msra.mxu0 %v3449
    %5688 = vmatprep.subr.bf16.mxu0 %v3446
    %5689 = vmatpush2.bf16.msra.mxu0 %v3445
    %5690 = vmatprep.subr.bf16.mxu0 %v3442
    %5691 = vmatpush2.bf16.msra.mxu0 %v3441
    %5692 = vmatprep.subr.bf16.mxu0 %v3438
    %5693 = vmatpush2.bf16.msra.mxu0 %v3437
    %5694 = vmatprep.subr.bf16.mxu0 %v3434
    %5695 = vmatpush2.bf16.msra.mxu0 %v3433
    %5696 = vmatprep.subr.bf16.mxu0 %v3430
    %5697 = vmatpush2.bf16.msra.mxu0 %v3429
    %5698 = vmatprep.mubr.bf16.mxu0 %v1170
    %5699 = vmatmul.mubr.bf16.gmra.mxu0 %v1169
    %v5700 = vpop.f32.mrf.mxu0
    %v5701 = vadd.f32 %v5588, %v5700
    %v5702 = vpop.f32.mrf.mxu0
    %v5703 = vadd.f32 %v5590, %v5702
    %v5704 = vpop.f32.mrf.mxu0
    %v5705 = vadd.f32 %v5592, %v5704
    %v5706 = vpop.f32.mrf.mxu0
    %v5707 = vadd.f32 %v5594, %v5706
    %5708 = vmatprep.mubr.bf16.mxu0 %v1186
    %5709 = vmatmul.mubr.bf16.gmra.mxu0 %v1185
    %v5710 = vpop.f32.mrf.mxu0
    %v5711 = vadd.f32 %v5598, %v5710
    %v5712 = vpop.f32.mrf.mxu0
    %v5713 = vadd.f32 %v5600, %v5712
    %v5714 = vpop.f32.mrf.mxu0
    %v5715 = vadd.f32 %v5602, %v5714
    %v5716 = vpop.f32.mrf.mxu0
    %v5717 = vadd.f32 %v5604, %v5716
    %5718 = vmatprep.mubr.bf16.mxu0 %v1202
    %5719 = vmatmul.mubr.bf16.gmra.mxu0 %v1201
    %v5720 = vpop.f32.mrf.mxu0
    %v5721 = vadd.f32 %v5608, %v5720
    %v5722 = vpop.f32.mrf.mxu0
    %v5723 = vadd.f32 %v5610, %v5722
    %v5724 = vpop.f32.mrf.mxu0
    %v5725 = vadd.f32 %v5612, %v5724
    %v5726 = vpop.f32.mrf.mxu0
    %v5727 = vadd.f32 %v5614, %v5726
    %5728 = vmatprep.mubr.bf16.mxu0 %v1218
    %5729 = vmatmul.mubr.bf16.gmra.mxu0 %v1217
    %v5730 = vpop.f32.mrf.mxu0
    %v5731 = vadd.f32 %v5618, %v5730
    %v5732 = vpop.f32.mrf.mxu0
    %v5733 = vadd.f32 %v5620, %v5732
    %v5734 = vpop.f32.mrf.mxu0
    %v5735 = vadd.f32 %v5622, %v5734
    %v5736 = vpop.f32.mrf.mxu0
    %v5737 = vadd.f32 %v5624, %v5736
    %5738 = vmatprep.mubr.bf16.mxu0 %v1234
    %5739 = vmatmul.mubr.bf16.gmra.mxu0 %v1233
    %v5740 = vpop.f32.mrf.mxu0
    %v5741 = vadd.f32 %v5628, %v5740
    %v5742 = vpop.f32.mrf.mxu0
    %v5743 = vadd.f32 %v5630, %v5742
    %v5744 = vpop.f32.mrf.mxu0
    %v5745 = vadd.f32 %v5632, %v5744
    %v5746 = vpop.f32.mrf.mxu0
    %v5747 = vadd.f32 %v5634, %v5746
    %5748 = vmatprep.mubr.bf16.mxu0 %v1250
    %5749 = vmatmul.mubr.bf16.gmra.mxu0 %v1249
    %v5750 = vpop.f32.mrf.mxu0
    %v5751 = vadd.f32 %v5638, %v5750
    %v5752 = vpop.f32.mrf.mxu0
    %v5753 = vadd.f32 %v5640, %v5752
    %v5754 = vpop.f32.mrf.mxu0
    %v5755 = vadd.f32 %v5642, %v5754
    %v5756 = vpop.f32.mrf.mxu0
    %v5757 = vadd.f32 %v5644, %v5756
    %5758 = vmatprep.mubr.bf16.mxu0 %v1266
    %5759 = vmatmul.mubr.bf16.gmra.mxu0 %v1265
    %v5760 = vpop.f32.mrf.mxu0
    %v5761 = vadd.f32 %v5648, %v5760
    %v5762 = vpop.f32.mrf.mxu0
    %v5763 = vadd.f32 %v5650, %v5762
    %v5764 = vpop.f32.mrf.mxu0
    %v5765 = vadd.f32 %v5652, %v5764
    %v5766 = vpop.f32.mrf.mxu0
    %v5767 = vadd.f32 %v5654, %v5766
    %5768 = vmatprep.mubr.bf16.mxu0 %v1282
    %5769 = vmatmul.mubr.bf16.gmra.mxu0 %v1281
    %v5770 = vpop.f32.mrf.mxu0
    %v5771 = vadd.f32 %v5658, %v5770
    %v5772 = vpop.f32.mrf.mxu0
    %v5773 = vadd.f32 %v5660, %v5772
    %v5774 = vpop.f32.mrf.mxu0
    %v5775 = vadd.f32 %v5662, %v5774
    %v5776 = vpop.f32.mrf.mxu0
    %v5777 = vadd.f32 %v5664, %v5776
    %5778 = vdwg.mxu0
    %v5779 = vmax.f32 %v4797, 0.0
    %v5780 = vmax.f32 %v4799, 0.0
    %v5781 = vmax.f32 %v5701, 0.0
    %v5782 = vmax.f32 %v5703, 0.0
    %v5783 = vmax.f32 %v4801, 0.0
    %v5784 = vmax.f32 %v4803, 0.0
    %v5785 = vmax.f32 %v5705, 0.0
    %v5786 = vmax.f32 %v5707, 0.0
    %v5787 = vmax.f32 %v4807, 0.0
    %v5788 = vmax.f32 %v4809, 0.0
    %v5789 = vmax.f32 %v5711, 0.0
    %v5790 = vmax.f32 %v5713, 0.0
    %v5791 = vmax.f32 %v4811, 0.0
    %v5792 = vmax.f32 %v4813, 0.0
    %v5793 = vmax.f32 %v5715, 0.0
    %v5794 = vmax.f32 %v5717, 0.0
    %v5795 = vmax.f32 %v4817, 0.0
    %v5796 = vmax.f32 %v4819, 0.0
    %v5797 = vmax.f32 %v5721, 0.0
    %v5798 = vmax.f32 %v5723, 0.0
    %v5799 = vmax.f32 %v4821, 0.0
    %v5800 = vmax.f32 %v4823, 0.0
    %v5801 = vmax.f32 %v5725, 0.0
    %v5802 = vmax.f32 %v5727, 0.0
    %v5803 = vmax.f32 %v4827, 0.0
    %v5804 = vmax.f32 %v4829, 0.0
    %v5805 = vmax.f32 %v5731, 0.0
    %v5806 = vmax.f32 %v5733, 0.0
    %v5807 = vmax.f32 %v4831, 0.0
    %v5808 = vmax.f32 %v4833, 0.0
    %v5809 = vmax.f32 %v5735, 0.0
    %v5810 = vmax.f32 %v5737, 0.0
    %v5811 = vmax.f32 %v4837, 0.0
    %v5812 = vmax.f32 %v4839, 0.0
    %v5813 = vmax.f32 %v5741, 0.0
    %v5814 = vmax.f32 %v5743, 0.0
    %v5815 = vmax.f32 %v4841, 0.0
    %v5816 = vmax.f32 %v4843, 0.0
    %v5817 = vmax.f32 %v5745, 0.0
    %v5818 = vmax.f32 %v5747, 0.0
    %v5819 = vmax.f32 %v4847, 0.0
    %v5820 = vmax.f32 %v4849, 0.0
    %v5821 = vmax.f32 %v5751, 0.0
    %v5822 = vmax.f32 %v5753, 0.0
    %v5823 = vmax.f32 %v4851, 0.0
    %v5824 = vmax.f32 %v4853, 0.0
    %v5825 = vmax.f32 %v5755, 0.0
    %v5826 = vmax.f32 %v5757, 0.0
    %v5827 = vmax.f32 %v4857, 0.0
    %v5828 = vmax.f32 %v4859, 0.0
    %v5829 = vmax.f32 %v5761, 0.0
    %v5830 = vmax.f32 %v5763, 0.0
    %v5831 = vmax.f32 %v4861, 0.0
    %v5832 = vmax.f32 %v4863, 0.0
    %v5833 = vmax.f32 %v5765, 0.0
    %v5834 = vmax.f32 %v5767, 0.0
    %v5835 = vmax.f32 %v4867, 0.0
    %v5836 = vmax.f32 %v4869, 0.0
    %v5837 = vmax.f32 %v5771, 0.0
    %v5838 = vmax.f32 %v5773, 0.0
    %v5839 = vmax.f32 %v4871, 0.0
    %v5840 = vmax.f32 %v4873, 0.0
    %v5841 = vmax.f32 %v5775, 0.0
    %v5842 = vmax.f32 %v5777, 0.0
    %v5843 = vpack.c.bf16 %v5783, %v5779
    %v5844 = vpack.c.bf16 %v5784, %v5780
    %v5845 = vpack.c.bf16 %v5785, %v5781
    %v5846 = vpack.c.bf16 %v5786, %v5782
    %v5847 = vpack.c.bf16 %v5791, %v5787
    %v5848 = vpack.c.bf16 %v5792, %v5788
    %v5849 = vpack.c.bf16 %v5793, %v5789
    %v5850 = vpack.c.bf16 %v5794, %v5790
    %v5851 = vpack.c.bf16 %v5799, %v5795
    %v5852 = vpack.c.bf16 %v5800, %v5796
    %v5853 = vpack.c.bf16 %v5801, %v5797
    %v5854 = vpack.c.bf16 %v5802, %v5798
    %v5855 = vpack.c.bf16 %v5807, %v5803
    %v5856 = vpack.c.bf16 %v5808, %v5804
    %v5857 = vpack.c.bf16 %v5809, %v5805
    %v5858 = vpack.c.bf16 %v5810, %v5806
    %v5859 = vpack.c.bf16 %v5815, %v5811
    %v5860 = vpack.c.bf16 %v5816, %v5812
    %v5861 = vpack.c.bf16 %v5817, %v5813
    %v5862 = vpack.c.bf16 %v5818, %v5814
    %v5863 = vpack.c.bf16 %v5823, %v5819
    %v5864 = vpack.c.bf16 %v5824, %v5820
    %v5865 = vpack.c.bf16 %v5825, %v5821
    %v5866 = vpack.c.bf16 %v5826, %v5822
    %v5867 = vpack.c.bf16 %v5831, %v5827
    %v5868 = vpack.c.bf16 %v5832, %v5828
    %v5869 = vpack.c.bf16 %v5833, %v5829
    %v5870 = vpack.c.bf16 %v5834, %v5830
    %v5871 = vpack.c.bf16 %v5839, %v5835
    %v5872 = vpack.c.bf16 %v5840, %v5836
    %v5873 = vpack.c.bf16 %v5841, %v5837
    %v5874 = vpack.c.bf16 %v5842, %v5838
    %v5875 = vld [vmem:[#allocation7] sm:$0xf]
    %v5876 = vld [vmem:[#allocation7 + $0x4] sm:$0xf]
    %v5877 = vld [vmem:[#allocation7 + $0x8] sm:$0xf]
    %v5878 = vld [vmem:[#allocation7 + $0xc] sm:$0xf]
    %v5879 = vld [vmem:[#allocation7 + $0x10] sm:$0xf]
    %v5880 = vld [vmem:[#allocation7 + $0x14] sm:$0xf]
    %v5881 = vld [vmem:[#allocation7 + $0x18] sm:$0xf]
    %v5882 = vld [vmem:[#allocation7 + $0x1c] sm:$0xf]
    %v5883 = vld [vmem:[#allocation7 + $0x20] sm:$0xf]
    %v5884 = vld [vmem:[#allocation7 + $0x24] sm:$0xf]
    %v5885 = vld [vmem:[#allocation7 + $0x28] sm:$0xf]
    %v5886 = vld [vmem:[#allocation7 + $0x2c] sm:$0xf]
    %v5887 = vld [vmem:[#allocation7 + $0x30] sm:$0xf]
    %v5888 = vld [vmem:[#allocation7 + $0x34] sm:$0xf]
    %v5889 = vld [vmem:[#allocation7 + $0x38] sm:$0xf]
    %v5890 = vld [vmem:[#allocation7 + $0x3c] sm:$0xf]
    %v5891 = vld [vmem:[#allocation7 + $0x40] sm:$0xf]
    %v5892 = vld [vmem:[#allocation7 + $0x44] sm:$0xf]
    %v5893 = vld [vmem:[#allocation7 + $0x48] sm:$0xf]
    %v5894 = vld [vmem:[#allocation7 + $0x4c] sm:$0xf]
    %v5895 = vld [vmem:[#allocation7 + $0x50] sm:$0xf]
    %v5896 = vld [vmem:[#allocation7 + $0x54] sm:$0xf]
    %v5897 = vld [vmem:[#allocation7 + $0x58] sm:$0xf]
    %v5898 = vld [vmem:[#allocation7 + $0x5c] sm:$0xf]
    %v5899 = vld [vmem:[#allocation7 + $0x60] sm:$0xf]
    %v5900 = vld [vmem:[#allocation7 + $0x64] sm:$0xf]
    %v5901 = vld [vmem:[#allocation7 + $0x68] sm:$0xf]
    %v5902 = vld [vmem:[#allocation7 + $0x6c] sm:$0xf]
    %v5903 = vld [vmem:[#allocation7 + $0x70] sm:$0xf]
    %v5904 = vld [vmem:[#allocation7 + $0x74] sm:$0xf]
    %v5905 = vld [vmem:[#allocation7 + $0x78] sm:$0xf]
    %v5906 = vld [vmem:[#allocation7 + $0x7c] sm:$0xf]
    %v5907 = vld [vmem:[#allocation7 + $0x80] sm:$0xf]
    %v5908 = vld [vmem:[#allocation7 + $0x84] sm:$0xf]
    %v5909 = vld [vmem:[#allocation7 + $0x88] sm:$0xf]
    %v5910 = vld [vmem:[#allocation7 + $0x8c] sm:$0xf]
    %v5911 = vld [vmem:[#allocation7 + $0x90] sm:$0xf]
    %v5912 = vld [vmem:[#allocation7 + $0x94] sm:$0xf]
    %v5913 = vld [vmem:[#allocation7 + $0x98] sm:$0xf]
    %v5914 = vld [vmem:[#allocation7 + $0x9c] sm:$0xf]
    %v5915 = vld [vmem:[#allocation7 + $0xa0] sm:$0xf]
    %v5916 = vld [vmem:[#allocation7 + $0xa4] sm:$0xf]
    %v5917 = vld [vmem:[#allocation7 + $0xa8] sm:$0xf]
    %v5918 = vld [vmem:[#allocation7 + $0xac] sm:$0xf]
    %v5919 = vld [vmem:[#allocation7 + $0xb0] sm:$0xf]
    %v5920 = vld [vmem:[#allocation7 + $0xb4] sm:$0xf]
    %v5921 = vld [vmem:[#allocation7 + $0xb8] sm:$0xf]
    %v5922 = vld [vmem:[#allocation7 + $0xbc] sm:$0xf]
    %v5923 = vld [vmem:[#allocation7 + $0xc0] sm:$0xf]
    %v5924 = vld [vmem:[#allocation7 + $0xc4] sm:$0xf]
    %v5925 = vld [vmem:[#allocation7 + $0xc8] sm:$0xf]
    %v5926 = vld [vmem:[#allocation7 + $0xcc] sm:$0xf]
    %v5927 = vld [vmem:[#allocation7 + $0xd0] sm:$0xf]
    %v5928 = vld [vmem:[#allocation7 + $0xd4] sm:$0xf]
    %v5929 = vld [vmem:[#allocation7 + $0xd8] sm:$0xf]
    %v5930 = vld [vmem:[#allocation7 + $0xdc] sm:$0xf]
    %v5931 = vld [vmem:[#allocation7 + $0xe0] sm:$0xf]
    %v5932 = vld [vmem:[#allocation7 + $0xe4] sm:$0xf]
    %v5933 = vld [vmem:[#allocation7 + $0xe8] sm:$0xf]
    %v5934 = vld [vmem:[#allocation7 + $0xec] sm:$0xf]
    %v5935 = vld [vmem:[#allocation7 + $0xf0] sm:$0xf]
    %v5936 = vld [vmem:[#allocation7 + $0xf4] sm:$0xf]
    %v5937 = vld [vmem:[#allocation7 + $0xf8] sm:$0xf]
    %v5938 = vld [vmem:[#allocation7 + $0xfc] sm:$0xf]
    %v5939 = vld [vmem:[#allocation9] sm:$0x1]
    %v5941 = vlaneseq
    %v5942 = vshrl.u32 %v5941, 7
    %v5943 = vsub.s32 0, %v5942
    %v5944 = vrot.slane %v5939, %v5943
    %v6010 = vunpack.c.l.b16 %v5875
    %v6011 = vunpack.c.l.b16 %v5876
    %v6012 = vunpack.c.l.b16 %v5877
    %v6013 = vunpack.c.l.b16 %v5878
    %v6014 = vunpack.c.l.b16 %v5879
    %v6015 = vunpack.c.l.b16 %v5880
    %v6016 = vunpack.c.l.b16 %v5881
    %v6017 = vunpack.c.l.b16 %v5882
    %v6018 = vunpack.c.l.b16 %v5883
    %v6019 = vunpack.c.l.b16 %v5884
    %v6020 = vunpack.c.l.b16 %v5885
    %v6021 = vunpack.c.l.b16 %v5886
    %v6022 = vunpack.c.l.b16 %v5887
    %v6023 = vunpack.c.l.b16 %v5888
    %v6024 = vunpack.c.l.b16 %v5889
    %v6025 = vunpack.c.l.b16 %v5890
    %v6026 = vunpack.c.l.b16 %v5891
    %v6027 = vunpack.c.l.b16 %v5892
    %v6028 = vunpack.c.l.b16 %v5893
    %v6029 = vunpack.c.l.b16 %v5894
    %v6030 = vunpack.c.l.b16 %v5895
    %v6031 = vunpack.c.l.b16 %v5896
    %v6032 = vunpack.c.l.b16 %v5897
    %v6033 = vunpack.c.l.b16 %v5898
    %v6034 = vunpack.c.l.b16 %v5899
    %v6035 = vunpack.c.l.b16 %v5900
    %v6036 = vunpack.c.l.b16 %v5901
    %v6037 = vunpack.c.l.b16 %v5902
    %v6038 = vunpack.c.l.b16 %v5903
    %v6039 = vunpack.c.l.b16 %v5904
    %v6040 = vunpack.c.l.b16 %v5905
    %v6041 = vunpack.c.l.b16 %v5906
    %v6042 = vunpack.c.l.b16 %v5907
    %v6043 = vunpack.c.l.b16 %v5908
    %v6044 = vunpack.c.l.b16 %v5909
    %v6045 = vunpack.c.l.b16 %v5910
    %v6046 = vunpack.c.l.b16 %v5911
    %v6047 = vunpack.c.l.b16 %v5912
    %v6048 = vunpack.c.l.b16 %v5913
    %v6049 = vunpack.c.l.b16 %v5914
    %v6050 = vunpack.c.l.b16 %v5915
    %v6051 = vunpack.c.l.b16 %v5916
    %v6052 = vunpack.c.l.b16 %v5917
    %v6053 = vunpack.c.l.b16 %v5918
    %v6054 = vunpack.c.l.b16 %v5919
    %v6055 = vunpack.c.l.b16 %v5920
    %v6056 = vunpack.c.l.b16 %v5921
    %v6057 = vunpack.c.l.b16 %v5922
    %v6058 = vunpack.c.l.b16 %v5923
    %v6059 = vunpack.c.l.b16 %v5924
    %v6060 = vunpack.c.l.b16 %v5925
    %v6061 = vunpack.c.l.b16 %v5926
    %v6062 = vunpack.c.l.b16 %v5927
    %v6063 = vunpack.c.l.b16 %v5928
    %v6064 = vunpack.c.l.b16 %v5929
    %v6065 = vunpack.c.l.b16 %v5930
    %v6066 = vunpack.c.l.b16 %v5931
    %v6067 = vunpack.c.l.b16 %v5932
    %v6068 = vunpack.c.l.b16 %v5933
    %v6069 = vunpack.c.l.b16 %v5934
    %v6070 = vunpack.c.l.b16 %v5935
    %v6071 = vunpack.c.l.b16 %v5936
    %v6072 = vunpack.c.l.b16 %v5937
    %v6073 = vunpack.c.l.b16 %v5938
    %v6074 = vpack.c.b16 %v6011, %v6010
    %v6075 = vpack.c.b16 %v6013, %v6012
    %v6076 = vpack.c.b16 %v6015, %v6014
    %v6077 = vpack.c.b16 %v6017, %v6016
    %v6078 = vpack.c.b16 %v6019, %v6018
    %v6079 = vpack.c.b16 %v6021, %v6020
    %v6080 = vpack.c.b16 %v6023, %v6022
    %v6081 = vpack.c.b16 %v6025, %v6024
    %v6082 = vpack.c.b16 %v6027, %v6026
    %v6083 = vpack.c.b16 %v6029, %v6028
    %v6084 = vpack.c.b16 %v6031, %v6030
    %v6085 = vpack.c.b16 %v6033, %v6032
    %v6086 = vpack.c.b16 %v6035, %v6034
    %v6087 = vpack.c.b16 %v6037, %v6036
    %v6088 = vpack.c.b16 %v6039, %v6038
    %v6089 = vpack.c.b16 %v6041, %v6040
    %v6090 = vpack.c.b16 %v6043, %v6042
    %v6091 = vpack.c.b16 %v6045, %v6044
    %v6092 = vpack.c.b16 %v6047, %v6046
    %v6093 = vpack.c.b16 %v6049, %v6048
    %v6094 = vpack.c.b16 %v6051, %v6050
    %v6095 = vpack.c.b16 %v6053, %v6052
    %v6096 = vpack.c.b16 %v6055, %v6054
    %v6097 = vpack.c.b16 %v6057, %v6056
    %v6098 = vpack.c.b16 %v6059, %v6058
    %v6099 = vpack.c.b16 %v6061, %v6060
    %v6100 = vpack.c.b16 %v6063, %v6062
    %v6101 = vpack.c.b16 %v6065, %v6064
    %v6102 = vpack.c.b16 %v6067, %v6066
    %v6103 = vpack.c.b16 %v6069, %v6068
    %v6104 = vpack.c.b16 %v6071, %v6070
    %v6105 = vpack.c.b16 %v6073, %v6072
    %6138 = vmatprep.subr.bf16.mxu0 0
    %6139 = vmatpush1.bf16.msra.mxu0 %v6081
    %6140 = vmatprep.subr.bf16.mxu0 0
    %6141 = vmatpush1.bf16.msra.mxu0 %v6080
    %6142 = vmatprep.subr.bf16.mxu0 0
    %6143 = vmatpush1.bf16.msra.mxu0 %v6079
    %6144 = vmatprep.subr.bf16.mxu0 0
    %6145 = vmatpush1.bf16.msra.mxu0 %v6078
    %6146 = vmatprep.subr.bf16.mxu0 0
    %6147 = vmatpush1.bf16.msra.mxu0 %v6077
    %6148 = vmatprep.subr.bf16.mxu0 0
    %6149 = vmatpush1.bf16.msra.mxu0 %v6076
    %6150 = vmatprep.subr.bf16.mxu0 0
    %6151 = vmatpush1.bf16.msra.mxu0 %v6075
    %6152 = vmatprep.subr.bf16.mxu0 0
    %6153 = vmatpush1.bf16.msra.mxu0 %v6074
    %6154 = vmatprep.subr.bf16.mxu0 0
    %6155 = vmatpush2.bf16.msra.mxu0 %v6089
    %6156 = vmatprep.subr.bf16.mxu0 0
    %6157 = vmatpush2.bf16.msra.mxu0 %v6088
    %6158 = vmatprep.subr.bf16.mxu0 0
    %6159 = vmatpush2.bf16.msra.mxu0 %v6087
    %6160 = vmatprep.subr.bf16.mxu0 0
    %6161 = vmatpush2.bf16.msra.mxu0 %v6086
    %6162 = vmatprep.subr.bf16.mxu0 0
    %6163 = vmatpush2.bf16.msra.mxu0 %v6085
    %6164 = vmatprep.subr.bf16.mxu0 0
    %6165 = vmatpush2.bf16.msra.mxu0 %v6084
    %6166 = vmatprep.subr.bf16.mxu0 0
    %6167 = vmatpush2.bf16.msra.mxu0 %v6083
    %6168 = vmatprep.subr.bf16.mxu0 0
    %6169 = vmatpush2.bf16.msra.mxu0 %v6082
    %6170 = vmatprep.mubr.bf16.mxu0 %v5844
    %6171 = vmatmul.mubr.bf16.gmra.mxu0 %v5843
    %v6172 = vpop.f32.mrf.mxu0
    %v6173 = vadd.f32 %v5944, %v6172
    %v6174 = vpop.f32.mrf.mxu0
    %v6175 = vpop.f32.mrf.mxu0
    %v6176 = vadd.f32 %v5944, %v6175
    %v6177 = vpop.f32.mrf.mxu0
    %6178 = vmatprep.mubr.bf16.mxu0 %v5848
    %6179 = vmatmul.mubr.bf16.gmra.mxu0 %v5847
    %v6180 = vpop.f32.mrf.mxu0
    %v6181 = vadd.f32 %v5944, %v6180
    %v6182 = vpop.f32.mrf.mxu0
    %v6183 = vpop.f32.mrf.mxu0
    %v6184 = vadd.f32 %v5944, %v6183
    %v6185 = vpop.f32.mrf.mxu0
    %6186 = vmatprep.mubr.bf16.mxu0 %v5852
    %6187 = vmatmul.mubr.bf16.gmra.mxu0 %v5851
    %v6188 = vpop.f32.mrf.mxu0
    %v6189 = vadd.f32 %v5944, %v6188
    %v6190 = vpop.f32.mrf.mxu0
    %v6191 = vpop.f32.mrf.mxu0
    %v6192 = vadd.f32 %v5944, %v6191
    %v6193 = vpop.f32.mrf.mxu0
    %6194 = vmatprep.mubr.bf16.mxu0 %v5856
    %6195 = vmatmul.mubr.bf16.gmra.mxu0 %v5855
    %v6196 = vpop.f32.mrf.mxu0
    %v6197 = vadd.f32 %v5944, %v6196
    %v6198 = vpop.f32.mrf.mxu0
    %v6199 = vpop.f32.mrf.mxu0
    %v6200 = vadd.f32 %v5944, %v6199
    %v6201 = vpop.f32.mrf.mxu0
    %6202 = vmatprep.mubr.bf16.mxu0 %v5860
    %6203 = vmatmul.mubr.bf16.gmra.mxu0 %v5859
    %v6204 = vpop.f32.mrf.mxu0
    %v6205 = vadd.f32 %v5944, %v6204
    %v6206 = vpop.f32.mrf.mxu0
    %v6207 = vpop.f32.mrf.mxu0
    %v6208 = vadd.f32 %v5944, %v6207
    %v6209 = vpop.f32.mrf.mxu0
    %6210 = vmatprep.mubr.bf16.mxu0 %v5864
    %6211 = vmatmul.mubr.bf16.gmra.mxu0 %v5863
    %v6212 = vpop.f32.mrf.mxu0
    %v6213 = vadd.f32 %v5944, %v6212
    %v6214 = vpop.f32.mrf.mxu0
    %v6215 = vpop.f32.mrf.mxu0
    %v6216 = vadd.f32 %v5944, %v6215
    %v6217 = vpop.f32.mrf.mxu0
    %6218 = vmatprep.mubr.bf16.mxu0 %v5868
    %6219 = vmatmul.mubr.bf16.gmra.mxu0 %v5867
    %v6220 = vpop.f32.mrf.mxu0
    %v6221 = vadd.f32 %v5944, %v6220
    %v6222 = vpop.f32.mrf.mxu0
    %v6223 = vpop.f32.mrf.mxu0
    %v6224 = vadd.f32 %v5944, %v6223
    %v6225 = vpop.f32.mrf.mxu0
    %6226 = vmatprep.mubr.bf16.mxu0 %v5872
    %6227 = vmatmul.mubr.bf16.gmra.mxu0 %v5871
    %v6228 = vpop.f32.mrf.mxu0
    %v6229 = vadd.f32 %v5944, %v6228
    %v6230 = vpop.f32.mrf.mxu0
    %v6231 = vpop.f32.mrf.mxu0
    %v6232 = vadd.f32 %v5944, %v6231
    %v6233 = vpop.f32.mrf.mxu0
    %6234 = vdwg.mxu0
    %6235 = vmatprep.subr.bf16.mxu0 0
    %6236 = vmatpush1.bf16.msra.mxu0 %v6097
    %6237 = vmatprep.subr.bf16.mxu0 0
    %6238 = vmatpush1.bf16.msra.mxu0 %v6096
    %6239 = vmatprep.subr.bf16.mxu0 0
    %6240 = vmatpush1.bf16.msra.mxu0 %v6095
    %6241 = vmatprep.subr.bf16.mxu0 0
    %6242 = vmatpush1.bf16.msra.mxu0 %v6094
    %6243 = vmatprep.subr.bf16.mxu0 0
    %6244 = vmatpush1.bf16.msra.mxu0 %v6093
    %6245 = vmatprep.subr.bf16.mxu0 0
    %6246 = vmatpush1.bf16.msra.mxu0 %v6092
    %6247 = vmatprep.subr.bf16.mxu0 0
    %6248 = vmatpush1.bf16.msra.mxu0 %v6091
    %6249 = vmatprep.subr.bf16.mxu0 0
    %6250 = vmatpush1.bf16.msra.mxu0 %v6090
    %6251 = vmatprep.subr.bf16.mxu0 0
    %6252 = vmatpush2.bf16.msra.mxu0 %v6105
    %6253 = vmatprep.subr.bf16.mxu0 0
    %6254 = vmatpush2.bf16.msra.mxu0 %v6104
    %6255 = vmatprep.subr.bf16.mxu0 0
    %6256 = vmatpush2.bf16.msra.mxu0 %v6103
    %6257 = vmatprep.subr.bf16.mxu0 0
    %6258 = vmatpush2.bf16.msra.mxu0 %v6102
    %6259 = vmatprep.subr.bf16.mxu0 0
    %6260 = vmatpush2.bf16.msra.mxu0 %v6101
    %6261 = vmatprep.subr.bf16.mxu0 0
    %6262 = vmatpush2.bf16.msra.mxu0 %v6100
    %6263 = vmatprep.subr.bf16.mxu0 0
    %6264 = vmatpush2.bf16.msra.mxu0 %v6099
    %6265 = vmatprep.subr.bf16.mxu0 0
    %6266 = vmatpush2.bf16.msra.mxu0 %v6098
    %6267 = vmatprep.mubr.bf16.mxu0 %v5846
    %6268 = vmatmul.mubr.bf16.gmra.mxu0 %v5845
    %v6269 = vpop.f32.mrf.mxu0
    %v6270 = vadd.f32 %v6173, %v6269
    %v6271 = vpop.f32.mrf.mxu0
    %v6272 = vpop.f32.mrf.mxu0
    %v6273 = vadd.f32 %v6176, %v6272
    %v6274 = vpop.f32.mrf.mxu0
    %6275 = vmatprep.mubr.bf16.mxu0 %v5850
    %6276 = vmatmul.mubr.bf16.gmra.mxu0 %v5849
    %v6277 = vpop.f32.mrf.mxu0
    %v6278 = vadd.f32 %v6181, %v6277
    %v6279 = vpop.f32.mrf.mxu0
    %v6280 = vpop.f32.mrf.mxu0
    %v6281 = vadd.f32 %v6184, %v6280
    %v6282 = vpop.f32.mrf.mxu0
    %6283 = vmatprep.mubr.bf16.mxu0 %v5854
    %6284 = vmatmul.mubr.bf16.gmra.mxu0 %v5853
    %v6285 = vpop.f32.mrf.mxu0
    %v6286 = vadd.f32 %v6189, %v6285
    %v6287 = vpop.f32.mrf.mxu0
    %v6288 = vpop.f32.mrf.mxu0
    %v6289 = vadd.f32 %v6192, %v6288
    %v6290 = vpop.f32.mrf.mxu0
    %6291 = vmatprep.mubr.bf16.mxu0 %v5858
    %6292 = vmatmul.mubr.bf16.gmra.mxu0 %v5857
    %v6293 = vpop.f32.mrf.mxu0
    %v6294 = vadd.f32 %v6197, %v6293
    %v6295 = vpop.f32.mrf.mxu0
    %v6296 = vpop.f32.mrf.mxu0
    %v6297 = vadd.f32 %v6200, %v6296
    %v6298 = vpop.f32.mrf.mxu0
    %6299 = vmatprep.mubr.bf16.mxu0 %v5862
    %6300 = vmatmul.mubr.bf16.gmra.mxu0 %v5861
    %v6301 = vpop.f32.mrf.mxu0
    %v6302 = vadd.f32 %v6205, %v6301
    %v6303 = vpop.f32.mrf.mxu0
    %v6304 = vpop.f32.mrf.mxu0
    %v6305 = vadd.f32 %v6208, %v6304
    %v6306 = vpop.f32.mrf.mxu0
    %6307 = vmatprep.mubr.bf16.mxu0 %v5866
    %6308 = vmatmul.mubr.bf16.gmra.mxu0 %v5865
    %v6309 = vpop.f32.mrf.mxu0
    %v6310 = vadd.f32 %v6213, %v6309
    %v6311 = vpop.f32.mrf.mxu0
    %v6312 = vpop.f32.mrf.mxu0
    %v6313 = vadd.f32 %v6216, %v6312
    %v6314 = vpop.f32.mrf.mxu0
    %6315 = vmatprep.mubr.bf16.mxu0 %v5870
    %6316 = vmatmul.mubr.bf16.gmra.mxu0 %v5869
    %v6317 = vpop.f32.mrf.mxu0
    %v6318 = vadd.f32 %v6221, %v6317
    %v6319 = vpop.f32.mrf.mxu0
    %v6320 = vpop.f32.mrf.mxu0
    %v6321 = vadd.f32 %v6224, %v6320
    %v6322 = vpop.f32.mrf.mxu0
    %6323 = vmatprep.mubr.bf16.mxu0 %v5874
    %6324 = vmatmul.mubr.bf16.gmra.mxu0 %v5873
    %v6325 = vpop.f32.mrf.mxu0
    %v6326 = vadd.f32 %v6229, %v6325
    %v6327 = vpop.f32.mrf.mxu0
    %v6328 = vpop.f32.mrf.mxu0
    %v6329 = vadd.f32 %v6232, %v6328
    %v6330 = vpop.f32.mrf.mxu0
    %6331 = vdwg.mxu0
    %v6332 = vmax.f32 %v6270, 0.0
    %v6333 = vmax.f32 %v6273, 0.0
    %v6334 = vmax.f32 %v6278, 0.0
    %v6335 = vmax.f32 %v6281, 0.0
    %v6336 = vmax.f32 %v6286, 0.0
    %v6337 = vmax.f32 %v6289, 0.0
    %v6338 = vmax.f32 %v6294, 0.0
    %v6339 = vmax.f32 %v6297, 0.0
    %v6340 = vmax.f32 %v6302, 0.0
    %v6341 = vmax.f32 %v6305, 0.0
    %v6342 = vmax.f32 %v6310, 0.0
    %v6343 = vmax.f32 %v6313, 0.0
    %v6344 = vmax.f32 %v6318, 0.0
    %v6345 = vmax.f32 %v6321, 0.0
    %v6346 = vmax.f32 %v6326, 0.0
    %v6347 = vmax.f32 %v6329, 0.0
    %v6348 = vpack.c.bf16 %v6333, %v6332
    %v6349 = vpack.c.bf16 %v6335, %v6334
    %v6350 = vpack.c.bf16 %v6337, %v6336
    %v6351 = vpack.c.bf16 %v6339, %v6338
    %v6352 = vpack.c.bf16 %v6341, %v6340
    %v6353 = vpack.c.bf16 %v6343, %v6342
    %v6354 = vpack.c.bf16 %v6345, %v6344
    %v6355 = vpack.c.bf16 %v6347, %v6346
    %v6356 = vld [vmem:[%s5] sm:$0xf]
    %v6357 = vld [vmem:[%s5 + $0x4] sm:$0xf]
    %v6358 = vld [vmem:[%s5 + $0x8] sm:$0xf]
    %v6359 = vld [vmem:[%s5 + $0xc] sm:$0xf]
    %v6360 = vld [vmem:[%s5 + $0x10] sm:$0xf]
    %v6361 = vld [vmem:[%s5 + $0x14] sm:$0xf]
    %v6362 = vld [vmem:[%s5 + $0x18] sm:$0xf]
    %v6363 = vld [vmem:[%s5 + $0x1c] sm:$0xf]
    %v6364 = vld [vmem:[%s5 + $0x20] sm:$0xf]
    %v6365 = vld [vmem:[%s5 + $0x24] sm:$0xf]
    %v6366 = vld [vmem:[%s5 + $0x28] sm:$0xf]
    %v6367 = vld [vmem:[%s5 + $0x2c] sm:$0xf]
    %v6368 = vld [vmem:[%s5 + $0x30] sm:$0xf]
    %v6369 = vld [vmem:[%s5 + $0x34] sm:$0xf]
    %v6370 = vld [vmem:[%s5 + $0x38] sm:$0xf]
    %v6371 = vld [vmem:[%s5 + $0x3c] sm:$0xf]
    %v6372 = vld [vmem:[#allocation10] sm:$0x1]
    %v6374 = vlaneseq
    %v6375 = vshrl.u32 %v6374, 7
    %v6376 = vsub.s32 0, %v6375
    %v6377 = vrot.slane %v6372, %v6376
    %v6395 = vunpack.c.l.b16 %v6356
    %v6396 = vunpack.c.l.b16 %v6357
    %v6397 = vunpack.c.l.b16 %v6358
    %v6398 = vunpack.c.l.b16 %v6359
    %v6399 = vunpack.c.l.b16 %v6360
    %v6400 = vunpack.c.l.b16 %v6361
    %v6401 = vunpack.c.l.b16 %v6362
    %v6402 = vunpack.c.l.b16 %v6363
    %v6403 = vunpack.c.l.b16 %v6364
    %v6404 = vunpack.c.l.b16 %v6365
    %v6405 = vunpack.c.l.b16 %v6366
    %v6406 = vunpack.c.l.b16 %v6367
    %v6407 = vunpack.c.l.b16 %v6368
    %v6408 = vunpack.c.l.b16 %v6369
    %v6409 = vunpack.c.l.b16 %v6370
    %v6410 = vunpack.c.l.b16 %v6371
    %v6411 = vpack.c.b16 %v6396, %v6395
    %v6412 = vpack.c.b16 %v6398, %v6397
    %v6413 = vpack.c.b16 %v6400, %v6399
    %v6414 = vpack.c.b16 %v6402, %v6401
    %v6415 = vpack.c.b16 %v6404, %v6403
    %v6416 = vpack.c.b16 %v6406, %v6405
    %v6417 = vpack.c.b16 %v6408, %v6407
    %v6418 = vpack.c.b16 %v6410, %v6409
    %6427 = vmatprep.subr.bf16.mxu0 0
    %6428 = vmatpush1.bf16.msra.mxu0 %v6418
    %6429 = vmatprep.subr.bf16.mxu0 0
    %6430 = vmatpush1.bf16.msra.mxu0 %v6417
    %6431 = vmatprep.subr.bf16.mxu0 0
    %6432 = vmatpush1.bf16.msra.mxu0 %v6416
    %6433 = vmatprep.subr.bf16.mxu0 0
    %6434 = vmatpush1.bf16.msra.mxu0 %v6415
    %6435 = vmatprep.subr.bf16.mxu0 0
    %6436 = vmatpush1.bf16.msra.mxu0 %v6414
    %6437 = vmatprep.subr.bf16.mxu0 0
    %6438 = vmatpush1.bf16.msra.mxu0 %v6413
    %6439 = vmatprep.subr.bf16.mxu0 0
    %6440 = vmatpush1.bf16.msra.mxu0 %v6412
    %6441 = vmatprep.subr.bf16.mxu0 0
    %6442 = vmatpush1.bf16.msra.mxu0 %v6411
    %6443 = vmatprep.subr.bf16.mxu0 0
    %6444 = vmatpush2.bf16.msra.mxu0 0
    %6445 = vmatprep.subr.bf16.mxu0 0
    %6446 = vmatpush2.bf16.msra.mxu0 0
    %6447 = vmatprep.subr.bf16.mxu0 0
    %6448 = vmatpush2.bf16.msra.mxu0 0
    %6449 = vmatprep.subr.bf16.mxu0 0
    %6450 = vmatpush2.bf16.msra.mxu0 0
    %6451 = vmatprep.subr.bf16.mxu0 0
    %6452 = vmatpush2.bf16.msra.mxu0 0
    %6453 = vmatprep.subr.bf16.mxu0 0
    %6454 = vmatpush2.bf16.msra.mxu0 0
    %6455 = vmatprep.subr.bf16.mxu0 0
    %6456 = vmatpush2.bf16.msra.mxu0 0
    %6457 = vmatprep.subr.bf16.mxu0 0
    %6458 = vmatpush2.bf16.msra.mxu0 0
    %6459 = vmatprep.mubr.bf16.mxu0 0
    %6460 = vmatmul.mubr.bf16.gmra.mxu0 %v6348
    %v6461 = vpop.f32.mrf.mxu0
    %v6462 = vadd.f32 %v6377, %v6461
    %v6463 = vpop.f32.mrf.mxu0
    %v6464 = vpop.f32.mrf.mxu0
    %v6465 = vadd.f32 %v6377, %v6464
    %v6466 = vpop.f32.mrf.mxu0
    %6467 = vmatprep.mubr.bf16.mxu0 0
    %6468 = vmatmul.mubr.bf16.gmra.mxu0 %v6349
    %v6469 = vpop.f32.mrf.mxu0
    %v6470 = vadd.f32 %v6377, %v6469
    %v6471 = vpop.f32.mrf.mxu0
    %v6472 = vpop.f32.mrf.mxu0
    %v6473 = vadd.f32 %v6377, %v6472
    %v6474 = vpop.f32.mrf.mxu0
    %6475 = vmatprep.mubr.bf16.mxu0 0
    %6476 = vmatmul.mubr.bf16.gmra.mxu0 %v6350
    %v6477 = vpop.f32.mrf.mxu0
    %v6478 = vadd.f32 %v6377, %v6477
    %v6479 = vpop.f32.mrf.mxu0
    %v6480 = vpop.f32.mrf.mxu0
    %v6481 = vadd.f32 %v6377, %v6480
    %v6482 = vpop.f32.mrf.mxu0
    %6483 = vmatprep.mubr.bf16.mxu0 0
    %6484 = vmatmul.mubr.bf16.gmra.mxu0 %v6351
    %v6485 = vpop.f32.mrf.mxu0
    %v6486 = vadd.f32 %v6377, %v6485
    %v6487 = vpop.f32.mrf.mxu0
    %v6488 = vpop.f32.mrf.mxu0
    %v6489 = vadd.f32 %v6377, %v6488
    %v6490 = vpop.f32.mrf.mxu0
    %6491 = vmatprep.mubr.bf16.mxu0 0
    %6492 = vmatmul.mubr.bf16.gmra.mxu0 %v6352
    %v6493 = vpop.f32.mrf.mxu0
    %v6494 = vadd.f32 %v6377, %v6493
    %v6495 = vpop.f32.mrf.mxu0
    %v6496 = vpop.f32.mrf.mxu0
    %v6497 = vadd.f32 %v6377, %v6496
    %v6498 = vpop.f32.mrf.mxu0
    %6499 = vmatprep.mubr.bf16.mxu0 0
    %6500 = vmatmul.mubr.bf16.gmra.mxu0 %v6353
    %v6501 = vpop.f32.mrf.mxu0
    %v6502 = vadd.f32 %v6377, %v6501
    %v6503 = vpop.f32.mrf.mxu0
    %v6504 = vpop.f32.mrf.mxu0
    %v6505 = vadd.f32 %v6377, %v6504
    %v6506 = vpop.f32.mrf.mxu0
    %6507 = vmatprep.mubr.bf16.mxu0 0
    %6508 = vmatmul.mubr.bf16.gmra.mxu0 %v6354
    %v6509 = vpop.f32.mrf.mxu0
    %v6510 = vadd.f32 %v6377, %v6509
    %v6511 = vpop.f32.mrf.mxu0
    %v6512 = vpop.f32.mrf.mxu0
    %v6513 = vadd.f32 %v6377, %v6512
    %v6514 = vpop.f32.mrf.mxu0
    %6515 = vmatprep.mubr.bf16.mxu0 0
    %6516 = vmatmul.mubr.bf16.gmra.mxu0 %v6355
    %v6517 = vpop.f32.mrf.mxu0
    %v6518 = vadd.f32 %v6377, %v6517
    %v6519 = vpop.f32.mrf.mxu0
    %v6520 = vpop.f32.mrf.mxu0
    %v6521 = vadd.f32 %v6377, %v6520
    %v6522 = vpop.f32.mrf.mxu0
    %6523 = vdwg.mxu0
    %v6524 = vmax.f32 %v6462, 0.0
    %v6525 = vmax.f32 %v6465, 0.0
    %v6526 = vmax.f32 %v6470, 0.0
    %v6527 = vmax.f32 %v6473, 0.0
    %v6528 = vmax.f32 %v6478, 0.0
    %v6529 = vmax.f32 %v6481, 0.0
    %v6530 = vmax.f32 %v6486, 0.0
    %v6531 = vmax.f32 %v6489, 0.0
    %v6532 = vmax.f32 %v6494, 0.0
    %v6533 = vmax.f32 %v6497, 0.0
    %v6534 = vmax.f32 %v6502, 0.0
    %v6535 = vmax.f32 %v6505, 0.0
    %v6536 = vmax.f32 %v6510, 0.0
    %v6537 = vmax.f32 %v6513, 0.0
    %v6538 = vmax.f32 %v6518, 0.0
    %v6539 = vmax.f32 %v6521, 0.0
    %v6540 = vld [vmem:[%s7] sm:$0xff]
    %v6541 = vld [vmem:[%s7 + $0x8] sm:$0xff]
    %v6542 = vld [vmem:[%s7 + $0x10] sm:$0xff]
    %v6543 = vld [vmem:[%s7 + $0x18] sm:$0xff]
    %v6544 = vld [vmem:[%s7 + $0x20] sm:$0xff]
    %v6545 = vld [vmem:[%s7 + $0x28] sm:$0xff]
    %v6546 = vld [vmem:[%s7 + $0x30] sm:$0xff]
    %v6547 = vld [vmem:[%s7 + $0x38] sm:$0xff]
    %v6548 = vld [vmem:[%s7 + $0x40] sm:$0xff]
    %v6549 = vld [vmem:[%s7 + $0x48] sm:$0xff]
    %v6550 = vld [vmem:[%s7 + $0x50] sm:$0xff]
    %v6551 = vld [vmem:[%s7 + $0x58] sm:$0xff]
    %v6552 = vld [vmem:[%s7 + $0x60] sm:$0xff]
    %v6553 = vld [vmem:[%s7 + $0x68] sm:$0xff]
    %v6554 = vld [vmem:[%s7 + $0x70] sm:$0xff]
    %v6555 = vld [vmem:[%s7 + $0x78] sm:$0xff]
    %v6556 = vmul.f32 %v6524, %v6540
    %v6557 = vmul.f32 %v6525, %v6541
    %v6558 = vmul.f32 %v6526, %v6542
    %v6559 = vmul.f32 %v6527, %v6543
    %v6560 = vmul.f32 %v6528, %v6544
    %v6561 = vmul.f32 %v6529, %v6545
    %v6562 = vmul.f32 %v6530, %v6546
    %v6563 = vmul.f32 %v6531, %v6547
    %v6564 = vmul.f32 %v6532, %v6548
    %v6565 = vmul.f32 %v6533, %v6549
    %v6566 = vmul.f32 %v6534, %v6550
    %v6567 = vmul.f32 %v6535, %v6551
    %v6568 = vmul.f32 %v6536, %v6552
    %v6569 = vmul.f32 %v6537, %v6553
    %v6570 = vmul.f32 %v6538, %v6554
    %v6571 = vmul.f32 %v6539, %v6555
    %vm6572 = vcmask 261120
    %v6573 = vsel %vm6572, %v6556, 0.0
    %6574 = vadd.xlane.f32.xlu0 %v6573
    %v6575 = vpop.xlane.xlu0 %6574
    %v6576 = vsel %vm6572, %v6557, 0.0
    %6577 = vadd.xlane.f32.xlu0 %v6576
    %v6578 = vpop.xlane.xlu0 %6577
    %v6579 = vsel %vm6572, %v6558, 0.0
    %6580 = vadd.xlane.f32.xlu0 %v6579
    %v6581 = vpop.xlane.xlu0 %6580
    %v6582 = vsel %vm6572, %v6559, 0.0
    %6583 = vadd.xlane.f32.xlu0 %v6582
    %v6584 = vpop.xlane.xlu0 %6583
    %v6585 = vsel %vm6572, %v6560, 0.0
    %6586 = vadd.xlane.f32.xlu0 %v6585
    %v6587 = vpop.xlane.xlu0 %6586
    %v6588 = vsel %vm6572, %v6561, 0.0
    %6589 = vadd.xlane.f32.xlu0 %v6588
    %v6590 = vpop.xlane.xlu0 %6589
    %v6591 = vsel %vm6572, %v6562, 0.0
    %6592 = vadd.xlane.f32.xlu0 %v6591
    %v6593 = vpop.xlane.xlu0 %6592
    %v6594 = vsel %vm6572, %v6563, 0.0
    %6595 = vadd.xlane.f32.xlu0 %v6594
    %v6596 = vpop.xlane.xlu0 %6595
    %v6597 = vsel %vm6572, %v6564, 0.0
    %6598 = vadd.xlane.f32.xlu0 %v6597
    %v6599 = vpop.xlane.xlu0 %6598
    %v6600 = vsel %vm6572, %v6565, 0.0
    %6601 = vadd.xlane.f32.xlu0 %v6600
    %v6602 = vpop.xlane.xlu0 %6601
    %v6603 = vsel %vm6572, %v6566, 0.0
    %6604 = vadd.xlane.f32.xlu0 %v6603
    %v6605 = vpop.xlane.xlu0 %6604
    %v6606 = vsel %vm6572, %v6567, 0.0
    %6607 = vadd.xlane.f32.xlu0 %v6606
    %v6608 = vpop.xlane.xlu0 %6607
    %v6609 = vsel %vm6572, %v6568, 0.0
    %6610 = vadd.xlane.f32.xlu0 %v6609
    %v6611 = vpop.xlane.xlu0 %6610
    %v6612 = vsel %vm6572, %v6569, 0.0
    %6613 = vadd.xlane.f32.xlu0 %v6612
    %v6614 = vpop.xlane.xlu0 %6613
    %v6615 = vsel %vm6572, %v6570, 0.0
    %6616 = vadd.xlane.f32.xlu0 %v6615
    %v6617 = vpop.xlane.xlu0 %6616
    %v6618 = vsel %vm6572, %v6571, 0.0
    %6619 = vadd.xlane.f32.xlu0 %v6618
    %v6620 = vpop.xlane.xlu0 %6619
    %v6621 = vld [vmem:[%s8] sm:$0xff]
    %v6622 = vld [vmem:[%s8 + $0x8] sm:$0xff]
    %v6623 = vld [vmem:[%s8 + $0x10] sm:$0xff]
    %v6624 = vld [vmem:[%s8 + $0x18] sm:$0xff]
    %v6625 = vld [vmem:[%s8 + $0x20] sm:$0xff]
    %v6626 = vld [vmem:[%s8 + $0x28] sm:$0xff]
    %v6627 = vld [vmem:[%s8 + $0x30] sm:$0xff]
    %v6628 = vld [vmem:[%s8 + $0x38] sm:$0xff]
    %v6629 = vld [vmem:[%s8 + $0x40] sm:$0xff]
    %v6630 = vld [vmem:[%s8 + $0x48] sm:$0xff]
    %v6631 = vld [vmem:[%s8 + $0x50] sm:$0xff]
    %v6632 = vld [vmem:[%s8 + $0x58] sm:$0xff]
    %v6633 = vld [vmem:[%s8 + $0x60] sm:$0xff]
    %v6634 = vld [vmem:[%s8 + $0x68] sm:$0xff]
    %v6635 = vld [vmem:[%s8 + $0x70] sm:$0xff]
    %v6636 = vld [vmem:[%s8 + $0x78] sm:$0xff]
    %v6637 = vmul.f32 %v6524, %v6621
    %v6638 = vmul.f32 %v6525, %v6622
    %v6639 = vmul.f32 %v6526, %v6623
    %v6640 = vmul.f32 %v6527, %v6624
    %v6641 = vmul.f32 %v6528, %v6625
    %v6642 = vmul.f32 %v6529, %v6626
    %v6643 = vmul.f32 %v6530, %v6627
    %v6644 = vmul.f32 %v6531, %v6628
    %v6645 = vmul.f32 %v6532, %v6629
    %v6646 = vmul.f32 %v6533, %v6630
    %v6647 = vmul.f32 %v6534, %v6631
    %v6648 = vmul.f32 %v6535, %v6632
    %v6649 = vmul.f32 %v6536, %v6633
    %v6650 = vmul.f32 %v6537, %v6634
    %v6651 = vmul.f32 %v6538, %v6635
    %v6652 = vmul.f32 %v6539, %v6636
    %v6653 = vsel %vm6572, %v6637, 0.0
    %6654 = vadd.xlane.f32.xlu0 %v6653
    %v6655 = vpop.xlane.xlu0 %6654
    %v6656 = vsel %vm6572, %v6638, 0.0
    %6657 = vadd.xlane.f32.xlu0 %v6656
    %v6658 = vpop.xlane.xlu0 %6657
    %v6659 = vsel %vm6572, %v6639, 0.0
    %6660 = vadd.xlane.f32.xlu0 %v6659
    %v6661 = vpop.xlane.xlu0 %6660
    %v6662 = vsel %vm6572, %v6640, 0.0
    %6663 = vadd.xlane.f32.xlu0 %v6662
    %v6664 = vpop.xlane.xlu0 %6663
    %v6665 = vsel %vm6572, %v6641, 0.0
    %6666 = vadd.xlane.f32.xlu0 %v6665
    %v6667 = vpop.xlane.xlu0 %6666
    %v6668 = vsel %vm6572, %v6642, 0.0
    %6669 = vadd.xlane.f32.xlu0 %v6668
    %v6670 = vpop.xlane.xlu0 %6669
    %v6671 = vsel %vm6572, %v6643, 0.0
    %6672 = vadd.xlane.f32.xlu0 %v6671
    %v6673 = vpop.xlane.xlu0 %6672
    %v6674 = vsel %vm6572, %v6644, 0.0
    %6675 = vadd.xlane.f32.xlu0 %v6674
    %v6676 = vpop.xlane.xlu0 %6675
    %v6677 = vsel %vm6572, %v6645, 0.0
    %6678 = vadd.xlane.f32.xlu0 %v6677
    %v6679 = vpop.xlane.xlu0 %6678
    %v6680 = vsel %vm6572, %v6646, 0.0
    %6681 = vadd.xlane.f32.xlu0 %v6680
    %v6682 = vpop.xlane.xlu0 %6681
    %v6683 = vsel %vm6572, %v6647, 0.0
    %6684 = vadd.xlane.f32.xlu0 %v6683
    %v6685 = vpop.xlane.xlu0 %6684
    %v6686 = vsel %vm6572, %v6648, 0.0
    %6687 = vadd.xlane.f32.xlu0 %v6686
    %v6688 = vpop.xlane.xlu0 %6687
    %v6689 = vsel %vm6572, %v6649, 0.0
    %6690 = vadd.xlane.f32.xlu0 %v6689
    %v6691 = vpop.xlane.xlu0 %6690
    %v6692 = vsel %vm6572, %v6650, 0.0
    %6693 = vadd.xlane.f32.xlu0 %v6692
    %v6694 = vpop.xlane.xlu0 %6693
    %v6695 = vsel %vm6572, %v6651, 0.0
    %6696 = vadd.xlane.f32.xlu0 %v6695
    %v6697 = vpop.xlane.xlu0 %6696
    %v6698 = vsel %vm6572, %v6652, 0.0
    %6699 = vadd.xlane.f32.xlu0 %v6698
    %v6700 = vpop.xlane.xlu0 %6699
    %v6701 = vlaneseq
    %v6702 = vand.u32 %v6701, 127
    %vm6703 = vcmp.eq.s32.totalorder %v6702, 0
    %v6704 = vsel %vm6703, %v6575, %v6655
    %v6705 = vsel %vm6703, %v6578, %v6658
    %v6706 = vsel %vm6703, %v6581, %v6661
    %v6707 = vsel %vm6703, %v6584, %v6664
    %v6708 = vsel %vm6703, %v6587, %v6667
    %v6709 = vsel %vm6703, %v6590, %v6670
    %v6710 = vsel %vm6703, %v6593, %v6673
    %v6711 = vsel %vm6703, %v6596, %v6676
    %v6712 = vsel %vm6703, %v6599, %v6679
    %v6713 = vsel %vm6703, %v6602, %v6682
    %v6714 = vsel %vm6703, %v6605, %v6685
    %v6715 = vsel %vm6703, %v6608, %v6688
    %v6716 = vsel %vm6703, %v6611, %v6691
    %v6717 = vsel %vm6703, %v6614, %v6694
    %v6718 = vsel %vm6703, %v6617, %v6697
    %v6719 = vsel %vm6703, %v6620, %v6700
    %vm6720 = vcmask 15360
    %6721 = vst.msk [vmem:[%s9] sm:$0xff] %vm6720, %v6704
    %6722 = vst.msk [vmem:[%s9 + $0x8] sm:$0xff] %vm6720, %v6705
    %6723 = vst.msk [vmem:[%s9 + $0x10] sm:$0xff] %vm6720, %v6706
    %6724 = vst.msk [vmem:[%s9 + $0x18] sm:$0xff] %vm6720, %v6707
    %6725 = vst.msk [vmem:[%s9 + $0x20] sm:$0xff] %vm6720, %v6708
    %6726 = vst.msk [vmem:[%s9 + $0x28] sm:$0xff] %vm6720, %v6709
    %6727 = vst.msk [vmem:[%s9 + $0x30] sm:$0xff] %vm6720, %v6710
    %6728 = vst.msk [vmem:[%s9 + $0x38] sm:$0xff] %vm6720, %v6711
    %6729 = vst.msk [vmem:[%s9 + $0x40] sm:$0xff] %vm6720, %v6712
    %6730 = vst.msk [vmem:[%s9 + $0x48] sm:$0xff] %vm6720, %v6713
    %6731 = vst.msk [vmem:[%s9 + $0x50] sm:$0xff] %vm6720, %v6714
    %6732 = vst.msk [vmem:[%s9 + $0x58] sm:$0xff] %vm6720, %v6715
    %6733 = vst.msk [vmem:[%s9 + $0x60] sm:$0xff] %vm6720, %v6716
    %6734 = vst.msk [vmem:[%s9 + $0x68] sm:$0xff] %vm6720, %v6717
    %6735 = vst.msk [vmem:[%s9 + $0x70] sm:$0xff] %vm6720, %v6718
    %6736 = vst.msk [vmem:[%s9 + $0x78] sm:$0xff] %vm6720, %v6719
    // Predicated region
    $region62: #{tpu_custom_call.1} parent=1 // pred_check
      _
    $region63: #{tpu_custom_call.1} parent=1 // pred_check_branch
      %6738 = sbr.rel (0) target = $region65
    $region64: #{tpu_custom_call.1} parent=1 // pred_region
      _
    $region65: #{tpu_custom_call.1} parent=1 // pred_fallthru
      _
    // Predicated region
    $region66: #{tpu_custom_call.1} parent=1 // pred_check
      _
    $region67: #{tpu_custom_call.1} parent=1 // pred_check_branch
      %6740 = sbr.rel (0) target = $region69
    $region68: #{tpu_custom_call.1} parent=1 // pred_region
      _
    $region69: #{tpu_custom_call.1} parent=1 // pred_fallthru
      _
    %6741 = vsyncpa [#allocation3], 1
    %6742 = vsyncpa [#allocation5], 1
    %6743 = vsyncpa [#allocation8], 1
    %6744 = vsyncpa [#allocation11], 1

// kernel: tpu_custom_call.1
$region0: #{tpu_custom_call.1}
  #allocation0 [shape = 'u32[]', space=smem, size = 0x4, offset = 0x4, fixed_abs, tag = 'smem constant byte address 0x4 - core index']
  #allocation1 [shape = 'u32[144,128]{1,0:T(1,128)}', space=vmem, size = 0x12000, scoped, tag = 'internal scratch']
  %s0 = inlined_call_operand.hbm [shape: bf16[128,2048], index: 0, kind: input, shape index: {}]
  %s1 = inlined_call_operand.hbm [shape: bf16[2048,512], index: 1, kind: input, shape index: {}]
  %s2 = inlined_call_operand.hbm [shape: f32[1,512], index: 2, kind: input, shape index: {}]
  %s3 = inlined_call_operand.hbm [shape: bf16[512,128], index: 3, kind: input, shape index: {}]
  %s4 = inlined_call_operand.hbm [shape: f32[1,128], index: 4, kind: input, shape index: {}]
  %s5 = inlined_call_operand.vmem [shape: bf16[128,32], index: 5, kind: input, shape index: {}]
  %s6 = inlined_call_operand.hbm [shape: f32[1,32], index: 6, kind: input, shape index: {}]
  %s7 = inlined_call_operand.vmem [shape: f32[128,32], index: 7, kind: input, shape index: {}]
  %s8 = inlined_call_operand.vmem [shape: f32[128,32], index: 8, kind: input, shape index: {}]
  %s9 = inlined_call_operand.vmem [shape: f32[128,2], index: 9, kind: output, shape index: {}]
  %s10 = sld [smem:[#allocation0]]
  $region70: #{tpu_custom_call.1} parent=0
    _
  %s12 = ssub.s32 1, %s10
  %s13 = scalar_select 0, %s12, %s10
  $region1: #{tpu_custom_call.1} parent=0
    #allocation2 [shape = 'u8[524288]{0}', space=vmem, size = 0x80000, scoped, tag = 'input window, operand 0, single buffered']
    #allocation3 [shape = 's32[1]{0}', space=sflag, size = 0x4, scoped, tag = 'scoped memory for tpu_custom_call.1']
    #allocation4 [shape = 'u8[2097152]{0}', space=vmem, size = 0x200000, scoped, tag = 'input window, operand 1, single buffered']
    #allocation5 [shape = 's32[1]{0}', space=sflag, size = 0x4, scoped, tag = 'scoped memory for tpu_custom_call.1']
    #allocation6 [shape = 'u8[2048]{0}', space=vmem, size = 0x800, scoped, tag = 'input window, operand 2, single buffered']
    #allocation7 [shape = 'u8[131072]{0}', space=vmem, size = 0x20000, scoped, tag = 'input window, operand 3, single buffered']
    #allocation8 [shape = 's32[1]{0}', space=sflag, size = 0x4, scoped, tag = 'scoped memory for tpu_custom_call.1']
    #allocation9 [shape = 'u8[512]{0}', space=vmem, size = 0x400, scoped, tag = 'input window, operand 4, single buffered']
    #allocation10 [shape = 'u8[512]{0}', space=vmem, size = 0x400, scoped, tag = 'input window, operand 6, single buffered']
    #allocation11 [shape = 's32[1]{0}', space=sflag, size = 0x4, scoped, tag = 'scoped memory for tpu_custom_call.1']
    %14 = vsyncpa [#allocation3], 0
    %15 = vsyncpa [#allocation5], 0
    %16 = vsyncpa [#allocation8], 0
    %17 = vsyncpa [#allocation11], 0
    // Predicated region
    $region2: #{tpu_custom_call.1} parent=1 // pred_check
      _
    $region3: #{tpu_custom_call.1} parent=1 // pred_check_branch
      %19 = sbr.rel (0) target = $region5
    $region4: #{tpu_custom_call.1} parent=1 // pred_region
      %s21 = ssub.s32 16384, 16384
      %22 = vsyncadd [#allocation3], %s21
      %s23 = sshll.u32 [#allocation2], 4
      %s24 = int_to_ptr.vmem [resolvable:$true] %s23
      %29 = dma.hbm_to_vmem [thread:$0]  %s0, 16384, %s24, [#allocation3], 1024, 1024, 64
    $region5: #{tpu_custom_call.1} parent=1 // pred_fallthru
      _
    // Predicated region
    $region6: #{tpu_custom_call.1} parent=1 // pred_check
      _
    $region7: #{tpu_custom_call.1} parent=1 // pred_check_branch
      %31 = sbr.rel (0) target = $region9
    $region8: #{tpu_custom_call.1} parent=1 // pred_region
      %s33 = ssub.s32 65536, 65536
      %34 = vsyncadd [#allocation5], %s33
      %s35 = sshll.u32 [#allocation4], 4
      %s36 = int_to_ptr.vmem [resolvable:$true] %s35
      %41 = dma.hbm_to_vmem [thread:$0]  %s1, 65536, %s36, [#allocation5], 256, 256, 16
    $region9: #{tpu_custom_call.1} parent=1 // pred_fallthru
      _
    // Predicated region
    $region10: #{tpu_custom_call.1} parent=1 // pred_check
      _
    $region11: #{tpu_custom_call.1} parent=1 // pred_check_branch
      %43 = sbr.rel (0) target = $region13
    $region12: #{tpu_custom_call.1} parent=1 // pred_region
      %s45 = ssub.s32 64, 64
      %46 = vsyncadd [#allocation5], %s45
      %s48 = sshll.u32 [#allocation6], 4
      %s49 = int_to_ptr.vmem [resolvable:$true] %s48
      %51 = dma.hbm_to_vmem [thread:$0]  %s2, 64, %s49, [#allocation5]
    $region13: #{tpu_custom_call.1} parent=1 // pred_fallthru
      _
    // Predicated region
    $region14: #{tpu_custom_call.1} parent=1 // pred_check
      _
    $region15: #{tpu_custom_call.1} parent=1 // pred_check_branch
      %53 = sbr.rel (0) target = $region17
    $region16: #{tpu_custom_call.1} parent=1 // pred_region
      %s55 = ssub.s32 4096, 4096
      %56 = vsyncadd [#allocation8], %s55
      %s57 = sshll.u32 [#allocation7], 4
      %s58 = int_to_ptr.vmem [resolvable:$true] %s57
      %63 = dma.hbm_to_vmem [thread:$0]  %s3, 4096, %s58, [#allocation8], 64, 64, 4
    $region17: #{tpu_custom_call.1} parent=1 // pred_fallthru
      _
    // Predicated region
    $region18: #{tpu_custom_call.1} parent=1 // pred_check
      _
    $region19: #{tpu_custom_call.1} parent=1 // pred_check_branch
      %65 = sbr.rel (0) target = $region21
    $region20: #{tpu_custom_call.1} parent=1 // pred_region
      %s67 = ssub.s32 16, 16
      %68 = vsyncadd [#allocation8], %s67
      %s70 = sshll.u32 [#allocation9], 4
      %s71 = int_to_ptr.vmem [resolvable:$true] %s70
      %73 = dma.hbm_to_vmem [thread:$0]  %s4, 16, %s71, [#allocation8]
    $region21: #{tpu_custom_call.1} parent=1 // pred_fallthru
      _
    // Predicated region
    $region22: #{tpu_custom_call.1} parent=1 // pred_check
      _
    $region23: #{tpu_custom_call.1} parent=1 // pred_check_branch
      %75 = sbr.rel (0) target = $region25
    $region24: #{tpu_custom_call.1} parent=1 // pred_region
      _
    $region25: #{tpu_custom_call.1} parent=1 // pred_fallthru
      _
    // Predicated region
    $region26: #{tpu_custom_call.1} parent=1 // pred_check
      _
    $region27: #{tpu_custom_call.1} parent=1 // pred_check_branch
      %77 = sbr.rel (0) target = $region29
    $region28: #{tpu_custom_call.1} parent=1 // pred_region
      %s79 = ssub.s32 16, 16
      %80 = vsyncadd [#allocation11], %s79
      %s82 = sshll.u32 [#allocation10], 4
      %s83 = int_to_ptr.vmem [resolvable:$true] %s82
      %85 = dma.hbm_to_vmem [thread:$0]  %s6, 16, %s83, [#allocation11]
    $region29: #{tpu_custom_call.1} parent=1 // pred_fallthru
      _
    // Predicated region
    $region30: #{tpu_custom_call.1} parent=1 // pred_check
      _
    $region31: #{tpu_custom_call.1} parent=1 // pred_check_branch
      %87 = sbr.rel (0) target = $region33
    $region32: #{tpu_custom_call.1} parent=1 // pred_region
      _
    $region33: #{tpu_custom_call.1} parent=1 // pred_fallthru
      _
    // Predicated region
    $region34: #{tpu_custom_call.1} parent=1 // pred_check
      _
    $region35: #{tpu_custom_call.1} parent=1 // pred_check_branch
      %89 = sbr.rel (0) target = $region37
    $region36: #{tpu_custom_call.1} parent=1 // pred_region
      _
    $region37: #{tpu_custom_call.1} parent=1 // pred_fallthru
      _
    // Predicated region
    $region38: #{tpu_custom_call.1} parent=1 // pred_check
      _
    $region39: #{tpu_custom_call.1} parent=1 // pred_check_branch
      %91 = sbr.rel (0) target = $region41
    $region40: #{tpu_custom_call.1} parent=1 // pred_region
      %92 = dma.done [#allocation3], 16384
    $region41: #{tpu_custom_call.1} parent=1 // pred_fallthru
      _
    // Predicated region
    $region42: #{tpu_custom_call.1} parent=1 // pred_check
      _
    $region43: #{tpu_custom_call.1} parent=1 // pred_check_branch
      %94 = sbr.rel (0) target = $region45
    $region44: #{tpu_custom_call.1} parent=1 // pred_region
      %95 = dma.done [#allocation5], 65536
    $region45: #{tpu_custom_call.1} parent=1 // pred_fallthru
      _
    // Predicated region
    $region46: #{tpu_custom_call.1} parent=1 // pred_check
      _
    $region47: #{tpu_custom_call.1} parent=1 // pred_check_branch
      %97 = sbr.rel (0) target = $region49
    $region48: #{tpu_custom_call.1} parent=1 // pred_region
      %98 = dma.done [#allocation5], 64
    $region49: #{tpu_custom_call.1} parent=1 // pred_fallthru
      _
    // Predicated region
    $region50: #{tpu_custom_call.1} parent=1 // pred_check
      _
    $region51: #{tpu_custom_call.1} parent=1 // pred_check_branch
      %100 = sbr.rel (0) target = $region53
    $region52: #{tpu_custom_call.1} parent=1 // pred_region
      %101 = dma.done [#allocation8], 4096
    $region53: #{tpu_custom_call.1} parent=1 // pred_fallthru
      _
    // Predicated region
    $region54: #{tpu_custom_call.1} parent=1 // pred_check
      _
    $region55: #{tpu_custom_call.1} parent=1 // pred_check_branch
      %103 = sbr.rel (0) target = $region57
    $region56: #{tpu_custom_call.1} parent=1 // pred_region
      %104 = dma.done [#allocation8], 16
    $region57: #{tpu_custom_call.1} parent=1 // pred_fallthru
      _
    // Predicated region
    $region58: #{tpu_custom_call.1} parent=1 // pred_check
      _
    $region59: #{tpu_custom_call.1} parent=1 // pred_check_branch
      %106 = sbr.rel (0) target = $region61
    $region60: #{tpu_custom_call.1} parent=1 // pred_region
      %107 = dma.done [#allocation11], 16
    $region61: #{tpu_custom_call.1} parent=1 // pred_fallthru
      _
    %v109 = vld [vmem:[#allocation2] sm:$0xff]
    %v110 = vld [vmem:[#allocation2 + $0x8] sm:$0xff]
    %v111 = vld [vmem:[#allocation2 + $0x10] sm:$0xff]
    %v112 = vld [vmem:[#allocation2 + $0x18] sm:$0xff]
    %v113 = vld [vmem:[#allocation2 + $0x20] sm:$0xff]
    %v114 = vld [vmem:[#allocation2 + $0x28] sm:$0xff]
    %v115 = vld [vmem:[#allocation2 + $0x30] sm:$0xff]
    %v116 = vld [vmem:[#allocation2 + $0x38] sm:$0xff]
    %v117 = vld [vmem:[#allocation2 + $0x40] sm:$0xff]
    %v118 = vld [vmem:[#allocation2 + $0x48] sm:$0xff]
    %v119 = vld [vmem:[#allocation2 + $0x50] sm:$0xff]
    %v120 = vld [vmem:[#allocation2 + $0x58] sm:$0xff]
    %v121 = vld [vmem:[#allocation2 + $0x60] sm:$0xff]
    %v122 = vld [vmem:[#allocation2 + $0x68] sm:$0xff]
    %v123 = vld [vmem:[#allocation2 + $0x70] sm:$0xff]
    %v124 = vld [vmem:[#allocation2 + $0x78] sm:$0xff]
    %v125 = vld [vmem:[#allocation2 + $0x80] sm:$0xff]
    %v126 = vld [vmem:[#allocation2 + $0x88] sm:$0xff]
    %v127 = vld [vmem:[#allocation2 + $0x90] sm:$0xff]
    %v128 = vld [vmem:[#allocation2 + $0x98] sm:$0xff]
    %v129 = vld [vmem:[#allocation2 + $0xa0] sm:$0xff]
    %v130 = vld [vmem:[#allocation2 + $0xa8] sm:$0xff]
    %v131 = vld [vmem:[#allocation2 + $0xb0] sm:$0xff]
    %v132 = vld [vmem:[#allocation2 + $0xb8] sm:$0xff]
    %v133 = vld [vmem:[#allocation2 + $0xc0] sm:$0xff]
    %v134 = vld [vmem:[#allocation2 + $0xc8] sm:$0xff]
    %v135 = vld [vmem:[#allocation2 + $0xd0] sm:$0xff]
    %v136 = vld [vmem:[#allocation2 + $0xd8] sm:$0xff]
    %v137 = vld [vmem:[#allocation2 + $0xe0] sm:$0xff]
    %v138 = vld [vmem:[#allocation2 + $0xe8] sm:$0xff]
    %v139 = vld [vmem:[#allocation2 + $0xf0] sm:$0xff]
    %v140 = vld [vmem:[#allocation2 + $0xf8] sm:$0xff]
    %v141 = vld [vmem:[#allocation2 + $0x100] sm:$0xff]
    %v142 = vld [vmem:[#allocation2 + $0x108] sm:$0xff]
    %v143 = vld [vmem:[#allocation2 + $0x110] sm:$0xff]
    %v144 = vld [vmem:[#allocation2 + $0x118] sm:$0xff]
    %v145 = vld [vmem:[#allocation2 + $0x120] sm:$0xff]
    %v146 = vld [vmem:[#allocation2 + $0x128] sm:$0xff]
    %v147 = vld [vmem:[#allocation2 + $0x130] sm:$0xff]
    %v148 = vld [vmem:[#allocation2 + $0x138] sm:$0xff]
    %v149 = vld [vmem:[#allocation2 + $0x140] sm:$0xff]
    %v150 = vld [vmem:[#allocation2 + $0x148] sm:$0xff]
    %v151 = vld [vmem:[#allocation2 + $0x150] sm:$0xff]
    %v152 = vld [vmem:[#allocation2 + $0x158] sm:$0xff]
    %v153 = vld [vmem:[#allocation2 + $0x160] sm:$0xff]
    %v154 = vld [vmem:[#allocation2 + $0x168] sm:$0xff]
    %v155 = vld [vmem:[#allocation2 + $0x170] sm:$0xff]
    %v156 = vld [vmem:[#allocation2 + $0x178] sm:$0xff]
    %v157 = vld [vmem:[#allocation2 + $0x180] sm:$0xff]
    %v158 = vld [vmem:[#allocation2 + $0x188] sm:$0xff]
    %v159 = vld [vmem:[#allocation2 + $0x190] sm:$0xff]
    %v160 = vld [vmem:[#allocation2 + $0x198] sm:$0xff]
    %v161 = vld [vmem:[#allocation2 + $0x1a0] sm:$0xff]
    %v162 = vld [vmem:[#allocation2 + $0x1a8] sm:$0xff]
    %v163 = vld [vmem:[#allocation2 + $0x1b0] sm:$0xff]
    %v164 = vld [vmem:[#allocation2 + $0x1b8] sm:$0xff]
    %v165 = vld [vmem:[#allocation2 + $0x1c0] sm:$0xff]
    %v166 = vld [vmem:[#allocation2 + $0x1c8] sm:$0xff]
    %v167 = vld [vmem:[#allocation2 + $0x1d0] sm:$0xff]
    %v168 = vld [vmem:[#allocation2 + $0x1d8] sm:$0xff]
    %v169 = vld [vmem:[#allocation2 + $0x1e0] sm:$0xff]
    %v170 = vld [vmem:[#allocation2 + $0x1e8] sm:$0xff]
    %v171 = vld [vmem:[#allocation2 + $0x1f0] sm:$0xff]
    %v172 = vld [vmem:[#allocation2 + $0x1f8] sm:$0xff]
    %v173 = vld [vmem:[#allocation2 + $0x200] sm:$0xff]
    %v174 = vld [vmem:[#allocation2 + $0x208] sm:$0xff]
    %v175 = vld [vmem:[#allocation2 + $0x210] sm:$0xff]
    %v176 = vld [vmem:[#allocation2 + $0x218] sm:$0xff]
    %v177 = vld [vmem:[#allocation2 + $0x220] sm:$0xff]
    %v178 = vld [vmem:[#allocation2 + $0x228] sm:$0xff]
    %v179 = vld [vmem:[#allocation2 + $0x230] sm:$0xff]
    %v180 = vld [vmem:[#allocation2 + $0x238] sm:$0xff]
    %v181 = vld [vmem:[#allocation2 + $0x240] sm:$0xff]
    %v182 = vld [vmem:[#allocation2 + $0x248] sm:$0xff]
    %v183 = vld [vmem:[#allocation2 + $0x250] sm:$0xff]
    %v184 = vld [vmem:[#allocation2 + $0x258] sm:$0xff]
    %v185 = vld [vmem:[#allocation2 + $0x260] sm:$0xff]
    %v186 = vld [vmem:[#allocation2 + $0x268] sm:$0xff]
    %v187 = vld [vmem:[#allocation2 + $0x270] sm:$0xff]
    %v188 = vld [vmem:[#allocation2 + $0x278] sm:$0xff]
    %v189 = vld [vmem:[#allocation2 + $0x280] sm:$0xff]
    %v190 = vld [vmem:[#allocation2 + $0x288] sm:$0xff]
    %v191 = vld [vmem:[#allocation2 + $0x290] sm:$0xff]
    %v192 = vld [vmem:[#allocation2 + $0x298] sm:$0xff]
    %v193 = vld [vmem:[#allocation2 + $0x2a0] sm:$0xff]
    %v194 = vld [vmem:[#allocation2 + $0x2a8] sm:$0xff]
    %v195 = vld [vmem:[#allocation2 + $0x2b0] sm:$0xff]
    %v196 = vld [vmem:[#allocation2 + $0x2b8] sm:$0xff]
    %v197 = vld [vmem:[#allocation2 + $0x2c0] sm:$0xff]
    %v198 = vld [vmem:[#allocation2 + $0x2c8] sm:$0xff]
    %v199 = vld [vmem:[#allocation2 + $0x2d0] sm:$0xff]
    %v200 = vld [vmem:[#allocation2 + $0x2d8] sm:$0xff]
    %v201 = vld [vmem:[#allocation2 + $0x2e0] sm:$0xff]
    %v202 = vld [vmem:[#allocation2 + $0x2e8] sm:$0xff]
    %v203 = vld [vmem:[#allocation2 + $0x2f0] sm:$0xff]
    %v204 = vld [vmem:[#allocation2 + $0x2f8] sm:$0xff]
    %v205 = vld [vmem:[#allocation2 + $0x300] sm:$0xff]
    %v206 = vld [vmem:[#allocation2 + $0x308] sm:$0xff]
    %v207 = vld [vmem:[#allocation2 + $0x310] sm:$0xff]
    %v208 = vld [vmem:[#allocation2 + $0x318] sm:$0xff]
    %v209 = vld [vmem:[#allocation2 + $0x320] sm:$0xff]
    %v210 = vld [vmem:[#allocation2 + $0x328] sm:$0xff]
    %v211 = vld [vmem:[#allocation2 + $0x330] sm:$0xff]
    %v212 = vld [vmem:[#allocation2 + $0x338] sm:$0xff]
    %v213 = vld [vmem:[#allocation2 + $0x340] sm:$0xff]
    %v214 = vld [vmem:[#allocation2 + $0x348] sm:$0xff]
    %v215 = vld [vmem:[#allocation2 + $0x350] sm:$0xff]
    %v216 = vld [vmem:[#allocation2 + $0x358] sm:$0xff]
    %v217 = vld [vmem:[#allocation2 + $0x360] sm:$0xff]
    %v218 = vld [vmem:[#allocation2 + $0x368] sm:$0xff]
    %v219 = vld [vmem:[#allocation2 + $0x370] sm:$0xff]
    %v220 = vld [vmem:[#allocation2 + $0x378] sm:$0xff]
    %v221 = vld [vmem:[#allocation2 + $0x380] sm:$0xff]
    %v222 = vld [vmem:[#allocation2 + $0x388] sm:$0xff]
    %v223 = vld [vmem:[#allocation2 + $0x390] sm:$0xff]
    %v224 = vld [vmem:[#allocation2 + $0x398] sm:$0xff]
    %v225 = vld [vmem:[#allocation2 + $0x3a0] sm:$0xff]
    %v226 = vld [vmem:[#allocation2 + $0x3a8] sm:$0xff]
    %v227 = vld [vmem:[#allocation2 + $0x3b0] sm:$0xff]
    %v228 = vld [vmem:[#allocation2 + $0x3b8] sm:$0xff]
    %v229 = vld [vmem:[#allocation2 + $0x3c0] sm:$0xff]
    %v230 = vld [vmem:[#allocation2 + $0x3c8] sm:$0xff]
    %v231 = vld [vmem:[#allocation2 + $0x3d0] sm:$0xff]
    %v232 = vld [vmem:[#allocation2 + $0x3d8] sm:$0xff]
    %v233 = vld [vmem:[#allocation2 + $0x3e0] sm:$0xff]
    %v234 = vld [vmem:[#allocation2 + $0x3e8] sm:$0xff]
    %v235 = vld [vmem:[#allocation2 + $0x3f0] sm:$0xff]
    %v236 = vld [vmem:[#allocation2 + $0x3f8] sm:$0xff]
    %v237 = vld [vmem:[#allocation4] sm:$0xff]
    %v238 = vld [vmem:[#allocation4 + $0x8] sm:$0xff]
    %v239 = vld [vmem:[#allocation4 + $0x10] sm:$0xff]
    %v240 = vld [vmem:[#allocation4 + $0x18] sm:$0xff]
    %v241 = vld [vmem:[#allocation4 + $0x20] sm:$0xff]
    %v242 = vld [vmem:[#allocation4 + $0x28] sm:$0xff]
    %v243 = vld [vmem:[#allocation4 + $0x30] sm:$0xff]
    %v244 = vld [vmem:[#allocation4 + $0x38] sm:$0xff]
    %v245 = vld [vmem:[#allocation4 + $0x40] sm:$0xff]
    %v246 = vld [vmem:[#allocation4 + $0x48] sm:$0xff]
    %v247 = vld [vmem:[#allocation4 + $0x50] sm:$0xff]
    %v248 = vld [vmem:[#allocation4 + $0x58] sm:$0xff]
    %v249 = vld [vmem:[#allocation4 + $0x60] sm:$0xff]
    %v250 = vld [vmem:[#allocation4 + $0x68] sm:$0xff]
    %v251 = vld [vmem:[#allocation4 + $0x70] sm:$0xff]
    %v252 = vld [vmem:[#allocation4 + $0x78] sm:$0xff]
    %v253 = vld [vmem:[#allocation4 + $0x80] sm:$0xff]
    %v254 = vld [vmem:[#allocation4 + $0x88] sm:$0xff]
    %v255 = vld [vmem:[#allocation4 + $0x90] sm:$0xff]
    %v256 = vld [vmem:[#allocation4 + $0x98] sm:$0xff]
    %v257 = vld [vmem:[#allocation4 + $0xa0] sm:$0xff]
    %v258 = vld [vmem:[#allocation4 + $0xa8] sm:$0xff]
    %v259 = vld [vmem:[#allocation4 + $0xb0] sm:$0xff]
    %v260 = vld [vmem:[#allocation4 + $0xb8] sm:$0xff]
    %v261 = vld [vmem:[#allocation4 + $0xc0] sm:$0xff]
    %v262 = vld [vmem:[#allocation4 + $0xc8] sm:$0xff]
    %v263 = vld [vmem:[#allocation4 + $0xd0] sm:$0xff]
    %v264 = vld [vmem:[#allocation4 + $0xd8] sm:$0xff]
    %v265 = vld [vmem:[#allocation4 + $0xe0] sm:$0xff]
    %v266 = vld [vmem:[#allocation4 + $0xe8] sm:$0xff]
    %v267 = vld [vmem:[#allocation4 + $0xf0] sm:$0xff]
    %v268 = vld [vmem:[#allocation4 + $0xf8] sm:$0xff]
    %v269 = vld [vmem:[#allocation4 + $0x100] sm:$0xff]
    %v270 = vld [vmem:[#allocation4 + $0x108] sm:$0xff]
    %v271 = vld [vmem:[#allocation4 + $0x110] sm:$0xff]
    %v272 = vld [vmem:[#allocation4 + $0x118] sm:$0xff]
    %v273 = vld [vmem:[#allocation4 + $0x120] sm:$0xff]
    %v274 = vld [vmem:[#allocation4 + $0x128] sm:$0xff]
    %v275 = vld [vmem:[#allocation4 + $0x130] sm:$0xff]
    %v276 = vld [vmem:[#allocation4 + $0x138] sm:$0xff]
    %v277 = vld [vmem:[#allocation4 + $0x140] sm:$0xff]
    %v278 = vld [vmem:[#allocation4 + $0x148] sm:$0xff]
    %v279 = vld [vmem:[#allocation4 + $0x150] sm:$0xff]
    %v280 = vld [vmem:[#allocation4 + $0x158] sm:$0xff]
    %v281 = vld [vmem:[#allocation4 + $0x160] sm:$0xff]
    %v282 = vld [vmem:[#allocation4 + $0x168] sm:$0xff]
    %v283 = vld [vmem:[#allocation4 + $0x170] sm:$0xff]
    %v284 = vld [vmem:[#allocation4 + $0x178] sm:$0xff]
    %v285 = vld [vmem:[#allocation4 + $0x180] sm:$0xff]
    %v286 = vld [vmem:[#allocation4 + $0x188] sm:$0xff]
    %v287 = vld [vmem:[#allocation4 + $0x190] sm:$0xff]
    %v288 = vld [vmem:[#allocation4 + $0x198] sm:$0xff]
    %v289 = vld [vmem:[#allocation4 + $0x1a0] sm:$0xff]
    %v290 = vld [vmem:[#allocation4 + $0x1a8] sm:$0xff]
    %v291 = vld [vmem:[#allocation4 + $0x1b0] sm:$0xff]
    %v292 = vld [vmem:[#allocation4 + $0x1b8] sm:$0xff]
    %v293 = vld [vmem:[#allocation4 + $0x1c0] sm:$0xff]
    %v294 = vld [vmem:[#allocation4 + $0x1c8] sm:$0xff]
    %v295 = vld [vmem:[#allocation4 + $0x1d0] sm:$0xff]
    %v296 = vld [vmem:[#allocation4 + $0x1d8] sm:$0xff]
    %v297 = vld [vmem:[#allocation4 + $0x1e0] sm:$0xff]
    %v298 = vld [vmem:[#allocation4 + $0x1e8] sm:$0xff]
    %v299 = vld [vmem:[#allocation4 + $0x1f0] sm:$0xff]
    %v300 = vld [vmem:[#allocation4 + $0x1f8] sm:$0xff]
    %v301 = vld [vmem:[#allocation4 + $0x200] sm:$0xff]
    %v302 = vld [vmem:[#allocation4 + $0x208] sm:$0xff]
    %v303 = vld [vmem:[#allocation4 + $0x210] sm:$0xff]
    %v304 = vld [vmem:[#allocation4 + $0x218] sm:$0xff]
    %v305 = vld [vmem:[#allocation4 + $0x220] sm:$0xff]
    %v306 = vld [vmem:[#allocation4 + $0x228] sm:$0xff]
    %v307 = vld [vmem:[#allocation4 + $0x230] sm:$0xff]
    %v308 = vld [vmem:[#allocation4 + $0x238] sm:$0xff]
    %v309 = vld [vmem:[#allocation4 + $0x240] sm:$0xff]
    %v310 = vld [vmem:[#allocation4 + $0x248] sm:$0xff]
    %v311 = vld [vmem:[#allocation4 + $0x250] sm:$0xff]
    %v312 = vld [vmem:[#allocation4 + $0x258] sm:$0xff]
    %v313 = vld [vmem:[#allocation4 + $0x260] sm:$0xff]
    %v314 = vld [vmem:[#allocation4 + $0x268] sm:$0xff]
    %v315 = vld [vmem:[#allocation4 + $0x270] sm:$0xff]
    %v316 = vld [vmem:[#allocation4 + $0x278] sm:$0xff]
    %v317 = vld [vmem:[#allocation4 + $0x280] sm:$0xff]
    %v318 = vld [vmem:[#allocation4 + $0x288] sm:$0xff]
    %v319 = vld [vmem:[#allocation4 + $0x290] sm:$0xff]
    %v320 = vld [vmem:[#allocation4 + $0x298] sm:$0xff]
    %v321 = vld [vmem:[#allocation4 + $0x2a0] sm:$0xff]
    %v322 = vld [vmem:[#allocation4 + $0x2a8] sm:$0xff]
    %v323 = vld [vmem:[#allocation4 + $0x2b0] sm:$0xff]
    %v324 = vld [vmem:[#allocation4 + $0x2b8] sm:$0xff]
    %v325 = vld [vmem:[#allocation4 + $0x2c0] sm:$0xff]
    %v326 = vld [vmem:[#allocation4 + $0x2c8] sm:$0xff]
    %v327 = vld [vmem:[#allocation4 + $0x2d0] sm:$0xff]
    %v328 = vld [vmem:[#allocation4 + $0x2d8] sm:$0xff]
    %v329 = vld [vmem:[#allocation4 + $0x2e0] sm:$0xff]
    %v330 = vld [vmem:[#allocation4 + $0x2e8] sm:$0xff]
    %v331 = vld [vmem:[#allocation4 + $0x2f0] sm:$0xff]
    %v332 = vld [vmem:[#allocation4 + $0x2f8] sm:$0xff]
    %v333 = vld [vmem:[#allocation4 + $0x300] sm:$0xff]
    %v334 = vld [vmem:[#allocation4 + $0x308] sm:$0xff]
    %v335 = vld [vmem:[#allocation4 + $0x310] sm:$0xff]
    %v336 = vld [vmem:[#allocation4 + $0x318] sm:$0xff]
    %v337 = vld [vmem:[#allocation4 + $0x320] sm:$0xff]
    %v338 = vld [vmem:[#allocation4 + $0x328] sm:$0xff]
    %v339 = vld [vmem:[#allocation4 + $0x330] sm:$0xff]
    %v340 = vld [vmem:[#allocation4 + $0x338] sm:$0xff]
    %v341 = vld [vmem:[#allocation4 + $0x340] sm:$0xff]
    %v342 = vld [vmem:[#allocation4 + $0x348] sm:$0xff]
    %v343 = vld [vmem:[#allocation4 + $0x350] sm:$0xff]
    %v344 = vld [vmem:[#allocation4 + $0x358] sm:$0xff]
    %v345 = vld [vmem:[#allocation4 + $0x360] sm:$0xff]
    %v346 = vld [vmem:[#allocation4 + $0x368] sm:$0xff]
    %v347 = vld [vmem:[#allocation4 + $0x370] sm:$0xff]
    %v348 = vld [vmem:[#allocation4 + $0x378] sm:$0xff]
    %v349 = vld [vmem:[#allocation4 + $0x380] sm:$0xff]
    %v350 = vld [vmem:[#allocation4 + $0x388] sm:$0xff]
    %v351 = vld [vmem:[#allocation4 + $0x390] sm:$0xff]
    %v352 = vld [vmem:[#allocation4 + $0x398] sm:$0xff]
    %v353 = vld [vmem:[#allocation4 + $0x3a0] sm:$0xff]
    %v354 = vld [vmem:[#allocation4 + $0x3a8] sm:$0xff]
    %v355 = vld [vmem:[#allocation4 + $0x3b0] sm:$0xff]
    %v356 = vld [vmem:[#allocation4 + $0x3b8] sm:$0xff]
    %v357 = vld [vmem:[#allocation4 + $0x3c0] sm:$0xff]
    %v358 = vld [vmem:[#allocation4 + $0x3c8] sm:$0xff]
    %v359 = vld [vmem:[#allocation4 + $0x3d0] sm:$0xff]
    %v360 = vld [vmem:[#allocation4 + $0x3d8] sm:$0xff]
    %v361 = vld [vmem:[#allocation4 + $0x3e0] sm:$0xff]
    %v362 = vld [vmem:[#allocation4 + $0x3e8] sm:$0xff]
    %v363 = vld [vmem:[#allocation4 + $0x3f0] sm:$0xff]
    %v364 = vld [vmem:[#allocation4 + $0x3f8] sm:$0xff]
    %v365 = vld [vmem:[#allocation4 + $0x400] sm:$0xff]
    %v366 = vld [vmem:[#allocation4 + $0x408] sm:$0xff]
    %v367 = vld [vmem:[#allocation4 + $0x410] sm:$0xff]
    %v368 = vld [vmem:[#allocation4 + $0x418] sm:$0xff]
    %v369 = vld [vmem:[#allocation4 + $0x420] sm:$0xff]
    %v370 = vld [vmem:[#allocation4 + $0x428] sm:$0xff]
    %v371 = vld [vmem:[#allocation4 + $0x430] sm:$0xff]
    %v372 = vld [vmem:[#allocation4 + $0x438] sm:$0xff]
    %v373 = vld [vmem:[#allocation4 + $0x440] sm:$0xff]
    %v374 = vld [vmem:[#allocation4 + $0x448] sm:$0xff]
    %v375 = vld [vmem:[#allocation4 + $0x450] sm:$0xff]
    %v376 = vld [vmem:[#allocation4 + $0x458] sm:$0xff]
    %v377 = vld [vmem:[#allocation4 + $0x460] sm:$0xff]
    %v378 = vld [vmem:[#allocation4 + $0x468] sm:$0xff]
    %v379 = vld [vmem:[#allocation4 + $0x470] sm:$0xff]
    %v380 = vld [vmem:[#allocation4 + $0x478] sm:$0xff]
    %v381 = vld [vmem:[#allocation4 + $0x480] sm:$0xff]
    %v382 = vld [vmem:[#allocation4 + $0x488] sm:$0xff]
    %v383 = vld [vmem:[#allocation4 + $0x490] sm:$0xff]
    %v384 = vld [vmem:[#allocation4 + $0x498] sm:$0xff]
    %v385 = vld [vmem:[#allocation4 + $0x4a0] sm:$0xff]
    %v386 = vld [vmem:[#allocation4 + $0x4a8] sm:$0xff]
    %v387 = vld [vmem:[#allocation4 + $0x4b0] sm:$0xff]
    %v388 = vld [vmem:[#allocation4 + $0x4b8] sm:$0xff]
    %v389 = vld [vmem:[#allocation4 + $0x4c0] sm:$0xff]
    %v390 = vld [vmem:[#allocation4 + $0x4c8] sm:$0xff]
    %v391 = vld [vmem:[#allocation4 + $0x4d0] sm:$0xff]
    %v392 = vld [vmem:[#allocation4 + $0x4d8] sm:$0xff]
    %v393 = vld [vmem:[#allocation4 + $0x4e0] sm:$0xff]
    %v394 = vld [vmem:[#allocation4 + $0x4e8] sm:$0xff]
    %v395 = vld [vmem:[#allocation4 + $0x4f0] sm:$0xff]
    %v396 = vld [vmem:[#allocation4 + $0x4f8] sm:$0xff]
    %v397 = vld [vmem:[#allocation4 + $0x500] sm:$0xff]
    %v398 = vld [vmem:[#allocation4 + $0x508] sm:$0xff]
    %v399 = vld [vmem:[#allocation4 + $0x510] sm:$0xff]
    %v400 = vld [vmem:[#allocation4 + $0x518] sm:$0xff]
    %v401 = vld [vmem:[#allocation4 + $0x520] sm:$0xff]
    %v402 = vld [vmem:[#allocation4 + $0x528] sm:$0xff]
    %v403 = vld [vmem:[#allocation4 + $0x530] sm:$0xff]
    %v404 = vld [vmem:[#allocation4 + $0x538] sm:$0xff]
    %v405 = vld [vmem:[#allocation4 + $0x540] sm:$0xff]
    %v406 = vld [vmem:[#allocation4 + $0x548] sm:$0xff]
    %v407 = vld [vmem:[#allocation4 + $0x550] sm:$0xff]
    %v408 = vld [vmem:[#allocation4 + $0x558] sm:$0xff]
    %v409 = vld [vmem:[#allocation4 + $0x560] sm:$0xff]
    %v410 = vld [vmem:[#allocation4 + $0x568] sm:$0xff]
    %v411 = vld [vmem:[#allocation4 + $0x570] sm:$0xff]
    %v412 = vld [vmem:[#allocation4 + $0x578] sm:$0xff]
    %v413 = vld [vmem:[#allocation4 + $0x580] sm:$0xff]
    %v414 = vld [vmem:[#allocation4 + $0x588] sm:$0xff]
    %v415 = vld [vmem:[#allocation4 + $0x590] sm:$0xff]
    %v416 = vld [vmem:[#allocation4 + $0x598] sm:$0xff]
    %v417 = vld [vmem:[#allocation4 + $0x5a0] sm:$0xff]
    %v418 = vld [vmem:[#allocation4 + $0x5a8] sm:$0xff]
    %v419 = vld [vmem:[#allocation4 + $0x5b0] sm:$0xff]
    %v420 = vld [vmem:[#allocation4 + $0x5b8] sm:$0xff]
    %v421 = vld [vmem:[#allocation4 + $0x5c0] sm:$0xff]
    %v422 = vld [vmem:[#allocation4 + $0x5c8] sm:$0xff]
    %v423 = vld [vmem:[#allocation4 + $0x5d0] sm:$0xff]
    %v424 = vld [vmem:[#allocation4 + $0x5d8] sm:$0xff]
    %v425 = vld [vmem:[#allocation4 + $0x5e0] sm:$0xff]
    %v426 = vld [vmem:[#allocation4 + $0x5e8] sm:$0xff]
    %v427 = vld [vmem:[#allocation4 + $0x5f0] sm:$0xff]
    %v428 = vld [vmem:[#allocation4 + $0x5f8] sm:$0xff]
    %v429 = vld [vmem:[#allocation4 + $0x600] sm:$0xff]
    %v430 = vld [vmem:[#allocation4 + $0x608] sm:$0xff]
    %v431 = vld [vmem:[#allocation4 + $0x610] sm:$0xff]
    %v432 = vld [vmem:[#allocation4 + $0x618] sm:$0xff]
    %v433 = vld [vmem:[#allocation4 + $0x620] sm:$0xff]
    %v434 = vld [vmem:[#allocation4 + $0x628] sm:$0xff]
    %v435 = vld [vmem:[#allocation4 + $0x630] sm:$0xff]
    %v436 = vld [vmem:[#allocation4 + $0x638] sm:$0xff]
    %v437 = vld [vmem:[#allocation4 + $0x640] sm:$0xff]
    %v438 = vld [vmem:[#allocation4 + $0x648] sm:$0xff]
    %v439 = vld [vmem:[#allocation4 + $0x650] sm:$0xff]
    %v440 = vld [vmem:[#allocation4 + $0x658] sm:$0xff]
    %v441 = vld [vmem:[#allocation4 + $0x660] sm:$0xff]
    %v442 = vld [vmem:[#allocation4 + $0x668] sm:$0xff]
    %v443 = vld [vmem:[#allocation4 + $0x670] sm:$0xff]
    %v444 = vld [vmem:[#allocation4 + $0x678] sm:$0xff]
    %v445 = vld [vmem:[#allocation4 + $0x680] sm:$0xff]
    %v446 = vld [vmem:[#allocation4 + $0x688] sm:$0xff]
    %v447 = vld [vmem:[#allocation4 + $0x690] sm:$0xff]
    %v448 = vld [vmem:[#allocation4 + $0x698] sm:$0xff]
    %v449 = vld [vmem:[#allocation4 + $0x6a0] sm:$0xff]
    %v450 = vld [vmem:[#allocation4 + $0x6a8] sm:$0xff]
    %v451 = vld [vmem:[#allocation4 + $0x6b0] sm:$0xff]
    %v452 = vld [vmem:[#allocation4 + $0x6b8] sm:$0xff]
    %v453 = vld [vmem:[#allocation4 + $0x6c0] sm:$0xff]
    %v454 = vld [vmem:[#allocation4 + $0x6c8] sm:$0xff]
    %v455 = vld [vmem:[#allocation4 + $0x6d0] sm:$0xff]
    %v456 = vld [vmem:[#allocation4 + $0x6d8] sm:$0xff]
    %v457 = vld [vmem:[#allocation4 + $0x6e0] sm:$0xff]
    %v458 = vld [vmem:[#allocation4 + $0x6e8] sm:$0xff]
    %v459 = vld [vmem:[#allocation4 + $0x6f0] sm:$0xff]
    %v460 = vld [vmem:[#allocation4 + $0x6f8] sm:$0xff]
    %v461 = vld [vmem:[#allocation4 + $0x700] sm:$0xff]
    %v462 = vld [vmem:[#allocation4 + $0x708] sm:$0xff]
    %v463 = vld [vmem:[#allocation4 + $0x710] sm:$0xff]
    %v464 = vld [vmem:[#allocation4 + $0x718] sm:$0xff]
    %v465 = vld [vmem:[#allocation4 + $0x720] sm:$0xff]
    %v466 = vld [vmem:[#allocation4 + $0x728] sm:$0xff]
    %v467 = vld [vmem:[#allocation4 + $0x730] sm:$0xff]
    %v468 = vld [vmem:[#allocation4 + $0x738] sm:$0xff]
    %v469 = vld [vmem:[#allocation4 + $0x740] sm:$0xff]
    %v470 = vld [vmem:[#allocation4 + $0x748] sm:$0xff]
    %v471 = vld [vmem:[#allocation4 + $0x750] sm:$0xff]
    %v472 = vld [vmem:[#allocation4 + $0x758] sm:$0xff]
    %v473 = vld [vmem:[#allocation4 + $0x760] sm:$0xff]
    %v474 = vld [vmem:[#allocation4 + $0x768] sm:$0xff]
    %v475 = vld [vmem:[#allocation4 + $0x770] sm:$0xff]
    %v476 = vld [vmem:[#allocation4 + $0x778] sm:$0xff]
    %v477 = vld [vmem:[#allocation4 + $0x780] sm:$0xff]
    %v478 = vld [vmem:[#allocation4 + $0x788] sm:$0xff]
    %v479 = vld [vmem:[#allocation4 + $0x790] sm:$0xff]
    %v480 = vld [vmem:[#allocation4 + $0x798] sm:$0xff]
    %v481 = vld [vmem:[#allocation4 + $0x7a0] sm:$0xff]
    %v482 = vld [vmem:[#allocation4 + $0x7a8] sm:$0xff]
    %v483 = vld [vmem:[#allocation4 + $0x7b0] sm:$0xff]
    %v484 = vld [vmem:[#allocation4 + $0x7b8] sm:$0xff]
    %v485 = vld [vmem:[#allocation4 + $0x7c0] sm:$0xff]
    %v486 = vld [vmem:[#allocation4 + $0x7c8] sm:$0xff]
    %v487 = vld [vmem:[#allocation4 + $0x7d0] sm:$0xff]
    %v488 = vld [vmem:[#allocation4 + $0x7d8] sm:$0xff]
    %v489 = vld [vmem:[#allocation4 + $0x7e0] sm:$0xff]
    %v490 = vld [vmem:[#allocation4 + $0x7e8] sm:$0xff]
    %v491 = vld [vmem:[#allocation4 + $0x7f0] sm:$0xff]
    %v492 = vld [vmem:[#allocation4 + $0x7f8] sm:$0xff]
    %v493 = vld [vmem:[#allocation4 + $0x800] sm:$0xff]
    %v494 = vld [vmem:[#allocation4 + $0x808] sm:$0xff]
    %v495 = vld [vmem:[#allocation4 + $0x810] sm:$0xff]
    %v496 = vld [vmem:[#allocation4 + $0x818] sm:$0xff]
    %v497 = vld [vmem:[#allocation4 + $0x820] sm:$0xff]
    %v498 = vld [vmem:[#allocation4 + $0x828] sm:$0xff]
    %v499 = vld [vmem:[#allocation4 + $0x830] sm:$0xff]
    %v500 = vld [vmem:[#allocation4 + $0x838] sm:$0xff]
    %v501 = vld [vmem:[#allocation4 + $0x840] sm:$0xff]
    %v502 = vld [vmem:[#allocation4 + $0x848] sm:$0xff]
    %v503 = vld [vmem:[#allocation4 + $0x850] sm:$0xff]
    %v504 = vld [vmem:[#allocation4 + $0x858] sm:$0xff]
    %v505 = vld [vmem:[#allocation4 + $0x860] sm:$0xff]
    %v506 = vld [vmem:[#allocation4 + $0x868] sm:$0xff]
    %v507 = vld [vmem:[#allocation4 + $0x870] sm:$0xff]
    %v508 = vld [vmem:[#allocation4 + $0x878] sm:$0xff]
    %v509 = vld [vmem:[#allocation4 + $0x880] sm:$0xff]
    %v510 = vld [vmem:[#allocation4 + $0x888] sm:$0xff]
    %v511 = vld [vmem:[#allocation4 + $0x890] sm:$0xff]
    %v512 = vld [vmem:[#allocation4 + $0x898] sm:$0xff]
    %v513 = vld [vmem:[#allocation4 + $0x8a0] sm:$0xff]
    %v514 = vld [vmem:[#allocation4 + $0x8a8] sm:$0xff]
    %v515 = vld [vmem:[#allocation4 + $0x8b0] sm:$0xff]
    %v516 = vld [vmem:[#allocation4 + $0x8b8] sm:$0xff]
    %v517 = vld [vmem:[#allocation4 + $0x8c0] sm:$0xff]
    %v518 = vld [vmem:[#allocation4 + $0x8c8] sm:$0xff]
    %v519 = vld [vmem:[#allocation4 + $0x8d0] sm:$0xff]
    %v520 = vld [vmem:[#allocation4 + $0x8d8] sm:$0xff]
    %v521 = vld [vmem:[#allocation4 + $0x8e0] sm:$0xff]
    %v522 = vld [vmem:[#allocation4 + $0x8e8] sm:$0xff]
    %v523 = vld [vmem:[#allocation4 + $0x8f0] sm:$0xff]
    %v524 = vld [vmem:[#allocation4 + $0x8f8] sm:$0xff]
    %v525 = vld [vmem:[#allocation4 + $0x900] sm:$0xff]
    %v526 = vld [vmem:[#allocation4 + $0x908] sm:$0xff]
    %v527 = vld [vmem:[#allocation4 + $0x910] sm:$0xff]
    %v528 = vld [vmem:[#allocation4 + $0x918] sm:$0xff]
    %v529 = vld [vmem:[#allocation4 + $0x920] sm:$0xff]
    %v530 = vld [vmem:[#allocation4 + $0x928] sm:$0xff]
    %v531 = vld [vmem:[#allocation4 + $0x930] sm:$0xff]
    %v532 = vld [vmem:[#allocation4 + $0x938] sm:$0xff]
    %v533 = vld [vmem:[#allocation4 + $0x940] sm:$0xff]
    %v534 = vld [vmem:[#allocation4 + $0x948] sm:$0xff]
    %v535 = vld [vmem:[#allocation4 + $0x950] sm:$0xff]
    %v536 = vld [vmem:[#allocation4 + $0x958] sm:$0xff]
    %v537 = vld [vmem:[#allocation4 + $0x960] sm:$0xff]
    %v538 = vld [vmem:[#allocation4 + $0x968] sm:$0xff]
    %v539 = vld [vmem:[#allocation4 + $0x970] sm:$0xff]
    %v540 = vld [vmem:[#allocation4 + $0x978] sm:$0xff]
    %v541 = vld [vmem:[#allocation4 + $0x980] sm:$0xff]
    %v542 = vld [vmem:[#allocation4 + $0x988] sm:$0xff]
    %v543 = vld [vmem:[#allocation4 + $0x990] sm:$0xff]
    %v544 = vld [vmem:[#allocation4 + $0x998] sm:$0xff]
    %v545 = vld [vmem:[#allocation4 + $0x9a0] sm:$0xff]
    %v546 = vld [vmem:[#allocation4 + $0x9a8] sm:$0xff]
    %v547 = vld [vmem:[#allocation4 + $0x9b0] sm:$0xff]
    %v548 = vld [vmem:[#allocation4 + $0x9b8] sm:$0xff]
    %v549 = vld [vmem:[#allocation4 + $0x9c0] sm:$0xff]
    %v550 = vld [vmem:[#allocation4 + $0x9c8] sm:$0xff]
    %v551 = vld [vmem:[#allocation4 + $0x9d0] sm:$0xff]
    %v552 = vld [vmem:[#allocation4 + $0x9d8] sm:$0xff]
    %v553 = vld [vmem:[#allocation4 + $0x9e0] sm:$0xff]
    %v554 = vld [vmem:[#allocation4 + $0x9e8] sm:$0xff]
    %v555 = vld [vmem:[#allocation4 + $0x9f0] sm:$0xff]
    %v556 = vld [vmem:[#allocation4 + $0x9f8] sm:$0xff]
    %v557 = vld [vmem:[#allocation4 + $0xa00] sm:$0xff]
    %v558 = vld [vmem:[#allocation4 + $0xa08] sm:$0xff]
    %v559 = vld [vmem:[#allocation4 + $0xa10] sm:$0xff]
    %v560 = vld [vmem:[#allocation4 + $0xa18] sm:$0xff]
    %v561 = vld [vmem:[#allocation4 + $0xa20] sm:$0xff]
    %v562 = vld [vmem:[#allocation4 + $0xa28] sm:$0xff]
    %v563 = vld [vmem:[#allocation4 + $0xa30] sm:$0xff]
    %v564 = vld [vmem:[#allocation4 + $0xa38] sm:$0xff]
    %v565 = vld [vmem:[#allocation4 + $0xa40] sm:$0xff]
    %v566 = vld [vmem:[#allocation4 + $0xa48] sm:$0xff]
    %v567 = vld [vmem:[#allocation4 + $0xa50] sm:$0xff]
    %v568 = vld [vmem:[#allocation4 + $0xa58] sm:$0xff]
    %v569 = vld [vmem:[#allocation4 + $0xa60] sm:$0xff]
    %v570 = vld [vmem:[#allocation4 + $0xa68] sm:$0xff]
    %v571 = vld [vmem:[#allocation4 + $0xa70] sm:$0xff]
    %v572 = vld [vmem:[#allocation4 + $0xa78] sm:$0xff]
    %v573 = vld [vmem:[#allocation4 + $0xa80] sm:$0xff]
    %v574 = vld [vmem:[#allocation4 + $0xa88] sm:$0xff]
    %v575 = vld [vmem:[#allocation4 + $0xa90] sm:$0xff]
    %v576 = vld [vmem:[#allocation4 + $0xa98] sm:$0xff]
    %v577 = vld [vmem:[#allocation4 + $0xaa0] sm:$0xff]
    %v578 = vld [vmem:[#allocation4 + $0xaa8] sm:$0xff]
    %v579 = vld [vmem:[#allocation4 + $0xab0] sm:$0xff]
    %v580 = vld [vmem:[#allocation4 + $0xab8] sm:$0xff]
    %v581 = vld [vmem:[#allocation4 + $0xac0] sm:$0xff]
    %v582 = vld [vmem:[#allocation4 + $0xac8] sm:$0xff]
    %v583 = vld [vmem:[#allocation4 + $0xad0] sm:$0xff]
    %v584 = vld [vmem:[#allocation4 + $0xad8] sm:$0xff]
    %v585 = vld [vmem:[#allocation4 + $0xae0] sm:$0xff]
    %v586 = vld [vmem:[#allocation4 + $0xae8] sm:$0xff]
    %v587 = vld [vmem:[#allocation4 + $0xaf0] sm:$0xff]
    %v588 = vld [vmem:[#allocation4 + $0xaf8] sm:$0xff]
    %v589 = vld [vmem:[#allocation4 + $0xb00] sm:$0xff]
    %v590 = vld [vmem:[#allocation4 + $0xb08] sm:$0xff]
    %v591 = vld [vmem:[#allocation4 + $0xb10] sm:$0xff]
    %v592 = vld [vmem:[#allocation4 + $0xb18] sm:$0xff]
    %v593 = vld [vmem:[#allocation4 + $0xb20] sm:$0xff]
    %v594 = vld [vmem:[#allocation4 + $0xb28] sm:$0xff]
    %v595 = vld [vmem:[#allocation4 + $0xb30] sm:$0xff]
    %v596 = vld [vmem:[#allocation4 + $0xb38] sm:$0xff]
    %v597 = vld [vmem:[#allocation4 + $0xb40] sm:$0xff]
    %v598 = vld [vmem:[#allocation4 + $0xb48] sm:$0xff]
    %v599 = vld [vmem:[#allocation4 + $0xb50] sm:$0xff]
    %v600 = vld [vmem:[#allocation4 + $0xb58] sm:$0xff]
    %v601 = vld [vmem:[#allocation4 + $0xb60] sm:$0xff]
    %v602 = vld [vmem:[#allocation4 + $0xb68] sm:$0xff]
    %v603 = vld [vmem:[#allocation4 + $0xb70] sm:$0xff]
    %v604 = vld [vmem:[#allocation4 + $0xb78] sm:$0xff]
    %v605 = vld [vmem:[#allocation4 + $0xb80] sm:$0xff]
    %v606 = vld [vmem:[#allocation4 + $0xb88] sm:$0xff]
    %v607 = vld [vmem:[#allocation4 + $0xb90] sm:$0xff]
    %v608 = vld [vmem:[#allocation4 + $0xb98] sm:$0xff]
    %v609 = vld [vmem:[#allocation4 + $0xba0] sm:$0xff]
    %v610 = vld [vmem:[#allocation4 + $0xba8] sm:$0xff]
    %v611 = vld [vmem:[#allocation4 + $0xbb0] sm:$0xff]
    %v612 = vld [vmem:[#allocation4 + $0xbb8] sm:$0xff]
    %v613 = vld [vmem:[#allocation4 + $0xbc0] sm:$0xff]
    %v614 = vld [vmem:[#allocation4 + $0xbc8] sm:$0xff]
    %v615 = vld [vmem:[#allocation4 + $0xbd0] sm:$0xff]
    %v616 = vld [vmem:[#allocation4 + $0xbd8] sm:$0xff]
    %v617 = vld [vmem:[#allocation4 + $0xbe0] sm:$0xff]
    %v618 = vld [vmem:[#allocation4 + $0xbe8] sm:$0xff]
    %v619 = vld [vmem:[#allocation4 + $0xbf0] sm:$0xff]
    %v620 = vld [vmem:[#allocation4 + $0xbf8] sm:$0xff]
    %v621 = vld [vmem:[#allocation4 + $0xc00] sm:$0xff]
    %v622 = vld [vmem:[#allocation4 + $0xc08] sm:$0xff]
    %v623 = vld [vmem:[#allocation4 + $0xc10] sm:$0xff]
    %v624 = vld [vmem:[#allocation4 + $0xc18] sm:$0xff]
    %v625 = vld [vmem:[#allocation4 + $0xc20] sm:$0xff]
    %v626 = vld [vmem:[#allocation4 + $0xc28] sm:$0xff]
    %v627 = vld [vmem:[#allocation4 + $0xc30] sm:$0xff]
    %v628 = vld [vmem:[#allocation4 + $0xc38] sm:$0xff]
    %v629 = vld [vmem:[#allocation4 + $0xc40] sm:$0xff]
    %v630 = vld [vmem:[#allocation4 + $0xc48] sm:$0xff]
    %v631 = vld [vmem:[#allocation4 + $0xc50] sm:$0xff]
    %v632 = vld [vmem:[#allocation4 + $0xc58] sm:$0xff]
    %v633 = vld [vmem:[#allocation4 + $0xc60] sm:$0xff]
    %v634 = vld [vmem:[#allocation4 + $0xc68] sm:$0xff]
    %v635 = vld [vmem:[#allocation4 + $0xc70] sm:$0xff]
    %v636 = vld [vmem:[#allocation4 + $0xc78] sm:$0xff]
    %v637 = vld [vmem:[#allocation4 + $0xc80] sm:$0xff]
    %v638 = vld [vmem:[#allocation4 + $0xc88] sm:$0xff]
    %v639 = vld [vmem:[#allocation4 + $0xc90] sm:$0xff]
    %v640 = vld [vmem:[#allocation4 + $0xc98] sm:$0xff]
    %v641 = vld [vmem:[#allocation4 + $0xca0] sm:$0xff]
    %v642 = vld [vmem:[#allocation4 + $0xca8] sm:$0xff]
    %v643 = vld [vmem:[#allocation4 + $0xcb0] sm:$0xff]
    %v644 = vld [vmem:[#allocation4 + $0xcb8] sm:$0xff]
    %v645 = vld [vmem:[#allocation4 + $0xcc0] sm:$0xff]
    %v646 = vld [vmem:[#allocation4 + $0xcc8] sm:$0xff]
    %v647 = vld [vmem:[#allocation4 + $0xcd0] sm:$0xff]
    %v648 = vld [vmem:[#allocation4 + $0xcd8] sm:$0xff]
    %v649 = vld [vmem:[#allocation4 + $0xce0] sm:$0xff]
    %v650 = vld [vmem:[#allocation4 + $0xce8] sm:$0xff]
    %v651 = vld [vmem:[#allocation4 + $0xcf0] sm:$0xff]
    %v652 = vld [vmem:[#allocation4 + $0xcf8] sm:$0xff]
    %v653 = vld [vmem:[#allocation4 + $0xd00] sm:$0xff]
    %v654 = vld [vmem:[#allocation4 + $0xd08] sm:$0xff]
    %v655 = vld [vmem:[#allocation4 + $0xd10] sm:$0xff]
    %v656 = vld [vmem:[#allocation4 + $0xd18] sm:$0xff]
    %v657 = vld [vmem:[#allocation4 + $0xd20] sm:$0xff]
    %v658 = vld [vmem:[#allocation4 + $0xd28] sm:$0xff]
    %v659 = vld [vmem:[#allocation4 + $0xd30] sm:$0xff]
    %v660 = vld [vmem:[#allocation4 + $0xd38] sm:$0xff]
    %v661 = vld [vmem:[#allocation4 + $0xd40] sm:$0xff]
    %v662 = vld [vmem:[#allocation4 + $0xd48] sm:$0xff]
    %v663 = vld [vmem:[#allocation4 + $0xd50] sm:$0xff]
    %v664 = vld [vmem:[#allocation4 + $0xd58] sm:$0xff]
    %v665 = vld [vmem:[#allocation4 + $0xd60] sm:$0xff]
    %v666 = vld [vmem:[#allocation4 + $0xd68] sm:$0xff]
    %v667 = vld [vmem:[#allocation4 + $0xd70] sm:$0xff]
    %v668 = vld [vmem:[#allocation4 + $0xd78] sm:$0xff]
    %v669 = vld [vmem:[#allocation4 + $0xd80] sm:$0xff]
    %v670 = vld [vmem:[#allocation4 + $0xd88] sm:$0xff]
    %v671 = vld [vmem:[#allocation4 + $0xd90] sm:$0xff]
    %v672 = vld [vmem:[#allocation4 + $0xd98] sm:$0xff]
    %v673 = vld [vmem:[#allocation4 + $0xda0] sm:$0xff]
    %v674 = vld [vmem:[#allocation4 + $0xda8] sm:$0xff]
    %v675 = vld [vmem:[#allocation4 + $0xdb0] sm:$0xff]
    %v676 = vld [vmem:[#allocation4 + $0xdb8] sm:$0xff]
    %v677 = vld [vmem:[#allocation4 + $0xdc0] sm:$0xff]
    %v678 = vld [vmem:[#allocation4 + $0xdc8] sm:$0xff]
    %v679 = vld [vmem:[#allocation4 + $0xdd0] sm:$0xff]
    %v680 = vld [vmem:[#allocation4 + $0xdd8] sm:$0xff]
    %v681 = vld [vmem:[#allocation4 + $0xde0] sm:$0xff]
    %v682 = vld [vmem:[#allocation4 + $0xde8] sm:$0xff]
    %v683 = vld [vmem:[#allocation4 + $0xdf0] sm:$0xff]
    %v684 = vld [vmem:[#allocation4 + $0xdf8] sm:$0xff]
    %v685 = vld [vmem:[#allocation4 + $0xe00] sm:$0xff]
    %v686 = vld [vmem:[#allocation4 + $0xe08] sm:$0xff]
    %v687 = vld [vmem:[#allocation4 + $0xe10] sm:$0xff]
    %v688 = vld [vmem:[#allocation4 + $0xe18] sm:$0xff]
    %v689 = vld [vmem:[#allocation4 + $0xe20] sm:$0xff]
    %v690 = vld [vmem:[#allocation4 + $0xe28] sm:$0xff]
    %v691 = vld [vmem:[#allocation4 + $0xe30] sm:$0xff]
    %v692 = vld [vmem:[#allocation4 + $0xe38] sm:$0xff]
    %v693 = vld [vmem:[#allocation4 + $0xe40] sm:$0xff]
    %v694 = vld [vmem:[#allocation4 + $0xe48] sm:$0xff]
    %v695 = vld [vmem:[#allocation4 + $0xe50] sm:$0xff]
    %v696 = vld [vmem:[#allocation4 + $0xe58] sm:$0xff]
    %v697 = vld [vmem:[#allocation4 + $0xe60] sm:$0xff]
    %v698 = vld [vmem:[#allocation4 + $0xe68] sm:$0xff]
    %v699 = vld [vmem:[#allocation4 + $0xe70] sm:$0xff]
    %v700 = vld [vmem:[#allocation4 + $0xe78] sm:$0xff]
    %v701 = vld [vmem:[#allocation4 + $0xe80] sm:$0xff]
    %v702 = vld [vmem:[#allocation4 + $0xe88] sm:$0xff]
    %v703 = vld [vmem:[#allocation4 + $0xe90] sm:$0xff]
    %v704 = vld [vmem:[#allocation4 + $0xe98] sm:$0xff]
    %v705 = vld [vmem:[#allocation4 + $0xea0] sm:$0xff]
    %v706 = vld [vmem:[#allocation4 + $0xea8] sm:$0xff]
    %v707 = vld [vmem:[#allocation4 + $0xeb0] sm:$0xff]
    %v708 = vld [vmem:[#allocation4 + $0xeb8] sm:$0xff]
    %v709 = vld [vmem:[#allocation4 + $0xec0] sm:$0xff]
    %v710 = vld [vmem:[#allocation4 + $0xec8] sm:$0xff]
    %v711 = vld [vmem:[#allocation4 + $0xed0] sm:$0xff]
    %v712 = vld [vmem:[#allocation4 + $0xed8] sm:$0xff]
    %v713 = vld [vmem:[#allocation4 + $0xee0] sm:$0xff]
    %v714 = vld [vmem:[#allocation4 + $0xee8] sm:$0xff]
    %v715 = vld [vmem:[#allocation4 + $0xef0] sm:$0xff]
    %v716 = vld [vmem:[#allocation4 + $0xef8] sm:$0xff]
    %v717 = vld [vmem:[#allocation4 + $0xf00] sm:$0xff]
    %v718 = vld [vmem:[#allocation4 + $0xf08] sm:$0xff]
    %v719 = vld [vmem:[#allocation4 + $0xf10] sm:$0xff]
    %v720 = vld [vmem:[#allocation4 + $0xf18] sm:$0xff]
    %v721 = vld [vmem:[#allocation4 + $0xf20] sm:$0xff]
    %v722 = vld [vmem:[#allocation4 + $0xf28] sm:$0xff]
    %v723 = vld [vmem:[#allocation4 + $0xf30] sm:$0xff]
    %v724 = vld [vmem:[#allocation4 + $0xf38] sm:$0xff]
    %v725 = vld [vmem:[#allocation4 + $0xf40] sm:$0xff]
    %v726 = vld [vmem:[#allocation4 + $0xf48] sm:$0xff]
    %v727 = vld [vmem:[#allocation4 + $0xf50] sm:$0xff]
    %v728 = vld [vmem:[#allocation4 + $0xf58] sm:$0xff]
    %v729 = vld [vmem:[#allocation4 + $0xf60] sm:$0xff]
    %v730 = vld [vmem:[#allocation4 + $0xf68] sm:$0xff]
    %v731 = vld [vmem:[#allocation4 + $0xf70] sm:$0xff]
    %v732 = vld [vmem:[#allocation4 + $0xf78] sm:$0xff]
    %v733 = vld [vmem:[#allocation4 + $0xf80] sm:$0xff]
    %v734 = vld [vmem:[#allocation4 + $0xf88] sm:$0xff]
    %v735 = vld [vmem:[#allocation4 + $0xf90] sm:$0xff]
    %v736 = vld [vmem:[#allocation4 + $0xf98] sm:$0xff]
    %v737 = vld [vmem:[#allocation4 + $0xfa0] sm:$0xff]
    %v738 = vld [vmem:[#allocation4 + $0xfa8] sm:$0xff]
    %v739 = vld [vmem:[#allocation4 + $0xfb0] sm:$0xff]
    %v740 = vld [vmem:[#allocation4 + $0xfb8] sm:$0xff]
    %v741 = vld [vmem:[#allocation4 + $0xfc0] sm:$0xff]
    %v742 = vld [vmem:[#allocation4 + $0xfc8] sm:$0xff]
    %v743 = vld [vmem:[#allocation4 + $0xfd0] sm:$0xff]
    %v744 = vld [vmem:[#allocation4 + $0xfd8] sm:$0xff]
    %v745 = vld [vmem:[#allocation4 + $0xfe0] sm:$0xff]
    %v746 = vld [vmem:[#allocation4 + $0xfe8] sm:$0xff]
    %v747 = vld [vmem:[#allocation4 + $0xff0] sm:$0xff]
    %v748 = vld [vmem:[#allocation4 + $0xff8] sm:$0xff]
    %v749 = vld [vmem:[#allocation6] sm:$0xf]
    %v751 = vlaneseq
    %v752 = vshrl.u32 %v751, 7
    %v753 = vsub.s32 0, %v752
    %v754 = vrot.slane %v749, %v753
    %v755 = vlaneseq
    %v756 = vshrl.u32 %v755, 7
    %v757 = vsub.s32 1, %v756
    %v758 = vrot.slane %v749, %v757
    %v759 = vlaneseq
    %v760 = vshrl.u32 %v759, 7
    %v761 = vsub.s32 2, %v760
    %v762 = vrot.slane %v749, %v761
    %v763 = vlaneseq
    %v764 = vshrl.u32 %v763, 7
    %v765 = vsub.s32 3, %v764
    %v766 = vrot.slane %v749, %v765
    %v899 = vunpack.c.l.b16 %v109
    %v900 = vunpack.c.h.b16 %v109
    %v901 = vunpack.c.l.b16 %v110
    %v902 = vunpack.c.h.b16 %v110
    %v903 = vunpack.c.l.b16 %v111
    %v904 = vunpack.c.h.b16 %v111
    %v905 = vunpack.c.l.b16 %v112
    %v906 = vunpack.c.h.b16 %v112
    %v907 = vunpack.c.l.b16 %v113
    %v908 = vunpack.c.h.b16 %v113
    %v909 = vunpack.c.l.b16 %v114
    %v910 = vunpack.c.h.b16 %v114
    %v911 = vunpack.c.l.b16 %v115
    %v912 = vunpack.c.h.b16 %v115
    %v913 = vunpack.c.l.b16 %v116
    %v914 = vunpack.c.h.b16 %v116
    %v915 = vunpack.c.l.b16 %v117
    %v916 = vunpack.c.h.b16 %v117
    %v917 = vunpack.c.l.b16 %v118
    %v918 = vunpack.c.h.b16 %v118
    %v919 = vunpack.c.l.b16 %v119
    %v920 = vunpack.c.h.b16 %v119
    %v921 = vunpack.c.l.b16 %v120
    %v922 = vunpack.c.h.b16 %v120
    %v923 = vunpack.c.l.b16 %v121
    %v924 = vunpack.c.h.b16 %v121
    %v925 = vunpack.c.l.b16 %v122
    %v926 = vunpack.c.h.b16 %v122
    %v927 = vunpack.c.l.b16 %v123
    %v928 = vunpack.c.h.b16 %v123
    %v929 = vunpack.c.l.b16 %v124
    %v930 = vunpack.c.h.b16 %v124
    %v931 = vunpack.c.l.b16 %v125
    %v932 = vunpack.c.h.b16 %v125
    %v933 = vunpack.c.l.b16 %v126
    %v934 = vunpack.c.h.b16 %v126
    %v935 = vunpack.c.l.b16 %v127
    %v936 = vunpack.c.h.b16 %v127
    %v937 = vunpack.c.l.b16 %v128
    %v938 = vunpack.c.h.b16 %v128
    %v939 = vunpack.c.l.b16 %v129
    %v940 = vunpack.c.h.b16 %v129
    %v941 = vunpack.c.l.b16 %v130
    %v942 = vunpack.c.h.b16 %v130
    %v943 = vunpack.c.l.b16 %v131
    %v944 = vunpack.c.h.b16 %v131
    %v945 = vunpack.c.l.b16 %v132
    %v946 = vunpack.c.h.b16 %v132
    %v947 = vunpack.c.l.b16 %v133
    %v948 = vunpack.c.h.b16 %v133
    %v949 = vunpack.c.l.b16 %v134
    %v950 = vunpack.c.h.b16 %v134
    %v951 = vunpack.c.l.b16 %v135
    %v952 = vunpack.c.h.b16 %v135
    %v953 = vunpack.c.l.b16 %v136
    %v954 = vunpack.c.h.b16 %v136
    %v955 = vunpack.c.l.b16 %v137
    %v956 = vunpack.c.h.b16 %v137
    %v957 = vunpack.c.l.b16 %v138
    %v958 = vunpack.c.h.b16 %v138
    %v959 = vunpack.c.l.b16 %v139
    %v960 = vunpack.c.h.b16 %v139
    %v961 = vunpack.c.l.b16 %v140
    %v962 = vunpack.c.h.b16 %v140
    %v963 = vunpack.c.l.b16 %v141
    %v964 = vunpack.c.h.b16 %v141
    %v965 = vunpack.c.l.b16 %v142
    %v966 = vunpack.c.h.b16 %v142
    %v967 = vunpack.c.l.b16 %v143
    %v968 = vunpack.c.h.b16 %v143
    %v969 = vunpack.c.l.b16 %v144
    %v970 = vunpack.c.h.b16 %v144
    %v971 = vunpack.c.l.b16 %v145
    %v972 = vunpack.c.h.b16 %v145
    %v973 = vunpack.c.l.b16 %v146
    %v974 = vunpack.c.h.b16 %v146
    %v975 = vunpack.c.l.b16 %v147
    %v976 = vunpack.c.h.b16 %v147
    %v977 = vunpack.c.l.b16 %v148
    %v978 = vunpack.c.h.b16 %v148
    %v979 = vunpack.c.l.b16 %v149
    %v980 = vunpack.c.h.b16 %v149
    %v981 = vunpack.c.l.b16 %v150
    %v982 = vunpack.c.h.b16 %v150
    %v983 = vunpack.c.l.b16 %v151
    %v984 = vunpack.c.h.b16 %v151
    %v985 = vunpack.c.l.b16 %v152
    %v986 = vunpack.c.h.b16 %v152
    %v987 = vunpack.c.l.b16 %v153
    %v988 = vunpack.c.h.b16 %v153
    %v989 = vunpack.c.l.b16 %v154
    %v990 = vunpack.c.h.b16 %v154
    %v991 = vunpack.c.l.b16 %v155
    %v992 = vunpack.c.h.b16 %v155
    %v993 = vunpack.c.l.b16 %v156
    %v994 = vunpack.c.h.b16 %v156
    %v995 = vunpack.c.l.b16 %v157
    %v996 = vunpack.c.h.b16 %v157
    %v997 = vunpack.c.l.b16 %v158
    %v998 = vunpack.c.h.b16 %v158
    %v999 = vunpack.c.l.b16 %v159
    %v1000 = vunpack.c.h.b16 %v159
    %v1001 = vunpack.c.l.b16 %v160
    %v1002 = vunpack.c.h.b16 %v160
    %v1003 = vunpack.c.l.b16 %v161
    %v1004 = vunpack.c.h.b16 %v161
    %v1005 = vunpack.c.l.b16 %v162
    %v1006 = vunpack.c.h.b16 %v162
    %v1007 = vunpack.c.l.b16 %v163
    %v1008 = vunpack.c.h.b16 %v163
    %v1009 = vunpack.c.l.b16 %v164
    %v1010 = vunpack.c.h.b16 %v164
    %v1011 = vunpack.c.l.b16 %v165
    %v1012 = vunpack.c.h.b16 %v165
    %v1013 = vunpack.c.l.b16 %v166
    %v1014 = vunpack.c.h.b16 %v166
    %v1015 = vunpack.c.l.b16 %v167
    %v1016 = vunpack.c.h.b16 %v167
    %v1017 = vunpack.c.l.b16 %v168
    %v1018 = vunpack.c.h.b16 %v168
    %v1019 = vunpack.c.l.b16 %v169
    %v1020 = vunpack.c.h.b16 %v169
    %v1021 = vunpack.c.l.b16 %v170
    %v1022 = vunpack.c.h.b16 %v170
    %v1023 = vunpack.c.l.b16 %v171
    %v1024 = vunpack.c.h.b16 %v171
    %v1025 = vunpack.c.l.b16 %v172
    %v1026 = vunpack.c.h.b16 %v172
    %v1027 = vunpack.c.l.b16 %v173
    %v1028 = vunpack.c.h.b16 %v173
    %v1029 = vunpack.c.l.b16 %v174
    %v1030 = vunpack.c.h.b16 %v174
    %v1031 = vunpack.c.l.b16 %v175
    %v1032 = vunpack.c.h.b16 %v175
    %v1033 = vunpack.c.l.b16 %v176
    %v1034 = vunpack.c.h.b16 %v176
    %v1035 = vunpack.c.l.b16 %v177
    %v1036 = vunpack.c.h.b16 %v177
    %v1037 = vunpack.c.l.b16 %v178
    %v1038 = vunpack.c.h.b16 %v178
    %v1039 = vunpack.c.l.b16 %v179
    %v1040 = vunpack.c.h.b16 %v179
    %v1041 = vunpack.c.l.b16 %v180
    %v1042 = vunpack.c.h.b16 %v180
    %v1043 = vunpack.c.l.b16 %v181
    %v1044 = vunpack.c.h.b16 %v181
    %v1045 = vunpack.c.l.b16 %v182
    %v1046 = vunpack.c.h.b16 %v182
    %v1047 = vunpack.c.l.b16 %v183
    %v1048 = vunpack.c.h.b16 %v183
    %v1049 = vunpack.c.l.b16 %v184
    %v1050 = vunpack.c.h.b16 %v184
    %v1051 = vunpack.c.l.b16 %v185
    %v1052 = vunpack.c.h.b16 %v185
    %v1053 = vunpack.c.l.b16 %v186
    %v1054 = vunpack.c.h.b16 %v186
    %v1055 = vunpack.c.l.b16 %v187
    %v1056 = vunpack.c.h.b16 %v187
    %v1057 = vunpack.c.l.b16 %v188
    %v1058 = vunpack.c.h.b16 %v188
    %v1059 = vunpack.c.l.b16 %v189
    %v1060 = vunpack.c.h.b16 %v189
    %v1061 = vunpack.c.l.b16 %v190
    %v1062 = vunpack.c.h.b16 %v190
    %v1063 = vunpack.c.l.b16 %v191
    %v1064 = vunpack.c.h.b16 %v191
    %v1065 = vunpack.c.l.b16 %v192
    %v1066 = vunpack.c.h.b16 %v192
    %v1067 = vunpack.c.l.b16 %v193
    %v1068 = vunpack.c.h.b16 %v193
    %v1069 = vunpack.c.l.b16 %v194
    %v1070 = vunpack.c.h.b16 %v194
    %v1071 = vunpack.c.l.b16 %v195
    %v1072 = vunpack.c.h.b16 %v195
    %v1073 = vunpack.c.l.b16 %v196
    %v1074 = vunpack.c.h.b16 %v196
    %v1075 = vunpack.c.l.b16 %v197
    %v1076 = vunpack.c.h.b16 %v197
    %v1077 = vunpack.c.l.b16 %v198
    %v1078 = vunpack.c.h.b16 %v198
    %v1079 = vunpack.c.l.b16 %v199
    %v1080 = vunpack.c.h.b16 %v199
    %v1081 = vunpack.c.l.b16 %v200
    %v1082 = vunpack.c.h.b16 %v200
    %v1083 = vunpack.c.l.b16 %v201
    %v1084 = vunpack.c.h.b16 %v201
    %v1085 = vunpack.c.l.b16 %v202
    %v1086 = vunpack.c.h.b16 %v202
    %v1087 = vunpack.c.l.b16 %v203
    %v1088 = vunpack.c.h.b16 %v203
    %v1089 = vunpack.c.l.b16 %v204
    %v1090 = vunpack.c.h.b16 %v204
    %v1091 = vunpack.c.l.b16 %v205
    %v1092 = vunpack.c.h.b16 %v205
    %v1093 = vunpack.c.l.b16 %v206
    %v1094 = vunpack.c.h.b16 %v206
    %v1095 = vunpack.c.l.b16 %v207
    %v1096 = vunpack.c.h.b16 %v207
    %v1097 = vunpack.c.l.b16 %v208
    %v1098 = vunpack.c.h.b16 %v208
    %v1099 = vunpack.c.l.b16 %v209
    %v1100 = vunpack.c.h.b16 %v209
    %v1101 = vunpack.c.l.b16 %v210
    %v1102 = vunpack.c.h.b16 %v210
    %v1103 = vunpack.c.l.b16 %v211
    %v1104 = vunpack.c.h.b16 %v211
    %v1105 = vunpack.c.l.b16 %v212
    %v1106 = vunpack.c.h.b16 %v212
    %v1107 = vunpack.c.l.b16 %v213
    %v1108 = vunpack.c.h.b16 %v213
    %v1109 = vunpack.c.l.b16 %v214
    %v1110 = vunpack.c.h.b16 %v214
    %v1111 = vunpack.c.l.b16 %v215
    %v1112 = vunpack.c.h.b16 %v215
    %v1113 = vunpack.c.l.b16 %v216
    %v1114 = vunpack.c.h.b16 %v216
    %v1115 = vunpack.c.l.b16 %v217
    %v1116 = vunpack.c.h.b16 %v217
    %v1117 = vunpack.c.l.b16 %v218
    %v1118 = vunpack.c.h.b16 %v218
    %v1119 = vunpack.c.l.b16 %v219
    %v1120 = vunpack.c.h.b16 %v219
    %v1121 = vunpack.c.l.b16 %v220
    %v1122 = vunpack.c.h.b16 %v220
    %v1123 = vunpack.c.l.b16 %v221
    %v1124 = vunpack.c.h.b16 %v221
    %v1125 = vunpack.c.l.b16 %v222
    %v1126 = vunpack.c.h.b16 %v222
    %v1127 = vunpack.c.l.b16 %v223
    %v1128 = vunpack.c.h.b16 %v223
    %v1129 = vunpack.c.l.b16 %v224
    %v1130 = vunpack.c.h.b16 %v224
    %v1131 = vunpack.c.l.b16 %v225
    %v1132 = vunpack.c.h.b16 %v225
    %v1133 = vunpack.c.l.b16 %v226
    %v1134 = vunpack.c.h.b16 %v226
    %v1135 = vunpack.c.l.b16 %v227
    %v1136 = vunpack.c.h.b16 %v227
    %v1137 = vunpack.c.l.b16 %v228
    %v1138 = vunpack.c.h.b16 %v228
    %v1139 = vunpack.c.l.b16 %v229
    %v1140 = vunpack.c.h.b16 %v229
    %v1141 = vunpack.c.l.b16 %v230
    %v1142 = vunpack.c.h.b16 %v230
    %v1143 = vunpack.c.l.b16 %v231
    %v1144 = vunpack.c.h.b16 %v231
    %v1145 = vunpack.c.l.b16 %v232
    %v1146 = vunpack.c.h.b16 %v232
    %v1147 = vunpack.c.l.b16 %v233
    %v1148 = vunpack.c.h.b16 %v233
    %v1149 = vunpack.c.l.b16 %v234
    %v1150 = vunpack.c.h.b16 %v234
    %v1151 = vunpack.c.l.b16 %v235
    %v1152 = vunpack.c.h.b16 %v235
    %v1153 = vunpack.c.l.b16 %v236
    %v1154 = vunpack.c.h.b16 %v236
    %v1155 = vpack.c.b16 %v915, %v899
    %v1156 = vpack.c.b16 %v916, %v900
    %v1157 = vpack.c.b16 %v917, %v901
    %v1158 = vpack.c.b16 %v918, %v902
    %v1159 = vpack.c.b16 %v919, %v903
    %v1160 = vpack.c.b16 %v920, %v904
    %v1161 = vpack.c.b16 %v921, %v905
    %v1162 = vpack.c.b16 %v922, %v906
    %v1163 = vpack.c.b16 %v923, %v907
    %v1164 = vpack.c.b16 %v924, %v908
    %v1165 = vpack.c.b16 %v925, %v909
    %v1166 = vpack.c.b16 %v926, %v910
    %v1167 = vpack.c.b16 %v927, %v911
    %v1168 = vpack.c.b16 %v928, %v912
    %v1169 = vpack.c.b16 %v929, %v913
    %v1170 = vpack.c.b16 %v930, %v914
    %v1171 = vpack.c.b16 %v947, %v931
    %v1172 = vpack.c.b16 %v948, %v932
    %v1173 = vpack.c.b16 %v949, %v933
    %v1174 = vpack.c.b16 %v950, %v934
    %v1175 = vpack.c.b16 %v951, %v935
    %v1176 = vpack.c.b16 %v952, %v936
    %v1177 = vpack.c.b16 %v953, %v937
    %v1178 = vpack.c.b16 %v954, %v938
    %v1179 = vpack.c.b16 %v955, %v939
    %v1180 = vpack.c.b16 %v956, %v940
    %v1181 = vpack.c.b16 %v957, %v941
    %v1182 = vpack.c.b16 %v958, %v942
    %v1183 = vpack.c.b16 %v959, %v943
    %v1184 = vpack.c.b16 %v960, %v944
    %v1185 = vpack.c.b16 %v961, %v945
    %v1186 = vpack.c.b16 %v962, %v946
    %v1187 = vpack.c.b16 %v979, %v963
    %v1188 = vpack.c.b16 %v980, %v964
    %v1189 = vpack.c.b16 %v981, %v965
    %v1190 = vpack.c.b16 %v982, %v966
    %v1191 = vpack.c.b16 %v983, %v967
    %v1192 = vpack.c.b16 %v984, %v968
    %v1193 = vpack.c.b16 %v985, %v969
    %v1194 = vpack.c.b16 %v986, %v970
    %v1195 = vpack.c.b16 %v987, %v971
    %v1196 = vpack.c.b16 %v988, %v972
    %v1197 = vpack.c.b16 %v989, %v973
    %v1198 = vpack.c.b16 %v990, %v974
    %v1199 = vpack.c.b16 %v991, %v975
    %v1200 = vpack.c.b16 %v992, %v976
    %v1201 = vpack.c.b16 %v993, %v977
    %v1202 = vpack.c.b16 %v994, %v978
    %v1203 = vpack.c.b16 %v1011, %v995
    %v1204 = vpack.c.b16 %v1012, %v996
    %v1205 = vpack.c.b16 %v1013, %v997
    %v1206 = vpack.c.b16 %v1014, %v998
    %v1207 = vpack.c.b16 %v1015, %v999
    %v1208 = vpack.c.b16 %v1016, %v1000
    %v1209 = vpack.c.b16 %v1017, %v1001
    %v1210 = vpack.c.b16 %v1018, %v1002
    %v1211 = vpack.c.b16 %v1019, %v1003
    %v1212 = vpack.c.b16 %v1020, %v1004
    %v1213 = vpack.c.b16 %v1021, %v1005
    %v1214 = vpack.c.b16 %v1022, %v1006
    %v1215 = vpack.c.b16 %v1023, %v1007
    %v1216 = vpack.c.b16 %v1024, %v1008
    %v1217 = vpack.c.b16 %v1025, %v1009
    %v1218 = vpack.c.b16 %v1026, %v1010
    %v1219 = vpack.c.b16 %v1043, %v1027
    %v1220 = vpack.c.b16 %v1044, %v1028
    %v1221 = vpack.c.b16 %v1045, %v1029
    %v1222 = vpack.c.b16 %v1046, %v1030
    %v1223 = vpack.c.b16 %v1047, %v1031
    %v1224 = vpack.c.b16 %v1048, %v1032
    %v1225 = vpack.c.b16 %v1049, %v1033
    %v1226 = vpack.c.b16 %v1050, %v1034
    %v1227 = vpack.c.b16 %v1051, %v1035
    %v1228 = vpack.c.b16 %v1052, %v1036
    %v1229 = vpack.c.b16 %v1053, %v1037
    %v1230 = vpack.c.b16 %v1054, %v1038
    %v1231 = vpack.c.b16 %v1055, %v1039
    %v1232 = vpack.c.b16 %v1056, %v1040
    %v1233 = vpack.c.b16 %v1057, %v1041
    %v1234 = vpack.c.b16 %v1058, %v1042
    %v1235 = vpack.c.b16 %v1075, %v1059
    %v1236 = vpack.c.b16 %v1076, %v1060
    %v1237 = vpack.c.b16 %v1077, %v1061
    %v1238 = vpack.c.b16 %v1078, %v1062
    %v1239 = vpack.c.b16 %v1079, %v1063
    %v1240 = vpack.c.b16 %v1080, %v1064
    %v1241 = vpack.c.b16 %v1081, %v1065
    %v1242 = vpack.c.b16 %v1082, %v1066
    %v1243 = vpack.c.b16 %v1083, %v1067
    %v1244 = vpack.c.b16 %v1084, %v1068
    %v1245 = vpack.c.b16 %v1085, %v1069
    %v1246 = vpack.c.b16 %v1086, %v1070
    %v1247 = vpack.c.b16 %v1087, %v1071
    %v1248 = vpack.c.b16 %v1088, %v1072
    %v1249 = vpack.c.b16 %v1089, %v1073
    %v1250 = vpack.c.b16 %v1090, %v1074
    %v1251 = vpack.c.b16 %v1107, %v1091
    %v1252 = vpack.c.b16 %v1108, %v1092
    %v1253 = vpack.c.b16 %v1109, %v1093
    %v1254 = vpack.c.b16 %v1110, %v1094
    %v1255 = vpack.c.b16 %v1111, %v1095
    %v1256 = vpack.c.b16 %v1112, %v1096
    %v1257 = vpack.c.b16 %v1113, %v1097
    %v1258 = vpack.c.b16 %v1114, %v1098
    %v1259 = vpack.c.b16 %v1115, %v1099
    %v1260 = vpack.c.b16 %v1116, %v1100
    %v1261 = vpack.c.b16 %v1117, %v1101
    %v1262 = vpack.c.b16 %v1118, %v1102
    %v1263 = vpack.c.b16 %v1119, %v1103
    %v1264 = vpack.c.b16 %v1120, %v1104
    %v1265 = vpack.c.b16 %v1121, %v1105
    %v1266 = vpack.c.b16 %v1122, %v1106
    %v1267 = vpack.c.b16 %v1139, %v1123
    %v1268 = vpack.c.b16 %v1140, %v1124
    %v1269 = vpack.c.b16 %v1141, %v1125
    %v1270 = vpack.c.b16 %v1142, %v1126
    %v1271 = vpack.c.b16 %v1143, %v1127
    %v1272 = vpack.c.b16 %v1144, %v1128
    %v1273 = vpack.c.b16 %v1145, %v1129
    %v1274 = vpack.c.b16 %v1146, %v1130
    %v1275 = vpack.c.b16 %v1147, %v1131
    %v1276 = vpack.c.b16 %v1148, %v1132
    %v1277 = vpack.c.b16 %v1149, %v1133
    %v1278 = vpack.c.b16 %v1150, %v1134
    %v1279 = vpack.c.b16 %v1151, %v1135
    %v1280 = vpack.c.b16 %v1152, %v1136
    %v1281 = vpack.c.b16 %v1153, %v1137
    %v1282 = vpack.c.b16 %v1154, %v1138
    %v1923 = vunpack.c.l.b16 %v237
    %v1924 = vunpack.c.h.b16 %v237
    %v1925 = vunpack.c.l.b16 %v238
    %v1926 = vunpack.c.h.b16 %v238
    %v1927 = vunpack.c.l.b16 %v239
    %v1928 = vunpack.c.h.b16 %v239
    %v1929 = vunpack.c.l.b16 %v240
    %v1930 = vunpack.c.h.b16 %v240
    %v1931 = vunpack.c.l.b16 %v241
    %v1932 = vunpack.c.h.b16 %v241
    %v1933 = vunpack.c.l.b16 %v242
    %v1934 = vunpack.c.h.b16 %v242
    %v1935 = vunpack.c.l.b16 %v243
    %v1936 = vunpack.c.h.b16 %v243
    %v1937 = vunpack.c.l.b16 %v244
    %v1938 = vunpack.c.h.b16 %v244
    %v1939 = vunpack.c.l.b16 %v245
    %v1940 = vunpack.c.h.b16 %v245
    %v1941 = vunpack.c.l.b16 %v246
    %v1942 = vunpack.c.h.b16 %v246
    %v1943 = vunpack.c.l.b16 %v247
    %v1944 = vunpack.c.h.b16 %v247
    %v1945 = vunpack.c.l.b16 %v248
    %v1946 = vunpack.c.h.b16 %v248
    %v1947 = vunpack.c.l.b16 %v249
    %v1948 = vunpack.c.h.b16 %v249
    %v1949 = vunpack.c.l.b16 %v250
    %v1950 = vunpack.c.h.b16 %v250
    %v1951 = vunpack.c.l.b16 %v251
    %v1952 = vunpack.c.h.b16 %v251
    %v1953 = vunpack.c.l.b16 %v252
    %v1954 = vunpack.c.h.b16 %v252
    %v1955 = vunpack.c.l.b16 %v253
    %v1956 = vunpack.c.h.b16 %v253
    %v1957 = vunpack.c.l.b16 %v254
    %v1958 = vunpack.c.h.b16 %v254
    %v1959 = vunpack.c.l.b16 %v255
    %v1960 = vunpack.c.h.b16 %v255
    %v1961 = vunpack.c.l.b16 %v256
    %v1962 = vunpack.c.h.b16 %v256
    %v1963 = vunpack.c.l.b16 %v257
    %v1964 = vunpack.c.h.b16 %v257
    %v1965 = vunpack.c.l.b16 %v258
    %v1966 = vunpack.c.h.b16 %v258
    %v1967 = vunpack.c.l.b16 %v259
    %v1968 = vunpack.c.h.b16 %v259
    %v1969 = vunpack.c.l.b16 %v260
    %v1970 = vunpack.c.h.b16 %v260
    %v1971 = vunpack.c.l.b16 %v261
    %v1972 = vunpack.c.h.b16 %v261
    %v1973 = vunpack.c.l.b16 %v262
    %v1974 = vunpack.c.h.b16 %v262
    %v1975 = vunpack.c.l.b16 %v263
    %v1976 = vunpack.c.h.b16 %v263
    %v1977 = vunpack.c.l.b16 %v264
    %v1978 = vunpack.c.h.b16 %v264
    %v1979 = vunpack.c.l.b16 %v265
    %v1980 = vunpack.c.h.b16 %v265
    %v1981 = vunpack.c.l.b16 %v266
    %v1982 = vunpack.c.h.b16 %v266
    %v1983 = vunpack.c.l.b16 %v267
    %v1984 = vunpack.c.h.b16 %v267
    %v1985 = vunpack.c.l.b16 %v268
    %v1986 = vunpack.c.h.b16 %v268
    %v1987 = vunpack.c.l.b16 %v269
    %v1988 = vunpack.c.h.b16 %v269
    %v1989 = vunpack.c.l.b16 %v270
    %v1990 = vunpack.c.h.b16 %v270
    %v1991 = vunpack.c.l.b16 %v271
    %v1992 = vunpack.c.h.b16 %v271
    %v1993 = vunpack.c.l.b16 %v272
    %v1994 = vunpack.c.h.b16 %v272
    %v1995 = vunpack.c.l.b16 %v273
    %v1996 = vunpack.c.h.b16 %v273
    %v1997 = vunpack.c.l.b16 %v274
    %v1998 = vunpack.c.h.b16 %v274
    %v1999 = vunpack.c.l.b16 %v275
    %v2000 = vunpack.c.h.b16 %v275
    %v2001 = vunpack.c.l.b16 %v276
    %v2002 = vunpack.c.h.b16 %v276
    %v2003 = vunpack.c.l.b16 %v277
    %v2004 = vunpack.c.h.b16 %v277
    %v2005 = vunpack.c.l.b16 %v278
    %v2006 = vunpack.c.h.b16 %v278
    %v2007 = vunpack.c.l.b16 %v279
    %v2008 = vunpack.c.h.b16 %v279
    %v2009 = vunpack.c.l.b16 %v280
    %v2010 = vunpack.c.h.b16 %v280
    %v2011 = vunpack.c.l.b16 %v281
    %v2012 = vunpack.c.h.b16 %v281
    %v2013 = vunpack.c.l.b16 %v282
    %v2014 = vunpack.c.h.b16 %v282
    %v2015 = vunpack.c.l.b16 %v283
    %v2016 = vunpack.c.h.b16 %v283
    %v2017 = vunpack.c.l.b16 %v284
    %v2018 = vunpack.c.h.b16 %v284
    %v2019 = vunpack.c.l.b16 %v285
    %v2020 = vunpack.c.h.b16 %v285
    %v2021 = vunpack.c.l.b16 %v286
    %v2022 = vunpack.c.h.b16 %v286
    %v2023 = vunpack.c.l.b16 %v287
    %v2024 = vunpack.c.h.b16 %v287
    %v2025 = vunpack.c.l.b16 %v288
    %v2026 = vunpack.c.h.b16 %v288
    %v2027 = vunpack.c.l.b16 %v289
    %v2028 = vunpack.c.h.b16 %v289
    %v2029 = vunpack.c.l.b16 %v290
    %v2030 = vunpack.c.h.b16 %v290
    %v2031 = vunpack.c.l.b16 %v291
    %v2032 = vunpack.c.h.b16 %v291
    %v2033 = vunpack.c.l.b16 %v292
    %v2034 = vunpack.c.h.b16 %v292
    %v2035 = vunpack.c.l.b16 %v293
    %v2036 = vunpack.c.h.b16 %v293
    %v2037 = vunpack.c.l.b16 %v294
    %v2038 = vunpack.c.h.b16 %v294
    %v2039 = vunpack.c.l.b16 %v295
    %v2040 = vunpack.c.h.b16 %v295
    %v2041 = vunpack.c.l.b16 %v296
    %v2042 = vunpack.c.h.b16 %v296
    %v2043 = vunpack.c.l.b16 %v297
    %v2044 = vunpack.c.h.b16 %v297
    %v2045 = vunpack.c.l.b16 %v298
    %v2046 = vunpack.c.h.b16 %v298
    %v2047 = vunpack.c.l.b16 %v299
    %v2048 = vunpack.c.h.b16 %v299
    %v2049 = vunpack.c.l.b16 %v300
    %v2050 = vunpack.c.h.b16 %v300
    %v2051 = vunpack.c.l.b16 %v301
    %v2052 = vunpack.c.h.b16 %v301
    %v2053 = vunpack.c.l.b16 %v302
    %v2054 = vunpack.c.h.b16 %v302
    %v2055 = vunpack.c.l.b16 %v303
    %v2056 = vunpack.c.h.b16 %v303
    %v2057 = vunpack.c.l.b16 %v304
    %v2058 = vunpack.c.h.b16 %v304
    %v2059 = vunpack.c.l.b16 %v305
    %v2060 = vunpack.c.h.b16 %v305
    %v2061 = vunpack.c.l.b16 %v306
    %v2062 = vunpack.c.h.b16 %v306
    %v2063 = vunpack.c.l.b16 %v307
    %v2064 = vunpack.c.h.b16 %v307
    %v2065 = vunpack.c.l.b16 %v308
    %v2066 = vunpack.c.h.b16 %v308
    %v2067 = vunpack.c.l.b16 %v309
    %v2068 = vunpack.c.h.b16 %v309
    %v2069 = vunpack.c.l.b16 %v310
    %v2070 = vunpack.c.h.b16 %v310
    %v2071 = vunpack.c.l.b16 %v311
    %v2072 = vunpack.c.h.b16 %v311
    %v2073 = vunpack.c.l.b16 %v312
    %v2074 = vunpack.c.h.b16 %v312
    %v2075 = vunpack.c.l.b16 %v313
    %v2076 = vunpack.c.h.b16 %v313
    %v2077 = vunpack.c.l.b16 %v314
    %v2078 = vunpack.c.h.b16 %v314
    %v2079 = vunpack.c.l.b16 %v315
    %v2080 = vunpack.c.h.b16 %v315
    %v2081 = vunpack.c.l.b16 %v316
    %v2082 = vunpack.c.h.b16 %v316
    %v2083 = vunpack.c.l.b16 %v317
    %v2084 = vunpack.c.h.b16 %v317
    %v2085 = vunpack.c.l.b16 %v318
    %v2086 = vunpack.c.h.b16 %v318
    %v2087 = vunpack.c.l.b16 %v319
    %v2088 = vunpack.c.h.b16 %v319
    %v2089 = vunpack.c.l.b16 %v320
    %v2090 = vunpack.c.h.b16 %v320
    %v2091 = vunpack.c.l.b16 %v321
    %v2092 = vunpack.c.h.b16 %v321
    %v2093 = vunpack.c.l.b16 %v322
    %v2094 = vunpack.c.h.b16 %v322
    %v2095 = vunpack.c.l.b16 %v323
    %v2096 = vunpack.c.h.b16 %v323
    %v2097 = vunpack.c.l.b16 %v324
    %v2098 = vunpack.c.h.b16 %v324
    %v2099 = vunpack.c.l.b16 %v325
    %v2100 = vunpack.c.h.b16 %v325
    %v2101 = vunpack.c.l.b16 %v326
    %v2102 = vunpack.c.h.b16 %v326
    %v2103 = vunpack.c.l.b16 %v327
    %v2104 = vunpack.c.h.b16 %v327
    %v2105 = vunpack.c.l.b16 %v328
    %v2106 = vunpack.c.h.b16 %v328
    %v2107 = vunpack.c.l.b16 %v329
    %v2108 = vunpack.c.h.b16 %v329
    %v2109 = vunpack.c.l.b16 %v330
    %v2110 = vunpack.c.h.b16 %v330
    %v2111 = vunpack.c.l.b16 %v331
    %v2112 = vunpack.c.h.b16 %v331
    %v2113 = vunpack.c.l.b16 %v332
    %v2114 = vunpack.c.h.b16 %v332
    %v2115 = vunpack.c.l.b16 %v333
    %v2116 = vunpack.c.h.b16 %v333
    %v2117 = vunpack.c.l.b16 %v334
    %v2118 = vunpack.c.h.b16 %v334
    %v2119 = vunpack.c.l.b16 %v335
    %v2120 = vunpack.c.h.b16 %v335
    %v2121 = vunpack.c.l.b16 %v336
    %v2122 = vunpack.c.h.b16 %v336
    %v2123 = vunpack.c.l.b16 %v337
    %v2124 = vunpack.c.h.b16 %v337
    %v2125 = vunpack.c.l.b16 %v338
    %v2126 = vunpack.c.h.b16 %v338
    %v2127 = vunpack.c.l.b16 %v339
    %v2128 = vunpack.c.h.b16 %v339
    %v2129 = vunpack.c.l.b16 %v340
    %v2130 = vunpack.c.h.b16 %v340
    %v2131 = vunpack.c.l.b16 %v341
    %v2132 = vunpack.c.h.b16 %v341
    %v2133 = vunpack.c.l.b16 %v342
    %v2134 = vunpack.c.h.b16 %v342
    %v2135 = vunpack.c.l.b16 %v343
    %v2136 = vunpack.c.h.b16 %v343
    %v2137 = vunpack.c.l.b16 %v344
    %v2138 = vunpack.c.h.b16 %v344
    %v2139 = vunpack.c.l.b16 %v345
    %v2140 = vunpack.c.h.b16 %v345
    %v2141 = vunpack.c.l.b16 %v346
    %v2142 = vunpack.c.h.b16 %v346
    %v2143 = vunpack.c.l.b16 %v347
    %v2144 = vunpack.c.h.b16 %v347
    %v2145 = vunpack.c.l.b16 %v348
    %v2146 = vunpack.c.h.b16 %v348
    %v2147 = vunpack.c.l.b16 %v349
    %v2148 = vunpack.c.h.b16 %v349
    %v2149 = vunpack.c.l.b16 %v350
    %v2150 = vunpack.c.h.b16 %v350
    %v2151 = vunpack.c.l.b16 %v351
    %v2152 = vunpack.c.h.b16 %v351
    %v2153 = vunpack.c.l.b16 %v352
    %v2154 = vunpack.c.h.b16 %v352
    %v2155 = vunpack.c.l.b16 %v353
    %v2156 = vunpack.c.h.b16 %v353
    %v2157 = vunpack.c.l.b16 %v354
    %v2158 = vunpack.c.h.b16 %v354
    %v2159 = vunpack.c.l.b16 %v355
    %v2160 = vunpack.c.h.b16 %v355
    %v2161 = vunpack.c.l.b16 %v356
    %v2162 = vunpack.c.h.b16 %v356
    %v2163 = vunpack.c.l.b16 %v357
    %v2164 = vunpack.c.h.b16 %v357
    %v2165 = vunpack.c.l.b16 %v358
    %v2166 = vunpack.c.h.b16 %v358
    %v2167 = vunpack.c.l.b16 %v359
    %v2168 = vunpack.c.h.b16 %v359
    %v2169 = vunpack.c.l.b16 %v360
    %v2170 = vunpack.c.h.b16 %v360
    %v2171 = vunpack.c.l.b16 %v361
    %v2172 = vunpack.c.h.b16 %v361
    %v2173 = vunpack.c.l.b16 %v362
    %v2174 = vunpack.c.h.b16 %v362
    %v2175 = vunpack.c.l.b16 %v363
    %v2176 = vunpack.c.h.b16 %v363
    %v2177 = vunpack.c.l.b16 %v364
    %v2178 = vunpack.c.h.b16 %v364
    %v2179 = vunpack.c.l.b16 %v365
    %v2180 = vunpack.c.h.b16 %v365
    %v2181 = vunpack.c.l.b16 %v366
    %v2182 = vunpack.c.h.b16 %v366
    %v2183 = vunpack.c.l.b16 %v367
    %v2184 = vunpack.c.h.b16 %v367
    %v2185 = vunpack.c.l.b16 %v368
    %v2186 = vunpack.c.h.b16 %v368
    %v2187 = vunpack.c.l.b16 %v369
    %v2188 = vunpack.c.h.b16 %v369
    %v2189 = vunpack.c.l.b16 %v370
    %v2190 = vunpack.c.h.b16 %v370
    %v2191 = vunpack.c.l.b16 %v371
    %v2192 = vunpack.c.h.b16 %v371
    %v2193 = vunpack.c.l.b16 %v372
    %v2194 = vunpack.c.h.b16 %v372
    %v2195 = vunpack.c.l.b16 %v373
    %v2196 = vunpack.c.h.b16 %v373
    %v2197 = vunpack.c.l.b16 %v374
    %v2198 = vunpack.c.h.b16 %v374
    %v2199 = vunpack.c.l.b16 %v375
    %v2200 = vunpack.c.h.b16 %v375
    %v2201 = vunpack.c.l.b16 %v376
    %v2202 = vunpack.c.h.b16 %v376
    %v2203 = vunpack.c.l.b16 %v377
    %v2204 = vunpack.c.h.b16 %v377
    %v2205 = vunpack.c.l.b16 %v378
    %v2206 = vunpack.c.h.b16 %v378
    %v2207 = vunpack.c.l.b16 %v379
    %v2208 = vunpack.c.h.b16 %v379
    %v2209 = vunpack.c.l.b16 %v380
    %v2210 = vunpack.c.h.b16 %v380
    %v2211 = vunpack.c.l.b16 %v381
    %v2212 = vunpack.c.h.b16 %v381
    %v2213 = vunpack.c.l.b16 %v382
    %v2214 = vunpack.c.h.b16 %v382
    %v2215 = vunpack.c.l.b16 %v383
    %v2216 = vunpack.c.h.b16 %v383
    %v2217 = vunpack.c.l.b16 %v384
    %v2218 = vunpack.c.h.b16 %v384
    %v2219 = vunpack.c.l.b16 %v385
    %v2220 = vunpack.c.h.b16 %v385
    %v2221 = vunpack.c.l.b16 %v386
    %v2222 = vunpack.c.h.b16 %v386
    %v2223 = vunpack.c.l.b16 %v387
    %v2224 = vunpack.c.h.b16 %v387
    %v2225 = vunpack.c.l.b16 %v388
    %v2226 = vunpack.c.h.b16 %v388
    %v2227 = vunpack.c.l.b16 %v389
    %v2228 = vunpack.c.h.b16 %v389
    %v2229 = vunpack.c.l.b16 %v390
    %v2230 = vunpack.c.h.b16 %v390
    %v2231 = vunpack.c.l.b16 %v391
    %v2232 = vunpack.c.h.b16 %v391
    %v2233 = vunpack.c.l.b16 %v392
    %v2234 = vunpack.c.h.b16 %v392
    %v2235 = vunpack.c.l.b16 %v393
    %v2236 = vunpack.c.h.b16 %v393
    %v2237 = vunpack.c.l.b16 %v394
    %v2238 = vunpack.c.h.b16 %v394
    %v2239 = vunpack.c.l.b16 %v395
    %v2240 = vunpack.c.h.b16 %v395
    %v2241 = vunpack.c.l.b16 %v396
    %v2242 = vunpack.c.h.b16 %v396
    %v2243 = vunpack.c.l.b16 %v397
    %v2244 = vunpack.c.h.b16 %v397
    %v2245 = vunpack.c.l.b16 %v398
    %v2246 = vunpack.c.h.b16 %v398
    %v2247 = vunpack.c.l.b16 %v399
    %v2248 = vunpack.c.h.b16 %v399
    %v2249 = vunpack.c.l.b16 %v400
    %v2250 = vunpack.c.h.b16 %v400
    %v2251 = vunpack.c.l.b16 %v401
    %v2252 = vunpack.c.h.b16 %v401
    %v2253 = vunpack.c.l.b16 %v402
    %v2254 = vunpack.c.h.b16 %v402
    %v2255 = vunpack.c.l.b16 %v403
    %v2256 = vunpack.c.h.b16 %v403
    %v2257 = vunpack.c.l.b16 %v404
    %v2258 = vunpack.c.h.b16 %v404
    %v2259 = vunpack.c.l.b16 %v405
    %v2260 = vunpack.c.h.b16 %v405
    %v2261 = vunpack.c.l.b16 %v406
    %v2262 = vunpack.c.h.b16 %v406
    %v2263 = vunpack.c.l.b16 %v407
    %v2264 = vunpack.c.h.b16 %v407
    %v2265 = vunpack.c.l.b16 %v408
    %v2266 = vunpack.c.h.b16 %v408
    %v2267 = vunpack.c.l.b16 %v409
    %v2268 = vunpack.c.h.b16 %v409
    %v2269 = vunpack.c.l.b16 %v410
    %v2270 = vunpack.c.h.b16 %v410
    %v2271 = vunpack.c.l.b16 %v411
    %v2272 = vunpack.c.h.b16 %v411
    %v2273 = vunpack.c.l.b16 %v412
    %v2274 = vunpack.c.h.b16 %v412
    %v2275 = vunpack.c.l.b16 %v413
    %v2276 = vunpack.c.h.b16 %v413
    %v2277 = vunpack.c.l.b16 %v414
    %v2278 = vunpack.c.h.b16 %v414
    %v2279 = vunpack.c.l.b16 %v415
    %v2280 = vunpack.c.h.b16 %v415
    %v2281 = vunpack.c.l.b16 %v416
    %v2282 = vunpack.c.h.b16 %v416
    %v2283 = vunpack.c.l.b16 %v417
    %v2284 = vunpack.c.h.b16 %v417
    %v2285 = vunpack.c.l.b16 %v418
    %v2286 = vunpack.c.h.b16 %v418
    %v2287 = vunpack.c.l.b16 %v419
    %v2288 = vunpack.c.h.b16 %v419
    %v2289 = vunpack.c.l.b16 %v420
    %v2290 = vunpack.c.h.b16 %v420
    %v2291 = vunpack.c.l.b16 %v421
    %v2292 = vunpack.c.h.b16 %v421
    %v2293 = vunpack.c.l.b16 %v422
    %v2294 = vunpack.c.h.b16 %v422
    %v2295 = vunpack.c.l.b16 %v423
    %v2296 = vunpack.c.h.b16 %v423
    %v2297 = vunpack.c.l.b16 %v424
    %v2298 = vunpack.c.h.b16 %v424
    %v2299 = vunpack.c.l.b16 %v425
    %v2300 = vunpack.c.h.b16 %v425
    %v2301 = vunpack.c.l.b16 %v426
    %v2302 = vunpack.c.h.b16 %v426
    %v2303 = vunpack.c.l.b16 %v427
    %v2304 = vunpack.c.h.b16 %v427
    %v2305 = vunpack.c.l.b16 %v428
    %v2306 = vunpack.c.h.b16 %v428
    %v2307 = vunpack.c.l.b16 %v429
    %v2308 = vunpack.c.h.b16 %v429
    %v2309 = vunpack.c.l.b16 %v430
    %v2310 = vunpack.c.h.b16 %v430
    %v2311 = vunpack.c.l.b16 %v431
    %v2312 = vunpack.c.h.b16 %v431
    %v2313 = vunpack.c.l.b16 %v432
    %v2314 = vunpack.c.h.b16 %v432
    %v2315 = vunpack.c.l.b16 %v433
    %v2316 = vunpack.c.h.b16 %v433
    %v2317 = vunpack.c.l.b16 %v434
    %v2318 = vunpack.c.h.b16 %v434
    %v2319 = vunpack.c.l.b16 %v435
    %v2320 = vunpack.c.h.b16 %v435
    %v2321 = vunpack.c.l.b16 %v436
    %v2322 = vunpack.c.h.b16 %v436
    %v2323 = vunpack.c.l.b16 %v437
    %v2324 = vunpack.c.h.b16 %v437
    %v2325 = vunpack.c.l.b16 %v438
    %v2326 = vunpack.c.h.b16 %v438
    %v2327 = vunpack.c.l.b16 %v439
    %v2328 = vunpack.c.h.b16 %v439
    %v2329 = vunpack.c.l.b16 %v440
    %v2330 = vunpack.c.h.b16 %v440
    %v2331 = vunpack.c.l.b16 %v441
    %v2332 = vunpack.c.h.b16 %v441
    %v2333 = vunpack.c.l.b16 %v442
    %v2334 = vunpack.c.h.b16 %v442
    %v2335 = vunpack.c.l.b16 %v443
    %v2336 = vunpack.c.h.b16 %v443
    %v2337 = vunpack.c.l.b16 %v444
    %v2338 = vunpack.c.h.b16 %v444
    %v2339 = vunpack.c.l.b16 %v445
    %v2340 = vunpack.c.h.b16 %v445
    %v2341 = vunpack.c.l.b16 %v446
    %v2342 = vunpack.c.h.b16 %v446
    %v2343 = vunpack.c.l.b16 %v447
    %v2344 = vunpack.c.h.b16 %v447
    %v2345 = vunpack.c.l.b16 %v448
    %v2346 = vunpack.c.h.b16 %v448
    %v2347 = vunpack.c.l.b16 %v449
    %v2348 = vunpack.c.h.b16 %v449
    %v2349 = vunpack.c.l.b16 %v450
    %v2350 = vunpack.c.h.b16 %v450
    %v2351 = vunpack.c.l.b16 %v451
    %v2352 = vunpack.c.h.b16 %v451
    %v2353 = vunpack.c.l.b16 %v452
    %v2354 = vunpack.c.h.b16 %v452
    %v2355 = vunpack.c.l.b16 %v453
    %v2356 = vunpack.c.h.b16 %v453
    %v2357 = vunpack.c.l.b16 %v454
    %v2358 = vunpack.c.h.b16 %v454
    %v2359 = vunpack.c.l.b16 %v455
    %v2360 = vunpack.c.h.b16 %v455
    %v2361 = vunpack.c.l.b16 %v456
    %v2362 = vunpack.c.h.b16 %v456
    %v2363 = vunpack.c.l.b16 %v457
    %v2364 = vunpack.c.h.b16 %v457
    %v2365 = vunpack.c.l.b16 %v458
    %v2366 = vunpack.c.h.b16 %v458
    %v2367 = vunpack.c.l.b16 %v459
    %v2368 = vunpack.c.h.b16 %v459
    %v2369 = vunpack.c.l.b16 %v460
    %v2370 = vunpack.c.h.b16 %v460
    %v2371 = vunpack.c.l.b16 %v461
    %v2372 = vunpack.c.h.b16 %v461
    %v2373 = vunpack.c.l.b16 %v462
    %v2374 = vunpack.c.h.b16 %v462
    %v2375 = vunpack.c.l.b16 %v463
    %v2376 = vunpack.c.h.b16 %v463
    %v2377 = vunpack.c.l.b16 %v464
    %v2378 = vunpack.c.h.b16 %v464
    %v2379 = vunpack.c.l.b16 %v465
    %v2380 = vunpack.c.h.b16 %v465
    %v2381 = vunpack.c.l.b16 %v466
    %v2382 = vunpack.c.h.b16 %v466
    %v2383 = vunpack.c.l.b16 %v467
    %v2384 = vunpack.c.h.b16 %v467
    %v2385 = vunpack.c.l.b16 %v468
    %v2386 = vunpack.c.h.b16 %v468
    %v2387 = vunpack.c.l.b16 %v469
    %v2388 = vunpack.c.h.b16 %v469
    %v2389 = vunpack.c.l.b16 %v470
    %v2390 = vunpack.c.h.b16 %v470
    %v2391 = vunpack.c.l.b16 %v471
    %v2392 = vunpack.c.h.b16 %v471
    %v2393 = vunpack.c.l.b16 %v472
    %v2394 = vunpack.c.h.b16 %v472
    %v2395 = vunpack.c.l.b16 %v473
    %v2396 = vunpack.c.h.b16 %v473
    %v2397 = vunpack.c.l.b16 %v474
    %v2398 = vunpack.c.h.b16 %v474
    %v2399 = vunpack.c.l.b16 %v475
    %v2400 = vunpack.c.h.b16 %v475
    %v2401 = vunpack.c.l.b16 %v476
    %v2402 = vunpack.c.h.b16 %v476
    %v2403 = vunpack.c.l.b16 %v477
    %v2404 = vunpack.c.h.b16 %v477
    %v2405 = vunpack.c.l.b16 %v478
    %v2406 = vunpack.c.h.b16 %v478
    %v2407 = vunpack.c.l.b16 %v479
    %v2408 = vunpack.c.h.b16 %v479
    %v2409 = vunpack.c.l.b16 %v480
    %v2410 = vunpack.c.h.b16 %v480
    %v2411 = vunpack.c.l.b16 %v481
    %v2412 = vunpack.c.h.b16 %v481
    %v2413 = vunpack.c.l.b16 %v482
    %v2414 = vunpack.c.h.b16 %v482
    %v2415 = vunpack.c.l.b16 %v483
    %v2416 = vunpack.c.h.b16 %v483
    %v2417 = vunpack.c.l.b16 %v484
    %v2418 = vunpack.c.h.b16 %v484
    %v2419 = vunpack.c.l.b16 %v485
    %v2420 = vunpack.c.h.b16 %v485
    %v2421 = vunpack.c.l.b16 %v486
    %v2422 = vunpack.c.h.b16 %v486
    %v2423 = vunpack.c.l.b16 %v487
    %v2424 = vunpack.c.h.b16 %v487
    %v2425 = vunpack.c.l.b16 %v488
    %v2426 = vunpack.c.h.b16 %v488
    %v2427 = vunpack.c.l.b16 %v489
    %v2428 = vunpack.c.h.b16 %v489
    %v2429 = vunpack.c.l.b16 %v490
    %v2430 = vunpack.c.h.b16 %v490
    %v2431 = vunpack.c.l.b16 %v491
    %v2432 = vunpack.c.h.b16 %v491
    %v2433 = vunpack.c.l.b16 %v492
    %v2434 = vunpack.c.h.b16 %v492
    %v2435 = vunpack.c.l.b16 %v493
    %v2436 = vunpack.c.h.b16 %v493
    %v2437 = vunpack.c.l.b16 %v494
    %v2438 = vunpack.c.h.b16 %v494
    %v2439 = vunpack.c.l.b16 %v495
    %v2440 = vunpack.c.h.b16 %v495
    %v2441 = vunpack.c.l.b16 %v496
    %v2442 = vunpack.c.h.b16 %v496
    %v2443 = vunpack.c.l.b16 %v497
    %v2444 = vunpack.c.h.b16 %v497
    %v2445 = vunpack.c.l.b16 %v498
    %v2446 = vunpack.c.h.b16 %v498
    %v2447 = vunpack.c.l.b16 %v499
    %v2448 = vunpack.c.h.b16 %v499
    %v2449 = vunpack.c.l.b16 %v500
    %v2450 = vunpack.c.h.b16 %v500
    %v2451 = vunpack.c.l.b16 %v501
    %v2452 = vunpack.c.h.b16 %v501
    %v2453 = vunpack.c.l.b16 %v502
    %v2454 = vunpack.c.h.b16 %v502
    %v2455 = vunpack.c.l.b16 %v503
    %v2456 = vunpack.c.h.b16 %v503
    %v2457 = vunpack.c.l.b16 %v504
    %v2458 = vunpack.c.h.b16 %v504
    %v2459 = vunpack.c.l.b16 %v505
    %v2460 = vunpack.c.h.b16 %v505
    %v2461 = vunpack.c.l.b16 %v506
    %v2462 = vunpack.c.h.b16 %v506
    %v2463 = vunpack.c.l.b16 %v507
    %v2464 = vunpack.c.h.b16 %v507
    %v2465 = vunpack.c.l.b16 %v508
    %v2466 = vunpack.c.h.b16 %v508
    %v2467 = vunpack.c.l.b16 %v509
    %v2468 = vunpack.c.h.b16 %v509
    %v2469 = vunpack.c.l.b16 %v510
    %v2470 = vunpack.c.h.b16 %v510
    %v2471 = vunpack.c.l.b16 %v511
    %v2472 = vunpack.c.h.b16 %v511
    %v2473 = vunpack.c.l.b16 %v512
    %v2474 = vunpack.c.h.b16 %v512
    %v2475 = vunpack.c.l.b16 %v513
    %v2476 = vunpack.c.h.b16 %v513
    %v2477 = vunpack.c.l.b16 %v514
    %v2478 = vunpack.c.h.b16 %v514
    %v2479 = vunpack.c.l.b16 %v515
    %v2480 = vunpack.c.h.b16 %v515
    %v2481 = vunpack.c.l.b16 %v516
    %v2482 = vunpack.c.h.b16 %v516
    %v2483 = vunpack.c.l.b16 %v517
    %v2484 = vunpack.c.h.b16 %v517
    %v2485 = vunpack.c.l.b16 %v518
    %v2486 = vunpack.c.h.b16 %v518
    %v2487 = vunpack.c.l.b16 %v519
    %v2488 = vunpack.c.h.b16 %v519
    %v2489 = vunpack.c.l.b16 %v520
    %v2490 = vunpack.c.h.b16 %v520
    %v2491 = vunpack.c.l.b16 %v521
    %v2492 = vunpack.c.h.b16 %v521
    %v2493 = vunpack.c.l.b16 %v522
    %v2494 = vunpack.c.h.b16 %v522
    %v2495 = vunpack.c.l.b16 %v523
    %v2496 = vunpack.c.h.b16 %v523
    %v2497 = vunpack.c.l.b16 %v524
    %v2498 = vunpack.c.h.b16 %v524
    %v2499 = vunpack.c.l.b16 %v525
    %v2500 = vunpack.c.h.b16 %v525
    %v2501 = vunpack.c.l.b16 %v526
    %v2502 = vunpack.c.h.b16 %v526
    %v2503 = vunpack.c.l.b16 %v527
    %v2504 = vunpack.c.h.b16 %v527
    %v2505 = vunpack.c.l.b16 %v528
    %v2506 = vunpack.c.h.b16 %v528
    %v2507 = vunpack.c.l.b16 %v529
    %v2508 = vunpack.c.h.b16 %v529
    %v2509 = vunpack.c.l.b16 %v530
    %v2510 = vunpack.c.h.b16 %v530
    %v2511 = vunpack.c.l.b16 %v531
    %v2512 = vunpack.c.h.b16 %v531
    %v2513 = vunpack.c.l.b16 %v532
    %v2514 = vunpack.c.h.b16 %v532
    %v2515 = vunpack.c.l.b16 %v533
    %v2516 = vunpack.c.h.b16 %v533
    %v2517 = vunpack.c.l.b16 %v534
    %v2518 = vunpack.c.h.b16 %v534
    %v2519 = vunpack.c.l.b16 %v535
    %v2520 = vunpack.c.h.b16 %v535
    %v2521 = vunpack.c.l.b16 %v536
    %v2522 = vunpack.c.h.b16 %v536
    %v2523 = vunpack.c.l.b16 %v537
    %v2524 = vunpack.c.h.b16 %v537
    %v2525 = vunpack.c.l.b16 %v538
    %v2526 = vunpack.c.h.b16 %v538
    %v2527 = vunpack.c.l.b16 %v539
    %v2528 = vunpack.c.h.b16 %v539
    %v2529 = vunpack.c.l.b16 %v540
    %v2530 = vunpack.c.h.b16 %v540
    %v2531 = vunpack.c.l.b16 %v541
    %v2532 = vunpack.c.h.b16 %v541
    %v2533 = vunpack.c.l.b16 %v542
    %v2534 = vunpack.c.h.b16 %v542
    %v2535 = vunpack.c.l.b16 %v543
    %v2536 = vunpack.c.h.b16 %v543
    %v2537 = vunpack.c.l.b16 %v544
    %v2538 = vunpack.c.h.b16 %v544
    %v2539 = vunpack.c.l.b16 %v545
    %v2540 = vunpack.c.h.b16 %v545
    %v2541 = vunpack.c.l.b16 %v546
    %v2542 = vunpack.c.h.b16 %v546
    %v2543 = vunpack.c.l.b16 %v547
    %v2544 = vunpack.c.h.b16 %v547
    %v2545 = vunpack.c.l.b16 %v548
    %v2546 = vunpack.c.h.b16 %v548
    %v2547 = vunpack.c.l.b16 %v549
    %v2548 = vunpack.c.h.b16 %v549
    %v2549 = vunpack.c.l.b16 %v550
    %v2550 = vunpack.c.h.b16 %v550
    %v2551 = vunpack.c.l.b16 %v551
    %v2552 = vunpack.c.h.b16 %v551
    %v2553 = vunpack.c.l.b16 %v552
    %v2554 = vunpack.c.h.b16 %v552
    %v2555 = vunpack.c.l.b16 %v553
    %v2556 = vunpack.c.h.b16 %v553
    %v2557 = vunpack.c.l.b16 %v554
    %v2558 = vunpack.c.h.b16 %v554
    %v2559 = vunpack.c.l.b16 %v555
    %v2560 = vunpack.c.h.b16 %v555
    %v2561 = vunpack.c.l.b16 %v556
    %v2562 = vunpack.c.h.b16 %v556
    %v2563 = vunpack.c.l.b16 %v557
    %v2564 = vunpack.c.h.b16 %v557
    %v2565 = vunpack.c.l.b16 %v558
    %v2566 = vunpack.c.h.b16 %v558
    %v2567 = vunpack.c.l.b16 %v559
    %v2568 = vunpack.c.h.b16 %v559
    %v2569 = vunpack.c.l.b16 %v560
    %v2570 = vunpack.c.h.b16 %v560
    %v2571 = vunpack.c.l.b16 %v561
    %v2572 = vunpack.c.h.b16 %v561
    %v2573 = vunpack.c.l.b16 %v562
    %v2574 = vunpack.c.h.b16 %v562
    %v2575 = vunpack.c.l.b16 %v563
    %v2576 = vunpack.c.h.b16 %v563
    %v2577 = vunpack.c.l.b16 %v564
    %v2578 = vunpack.c.h.b16 %v564
    %v2579 = vunpack.c.l.b16 %v565
    %v2580 = vunpack.c.h.b16 %v565
    %v2581 = vunpack.c.l.b16 %v566
    %v2582 = vunpack.c.h.b16 %v566
    %v2583 = vunpack.c.l.b16 %v567
    %v2584 = vunpack.c.h.b16 %v567
    %v2585 = vunpack.c.l.b16 %v568
    %v2586 = vunpack.c.h.b16 %v568
    %v2587 = vunpack.c.l.b16 %v569
    %v2588 = vunpack.c.h.b16 %v569
    %v2589 = vunpack.c.l.b16 %v570
    %v2590 = vunpack.c.h.b16 %v570
    %v2591 = vunpack.c.l.b16 %v571
    %v2592 = vunpack.c.h.b16 %v571
    %v2593 = vunpack.c.l.b16 %v572
    %v2594 = vunpack.c.h.b16 %v572
    %v2595 = vunpack.c.l.b16 %v573
    %v2596 = vunpack.c.h.b16 %v573
    %v2597 = vunpack.c.l.b16 %v574
    %v2598 = vunpack.c.h.b16 %v574
    %v2599 = vunpack.c.l.b16 %v575
    %v2600 = vunpack.c.h.b16 %v575
    %v2601 = vunpack.c.l.b16 %v576
    %v2602 = vunpack.c.h.b16 %v576
    %v2603 = vunpack.c.l.b16 %v577
    %v2604 = vunpack.c.h.b16 %v577
    %v2605 = vunpack.c.l.b16 %v578
    %v2606 = vunpack.c.h.b16 %v578
    %v2607 = vunpack.c.l.b16 %v579
    %v2608 = vunpack.c.h.b16 %v579
    %v2609 = vunpack.c.l.b16 %v580
    %v2610 = vunpack.c.h.b16 %v580
    %v2611 = vunpack.c.l.b16 %v581
    %v2612 = vunpack.c.h.b16 %v581
    %v2613 = vunpack.c.l.b16 %v582
    %v2614 = vunpack.c.h.b16 %v582
    %v2615 = vunpack.c.l.b16 %v583
    %v2616 = vunpack.c.h.b16 %v583
    %v2617 = vunpack.c.l.b16 %v584
    %v2618 = vunpack.c.h.b16 %v584
    %v2619 = vunpack.c.l.b16 %v585
    %v2620 = vunpack.c.h.b16 %v585
    %v2621 = vunpack.c.l.b16 %v586
    %v2622 = vunpack.c.h.b16 %v586
    %v2623 = vunpack.c.l.b16 %v587
    %v2624 = vunpack.c.h.b16 %v587
    %v2625 = vunpack.c.l.b16 %v588
    %v2626 = vunpack.c.h.b16 %v588
    %v2627 = vunpack.c.l.b16 %v589
    %v2628 = vunpack.c.h.b16 %v589
    %v2629 = vunpack.c.l.b16 %v590
    %v2630 = vunpack.c.h.b16 %v590
    %v2631 = vunpack.c.l.b16 %v591
    %v2632 = vunpack.c.h.b16 %v591
    %v2633 = vunpack.c.l.b16 %v592
    %v2634 = vunpack.c.h.b16 %v592
    %v2635 = vunpack.c.l.b16 %v593
    %v2636 = vunpack.c.h.b16 %v593
    %v2637 = vunpack.c.l.b16 %v594
    %v2638 = vunpack.c.h.b16 %v594
    %v2639 = vunpack.c.l.b16 %v595
    %v2640 = vunpack.c.h.b16 %v595
    %v2641 = vunpack.c.l.b16 %v596
    %v2642 = vunpack.c.h.b16 %v596
    %v2643 = vunpack.c.l.b16 %v597
    %v2644 = vunpack.c.h.b16 %v597
    %v2645 = vunpack.c.l.b16 %v598
    %v2646 = vunpack.c.h.b16 %v598
    %v2647 = vunpack.c.l.b16 %v599
    %v2648 = vunpack.c.h.b16 %v599
    %v2649 = vunpack.c.l.b16 %v600
    %v2650 = vunpack.c.h.b16 %v600
    %v2651 = vunpack.c.l.b16 %v601
    %v2652 = vunpack.c.h.b16 %v601
    %v2653 = vunpack.c.l.b16 %v602
    %v2654 = vunpack.c.h.b16 %v602
    %v2655 = vunpack.c.l.b16 %v603
    %v2656 = vunpack.c.h.b16 %v603
    %v2657 = vunpack.c.l.b16 %v604
    %v2658 = vunpack.c.h.b16 %v604
    %v2659 = vunpack.c.l.b16 %v605
    %v2660 = vunpack.c.h.b16 %v605
    %v2661 = vunpack.c.l.b16 %v606
    %v2662 = vunpack.c.h.b16 %v606
    %v2663 = vunpack.c.l.b16 %v607
    %v2664 = vunpack.c.h.b16 %v607
    %v2665 = vunpack.c.l.b16 %v608
    %v2666 = vunpack.c.h.b16 %v608
    %v2667 = vunpack.c.l.b16 %v609
    %v2668 = vunpack.c.h.b16 %v609
    %v2669 = vunpack.c.l.b16 %v610
    %v2670 = vunpack.c.h.b16 %v610
    %v2671 = vunpack.c.l.b16 %v611
    %v2672 = vunpack.c.h.b16 %v611
    %v2673 = vunpack.c.l.b16 %v612
    %v2674 = vunpack.c.h.b16 %v612
    %v2675 = vunpack.c.l.b16 %v613
    %v2676 = vunpack.c.h.b16 %v613
    %v2677 = vunpack.c.l.b16 %v614
    %v2678 = vunpack.c.h.b16 %v614
    %v2679 = vunpack.c.l.b16 %v615
    %v2680 = vunpack.c.h.b16 %v615
    %v2681 = vunpack.c.l.b16 %v616
    %v2682 = vunpack.c.h.b16 %v616
    %v2683 = vunpack.c.l.b16 %v617
    %v2684 = vunpack.c.h.b16 %v617
    %v2685 = vunpack.c.l.b16 %v618
    %v2686 = vunpack.c.h.b16 %v618
    %v2687 = vunpack.c.l.b16 %v619
    %v2688 = vunpack.c.h.b16 %v619
    %v2689 = vunpack.c.l.b16 %v620
    %v2690 = vunpack.c.h.b16 %v620
    %v2691 = vunpack.c.l.b16 %v621
    %v2692 = vunpack.c.h.b16 %v621
    %v2693 = vunpack.c.l.b16 %v622
    %v2694 = vunpack.c.h.b16 %v622
    %v2695 = vunpack.c.l.b16 %v623
    %v2696 = vunpack.c.h.b16 %v623
    %v2697 = vunpack.c.l.b16 %v624
    %v2698 = vunpack.c.h.b16 %v624
    %v2699 = vunpack.c.l.b16 %v625
    %v2700 = vunpack.c.h.b16 %v625
    %v2701 = vunpack.c.l.b16 %v626
    %v2702 = vunpack.c.h.b16 %v626
    %v2703 = vunpack.c.l.b16 %v627
    %v2704 = vunpack.c.h.b16 %v627
    %v2705 = vunpack.c.l.b16 %v628
    %v2706 = vunpack.c.h.b16 %v628
    %v2707 = vunpack.c.l.b16 %v629
    %v2708 = vunpack.c.h.b16 %v629
    %v2709 = vunpack.c.l.b16 %v630
    %v2710 = vunpack.c.h.b16 %v630
    %v2711 = vunpack.c.l.b16 %v631
    %v2712 = vunpack.c.h.b16 %v631
    %v2713 = vunpack.c.l.b16 %v632
    %v2714 = vunpack.c.h.b16 %v632
    %v2715 = vunpack.c.l.b16 %v633
    %v2716 = vunpack.c.h.b16 %v633
    %v2717 = vunpack.c.l.b16 %v634
    %v2718 = vunpack.c.h.b16 %v634
    %v2719 = vunpack.c.l.b16 %v635
    %v2720 = vunpack.c.h.b16 %v635
    %v2721 = vunpack.c.l.b16 %v636
    %v2722 = vunpack.c.h.b16 %v636
    %v2723 = vunpack.c.l.b16 %v637
    %v2724 = vunpack.c.h.b16 %v637
    %v2725 = vunpack.c.l.b16 %v638
    %v2726 = vunpack.c.h.b16 %v638
    %v2727 = vunpack.c.l.b16 %v639
    %v2728 = vunpack.c.h.b16 %v639
    %v2729 = vunpack.c.l.b16 %v640
    %v2730 = vunpack.c.h.b16 %v640
    %v2731 = vunpack.c.l.b16 %v641
    %v2732 = vunpack.c.h.b16 %v641
    %v2733 = vunpack.c.l.b16 %v642
    %v2734 = vunpack.c.h.b16 %v642
    %v2735 = vunpack.c.l.b16 %v643
    %v2736 = vunpack.c.h.b16 %v643
    %v2737 = vunpack.c.l.b16 %v644
    %v2738 = vunpack.c.h.b16 %v644
    %v2739 = vunpack.c.l.b16 %v645
    %v2740 = vunpack.c.h.b16 %v645
    %v2741 = vunpack.c.l.b16 %v646
    %v2742 = vunpack.c.h.b16 %v646
    %v2743 = vunpack.c.l.b16 %v647
    %v2744 = vunpack.c.h.b16 %v647
    %v2745 = vunpack.c.l.b16 %v648
    %v2746 = vunpack.c.h.b16 %v648
    %v2747 = vunpack.c.l.b16 %v649
    %v2748 = vunpack.c.h.b16 %v649
    %v2749 = vunpack.c.l.b16 %v650
    %v2750 = vunpack.c.h.b16 %v650
    %v2751 = vunpack.c.l.b16 %v651
    %v2752 = vunpack.c.h.b16 %v651
    %v2753 = vunpack.c.l.b16 %v652
    %v2754 = vunpack.c.h.b16 %v652
    %v2755 = vunpack.c.l.b16 %v653
    %v2756 = vunpack.c.h.b16 %v653
    %v2757 = vunpack.c.l.b16 %v654
    %v2758 = vunpack.c.h.b16 %v654
    %v2759 = vunpack.c.l.b16 %v655
    %v2760 = vunpack.c.h.b16 %v655
    %v2761 = vunpack.c.l.b16 %v656
    %v2762 = vunpack.c.h.b16 %v656
    %v2763 = vunpack.c.l.b16 %v657
    %v2764 = vunpack.c.h.b16 %v657
    %v2765 = vunpack.c.l.b16 %v658
    %v2766 = vunpack.c.h.b16 %v658
    %v2767 = vunpack.c.l.b16 %v659
    %v2768 = vunpack.c.h.b16 %v659
    %v2769 = vunpack.c.l.b16 %v660
    %v2770 = vunpack.c.h.b16 %v660
    %v2771 = vunpack.c.l.b16 %v661
    %v2772 = vunpack.c.h.b16 %v661
    %v2773 = vunpack.c.l.b16 %v662
    %v2774 = vunpack.c.h.b16 %v662
    %v2775 = vunpack.c.l.b16 %v663
    %v2776 = vunpack.c.h.b16 %v663
    %v2777 = vunpack.c.l.b16 %v664
    %v2778 = vunpack.c.h.b16 %v664
    %v2779 = vunpack.c.l.b16 %v665
    %v2780 = vunpack.c.h.b16 %v665
    %v2781 = vunpack.c.l.b16 %v666
    %v2782 = vunpack.c.h.b16 %v666
    %v2783 = vunpack.c.l.b16 %v667
    %v2784 = vunpack.c.h.b16 %v667
    %v2785 = vunpack.c.l.b16 %v668
    %v2786 = vunpack.c.h.b16 %v668
    %v2787 = vunpack.c.l.b16 %v669
    %v2788 = vunpack.c.h.b16 %v669
    %v2789 = vunpack.c.l.b16 %v670
    %v2790 = vunpack.c.h.b16 %v670
    %v2791 = vunpack.c.l.b16 %v671
    %v2792 = vunpack.c.h.b16 %v671
    %v2793 = vunpack.c.l.b16 %v672
    %v2794 = vunpack.c.h.b16 %v672
    %v2795 = vunpack.c.l.b16 %v673
    %v2796 = vunpack.c.h.b16 %v673
    %v2797 = vunpack.c.l.b16 %v674
    %v2798 = vunpack.c.h.b16 %v674
    %v2799 = vunpack.c.l.b16 %v675
    %v2800 = vunpack.c.h.b16 %v675
    %v2801 = vunpack.c.l.b16 %v676
    %v2802 = vunpack.c.h.b16 %v676
    %v2803 = vunpack.c.l.b16 %v677
    %v2804 = vunpack.c.h.b16 %v677
    %v2805 = vunpack.c.l.b16 %v678
    %v2806 = vunpack.c.h.b16 %v678
    %v2807 = vunpack.c.l.b16 %v679
    %v2808 = vunpack.c.h.b16 %v679
    %v2809 = vunpack.c.l.b16 %v680
    %v2810 = vunpack.c.h.b16 %v680
    %v2811 = vunpack.c.l.b16 %v681
    %v2812 = vunpack.c.h.b16 %v681
    %v2813 = vunpack.c.l.b16 %v682
    %v2814 = vunpack.c.h.b16 %v682
    %v2815 = vunpack.c.l.b16 %v683
    %v2816 = vunpack.c.h.b16 %v683
    %v2817 = vunpack.c.l.b16 %v684
    %v2818 = vunpack.c.h.b16 %v684
    %v2819 = vunpack.c.l.b16 %v685
    %v2820 = vunpack.c.h.b16 %v685
    %v2821 = vunpack.c.l.b16 %v686
    %v2822 = vunpack.c.h.b16 %v686
    %v2823 = vunpack.c.l.b16 %v687
    %v2824 = vunpack.c.h.b16 %v687
    %v2825 = vunpack.c.l.b16 %v688
    %v2826 = vunpack.c.h.b16 %v688
    %v2827 = vunpack.c.l.b16 %v689
    %v2828 = vunpack.c.h.b16 %v689
    %v2829 = vunpack.c.l.b16 %v690
    %v2830 = vunpack.c.h.b16 %v690
    %v2831 = vunpack.c.l.b16 %v691
    %v2832 = vunpack.c.h.b16 %v691
    %v2833 = vunpack.c.l.b16 %v692
    %v2834 = vunpack.c.h.b16 %v692
    %v2835 = vunpack.c.l.b16 %v693
    %v2836 = vunpack.c.h.b16 %v693
    %v2837 = vunpack.c.l.b16 %v694
    %v2838 = vunpack.c.h.b16 %v694
    %v2839 = vunpack.c.l.b16 %v695
    %v2840 = vunpack.c.h.b16 %v695
    %v2841 = vunpack.c.l.b16 %v696
    %v2842 = vunpack.c.h.b16 %v696
    %v2843 = vunpack.c.l.b16 %v697
    %v2844 = vunpack.c.h.b16 %v697
    %v2845 = vunpack.c.l.b16 %v698
    %v2846 = vunpack.c.h.b16 %v698
    %v2847 = vunpack.c.l.b16 %v699
    %v2848 = vunpack.c.h.b16 %v699
    %v2849 = vunpack.c.l.b16 %v700
    %v2850 = vunpack.c.h.b16 %v700
    %v2851 = vunpack.c.l.b16 %v701
    %v2852 = vunpack.c.h.b16 %v701
    %v2853 = vunpack.c.l.b16 %v702
    %v2854 = vunpack.c.h.b16 %v702
    %v2855 = vunpack.c.l.b16 %v703
    %v2856 = vunpack.c.h.b16 %v703
    %v2857 = vunpack.c.l.b16 %v704
    %v2858 = vunpack.c.h.b16 %v704
    %v2859 = vunpack.c.l.b16 %v705
    %v2860 = vunpack.c.h.b16 %v705
    %v2861 = vunpack.c.l.b16 %v706
    %v2862 = vunpack.c.h.b16 %v706
    %v2863 = vunpack.c.l.b16 %v707
    %v2864 = vunpack.c.h.b16 %v707
    %v2865 = vunpack.c.l.b16 %v708
    %v2866 = vunpack.c.h.b16 %v708
    %v2867 = vunpack.c.l.b16 %v709
    %v2868 = vunpack.c.h.b16 %v709
    %v2869 = vunpack.c.l.b16 %v710
    %v2870 = vunpack.c.h.b16 %v710
    %v2871 = vunpack.c.l.b16 %v711
    %v2872 = vunpack.c.h.b16 %v711
    %v2873 = vunpack.c.l.b16 %v712
    %v2874 = vunpack.c.h.b16 %v712
    %v2875 = vunpack.c.l.b16 %v713
    %v2876 = vunpack.c.h.b16 %v713
    %v2877 = vunpack.c.l.b16 %v714
    %v2878 = vunpack.c.h.b16 %v714
    %v2879 = vunpack.c.l.b16 %v715
    %v2880 = vunpack.c.h.b16 %v715
    %v2881 = vunpack.c.l.b16 %v716
    %v2882 = vunpack.c.h.b16 %v716
    %v2883 = vunpack.c.l.b16 %v717
    %v2884 = vunpack.c.h.b16 %v717
    %v2885 = vunpack.c.l.b16 %v718
    %v2886 = vunpack.c.h.b16 %v718
    %v2887 = vunpack.c.l.b16 %v719
    %v2888 = vunpack.c.h.b16 %v719
    %v2889 = vunpack.c.l.b16 %v720
    %v2890 = vunpack.c.h.b16 %v720
    %v2891 = vunpack.c.l.b16 %v721
    %v2892 = vunpack.c.h.b16 %v721
    %v2893 = vunpack.c.l.b16 %v722
    %v2894 = vunpack.c.h.b16 %v722
    %v2895 = vunpack.c.l.b16 %v723
    %v2896 = vunpack.c.h.b16 %v723
    %v2897 = vunpack.c.l.b16 %v724
    %v2898 = vunpack.c.h.b16 %v724
    %v2899 = vunpack.c.l.b16 %v725
    %v2900 = vunpack.c.h.b16 %v725
    %v2901 = vunpack.c.l.b16 %v726
    %v2902 = vunpack.c.h.b16 %v726
    %v2903 = vunpack.c.l.b16 %v727
    %v2904 = vunpack.c.h.b16 %v727
    %v2905 = vunpack.c.l.b16 %v728
    %v2906 = vunpack.c.h.b16 %v728
    %v2907 = vunpack.c.l.b16 %v729
    %v2908 = vunpack.c.h.b16 %v729
    %v2909 = vunpack.c.l.b16 %v730
    %v2910 = vunpack.c.h.b16 %v730
    %v2911 = vunpack.c.l.b16 %v731
    %v2912 = vunpack.c.h.b16 %v731
    %v2913 = vunpack.c.l.b16 %v732
    %v2914 = vunpack.c.h.b16 %v732
    %v2915 = vunpack.c.l.b16 %v733
    %v2916 = vunpack.c.h.b16 %v733
    %v2917 = vunpack.c.l.b16 %v734
    %v2918 = vunpack.c.h.b16 %v734
    %v2919 = vunpack.c.l.b16 %v735
    %v2920 = vunpack.c.h.b16 %v735
    %v2921 = vunpack.c.l.b16 %v736
    %v2922 = vunpack.c.h.b16 %v736
    %v2923 = vunpack.c.l.b16 %v737
    %v2924 = vunpack.c.h.b16 %v737
    %v2925 = vunpack.c.l.b16 %v738
    %v2926 = vunpack.c.h.b16 %v738
    %v2927 = vunpack.c.l.b16 %v739
    %v2928 = vunpack.c.h.b16 %v739
    %v2929 = vunpack.c.l.b16 %v740
    %v2930 = vunpack.c.h.b16 %v740
    %v2931 = vunpack.c.l.b16 %v741
    %v2932 = vunpack.c.h.b16 %v741
    %v2933 = vunpack.c.l.b16 %v742
    %v2934 = vunpack.c.h.b16 %v742
    %v2935 = vunpack.c.l.b16 %v743
    %v2936 = vunpack.c.h.b16 %v743
    %v2937 = vunpack.c.l.b16 %v744
    %v2938 = vunpack.c.h.b16 %v744
    %v2939 = vunpack.c.l.b16 %v745
    %v2940 = vunpack.c.h.b16 %v745
    %v2941 = vunpack.c.l.b16 %v746
    %v2942 = vunpack.c.h.b16 %v746
    %v2943 = vunpack.c.l.b16 %v747
    %v2944 = vunpack.c.h.b16 %v747
    %v2945 = vunpack.c.l.b16 %v748
    %v2946 = vunpack.c.h.b16 %v748
    %v2947 = vpack.c.b16 %v1927, %v1923
    %v2948 = vpack.c.b16 %v1928, %v1924
    %v2949 = vpack.c.b16 %v1929, %v1925
    %v2950 = vpack.c.b16 %v1930, %v1926
    %v2951 = vpack.c.b16 %v1935, %v1931
    %v2952 = vpack.c.b16 %v1936, %v1932
    %v2953 = vpack.c.b16 %v1937, %v1933
    %v2954 = vpack.c.b16 %v1938, %v1934
    %v2955 = vpack.c.b16 %v1943, %v1939
    %v2956 = vpack.c.b16 %v1944, %v1940
    %v2957 = vpack.c.b16 %v1945, %v1941
    %v2958 = vpack.c.b16 %v1946, %v1942
    %v2959 = vpack.c.b16 %v1951, %v1947
    %v2960 = vpack.c.b16 %v1952, %v1948
    %v2961 = vpack.c.b16 %v1953, %v1949
    %v2962 = vpack.c.b16 %v1954, %v1950
    %v2963 = vpack.c.b16 %v1959, %v1955
    %v2964 = vpack.c.b16 %v1960, %v1956
    %v2965 = vpack.c.b16 %v1961, %v1957
    %v2966 = vpack.c.b16 %v1962, %v1958
    %v2967 = vpack.c.b16 %v1967, %v1963
    %v2968 = vpack.c.b16 %v1968, %v1964
    %v2969 = vpack.c.b16 %v1969, %v1965
    %v2970 = vpack.c.b16 %v1970, %v1966
    %v2971 = vpack.c.b16 %v1975, %v1971
    %v2972 = vpack.c.b16 %v1976, %v1972
    %v2973 = vpack.c.b16 %v1977, %v1973
    %v2974 = vpack.c.b16 %v1978, %v1974
    %v2975 = vpack.c.b16 %v1983, %v1979
    %v2976 = vpack.c.b16 %v1984, %v1980
    %v2977 = vpack.c.b16 %v1985, %v1981
    %v2978 = vpack.c.b16 %v1986, %v1982
    %v2979 = vpack.c.b16 %v1991, %v1987
    %v2980 = vpack.c.b16 %v1992, %v1988
    %v2981 = vpack.c.b16 %v1993, %v1989
    %v2982 = vpack.c.b16 %v1994, %v1990
    %v2983 = vpack.c.b16 %v1999, %v1995
    %v2984 = vpack.c.b16 %v2000, %v1996
    %v2985 = vpack.c.b16 %v2001, %v1997
    %v2986 = vpack.c.b16 %v2002, %v1998
    %v2987 = vpack.c.b16 %v2007, %v2003
    %v2988 = vpack.c.b16 %v2008, %v2004
    %v2989 = vpack.c.b16 %v2009, %v2005
    %v2990 = vpack.c.b16 %v2010, %v2006
    %v2991 = vpack.c.b16 %v2015, %v2011
    %v2992 = vpack.c.b16 %v2016, %v2012
    %v2993 = vpack.c.b16 %v2017, %v2013
    %v2994 = vpack.c.b16 %v2018, %v2014
    %v2995 = vpack.c.b16 %v2023, %v2019
    %v2996 = vpack.c.b16 %v2024, %v2020
    %v2997 = vpack.c.b16 %v2025, %v2021
    %v2998 = vpack.c.b16 %v2026, %v2022
    %v2999 = vpack.c.b16 %v2031, %v2027
    %v3000 = vpack.c.b16 %v2032, %v2028
    %v3001 = vpack.c.b16 %v2033, %v2029
    %v3002 = vpack.c.b16 %v2034, %v2030
    %v3003 = vpack.c.b16 %v2039, %v2035
    %v3004 = vpack.c.b16 %v2040, %v2036
    %v3005 = vpack.c.b16 %v2041, %v2037
    %v3006 = vpack.c.b16 %v2042, %v2038
    %v3007 = vpack.c.b16 %v2047, %v2043
    %v3008 = vpack.c.b16 %v2048, %v2044
    %v3009 = vpack.c.b16 %v2049, %v2045
    %v3010 = vpack.c.b16 %v2050, %v2046
    %v3011 = vpack.c.b16 %v2055, %v2051
    %v3012 = vpack.c.b16 %v2056, %v2052
    %v3013 = vpack.c.b16 %v2057, %v2053
    %v3014 = vpack.c.b16 %v2058, %v2054
    %v3015 = vpack.c.b16 %v2063, %v2059
    %v3016 = vpack.c.b16 %v2064, %v2060
    %v3017 = vpack.c.b16 %v2065, %v2061
    %v3018 = vpack.c.b16 %v2066, %v2062
    %v3019 = vpack.c.b16 %v2071, %v2067
    %v3020 = vpack.c.b16 %v2072, %v2068
    %v3021 = vpack.c.b16 %v2073, %v2069
    %v3022 = vpack.c.b16 %v2074, %v2070
    %v3023 = vpack.c.b16 %v2079, %v2075
    %v3024 = vpack.c.b16 %v2080, %v2076
    %v3025 = vpack.c.b16 %v2081, %v2077
    %v3026 = vpack.c.b16 %v2082, %v2078
    %v3027 = vpack.c.b16 %v2087, %v2083
    %v3028 = vpack.c.b16 %v2088, %v2084
    %v3029 = vpack.c.b16 %v2089, %v2085
    %v3030 = vpack.c.b16 %v2090, %v2086
    %v3031 = vpack.c.b16 %v2095, %v2091
    %v3032 = vpack.c.b16 %v2096, %v2092
    %v3033 = vpack.c.b16 %v2097, %v2093
    %v3034 = vpack.c.b16 %v2098, %v2094
    %v3035 = vpack.c.b16 %v2103, %v2099
    %v3036 = vpack.c.b16 %v2104, %v2100
    %v3037 = vpack.c.b16 %v2105, %v2101
    %v3038 = vpack.c.b16 %v2106, %v2102
    %v3039 = vpack.c.b16 %v2111, %v2107
    %v3040 = vpack.c.b16 %v2112, %v2108
    %v3041 = vpack.c.b16 %v2113, %v2109
    %v3042 = vpack.c.b16 %v2114, %v2110
    %v3043 = vpack.c.b16 %v2119, %v2115
    %v3044 = vpack.c.b16 %v2120, %v2116
    %v3045 = vpack.c.b16 %v2121, %v2117
    %v3046 = vpack.c.b16 %v2122, %v2118
    %v3047 = vpack.c.b16 %v2127, %v2123
    %v3048 = vpack.c.b16 %v2128, %v2124
    %v3049 = vpack.c.b16 %v2129, %v2125
    %v3050 = vpack.c.b16 %v2130, %v2126
    %v3051 = vpack.c.b16 %v2135, %v2131
    %v3052 = vpack.c.b16 %v2136, %v2132
    %v3053 = vpack.c.b16 %v2137, %v2133
    %v3054 = vpack.c.b16 %v2138, %v2134
    %v3055 = vpack.c.b16 %v2143, %v2139
    %v3056 = vpack.c.b16 %v2144, %v2140
    %v3057 = vpack.c.b16 %v2145, %v2141
    %v3058 = vpack.c.b16 %v2146, %v2142
    %v3059 = vpack.c.b16 %v2151, %v2147
    %v3060 = vpack.c.b16 %v2152, %v2148
    %v3061 = vpack.c.b16 %v2153, %v2149
    %v3062 = vpack.c.b16 %v2154, %v2150
    %v3063 = vpack.c.b16 %v2159, %v2155
    %v3064 = vpack.c.b16 %v2160, %v2156
    %v3065 = vpack.c.b16 %v2161, %v2157
    %v3066 = vpack.c.b16 %v2162, %v2158
    %v3067 = vpack.c.b16 %v2167, %v2163
    %v3068 = vpack.c.b16 %v2168, %v2164
    %v3069 = vpack.c.b16 %v2169, %v2165
    %v3070 = vpack.c.b16 %v2170, %v2166
    %v3071 = vpack.c.b16 %v2175, %v2171
    %v3072 = vpack.c.b16 %v2176, %v2172
    %v3073 = vpack.c.b16 %v2177, %v2173
    %v3074 = vpack.c.b16 %v2178, %v2174
    %v3075 = vpack.c.b16 %v2183, %v2179
    %v3076 = vpack.c.b16 %v2184, %v2180
    %v3077 = vpack.c.b16 %v2185, %v2181
    %v3078 = vpack.c.b16 %v2186, %v2182
    %v3079 = vpack.c.b16 %v2191, %v2187
    %v3080 = vpack.c.b16 %v2192, %v2188
    %v3081 = vpack.c.b16 %v2193, %v2189
    %v3082 = vpack.c.b16 %v2194, %v2190
    %v3083 = vpack.c.b16 %v2199, %v2195
    %v3084 = vpack.c.b16 %v2200, %v2196
    %v3085 = vpack.c.b16 %v2201, %v2197
    %v3086 = vpack.c.b16 %v2202, %v2198
    %v3087 = vpack.c.b16 %v2207, %v2203
    %v3088 = vpack.c.b16 %v2208, %v2204
    %v3089 = vpack.c.b16 %v2209, %v2205
    %v3090 = vpack.c.b16 %v2210, %v2206
    %v3091 = vpack.c.b16 %v2215, %v2211
    %v3092 = vpack.c.b16 %v2216, %v2212
    %v3093 = vpack.c.b16 %v2217, %v2213
    %v3094 = vpack.c.b16 %v2218, %v2214
    %v3095 = vpack.c.b16 %v2223, %v2219
    %v3096 = vpack.c.b16 %v2224, %v2220
    %v3097 = vpack.c.b16 %v2225, %v2221
    %v3098 = vpack.c.b16 %v2226, %v2222
    %v3099 = vpack.c.b16 %v2231, %v2227
    %v3100 = vpack.c.b16 %v2232, %v2228
    %v3101 = vpack.c.b16 %v2233, %v2229
    %v3102 = vpack.c.b16 %v2234, %v2230
    %v3103 = vpack.c.b16 %v2239, %v2235
    %v3104 = vpack.c.b16 %v2240, %v2236
    %v3105 = vpack.c.b16 %v2241, %v2237
    %v3106 = vpack.c.b16 %v2242, %v2238
    %v3107 = vpack.c.b16 %v2247, %v2243
    %v3108 = vpack.c.b16 %v2248, %v2244
    %v3109 = vpack.c.b16 %v2249, %v2245
    %v3110 = vpack.c.b16 %v2250, %v2246
    %v3111 = vpack.c.b16 %v2255, %v2251
    %v3112 = vpack.c.b16 %v2256, %v2252
    %v3113 = vpack.c.b16 %v2257, %v2253
    %v3114 = vpack.c.b16 %v2258, %v2254
    %v3115 = vpack.c.b16 %v2263, %v2259
    %v3116 = vpack.c.b16 %v2264, %v2260
    %v3117 = vpack.c.b16 %v2265, %v2261
    %v3118 = vpack.c.b16 %v2266, %v2262
    %v3119 = vpack.c.b16 %v2271, %v2267
    %v3120 = vpack.c.b16 %v2272, %v2268
    %v3121 = vpack.c.b16 %v2273, %v2269
    %v3122 = vpack.c.b16 %v2274, %v2270
    %v3123 = vpack.c.b16 %v2279, %v2275
    %v3124 = vpack.c.b16 %v2280, %v2276
    %v3125 = vpack.c.b16 %v2281, %v2277
    %v3126 = vpack.c.b16 %v2282, %v2278
    %v3127 = vpack.c.b16 %v2287, %v2283
    %v3128 = vpack.c.b16 %v2288, %v2284
    %v3129 = vpack.c.b16 %v2289, %v2285
    %v3130 = vpack.c.b16 %v2290, %v2286
    %v3131 = vpack.c.b16 %v2295, %v2291
    %v3132 = vpack.c.b16 %v2296, %v2292
    %v3133 = vpack.c.b16 %v2297, %v2293
    %v3134 = vpack.c.b16 %v2298, %v2294
    %v3135 = vpack.c.b16 %v2303, %v2299
    %v3136 = vpack.c.b16 %v2304, %v2300
    %v3137 = vpack.c.b16 %v2305, %v2301
    %v3138 = vpack.c.b16 %v2306, %v2302
    %v3139 = vpack.c.b16 %v2311, %v2307
    %v3140 = vpack.c.b16 %v2312, %v2308
    %v3141 = vpack.c.b16 %v2313, %v2309
    %v3142 = vpack.c.b16 %v2314, %v2310
    %v3143 = vpack.c.b16 %v2319, %v2315
    %v3144 = vpack.c.b16 %v2320, %v2316
    %v3145 = vpack.c.b16 %v2321, %v2317
    %v3146 = vpack.c.b16 %v2322, %v2318
    %v3147 = vpack.c.b16 %v2327, %v2323
    %v3148 = vpack.c.b16 %v2328, %v2324
    %v3149 = vpack.c.b16 %v2329, %v2325
    %v3150 = vpack.c.b16 %v2330, %v2326
    %v3151 = vpack.c.b16 %v2335, %v2331
    %v3152 = vpack.c.b16 %v2336, %v2332
    %v3153 = vpack.c.b16 %v2337, %v2333
    %v3154 = vpack.c.b16 %v2338, %v2334
    %v3155 = vpack.c.b16 %v2343, %v2339
    %v3156 = vpack.c.b16 %v2344, %v2340
    %v3157 = vpack.c.b16 %v2345, %v2341
    %v3158 = vpack.c.b16 %v2346, %v2342
    %v3159 = vpack.c.b16 %v2351, %v2347
    %v3160 = vpack.c.b16 %v2352, %v2348
    %v3161 = vpack.c.b16 %v2353, %v2349
    %v3162 = vpack.c.b16 %v2354, %v2350
    %v3163 = vpack.c.b16 %v2359, %v2355
    %v3164 = vpack.c.b16 %v2360, %v2356
    %v3165 = vpack.c.b16 %v2361, %v2357
    %v3166 = vpack.c.b16 %v2362, %v2358
    %v3167 = vpack.c.b16 %v2367, %v2363
    %v3168 = vpack.c.b16 %v2368, %v2364
    %v3169 = vpack.c.b16 %v2369, %v2365
    %v3170 = vpack.c.b16 %v2370, %v2366
    %v3171 = vpack.c.b16 %v2375, %v2371
    %v3172 = vpack.c.b16 %v2376, %v2372
    %v3173 = vpack.c.b16 %v2377, %v2373
    %v3174 = vpack.c.b16 %v2378, %v2374
    %v3175 = vpack.c.b16 %v2383, %v2379
    %v3176 = vpack.c.b16 %v2384, %v2380
    %v3177 = vpack.c.b16 %v2385, %v2381
    %v3178 = vpack.c.b16 %v2386, %v2382
    %v3179 = vpack.c.b16 %v2391, %v2387
    %v3180 = vpack.c.b16 %v2392, %v2388
    %v3181 = vpack.c.b16 %v2393, %v2389
    %v3182 = vpack.c.b16 %v2394, %v2390
    %v3183 = vpack.c.b16 %v2399, %v2395
    %v3184 = vpack.c.b16 %v2400, %v2396
    %v3185 = vpack.c.b16 %v2401, %v2397
    %v3186 = vpack.c.b16 %v2402, %v2398
    %v3187 = vpack.c.b16 %v2407, %v2403
    %v3188 = vpack.c.b16 %v2408, %v2404
    %v3189 = vpack.c.b16 %v2409, %v2405
    %v3190 = vpack.c.b16 %v2410, %v2406
    %v3191 = vpack.c.b16 %v2415, %v2411
    %v3192 = vpack.c.b16 %v2416, %v2412
    %v3193 = vpack.c.b16 %v2417, %v2413
    %v3194 = vpack.c.b16 %v2418, %v2414
    %v3195 = vpack.c.b16 %v2423, %v2419
    %v3196 = vpack.c.b16 %v2424, %v2420
    %v3197 = vpack.c.b16 %v2425, %v2421
    %v3198 = vpack.c.b16 %v2426, %v2422
    %v3199 = vpack.c.b16 %v2431, %v2427
    %v3200 = vpack.c.b16 %v2432, %v2428
    %v3201 = vpack.c.b16 %v2433, %v2429
    %v3202 = vpack.c.b16 %v2434, %v2430
    %v3203 = vpack.c.b16 %v2439, %v2435
    %v3204 = vpack.c.b16 %v2440, %v2436
    %v3205 = vpack.c.b16 %v2441, %v2437
    %v3206 = vpack.c.b16 %v2442, %v2438
    %v3207 = vpack.c.b16 %v2447, %v2443
    %v3208 = vpack.c.b16 %v2448, %v2444
    %v3209 = vpack.c.b16 %v2449, %v2445
    %v3210 = vpack.c.b16 %v2450, %v2446
    %v3211 = vpack.c.b16 %v2455, %v2451
    %v3212 = vpack.c.b16 %v2456, %v2452
    %v3213 = vpack.c.b16 %v2457, %v2453
    %v3214 = vpack.c.b16 %v2458, %v2454
    %v3215 = vpack.c.b16 %v2463, %v2459
    %v3216 = vpack.c.b16 %v2464, %v2460
    %v3217 = vpack.c.b16 %v2465, %v2461
    %v3218 = vpack.c.b16 %v2466, %v2462
    %v3219 = vpack.c.b16 %v2471, %v2467
    %v3220 = vpack.c.b16 %v2472, %v2468
    %v3221 = vpack.c.b16 %v2473, %v2469
    %v3222 = vpack.c.b16 %v2474, %v2470
    %v3223 = vpack.c.b16 %v2479, %v2475
    %v3224 = vpack.c.b16 %v2480, %v2476
    %v3225 = vpack.c.b16 %v2481, %v2477
    %v3226 = vpack.c.b16 %v2482, %v2478
    %v3227 = vpack.c.b16 %v2487, %v2483
    %v3228 = vpack.c.b16 %v2488, %v2484
    %v3229 = vpack.c.b16 %v2489, %v2485
    %v3230 = vpack.c.b16 %v2490, %v2486
    %v3231 = vpack.c.b16 %v2495, %v2491
    %v3232 = vpack.c.b16 %v2496, %v2492
    %v3233 = vpack.c.b16 %v2497, %v2493
    %v3234 = vpack.c.b16 %v2498, %v2494
    %v3235 = vpack.c.b16 %v2503, %v2499
    %v3236 = vpack.c.b16 %v2504, %v2500
    %v3237 = vpack.c.b16 %v2505, %v2501
    %v3238 = vpack.c.b16 %v2506, %v2502
    %v3239 = vpack.c.b16 %v2511, %v2507
    %v3240 = vpack.c.b16 %v2512, %v2508
    %v3241 = vpack.c.b16 %v2513, %v2509
    %v3242 = vpack.c.b16 %v2514, %v2510
    %v3243 = vpack.c.b16 %v2519, %v2515
    %v3244 = vpack.c.b16 %v2520, %v2516
    %v3245 = vpack.c.b16 %v2521, %v2517
    %v3246 = vpack.c.b16 %v2522, %v2518
    %v3247 = vpack.c.b16 %v2527, %v2523
    %v3248 = vpack.c.b16 %v2528, %v2524
    %v3249 = vpack.c.b16 %v2529, %v2525
    %v3250 = vpack.c.b16 %v2530, %v2526
    %v3251 = vpack.c.b16 %v2535, %v2531
    %v3252 = vpack.c.b16 %v2536, %v2532
    %v3253 = vpack.c.b16 %v2537, %v2533
    %v3254 = vpack.c.b16 %v2538, %v2534
    %v3255 = vpack.c.b16 %v2543, %v2539
    %v3256 = vpack.c.b16 %v2544, %v2540
    %v3257 = vpack.c.b16 %v2545, %v2541
    %v3258 = vpack.c.b16 %v2546, %v2542
    %v3259 = vpack.c.b16 %v2551, %v2547
    %v3260 = vpack.c.b16 %v2552, %v2548
    %v3261 = vpack.c.b16 %v2553, %v2549
    %v3262 = vpack.c.b16 %v2554, %v2550
    %v3263 = vpack.c.b16 %v2559, %v2555
    %v3264 = vpack.c.b16 %v2560, %v2556
    %v3265 = vpack.c.b16 %v2561, %v2557
    %v3266 = vpack.c.b16 %v2562, %v2558
    %v3267 = vpack.c.b16 %v2567, %v2563
    %v3268 = vpack.c.b16 %v2568, %v2564
    %v3269 = vpack.c.b16 %v2569, %v2565
    %v3270 = vpack.c.b16 %v2570, %v2566
    %v3271 = vpack.c.b16 %v2575, %v2571
    %v3272 = vpack.c.b16 %v2576, %v2572
    %v3273 = vpack.c.b16 %v2577, %v2573
    %v3274 = vpack.c.b16 %v2578, %v2574
    %v3275 = vpack.c.b16 %v2583, %v2579
    %v3276 = vpack.c.b16 %v2584, %v2580
    %v3277 = vpack.c.b16 %v2585, %v2581
    %v3278 = vpack.c.b16 %v2586, %v2582
    %v3279 = vpack.c.b16 %v2591, %v2587
    %v3280 = vpack.c.b16 %v2592, %v2588
    %v3281 = vpack.c.b16 %v2593, %v2589
    %v3282 = vpack.c.b16 %v2594, %v2590
    %v3283 = vpack.c.b16 %v2599, %v2595
    %v3284 = vpack.c.b16 %v2600, %v2596
    %v3285 = vpack.c.b16 %v2601, %v2597
    %v3286 = vpack.c.b16 %v2602, %v2598
    %v3287 = vpack.c.b16 %v2607, %v2603
    %v3288 = vpack.c.b16 %v2608, %v2604
    %v3289 = vpack.c.b16 %v2609, %v2605
    %v3290 = vpack.c.b16 %v2610, %v2606
    %v3291 = vpack.c.b16 %v2615, %v2611
    %v3292 = vpack.c.b16 %v2616, %v2612
    %v3293 = vpack.c.b16 %v2617, %v2613
    %v3294 = vpack.c.b16 %v2618, %v2614
    %v3295 = vpack.c.b16 %v2623, %v2619
    %v3296 = vpack.c.b16 %v2624, %v2620
    %v3297 = vpack.c.b16 %v2625, %v2621
    %v3298 = vpack.c.b16 %v2626, %v2622
    %v3299 = vpack.c.b16 %v2631, %v2627
    %v3300 = vpack.c.b16 %v2632, %v2628
    %v3301 = vpack.c.b16 %v2633, %v2629
    %v3302 = vpack.c.b16 %v2634, %v2630
    %v3303 = vpack.c.b16 %v2639, %v2635
    %v3304 = vpack.c.b16 %v2640, %v2636
    %v3305 = vpack.c.b16 %v2641, %v2637
    %v3306 = vpack.c.b16 %v2642, %v2638
    %v3307 = vpack.c.b16 %v2647, %v2643
    %v3308 = vpack.c.b16 %v2648, %v2644
    %v3309 = vpack.c.b16 %v2649, %v2645
    %v3310 = vpack.c.b16 %v2650, %v2646
    %v3311 = vpack.c.b16 %v2655, %v2651
    %v3312 = vpack.c.b16 %v2656, %v2652
    %v3313 = vpack.c.b16 %v2657, %v2653
    %v3314 = vpack.c.b16 %v2658, %v2654
    %v3315 = vpack.c.b16 %v2663, %v2659
    %v3316 = vpack.c.b16 %v2664, %v2660
    %v3317 = vpack.c.b16 %v2665, %v2661
    %v3318 = vpack.c.b16 %v2666, %v2662
    %v3319 = vpack.c.b16 %v2671, %v2667
    %v3320 = vpack.c.b16 %v2672, %v2668
    %v3321 = vpack.c.b16 %v2673, %v2669
    %v3322 = vpack.c.b16 %v2674, %v2670
    %v3323 = vpack.c.b16 %v2679, %v2675
    %v3324 = vpack.c.b16 %v2680, %v2676
    %v3325 = vpack.c.b16 %v2681, %v2677
    %v3326 = vpack.c.b16 %v2682, %v2678
    %v3327 = vpack.c.b16 %v2687, %v2683
    %v3328 = vpack.c.b16 %v2688, %v2684
    %v3329 = vpack.c.b16 %v2689, %v2685
    %v3330 = vpack.c.b16 %v2690, %v2686
    %v3331 = vpack.c.b16 %v2695, %v2691
    %v3332 = vpack.c.b16 %v2696, %v2692
    %v3333 = vpack.c.b16 %v2697, %v2693
    %v3334 = vpack.c.b16 %v2698, %v2694
    %v3335 = vpack.c.b16 %v2703, %v2699
    %v3336 = vpack.c.b16 %v2704, %v2700
    %v3337 = vpack.c.b16 %v2705, %v2701
    %v3338 = vpack.c.b16 %v2706, %v2702
    %v3339 = vpack.c.b16 %v2711, %v2707
    %v3340 = vpack.c.b16 %v2712, %v2708
    %v3341 = vpack.c.b16 %v2713, %v2709
    %v3342 = vpack.c.b16 %v2714, %v2710
    %v3343 = vpack.c.b16 %v2719, %v2715
    %v3344 = vpack.c.b16 %v2720, %v2716
    %v3345 = vpack.c.b16 %v2721, %v2717
    %v3346 = vpack.c.b16 %v2722, %v2718
    %v3347 = vpack.c.b16 %v2727, %v2723
    %v3348 = vpack.c.b16 %v2728, %v2724
    %v3349 = vpack.c.b16 %v2729, %v2725
    %v3350 = vpack.c.b16 %v2730, %v2726
    %v3351 = vpack.c.b16 %v2735, %v2731
    %v3352 = vpack.c.b16 %v2736, %v2732
    %v3353 = vpack.c.b16 %v2737, %v2733
    %v3354 = vpack.c.b16 %v2738, %v2734
    %v3355 = vpack.c.b16 %v2743, %v2739
    %v3356 = vpack.c.b16 %v2744, %v2740
    %v3357 = vpack.c.b16 %v2745, %v2741
    %v3358 = vpack.c.b16 %v2746, %v2742
    %v3359 = vpack.c.b16 %v2751, %v2747
    %v3360 = vpack.c.b16 %v2752, %v2748
    %v3361 = vpack.c.b16 %v2753, %v2749
    %v3362 = vpack.c.b16 %v2754, %v2750
    %v3363 = vpack.c.b16 %v2759, %v2755
    %v3364 = vpack.c.b16 %v2760, %v2756
    %v3365 = vpack.c.b16 %v2761, %v2757
    %v3366 = vpack.c.b16 %v2762, %v2758
    %v3367 = vpack.c.b16 %v2767, %v2763
    %v3368 = vpack.c.b16 %v2768, %v2764
    %v3369 = vpack.c.b16 %v2769, %v2765
    %v3370 = vpack.c.b16 %v2770, %v2766
    %v3371 = vpack.c.b16 %v2775, %v2771
    %v3372 = vpack.c.b16 %v2776, %v2772
    %v3373 = vpack.c.b16 %v2777, %v2773
    %v3374 = vpack.c.b16 %v2778, %v2774
    %v3375 = vpack.c.b16 %v2783, %v2779
    %v3376 = vpack.c.b16 %v2784, %v2780
    %v3377 = vpack.c.b16 %v2785, %v2781
    %v3378 = vpack.c.b16 %v2786, %v2782
    %v3379 = vpack.c.b16 %v2791, %v2787
    %v3380 = vpack.c.b16 %v2792, %v2788
    %v3381 = vpack.c.b16 %v2793, %v2789
    %v3382 = vpack.c.b16 %v2794, %v2790
    %v3383 = vpack.c.b16 %v2799, %v2795
    %v3384 = vpack.c.b16 %v2800, %v2796
    %v3385 = vpack.c.b16 %v2801, %v2797
    %v3386 = vpack.c.b16 %v2802, %v2798
    %v3387 = vpack.c.b16 %v2807, %v2803
    %v3388 = vpack.c.b16 %v2808, %v2804
    %v3389 = vpack.c.b16 %v2809, %v2805
    %v3390 = vpack.c.b16 %v2810, %v2806
    %v3391 = vpack.c.b16 %v2815, %v2811
    %v3392 = vpack.c.b16 %v2816, %v2812
    %v3393 = vpack.c.b16 %v2817, %v2813
    %v3394 = vpack.c.b16 %v2818, %v2814
    %v3395 = vpack.c.b16 %v2823, %v2819
    %v3396 = vpack.c.b16 %v2824, %v2820
    %v3397 = vpack.c.b16 %v2825, %v2821
    %v3398 = vpack.c.b16 %v2826, %v2822
    %v3399 = vpack.c.b16 %v2831, %v2827
    %v3400 = vpack.c.b16 %v2832, %v2828
    %v3401 = vpack.c.b16 %v2833, %v2829
    %v3402 = vpack.c.b16 %v2834, %v2830
    %v3403 = vpack.c.b16 %v2839, %v2835
    %v3404 = vpack.c.b16 %v2840, %v2836
    %v3405 = vpack.c.b16 %v2841, %v2837
    %v3406 = vpack.c.b16 %v2842, %v2838
    %v3407 = vpack.c.b16 %v2847, %v2843
    %v3408 = vpack.c.b16 %v2848, %v2844
    %v3409 = vpack.c.b16 %v2849, %v2845
    %v3410 = vpack.c.b16 %v2850, %v2846
    %v3411 = vpack.c.b16 %v2855, %v2851
    %v3412 = vpack.c.b16 %v2856, %v2852
    %v3413 = vpack.c.b16 %v2857, %v2853
    %v3414 = vpack.c.b16 %v2858, %v2854
    %v3415 = vpack.c.b16 %v2863, %v2859
    %v3416 = vpack.c.b16 %v2864, %v2860
    %v3417 = vpack.c.b16 %v2865, %v2861
    %v3418 = vpack.c.b16 %v2866, %v2862
    %v3419 = vpack.c.b16 %v2871, %v2867
    %v3420 = vpack.c.b16 %v2872, %v2868
    %v3421 = vpack.c.b16 %v2873, %v2869
    %v3422 = vpack.c.b16 %v2874, %v2870
    %v3423 = vpack.c.b16 %v2879, %v2875
    %v3424 = vpack.c.b16 %v2880, %v2876
    %v3425 = vpack.c.b16 %v2881, %v2877
    %v3426 = vpack.c.b16 %v2882, %v2878
    %v3427 = vpack.c.b16 %v2887, %v2883
    %v3428 = vpack.c.b16 %v2888, %v2884
    %v3429 = vpack.c.b16 %v2889, %v2885
    %v3430 = vpack.c.b16 %v2890, %v2886
    %v3431 = vpack.c.b16 %v2895, %v2891
    %v3432 = vpack.c.b16 %v2896, %v2892
    %v3433 = vpack.c.b16 %v2897, %v2893
    %v3434 = vpack.c.b16 %v2898, %v2894
    %v3435 = vpack.c.b16 %v2903, %v2899
    %v3436 = vpack.c.b16 %v2904, %v2900
    %v3437 = vpack.c.b16 %v2905, %v2901
    %v3438 = vpack.c.b16 %v2906, %v2902
    %v3439 = vpack.c.b16 %v2911, %v2907
    %v3440 = vpack.c.b16 %v2912, %v2908
    %v3441 = vpack.c.b16 %v2913, %v2909
    %v3442 = vpack.c.b16 %v2914, %v2910
    %v3443 = vpack.c.b16 %v2919, %v2915
    %v3444 = vpack.c.b16 %v2920, %v2916
    %v3445 = vpack.c.b16 %v2921, %v2917
    %v3446 = vpack.c.b16 %v2922, %v2918
    %v3447 = vpack.c.b16 %v2927, %v2923
    %v3448 = vpack.c.b16 %v2928, %v2924
    %v3449 = vpack.c.b16 %v2929, %v2925
    %v3450 = vpack.c.b16 %v2930, %v2926
    %v3451 = vpack.c.b16 %v2935, %v2931
    %v3452 = vpack.c.b16 %v2936, %v2932
    %v3453 = vpack.c.b16 %v2937, %v2933
    %v3454 = vpack.c.b16 %v2938, %v2934
    %v3455 = vpack.c.b16 %v2943, %v2939
    %v3456 = vpack.c.b16 %v2944, %v2940
    %v3457 = vpack.c.b16 %v2945, %v2941
    %v3458 = vpack.c.b16 %v2946, %v2942
    %3971 = vmatprep.subr.bf16.mxu0 %v2976
    %3972 = vmatpush1.bf16.msra.mxu0 %v2975
    %3973 = vmatprep.subr.bf16.mxu0 %v2972
    %3974 = vmatpush1.bf16.msra.mxu0 %v2971
    %3975 = vmatprep.subr.bf16.mxu0 %v2968
    %3976 = vmatpush1.bf16.msra.mxu0 %v2967
    %3977 = vmatprep.subr.bf16.mxu0 %v2964
    %3978 = vmatpush1.bf16.msra.mxu0 %v2963
    %3979 = vmatprep.subr.bf16.mxu0 %v2960
    %3980 = vmatpush1.bf16.msra.mxu0 %v2959
    %3981 = vmatprep.subr.bf16.mxu0 %v2956
    %3982 = vmatpush1.bf16.msra.mxu0 %v2955
    %3983 = vmatprep.subr.bf16.mxu0 %v2952
    %3984 = vmatpush1.bf16.msra.mxu0 %v2951
    %3985 = vmatprep.subr.bf16.mxu0 %v2948
    %3986 = vmatpush1.bf16.msra.mxu0 %v2947
    %3987 = vmatprep.subr.bf16.mxu0 %v3008
    %3988 = vmatpush2.bf16.msra.mxu0 %v3007
    %3989 = vmatprep.subr.bf16.mxu0 %v3004
    %3990 = vmatpush2.bf16.msra.mxu0 %v3003
    %3991 = vmatprep.subr.bf16.mxu0 %v3000
    %3992 = vmatpush2.bf16.msra.mxu0 %v2999
    %3993 = vmatprep.subr.bf16.mxu0 %v2996
    %3994 = vmatpush2.bf16.msra.mxu0 %v2995
    %3995 = vmatprep.subr.bf16.mxu0 %v2992
    %3996 = vmatpush2.bf16.msra.mxu0 %v2991
    %3997 = vmatprep.subr.bf16.mxu0 %v2988
    %3998 = vmatpush2.bf16.msra.mxu0 %v2987
    %3999 = vmatprep.subr.bf16.mxu0 %v2984
    %4000 = vmatpush2.bf16.msra.mxu0 %v2983
    %4001 = vmatprep.subr.bf16.mxu0 %v2980
    %4002 = vmatpush2.bf16.msra.mxu0 %v2979
    %4003 = vmatprep.mubr.bf16.mxu0 %v1156
    %4004 = vmatmul.mubr.bf16.gmra.mxu0 %v1155
    %v4005 = vpop.f32.mrf.mxu0
    %v4006 = vadd.f32 %v754, %v4005
    %v4007 = vpop.f32.mrf.mxu0
    %v4008 = vadd.f32 %v758, %v4007
    %v4009 = vpop.f32.mrf.mxu0
    %v4010 = vadd.f32 %v754, %v4009
    %v4011 = vpop.f32.mrf.mxu0
    %v4012 = vadd.f32 %v758, %v4011
    %4013 = vmatprep.mubr.bf16.mxu0 %v1172
    %4014 = vmatmul.mubr.bf16.gmra.mxu0 %v1171
    %v4015 = vpop.f32.mrf.mxu0
    %v4016 = vadd.f32 %v754, %v4015
    %v4017 = vpop.f32.mrf.mxu0
    %v4018 = vadd.f32 %v758, %v4017
    %v4019 = vpop.f32.mrf.mxu0
    %v4020 = vadd.f32 %v754, %v4019
    %v4021 = vpop.f32.mrf.mxu0
    %v4022 = vadd.f32 %v758, %v4021
    %4023 = vmatprep.mubr.bf16.mxu0 %v1188
    %4024 = vmatmul.mubr.bf16.gmra.mxu0 %v1187
    %v4025 = vpop.f32.mrf.mxu0
    %v4026 = vadd.f32 %v754, %v4025
    %v4027 = vpop.f32.mrf.mxu0
    %v4028 = vadd.f32 %v758, %v4027
    %v4029 = vpop.f32.mrf.mxu0
    %v4030 = vadd.f32 %v754, %v4029
    %v4031 = vpop.f32.mrf.mxu0
    %v4032 = vadd.f32 %v758, %v4031
    %4033 = vmatprep.mubr.bf16.mxu0 %v1204
    %4034 = vmatmul.mubr.bf16.gmra.mxu0 %v1203
    %v4035 = vpop.f32.mrf.mxu0
    %v4036 = vadd.f32 %v754, %v4035
    %v4037 = vpop.f32.mrf.mxu0
    %v4038 = vadd.f32 %v758, %v4037
    %v4039 = vpop.f32.mrf.mxu0
    %v4040 = vadd.f32 %v754, %v4039
    %v4041 = vpop.f32.mrf.mxu0
    %v4042 = vadd.f32 %v758, %v4041
    %4043 = vmatprep.mubr.bf16.mxu0 %v1220
    %4044 = vmatmul.mubr.bf16.gmra.mxu0 %v1219
    %v4045 = vpop.f32.mrf.mxu0
    %v4046 = vadd.f32 %v754, %v4045
    %v4047 = vpop.f32.mrf.mxu0
    %v4048 = vadd.f32 %v758, %v4047
    %v4049 = vpop.f32.mrf.mxu0
    %v4050 = vadd.f32 %v754, %v4049
    %v4051 = vpop.f32.mrf.mxu0
    %v4052 = vadd.f32 %v758, %v4051
    %4053 = vmatprep.mubr.bf16.mxu0 %v1236
    %4054 = vmatmul.mubr.bf16.gmra.mxu0 %v1235
    %v4055 = vpop.f32.mrf.mxu0
    %v4056 = vadd.f32 %v754, %v4055
    %v4057 = vpop.f32.mrf.mxu0
    %v4058 = vadd.f32 %v758, %v4057
    %v4059 = vpop.f32.mrf.mxu0
    %v4060 = vadd.f32 %v754, %v4059
    %v4061 = vpop.f32.mrf.mxu0
    %v4062 = vadd.f32 %v758, %v4061
    %4063 = vmatprep.mubr.bf16.mxu0 %v1252
    %4064 = vmatmul.mubr.bf16.gmra.mxu0 %v1251
    %v4065 = vpop.f32.mrf.mxu0
    %v4066 = vadd.f32 %v754, %v4065
    %v4067 = vpop.f32.mrf.mxu0
    %v4068 = vadd.f32 %v758, %v4067
    %v4069 = vpop.f32.mrf.mxu0
    %v4070 = vadd.f32 %v754, %v4069
    %v4071 = vpop.f32.mrf.mxu0
    %v4072 = vadd.f32 %v758, %v4071
    %4073 = vmatprep.mubr.bf16.mxu0 %v1268
    %4074 = vmatmul.mubr.bf16.gmra.mxu0 %v1267
    %v4075 = vpop.f32.mrf.mxu0
    %v4076 = vadd.f32 %v754, %v4075
    %v4077 = vpop.f32.mrf.mxu0
    %v4078 = vadd.f32 %v758, %v4077
    %v4079 = vpop.f32.mrf.mxu0
    %v4080 = vadd.f32 %v754, %v4079
    %v4081 = vpop.f32.mrf.mxu0
    %v4082 = vadd.f32 %v758, %v4081
    %4083 = vdwg.mxu0
    %4084 = vmatprep.subr.bf16.mxu0 %v3040
    %4085 = vmatpush1.bf16.msra.mxu0 %v3039
    %4086 = vmatprep.subr.bf16.mxu0 %v3036
    %4087 = vmatpush1.bf16.msra.mxu0 %v3035
    %4088 = vmatprep.subr.bf16.mxu0 %v3032
    %4089 = vmatpush1.bf16.msra.mxu0 %v3031
    %4090 = vmatprep.subr.bf16.mxu0 %v3028
    %4091 = vmatpush1.bf16.msra.mxu0 %v3027
    %4092 = vmatprep.subr.bf16.mxu0 %v3024
    %4093 = vmatpush1.bf16.msra.mxu0 %v3023
    %4094 = vmatprep.subr.bf16.mxu0 %v3020
    %4095 = vmatpush1.bf16.msra.mxu0 %v3019
    %4096 = vmatprep.subr.bf16.mxu0 %v3016
    %4097 = vmatpush1.bf16.msra.mxu0 %v3015
    %4098 = vmatprep.subr.bf16.mxu0 %v3012
    %4099 = vmatpush1.bf16.msra.mxu0 %v3011
    %4100 = vmatprep.subr.bf16.mxu0 %v3072
    %4101 = vmatpush2.bf16.msra.mxu0 %v3071
    %4102 = vmatprep.subr.bf16.mxu0 %v3068
    %4103 = vmatpush2.bf16.msra.mxu0 %v3067
    %4104 = vmatprep.subr.bf16.mxu0 %v3064
    %4105 = vmatpush2.bf16.msra.mxu0 %v3063
    %4106 = vmatprep.subr.bf16.mxu0 %v3060
    %4107 = vmatpush2.bf16.msra.mxu0 %v3059
    %4108 = vmatprep.subr.bf16.mxu0 %v3056
    %4109 = vmatpush2.bf16.msra.mxu0 %v3055
    %4110 = vmatprep.subr.bf16.mxu0 %v3052
    %4111 = vmatpush2.bf16.msra.mxu0 %v3051
    %4112 = vmatprep.subr.bf16.mxu0 %v3048
    %4113 = vmatpush2.bf16.msra.mxu0 %v3047
    %4114 = vmatprep.subr.bf16.mxu0 %v3044
    %4115 = vmatpush2.bf16.msra.mxu0 %v3043
    %4116 = vmatprep.mubr.bf16.mxu0 %v1158
    %4117 = vmatmul.mubr.bf16.gmra.mxu0 %v1157
    %v4118 = vpop.f32.mrf.mxu0
    %v4119 = vadd.f32 %v4006, %v4118
    %v4120 = vpop.f32.mrf.mxu0
    %v4121 = vadd.f32 %v4008, %v4120
    %v4122 = vpop.f32.mrf.mxu0
    %v4123 = vadd.f32 %v4010, %v4122
    %v4124 = vpop.f32.mrf.mxu0
    %v4125 = vadd.f32 %v4012, %v4124
    %4126 = vmatprep.mubr.bf16.mxu0 %v1174
    %4127 = vmatmul.mubr.bf16.gmra.mxu0 %v1173
    %v4128 = vpop.f32.mrf.mxu0
    %v4129 = vadd.f32 %v4016, %v4128
    %v4130 = vpop.f32.mrf.mxu0
    %v4131 = vadd.f32 %v4018, %v4130
    %v4132 = vpop.f32.mrf.mxu0
    %v4133 = vadd.f32 %v4020, %v4132
    %v4134 = vpop.f32.mrf.mxu0
    %v4135 = vadd.f32 %v4022, %v4134
    %4136 = vmatprep.mubr.bf16.mxu0 %v1190
    %4137 = vmatmul.mubr.bf16.gmra.mxu0 %v1189
    %v4138 = vpop.f32.mrf.mxu0
    %v4139 = vadd.f32 %v4026, %v4138
    %v4140 = vpop.f32.mrf.mxu0
    %v4141 = vadd.f32 %v4028, %v4140
    %v4142 = vpop.f32.mrf.mxu0
    %v4143 = vadd.f32 %v4030, %v4142
    %v4144 = vpop.f32.mrf.mxu0
    %v4145 = vadd.f32 %v4032, %v4144
    %4146 = vmatprep.mubr.bf16.mxu0 %v1206
    %4147 = vmatmul.mubr.bf16.gmra.mxu0 %v1205
    %v4148 = vpop.f32.mrf.mxu0
    %v4149 = vadd.f32 %v4036, %v4148
    %v4150 = vpop.f32.mrf.mxu0
    %v4151 = vadd.f32 %v4038, %v4150
    %v4152 = vpop.f32.mrf.mxu0
    %v4153 = vadd.f32 %v4040, %v4152
    %v4154 = vpop.f32.mrf.mxu0
    %v4155 = vadd.f32 %v4042, %v4154
    %4156 = vmatprep.mubr.bf16.mxu0 %v1222
    %4157 = vmatmul.mubr.bf16.gmra.mxu0 %v1221
    %v4158 = vpop.f32.mrf.mxu0
    %v4159 = vadd.f32 %v4046, %v4158
    %v4160 = vpop.f32.mrf.mxu0
    %v4161 = vadd.f32 %v4048, %v4160
    %v4162 = vpop.f32.mrf.mxu0
    %v4163 = vadd.f32 %v4050, %v4162
    %v4164 = vpop.f32.mrf.mxu0
    %v4165 = vadd.f32 %v4052, %v4164
    %4166 = vmatprep.mubr.bf16.mxu0 %v1238
    %4167 = vmatmul.mubr.bf16.gmra.mxu0 %v1237
    %v4168 = vpop.f32.mrf.mxu0
    %v4169 = vadd.f32 %v4056, %v4168
    %v4170 = vpop.f32.mrf.mxu0
    %v4171 = vadd.f32 %v4058, %v4170
    %v4172 = vpop.f32.mrf.mxu0
    %v4173 = vadd.f32 %v4060, %v4172
    %v4174 = vpop.f32.mrf.mxu0
    %v4175 = vadd.f32 %v4062, %v4174
    %4176 = vmatprep.mubr.bf16.mxu0 %v1254
    %4177 = vmatmul.mubr.bf16.gmra.mxu0 %v1253
    %v4178 = vpop.f32.mrf.mxu0
    %v4179 = vadd.f32 %v4066, %v4178
    %v4180 = vpop.f32.mrf.mxu0
    %v4181 = vadd.f32 %v4068, %v4180
    %v4182 = vpop.f32.mrf.mxu0
    %v4183 = vadd.f32 %v4070, %v4182
    %v4184 = vpop.f32.mrf.mxu0
    %v4185 = vadd.f32 %v4072, %v4184
    %4186 = vmatprep.mubr.bf16.mxu0 %v1270
    %4187 = vmatmul.mubr.bf16.gmra.mxu0 %v1269
    %v4188 = vpop.f32.mrf.mxu0
    %v4189 = vadd.f32 %v4076, %v4188
    %v4190 = vpop.f32.mrf.mxu0
    %v4191 = vadd.f32 %v4078, %v4190
    %v4192 = vpop.f32.mrf.mxu0
    %v4193 = vadd.f32 %v4080, %v4192
    %v4194 = vpop.f32.mrf.mxu0
    %v4195 = vadd.f32 %v4082, %v4194
    %4196 = vdwg.mxu0
    %4197 = vmatprep.subr.bf16.mxu0 %v3104
    %4198 = vmatpush1.bf16.msra.mxu0 %v3103
    %4199 = vmatprep.subr.bf16.mxu0 %v3100
    %4200 = vmatpush1.bf16.msra.mxu0 %v3099
    %4201 = vmatprep.subr.bf16.mxu0 %v3096
    %4202 = vmatpush1.bf16.msra.mxu0 %v3095
    %4203 = vmatprep.subr.bf16.mxu0 %v3092
    %4204 = vmatpush1.bf16.msra.mxu0 %v3091
    %4205 = vmatprep.subr.bf16.mxu0 %v3088
    %4206 = vmatpush1.bf16.msra.mxu0 %v3087
    %4207 = vmatprep.subr.bf16.mxu0 %v3084
    %4208 = vmatpush1.bf16.msra.mxu0 %v3083
    %4209 = vmatprep.subr.bf16.mxu0 %v3080
    %4210 = vmatpush1.bf16.msra.mxu0 %v3079
    %4211 = vmatprep.subr.bf16.mxu0 %v3076
    %4212 = vmatpush1.bf16.msra.mxu0 %v3075
    %4213 = vmatprep.subr.bf16.mxu0 %v3136
    %4214 = vmatpush2.bf16.msra.mxu0 %v3135
    %4215 = vmatprep.subr.bf16.mxu0 %v3132
    %4216 = vmatpush2.bf16.msra.mxu0 %v3131
    %4217 = vmatprep.subr.bf16.mxu0 %v3128
    %4218 = vmatpush2.bf16.msra.mxu0 %v3127
    %4219 = vmatprep.subr.bf16.mxu0 %v3124
    %4220 = vmatpush2.bf16.msra.mxu0 %v3123
    %4221 = vmatprep.subr.bf16.mxu0 %v3120
    %4222 = vmatpush2.bf16.msra.mxu0 %v3119
    %4223 = vmatprep.subr.bf16.mxu0 %v3116
    %4224 = vmatpush2.bf16.msra.mxu0 %v3115
    %4225 = vmatprep.subr.bf16.mxu0 %v3112
    %4226 = vmatpush2.bf16.msra.mxu0 %v3111
    %4227 = vmatprep.subr.bf16.mxu0 %v3108
    %4228 = vmatpush2.bf16.msra.mxu0 %v3107
    %4229 = vmatprep.mubr.bf16.mxu0 %v1160
    %4230 = vmatmul.mubr.bf16.gmra.mxu0 %v1159
    %v4231 = vpop.f32.mrf.mxu0
    %v4232 = vadd.f32 %v4119, %v4231
    %v4233 = vpop.f32.mrf.mxu0
    %v4234 = vadd.f32 %v4121, %v4233
    %v4235 = vpop.f32.mrf.mxu0
    %v4236 = vadd.f32 %v4123, %v4235
    %v4237 = vpop.f32.mrf.mxu0
    %v4238 = vadd.f32 %v4125, %v4237
    %4239 = vmatprep.mubr.bf16.mxu0 %v1176
    %4240 = vmatmul.mubr.bf16.gmra.mxu0 %v1175
    %v4241 = vpop.f32.mrf.mxu0
    %v4242 = vadd.f32 %v4129, %v4241
    %v4243 = vpop.f32.mrf.mxu0
    %v4244 = vadd.f32 %v4131, %v4243
    %v4245 = vpop.f32.mrf.mxu0
    %v4246 = vadd.f32 %v4133, %v4245
    %v4247 = vpop.f32.mrf.mxu0
    %v4248 = vadd.f32 %v4135, %v4247
    %4249 = vmatprep.mubr.bf16.mxu0 %v1192
    %4250 = vmatmul.mubr.bf16.gmra.mxu0 %v1191
    %v4251 = vpop.f32.mrf.mxu0
    %v4252 = vadd.f32 %v4139, %v4251
    %v4253 = vpop.f32.mrf.mxu0
    %v4254 = vadd.f32 %v4141, %v4253
    %v4255 = vpop.f32.mrf.mxu0
    %v4256 = vadd.f32 %v4143, %v4255
    %v4257 = vpop.f32.mrf.mxu0
    %v4258 = vadd.f32 %v4145, %v4257
    %4259 = vmatprep.mubr.bf16.mxu0 %v1208
    %4260 = vmatmul.mubr.bf16.gmra.mxu0 %v1207
    %v4261 = vpop.f32.mrf.mxu0
    %v4262 = vadd.f32 %v4149, %v4261
    %v4263 = vpop.f32.mrf.mxu0
    %v4264 = vadd.f32 %v4151, %v4263
    %v4265 = vpop.f32.mrf.mxu0
    %v4266 = vadd.f32 %v4153, %v4265
    %v4267 = vpop.f32.mrf.mxu0
    %v4268 = vadd.f32 %v4155, %v4267
    %4269 = vmatprep.mubr.bf16.mxu0 %v1224
    %4270 = vmatmul.mubr.bf16.gmra.mxu0 %v1223
    %v4271 = vpop.f32.mrf.mxu0
    %v4272 = vadd.f32 %v4159, %v4271
    %v4273 = vpop.f32.mrf.mxu0
    %v4274 = vadd.f32 %v4161, %v4273
    %v4275 = vpop.f32.mrf.mxu0
    %v4276 = vadd.f32 %v4163, %v4275
    %v4277 = vpop.f32.mrf.mxu0
    %v4278 = vadd.f32 %v4165, %v4277
    %4279 = vmatprep.mubr.bf16.mxu0 %v1240
    %4280 = vmatmul.mubr.bf16.gmra.mxu0 %v1239
    %v4281 = vpop.f32.mrf.mxu0
    %v4282 = vadd.f32 %v4169, %v4281
    %v4283 = vpop.f32.mrf.mxu0
    %v4284 = vadd.f32 %v4171, %v4283
    %v4285 = vpop.f32.mrf.mxu0
    %v4286 = vadd.f32 %v4173, %v4285
    %v4287 = vpop.f32.mrf.mxu0
    %v4288 = vadd.f32 %v4175, %v4287
    %4289 = vmatprep.mubr.bf16.mxu0 %v1256
    %4290 = vmatmul.mubr.bf16.gmra.mxu0 %v1255
    %v4291 = vpop.f32.mrf.mxu0
    %v4292 = vadd.f32 %v4179, %v4291
    %v4293 = vpop.f32.mrf.mxu0
    %v4294 = vadd.f32 %v4181, %v4293
    %v4295 = vpop.f32.mrf.mxu0
    %v4296 = vadd.f32 %v4183, %v4295
    %v4297 = vpop.f32.mrf.mxu0
    %v4298 = vadd.f32 %v4185, %v4297
    %4299 = vmatprep.mubr.bf16.mxu0 %v1272
    %4300 = vmatmul.mubr.bf16.gmra.mxu0 %v1271
    %v4301 = vpop.f32.mrf.mxu0
    %v4302 = vadd.f32 %v4189, %v4301
    %v4303 = vpop.f32.mrf.mxu0
    %v4304 = vadd.f32 %v4191, %v4303
    %v4305 = vpop.f32.mrf.mxu0
    %v4306 = vadd.f32 %v4193, %v4305
    %v4307 = vpop.f32.mrf.mxu0
    %v4308 = vadd.f32 %v4195, %v4307
    %4309 = vdwg.mxu0
    %4310 = vmatprep.subr.bf16.mxu0 %v3168
    %4311 = vmatpush1.bf16.msra.mxu0 %v3167
    %4312 = vmatprep.subr.bf16.mxu0 %v3164
    %4313 = vmatpush1.bf16.msra.mxu0 %v3163
    %4314 = vmatprep.subr.bf16.mxu0 %v3160
    %4315 = vmatpush1.bf16.msra.mxu0 %v3159
    %4316 = vmatprep.subr.bf16.mxu0 %v3156
    %4317 = vmatpush1.bf16.msra.mxu0 %v3155
    %4318 = vmatprep.subr.bf16.mxu0 %v3152
    %4319 = vmatpush1.bf16.msra.mxu0 %v3151
    %4320 = vmatprep.subr.bf16.mxu0 %v3148
    %4321 = vmatpush1.bf16.msra.mxu0 %v3147
    %4322 = vmatprep.subr.bf16.mxu0 %v3144
    %4323 = vmatpush1.bf16.msra.mxu0 %v3143
    %4324 = vmatprep.subr.bf16.mxu0 %v3140
    %4325 = vmatpush1.bf16.msra.mxu0 %v3139
    %4326 = vmatprep.subr.bf16.mxu0 %v3200
    %4327 = vmatpush2.bf16.msra.mxu0 %v3199
    %4328 = vmatprep.subr.bf16.mxu0 %v3196
    %4329 = vmatpush2.bf16.msra.mxu0 %v3195
    %4330 = vmatprep.subr.bf16.mxu0 %v3192
    %4331 = vmatpush2.bf16.msra.mxu0 %v3191
    %4332 = vmatprep.subr.bf16.mxu0 %v3188
    %4333 = vmatpush2.bf16.msra.mxu0 %v3187
    %4334 = vmatprep.subr.bf16.mxu0 %v3184
    %4335 = vmatpush2.bf16.msra.mxu0 %v3183
    %4336 = vmatprep.subr.bf16.mxu0 %v3180
    %4337 = vmatpush2.bf16.msra.mxu0 %v3179
    %4338 = vmatprep.subr.bf16.mxu0 %v3176
    %4339 = vmatpush2.bf16.msra.mxu0 %v3175
    %4340 = vmatprep.subr.bf16.mxu0 %v3172
    %4341 = vmatpush2.bf16.msra.mxu0 %v3171
    %4342 = vmatprep.mubr.bf16.mxu0 %v1162
    %4343 = vmatmul.mubr.bf16.gmra.mxu0 %v1161
    %v4344 = vpop.f32.mrf.mxu0
    %v4345 = vadd.f32 %v4232, %v4344
    %v4346 = vpop.f32.mrf.mxu0
    %v4347 = vadd.f32 %v4234, %v4346
    %v4348 = vpop.f32.mrf.mxu0
    %v4349 = vadd.f32 %v4236, %v4348
    %v4350 = vpop.f32.mrf.mxu0
    %v4351 = vadd.f32 %v4238, %v4350
    %4352 = vmatprep.mubr.bf16.mxu0 %v1178
    %4353 = vmatmul.mubr.bf16.gmra.mxu0 %v1177
    %v4354 = vpop.f32.mrf.mxu0
    %v4355 = vadd.f32 %v4242, %v4354
    %v4356 = vpop.f32.mrf.mxu0
    %v4357 = vadd.f32 %v4244, %v4356
    %v4358 = vpop.f32.mrf.mxu0
    %v4359 = vadd.f32 %v4246, %v4358
    %v4360 = vpop.f32.mrf.mxu0
    %v4361 = vadd.f32 %v4248, %v4360
    %4362 = vmatprep.mubr.bf16.mxu0 %v1194
    %4363 = vmatmul.mubr.bf16.gmra.mxu0 %v1193
    %v4364 = vpop.f32.mrf.mxu0
    %v4365 = vadd.f32 %v4252, %v4364
    %v4366 = vpop.f32.mrf.mxu0
    %v4367 = vadd.f32 %v4254, %v4366
    %v4368 = vpop.f32.mrf.mxu0
    %v4369 = vadd.f32 %v4256, %v4368
    %v4370 = vpop.f32.mrf.mxu0
    %v4371 = vadd.f32 %v4258, %v4370
    %4372 = vmatprep.mubr.bf16.mxu0 %v1210
    %4373 = vmatmul.mubr.bf16.gmra.mxu0 %v1209
    %v4374 = vpop.f32.mrf.mxu0
    %v4375 = vadd.f32 %v4262, %v4374
    %v4376 = vpop.f32.mrf.mxu0
    %v4377 = vadd.f32 %v4264, %v4376
    %v4378 = vpop.f32.mrf.mxu0
    %v4379 = vadd.f32 %v4266, %v4378
    %v4380 = vpop.f32.mrf.mxu0
    %v4381 = vadd.f32 %v4268, %v4380
    %4382 = vmatprep.mubr.bf16.mxu0 %v1226
    %4383 = vmatmul.mubr.bf16.gmra.mxu0 %v1225
    %v4384 = vpop.f32.mrf.mxu0
    %v4385 = vadd.f32 %v4272, %v4384
    %v4386 = vpop.f32.mrf.mxu0
    %v4387 = vadd.f32 %v4274, %v4386
    %v4388 = vpop.f32.mrf.mxu0
    %v4389 = vadd.f32 %v4276, %v4388
    %v4390 = vpop.f32.mrf.mxu0
    %v4391 = vadd.f32 %v4278, %v4390
    %4392 = vmatprep.mubr.bf16.mxu0 %v1242
    %4393 = vmatmul.mubr.bf16.gmra.mxu0 %v1241
    %v4394 = vpop.f32.mrf.mxu0
    %v4395 = vadd.f32 %v4282, %v4394
    %v4396 = vpop.f32.mrf.mxu0
    %v4397 = vadd.f32 %v4284, %v4396
    %v4398 = vpop.f32.mrf.mxu0
    %v4399 = vadd.f32 %v4286, %v4398
    %v4400 = vpop.f32.mrf.mxu0
    %v4401 = vadd.f32 %v4288, %v4400
    %4402 = vmatprep.mubr.bf16.mxu0 %v1258
    %4403 = vmatmul.mubr.bf16.gmra.mxu0 %v1257
    %v4404 = vpop.f32.mrf.mxu0
    %v4405 = vadd.f32 %v4292, %v4404
    %v4406 = vpop.f32.mrf.mxu0
    %v4407 = vadd.f32 %v4294, %v4406
    %v4408 = vpop.f32.mrf.mxu0
    %v4409 = vadd.f32 %v4296, %v4408
    %v4410 = vpop.f32.mrf.mxu0
    %v4411 = vadd.f32 %v4298, %v4410
    %4412 = vmatprep.mubr.bf16.mxu0 %v1274
    %4413 = vmatmul.mubr.bf16.gmra.mxu0 %v1273
    %v4414 = vpop.f32.mrf.mxu0
    %v4415 = vadd.f32 %v4302, %v4414
    %v4416 = vpop.f32.mrf.mxu0
    %v4417 = vadd.f32 %v4304, %v4416
    %v4418 = vpop.f32.mrf.mxu0
    %v4419 = vadd.f32 %v4306, %v4418
    %v4420 = vpop.f32.mrf.mxu0
    %v4421 = vadd.f32 %v4308, %v4420
    %4422 = vdwg.mxu0
    %4423 = vmatprep.subr.bf16.mxu0 %v3232
    %4424 = vmatpush1.bf16.msra.mxu0 %v3231
    %4425 = vmatprep.subr.bf16.mxu0 %v3228
    %4426 = vmatpush1.bf16.msra.mxu0 %v3227
    %4427 = vmatprep.subr.bf16.mxu0 %v3224
    %4428 = vmatpush1.bf16.msra.mxu0 %v3223
    %4429 = vmatprep.subr.bf16.mxu0 %v3220
    %4430 = vmatpush1.bf16.msra.mxu0 %v3219
    %4431 = vmatprep.subr.bf16.mxu0 %v3216
    %4432 = vmatpush1.bf16.msra.mxu0 %v3215
    %4433 = vmatprep.subr.bf16.mxu0 %v3212
    %4434 = vmatpush1.bf16.msra.mxu0 %v3211
    %4435 = vmatprep.subr.bf16.mxu0 %v3208
    %4436 = vmatpush1.bf16.msra.mxu0 %v3207
    %4437 = vmatprep.subr.bf16.mxu0 %v3204
    %4438 = vmatpush1.bf16.msra.mxu0 %v3203
    %4439 = vmatprep.subr.bf16.mxu0 %v3264
    %4440 = vmatpush2.bf16.msra.mxu0 %v3263
    %4441 = vmatprep.subr.bf16.mxu0 %v3260
    %4442 = vmatpush2.bf16.msra.mxu0 %v3259
    %4443 = vmatprep.subr.bf16.mxu0 %v3256
    %4444 = vmatpush2.bf16.msra.mxu0 %v3255
    %4445 = vmatprep.subr.bf16.mxu0 %v3252
    %4446 = vmatpush2.bf16.msra.mxu0 %v3251
    %4447 = vmatprep.subr.bf16.mxu0 %v3248
    %4448 = vmatpush2.bf16.msra.mxu0 %v3247
    %4449 = vmatprep.subr.bf16.mxu0 %v3244
    %4450 = vmatpush2.bf16.msra.mxu0 %v3243
    %4451 = vmatprep.subr.bf16.mxu0 %v3240
    %4452 = vmatpush2.bf16.msra.mxu0 %v3239
    %4453 = vmatprep.subr.bf16.mxu0 %v3236
    %4454 = vmatpush2.bf16.msra.mxu0 %v3235
    %4455 = vmatprep.mubr.bf16.mxu0 %v1164
    %4456 = vmatmul.mubr.bf16.gmra.mxu0 %v1163
    %v4457 = vpop.f32.mrf.mxu0
    %v4458 = vadd.f32 %v4345, %v4457
    %v4459 = vpop.f32.mrf.mxu0
    %v4460 = vadd.f32 %v4347, %v4459
    %v4461 = vpop.f32.mrf.mxu0
    %v4462 = vadd.f32 %v4349, %v4461
    %v4463 = vpop.f32.mrf.mxu0
    %v4464 = vadd.f32 %v4351, %v4463
    %4465 = vmatprep.mubr.bf16.mxu0 %v1180
    %4466 = vmatmul.mubr.bf16.gmra.mxu0 %v1179
    %v4467 = vpop.f32.mrf.mxu0
    %v4468 = vadd.f32 %v4355, %v4467
    %v4469 = vpop.f32.mrf.mxu0
    %v4470 = vadd.f32 %v4357, %v4469
    %v4471 = vpop.f32.mrf.mxu0
    %v4472 = vadd.f32 %v4359, %v4471
    %v4473 = vpop.f32.mrf.mxu0
    %v4474 = vadd.f32 %v4361, %v4473
    %4475 = vmatprep.mubr.bf16.mxu0 %v1196
    %4476 = vmatmul.mubr.bf16.gmra.mxu0 %v1195
    %v4477 = vpop.f32.mrf.mxu0
    %v4478 = vadd.f32 %v4365, %v4477
    %v4479 = vpop.f32.mrf.mxu0
    %v4480 = vadd.f32 %v4367, %v4479
    %v4481 = vpop.f32.mrf.mxu0
    %v4482 = vadd.f32 %v4369, %v4481
    %v4483 = vpop.f32.mrf.mxu0
    %v4484 = vadd.f32 %v4371, %v4483
    %4485 = vmatprep.mubr.bf16.mxu0 %v1212
    %4486 = vmatmul.mubr.bf16.gmra.mxu0 %v1211
    %v4487 = vpop.f32.mrf.mxu0
    %v4488 = vadd.f32 %v4375, %v4487
    %v4489 = vpop.f32.mrf.mxu0
    %v4490 = vadd.f32 %v4377, %v4489
    %v4491 = vpop.f32.mrf.mxu0
    %v4492 = vadd.f32 %v4379, %v4491
    %v4493 = vpop.f32.mrf.mxu0
    %v4494 = vadd.f32 %v4381, %v4493
    %4495 = vmatprep.mubr.bf16.mxu0 %v1228
    %4496 = vmatmul.mubr.bf16.gmra.mxu0 %v1227
    %v4497 = vpop.f32.mrf.mxu0
    %v4498 = vadd.f32 %v4385, %v4497
    %v4499 = vpop.f32.mrf.mxu0
    %v4500 = vadd.f32 %v4387, %v4499
    %v4501 = vpop.f32.mrf.mxu0
    %v4502 = vadd.f32 %v4389, %v4501
    %v4503 = vpop.f32.mrf.mxu0
    %v4504 = vadd.f32 %v4391, %v4503
    %4505 = vmatprep.mubr.bf16.mxu0 %v1244
    %4506 = vmatmul.mubr.bf16.gmra.mxu0 %v1243
    %v4507 = vpop.f32.mrf.mxu0
    %v4508 = vadd.f32 %v4395, %v4507
    %v4509 = vpop.f32.mrf.mxu0
    %v4510 = vadd.f32 %v4397, %v4509
    %v4511 = vpop.f32.mrf.mxu0
    %v4512 = vadd.f32 %v4399, %v4511
    %v4513 = vpop.f32.mrf.mxu0
    %v4514 = vadd.f32 %v4401, %v4513
    %4515 = vmatprep.mubr.bf16.mxu0 %v1260
    %4516 = vmatmul.mubr.bf16.gmra.mxu0 %v1259
    %v4517 = vpop.f32.mrf.mxu0
    %v4518 = vadd.f32 %v4405, %v4517
    %v4519 = vpop.f32.mrf.mxu0
    %v4520 = vadd.f32 %v4407, %v4519
    %v4521 = vpop.f32.mrf.mxu0
    %v4522 = vadd.f32 %v4409, %v4521
    %v4523 = vpop.f32.mrf.mxu0
    %v4524 = vadd.f32 %v4411, %v4523
    %4525 = vmatprep.mubr.bf16.mxu0 %v1276
    %4526 = vmatmul.mubr.bf16.gmra.mxu0 %v1275
    %v4527 = vpop.f32.mrf.mxu0
    %v4528 = vadd.f32 %v4415, %v4527
    %v4529 = vpop.f32.mrf.mxu0
    %v4530 = vadd.f32 %v4417, %v4529
    %v4531 = vpop.f32.mrf.mxu0
    %v4532 = vadd.f32 %v4419, %v4531
    %v4533 = vpop.f32.mrf.mxu0
    %v4534 = vadd.f32 %v4421, %v4533
    %4535 = vdwg.mxu0
    %4536 = vmatprep.subr.bf16.mxu0 %v3296
    %4537 = vmatpush1.bf16.msra.mxu0 %v3295
    %4538 = vmatprep.subr.bf16.mxu0 %v3292
    %4539 = vmatpush1.bf16.msra.mxu0 %v3291
    %4540 = vmatprep.subr.bf16.mxu0 %v3288
    %4541 = vmatpush1.bf16.msra.mxu0 %v3287
    %4542 = vmatprep.subr.bf16.mxu0 %v3284
    %4543 = vmatpush1.bf16.msra.mxu0 %v3283
    %4544 = vmatprep.subr.bf16.mxu0 %v3280
    %4545 = vmatpush1.bf16.msra.mxu0 %v3279
    %4546 = vmatprep.subr.bf16.mxu0 %v3276
    %4547 = vmatpush1.bf16.msra.mxu0 %v3275
    %4548 = vmatprep.subr.bf16.mxu0 %v3272
    %4549 = vmatpush1.bf16.msra.mxu0 %v3271
    %4550 = vmatprep.subr.bf16.mxu0 %v3268
    %4551 = vmatpush1.bf16.msra.mxu0 %v3267
    %4552 = vmatprep.subr.bf16.mxu0 %v3328
    %4553 = vmatpush2.bf16.msra.mxu0 %v3327
    %4554 = vmatprep.subr.bf16.mxu0 %v3324
    %4555 = vmatpush2.bf16.msra.mxu0 %v3323
    %4556 = vmatprep.subr.bf16.mxu0 %v3320
    %4557 = vmatpush2.bf16.msra.mxu0 %v3319
    %4558 = vmatprep.subr.bf16.mxu0 %v3316
    %4559 = vmatpush2.bf16.msra.mxu0 %v3315
    %4560 = vmatprep.subr.bf16.mxu0 %v3312
    %4561 = vmatpush2.bf16.msra.mxu0 %v3311
    %4562 = vmatprep.subr.bf16.mxu0 %v3308
    %4563 = vmatpush2.bf16.msra.mxu0 %v3307
    %4564 = vmatprep.subr.bf16.mxu0 %v3304
    %4565 = vmatpush2.bf16.msra.mxu0 %v3303
    %4566 = vmatprep.subr.bf16.mxu0 %v3300
    %4567 = vmatpush2.bf16.msra.mxu0 %v3299
    %4568 = vmatprep.mubr.bf16.mxu0 %v1166
    %4569 = vmatmul.mubr.bf16.gmra.mxu0 %v1165
    %v4570 = vpop.f32.mrf.mxu0
    %v4571 = vadd.f32 %v4458, %v4570
    %v4572 = vpop.f32.mrf.mxu0
    %v4573 = vadd.f32 %v4460, %v4572
    %v4574 = vpop.f32.mrf.mxu0
    %v4575 = vadd.f32 %v4462, %v4574
    %v4576 = vpop.f32.mrf.mxu0
    %v4577 = vadd.f32 %v4464, %v4576
    %4578 = vmatprep.mubr.bf16.mxu0 %v1182
    %4579 = vmatmul.mubr.bf16.gmra.mxu0 %v1181
    %v4580 = vpop.f32.mrf.mxu0
    %v4581 = vadd.f32 %v4468, %v4580
    %v4582 = vpop.f32.mrf.mxu0
    %v4583 = vadd.f32 %v4470, %v4582
    %v4584 = vpop.f32.mrf.mxu0
    %v4585 = vadd.f32 %v4472, %v4584
    %v4586 = vpop.f32.mrf.mxu0
    %v4587 = vadd.f32 %v4474, %v4586
    %4588 = vmatprep.mubr.bf16.mxu0 %v1198
    %4589 = vmatmul.mubr.bf16.gmra.mxu0 %v1197
    %v4590 = vpop.f32.mrf.mxu0
    %v4591 = vadd.f32 %v4478, %v4590
    %v4592 = vpop.f32.mrf.mxu0
    %v4593 = vadd.f32 %v4480, %v4592
    %v4594 = vpop.f32.mrf.mxu0
    %v4595 = vadd.f32 %v4482, %v4594
    %v4596 = vpop.f32.mrf.mxu0
    %v4597 = vadd.f32 %v4484, %v4596
    %4598 = vmatprep.mubr.bf16.mxu0 %v1214
    %4599 = vmatmul.mubr.bf16.gmra.mxu0 %v1213
    %v4600 = vpop.f32.mrf.mxu0
    %v4601 = vadd.f32 %v4488, %v4600
    %v4602 = vpop.f32.mrf.mxu0
    %v4603 = vadd.f32 %v4490, %v4602
    %v4604 = vpop.f32.mrf.mxu0
    %v4605 = vadd.f32 %v4492, %v4604
    %v4606 = vpop.f32.mrf.mxu0
    %v4607 = vadd.f32 %v4494, %v4606
    %4608 = vmatprep.mubr.bf16.mxu0 %v1230
    %4609 = vmatmul.mubr.bf16.gmra.mxu0 %v1229
    %v4610 = vpop.f32.mrf.mxu0
    %v4611 = vadd.f32 %v4498, %v4610
    %v4612 = vpop.f32.mrf.mxu0
    %v4613 = vadd.f32 %v4500, %v4612
    %v4614 = vpop.f32.mrf.mxu0
    %v4615 = vadd.f32 %v4502, %v4614
    %v4616 = vpop.f32.mrf.mxu0
    %v4617 = vadd.f32 %v4504, %v4616
    %4618 = vmatprep.mubr.bf16.mxu0 %v1246
    %4619 = vmatmul.mubr.bf16.gmra.mxu0 %v1245
    %v4620 = vpop.f32.mrf.mxu0
    %v4621 = vadd.f32 %v4508, %v4620
    %v4622 = vpop.f32.mrf.mxu0
    %v4623 = vadd.f32 %v4510, %v4622
    %v4624 = vpop.f32.mrf.mxu0
    %v4625 = vadd.f32 %v4512, %v4624
    %v4626 = vpop.f32.mrf.mxu0
    %v4627 = vadd.f32 %v4514, %v4626
    %4628 = vmatprep.mubr.bf16.mxu0 %v1262
    %4629 = vmatmul.mubr.bf16.gmra.mxu0 %v1261
    %v4630 = vpop.f32.mrf.mxu0
    %v4631 = vadd.f32 %v4518, %v4630
    %v4632 = vpop.f32.mrf.mxu0
    %v4633 = vadd.f32 %v4520, %v4632
    %v4634 = vpop.f32.mrf.mxu0
    %v4635 = vadd.f32 %v4522, %v4634
    %v4636 = vpop.f32.mrf.mxu0
    %v4637 = vadd.f32 %v4524, %v4636
    %4638 = vmatprep.mubr.bf16.mxu0 %v1278
    %4639 = vmatmul.mubr.bf16.gmra.mxu0 %v1277
    %v4640 = vpop.f32.mrf.mxu0
    %v4641 = vadd.f32 %v4528, %v4640
    %v4642 = vpop.f32.mrf.mxu0
    %v4643 = vadd.f32 %v4530, %v4642
    %v4644 = vpop.f32.mrf.mxu0
    %v4645 = vadd.f32 %v4532, %v4644
    %v4646 = vpop.f32.mrf.mxu0
    %v4647 = vadd.f32 %v4534, %v4646
    %4648 = vdwg.mxu0
    %4649 = vmatprep.subr.bf16.mxu0 %v3360
    %4650 = vmatpush1.bf16.msra.mxu0 %v3359
    %4651 = vmatprep.subr.bf16.mxu0 %v3356
    %4652 = vmatpush1.bf16.msra.mxu0 %v3355
    %4653 = vmatprep.subr.bf16.mxu0 %v3352
    %4654 = vmatpush1.bf16.msra.mxu0 %v3351
    %4655 = vmatprep.subr.bf16.mxu0 %v3348
    %4656 = vmatpush1.bf16.msra.mxu0 %v3347
    %4657 = vmatprep.subr.bf16.mxu0 %v3344
    %4658 = vmatpush1.bf16.msra.mxu0 %v3343
    %4659 = vmatprep.subr.bf16.mxu0 %v3340
    %4660 = vmatpush1.bf16.msra.mxu0 %v3339
    %4661 = vmatprep.subr.bf16.mxu0 %v3336
    %4662 = vmatpush1.bf16.msra.mxu0 %v3335
    %4663 = vmatprep.subr.bf16.mxu0 %v3332
    %4664 = vmatpush1.bf16.msra.mxu0 %v3331
    %4665 = vmatprep.subr.bf16.mxu0 %v3392
    %4666 = vmatpush2.bf16.msra.mxu0 %v3391
    %4667 = vmatprep.subr.bf16.mxu0 %v3388
    %4668 = vmatpush2.bf16.msra.mxu0 %v3387
    %4669 = vmatprep.subr.bf16.mxu0 %v3384
    %4670 = vmatpush2.bf16.msra.mxu0 %v3383
    %4671 = vmatprep.subr.bf16.mxu0 %v3380
    %4672 = vmatpush2.bf16.msra.mxu0 %v3379
    %4673 = vmatprep.subr.bf16.mxu0 %v3376
    %4674 = vmatpush2.bf16.msra.mxu0 %v3375
    %4675 = vmatprep.subr.bf16.mxu0 %v3372
    %4676 = vmatpush2.bf16.msra.mxu0 %v3371
    %4677 = vmatprep.subr.bf16.mxu0 %v3368
    %4678 = vmatpush2.bf16.msra.mxu0 %v3367
    %4679 = vmatprep.subr.bf16.mxu0 %v3364
    %4680 = vmatpush2.bf16.msra.mxu0 %v3363
    %4681 = vmatprep.mubr.bf16.mxu0 %v1168
    %4682 = vmatmul.mubr.bf16.gmra.mxu0 %v1167
    %v4683 = vpop.f32.mrf.mxu0
    %v4684 = vadd.f32 %v4571, %v4683
    %v4685 = vpop.f32.mrf.mxu0
    %v4686 = vadd.f32 %v4573, %v4685
    %v4687 = vpop.f32.mrf.mxu0
    %v4688 = vadd.f32 %v4575, %v4687
    %v4689 = vpop.f32.mrf.mxu0
    %v4690 = vadd.f32 %v4577, %v4689
    %4691 = vmatprep.mubr.bf16.mxu0 %v1184
    %4692 = vmatmul.mubr.bf16.gmra.mxu0 %v1183
    %v4693 = vpop.f32.mrf.mxu0
    %v4694 = vadd.f32 %v4581, %v4693
    %v4695 = vpop.f32.mrf.mxu0
    %v4696 = vadd.f32 %v4583, %v4695
    %v4697 = vpop.f32.mrf.mxu0
    %v4698 = vadd.f32 %v4585, %v4697
    %v4699 = vpop.f32.mrf.mxu0
    %v4700 = vadd.f32 %v4587, %v4699
    %4701 = vmatprep.mubr.bf16.mxu0 %v1200
    %4702 = vmatmul.mubr.bf16.gmra.mxu0 %v1199
    %v4703 = vpop.f32.mrf.mxu0
    %v4704 = vadd.f32 %v4591, %v4703
    %v4705 = vpop.f32.mrf.mxu0
    %v4706 = vadd.f32 %v4593, %v4705
    %v4707 = vpop.f32.mrf.mxu0
    %v4708 = vadd.f32 %v4595, %v4707
    %v4709 = vpop.f32.mrf.mxu0
    %v4710 = vadd.f32 %v4597, %v4709
    %4711 = vmatprep.mubr.bf16.mxu0 %v1216
    %4712 = vmatmul.mubr.bf16.gmra.mxu0 %v1215
    %v4713 = vpop.f32.mrf.mxu0
    %v4714 = vadd.f32 %v4601, %v4713
    %v4715 = vpop.f32.mrf.mxu0
    %v4716 = vadd.f32 %v4603, %v4715
    %v4717 = vpop.f32.mrf.mxu0
    %v4718 = vadd.f32 %v4605, %v4717
    %v4719 = vpop.f32.mrf.mxu0
    %v4720 = vadd.f32 %v4607, %v4719
    %4721 = vmatprep.mubr.bf16.mxu0 %v1232
    %4722 = vmatmul.mubr.bf16.gmra.mxu0 %v1231
    %v4723 = vpop.f32.mrf.mxu0
    %v4724 = vadd.f32 %v4611, %v4723
    %v4725 = vpop.f32.mrf.mxu0
    %v4726 = vadd.f32 %v4613, %v4725
    %v4727 = vpop.f32.mrf.mxu0
    %v4728 = vadd.f32 %v4615, %v4727
    %v4729 = vpop.f32.mrf.mxu0
    %v4730 = vadd.f32 %v4617, %v4729
    %4731 = vmatprep.mubr.bf16.mxu0 %v1248
    %4732 = vmatmul.mubr.bf16.gmra.mxu0 %v1247
    %v4733 = vpop.f32.mrf.mxu0
    %v4734 = vadd.f32 %v4621, %v4733
    %v4735 = vpop.f32.mrf.mxu0
    %v4736 = vadd.f32 %v4623, %v4735
    %v4737 = vpop.f32.mrf.mxu0
    %v4738 = vadd.f32 %v4625, %v4737
    %v4739 = vpop.f32.mrf.mxu0
    %v4740 = vadd.f32 %v4627, %v4739
    %4741 = vmatprep.mubr.bf16.mxu0 %v1264
    %4742 = vmatmul.mubr.bf16.gmra.mxu0 %v1263
    %v4743 = vpop.f32.mrf.mxu0
    %v4744 = vadd.f32 %v4631, %v4743
    %v4745 = vpop.f32.mrf.mxu0
    %v4746 = vadd.f32 %v4633, %v4745
    %v4747 = vpop.f32.mrf.mxu0
    %v4748 = vadd.f32 %v4635, %v4747
    %v4749 = vpop.f32.mrf.mxu0
    %v4750 = vadd.f32 %v4637, %v4749
    %4751 = vmatprep.mubr.bf16.mxu0 %v1280
    %4752 = vmatmul.mubr.bf16.gmra.mxu0 %v1279
    %v4753 = vpop.f32.mrf.mxu0
    %v4754 = vadd.f32 %v4641, %v4753
    %v4755 = vpop.f32.mrf.mxu0
    %v4756 = vadd.f32 %v4643, %v4755
    %v4757 = vpop.f32.mrf.mxu0
    %v4758 = vadd.f32 %v4645, %v4757
    %v4759 = vpop.f32.mrf.mxu0
    %v4760 = vadd.f32 %v4647, %v4759
    %4761 = vdwg.mxu0
    %4762 = vmatprep.subr.bf16.mxu0 %v3424
    %4763 = vmatpush1.bf16.msra.mxu0 %v3423
    %4764 = vmatprep.subr.bf16.mxu0 %v3420
    %4765 = vmatpush1.bf16.msra.mxu0 %v3419
    %4766 = vmatprep.subr.bf16.mxu0 %v3416
    %4767 = vmatpush1.bf16.msra.mxu0 %v3415
    %4768 = vmatprep.subr.bf16.mxu0 %v3412
    %4769 = vmatpush1.bf16.msra.mxu0 %v3411
    %4770 = vmatprep.subr.bf16.mxu0 %v3408
    %4771 = vmatpush1.bf16.msra.mxu0 %v3407
    %4772 = vmatprep.subr.bf16.mxu0 %v3404
    %4773 = vmatpush1.bf16.msra.mxu0 %v3403
    %4774 = vmatprep.subr.bf16.mxu0 %v3400
    %4775 = vmatpush1.bf16.msra.mxu0 %v3399
    %4776 = vmatprep.subr.bf16.mxu0 %v3396
    %4777 = vmatpush1.bf16.msra.mxu0 %v3395
    %4778 = vmatprep.subr.bf16.mxu0 %v3456
    %4779 = vmatpush2.bf16.msra.mxu0 %v3455
    %4780 = vmatprep.subr.bf16.mxu0 %v3452
    %4781 = vmatpush2.bf16.msra.mxu0 %v3451
    %4782 = vmatprep.subr.bf16.mxu0 %v3448
    %4783 = vmatpush2.bf16.msra.mxu0 %v3447
    %4784 = vmatprep.subr.bf16.mxu0 %v3444
    %4785 = vmatpush2.bf16.msra.mxu0 %v3443
    %4786 = vmatprep.subr.bf16.mxu0 %v3440
    %4787 = vmatpush2.bf16.msra.mxu0 %v3439
    %4788 = vmatprep.subr.bf16.mxu0 %v3436
    %4789 = vmatpush2.bf16.msra.mxu0 %v3435
    %4790 = vmatprep.subr.bf16.mxu0 %v3432
    %4791 = vmatpush2.bf16.msra.mxu0 %v3431
    %4792 = vmatprep.subr.bf16.mxu0 %v3428
    %4793 = vmatpush2.bf16.msra.mxu0 %v3427
    %4794 = vmatprep.mubr.bf16.mxu0 %v1170
    %4795 = vmatmul.mubr.bf16.gmra.mxu0 %v1169
    %v4796 = vpop.f32.mrf.mxu0
    %v4797 = vadd.f32 %v4684, %v4796
    %v4798 = vpop.f32.mrf.mxu0
    %v4799 = vadd.f32 %v4686, %v4798
    %v4800 = vpop.f32.mrf.mxu0
    %v4801 = vadd.f32 %v4688, %v4800
    %v4802 = vpop.f32.mrf.mxu0
    %v4803 = vadd.f32 %v4690, %v4802
    %4804 = vmatprep.mubr.bf16.mxu0 %v1186
    %4805 = vmatmul.mubr.bf16.gmra.mxu0 %v1185
    %v4806 = vpop.f32.mrf.mxu0
    %v4807 = vadd.f32 %v4694, %v4806
    %v4808 = vpop.f32.mrf.mxu0
    %v4809 = vadd.f32 %v4696, %v4808
    %v4810 = vpop.f32.mrf.mxu0
    %v4811 = vadd.f32 %v4698, %v4810
    %v4812 = vpop.f32.mrf.mxu0
    %v4813 = vadd.f32 %v4700, %v4812
    %4814 = vmatprep.mubr.bf16.mxu0 %v1202
    %4815 = vmatmul.mubr.bf16.gmra.mxu0 %v1201
    %v4816 = vpop.f32.mrf.mxu0
    %v4817 = vadd.f32 %v4704, %v4816
    %v4818 = vpop.f32.mrf.mxu0
    %v4819 = vadd.f32 %v4706, %v4818
    %v4820 = vpop.f32.mrf.mxu0
    %v4821 = vadd.f32 %v4708, %v4820
    %v4822 = vpop.f32.mrf.mxu0
    %v4823 = vadd.f32 %v4710, %v4822
    %4824 = vmatprep.mubr.bf16.mxu0 %v1218
    %4825 = vmatmul.mubr.bf16.gmra.mxu0 %v1217
    %v4826 = vpop.f32.mrf.mxu0
    %v4827 = vadd.f32 %v4714, %v4826
    %v4828 = vpop.f32.mrf.mxu0
    %v4829 = vadd.f32 %v4716, %v4828
    %v4830 = vpop.f32.mrf.mxu0
    %v4831 = vadd.f32 %v4718, %v4830
    %v4832 = vpop.f32.mrf.mxu0
    %v4833 = vadd.f32 %v4720, %v4832
    %4834 = vmatprep.mubr.bf16.mxu0 %v1234
    %4835 = vmatmul.mubr.bf16.gmra.mxu0 %v1233
    %v4836 = vpop.f32.mrf.mxu0
    %v4837 = vadd.f32 %v4724, %v4836
    %v4838 = vpop.f32.mrf.mxu0
    %v4839 = vadd.f32 %v4726, %v4838
    %v4840 = vpop.f32.mrf.mxu0
    %v4841 = vadd.f32 %v4728, %v4840
    %v4842 = vpop.f32.mrf.mxu0
    %v4843 = vadd.f32 %v4730, %v4842
    %4844 = vmatprep.mubr.bf16.mxu0 %v1250
    %4845 = vmatmul.mubr.bf16.gmra.mxu0 %v1249
    %v4846 = vpop.f32.mrf.mxu0
    %v4847 = vadd.f32 %v4734, %v4846
    %v4848 = vpop.f32.mrf.mxu0
    %v4849 = vadd.f32 %v4736, %v4848
    %v4850 = vpop.f32.mrf.mxu0
    %v4851 = vadd.f32 %v4738, %v4850
    %v4852 = vpop.f32.mrf.mxu0
    %v4853 = vadd.f32 %v4740, %v4852
    %4854 = vmatprep.mubr.bf16.mxu0 %v1266
    %4855 = vmatmul.mubr.bf16.gmra.mxu0 %v1265
    %v4856 = vpop.f32.mrf.mxu0
    %v4857 = vadd.f32 %v4744, %v4856
    %v4858 = vpop.f32.mrf.mxu0
    %v4859 = vadd.f32 %v4746, %v4858
    %v4860 = vpop.f32.mrf.mxu0
    %v4861 = vadd.f32 %v4748, %v4860
    %v4862 = vpop.f32.mrf.mxu0
    %v4863 = vadd.f32 %v4750, %v4862
    %4864 = vmatprep.mubr.bf16.mxu0 %v1282
    %4865 = vmatmul.mubr.bf16.gmra.mxu0 %v1281
    %v4866 = vpop.f32.mrf.mxu0
    %v4867 = vadd.f32 %v4754, %v4866
    %v4868 = vpop.f32.mrf.mxu0
    %v4869 = vadd.f32 %v4756, %v4868
    %v4870 = vpop.f32.mrf.mxu0
    %v4871 = vadd.f32 %v4758, %v4870
    %v4872 = vpop.f32.mrf.mxu0
    %v4873 = vadd.f32 %v4760, %v4872
    %4874 = vdwg.mxu0
    %4875 = vmatprep.subr.bf16.mxu0 %v2978
    %4876 = vmatpush1.bf16.msra.mxu0 %v2977
    %4877 = vmatprep.subr.bf16.mxu0 %v2974
    %4878 = vmatpush1.bf16.msra.mxu0 %v2973
    %4879 = vmatprep.subr.bf16.mxu0 %v2970
    %4880 = vmatpush1.bf16.msra.mxu0 %v2969
    %4881 = vmatprep.subr.bf16.mxu0 %v2966
    %4882 = vmatpush1.bf16.msra.mxu0 %v2965
    %4883 = vmatprep.subr.bf16.mxu0 %v2962
    %4884 = vmatpush1.bf16.msra.mxu0 %v2961
    %4885 = vmatprep.subr.bf16.mxu0 %v2958
    %4886 = vmatpush1.bf16.msra.mxu0 %v2957
    %4887 = vmatprep.subr.bf16.mxu0 %v2954
    %4888 = vmatpush1.bf16.msra.mxu0 %v2953
    %4889 = vmatprep.subr.bf16.mxu0 %v2950
    %4890 = vmatpush1.bf16.msra.mxu0 %v2949
    %4891 = vmatprep.subr.bf16.mxu0 %v3010
    %4892 = vmatpush2.bf16.msra.mxu0 %v3009
    %4893 = vmatprep.subr.bf16.mxu0 %v3006
    %4894 = vmatpush2.bf16.msra.mxu0 %v3005
    %4895 = vmatprep.subr.bf16.mxu0 %v3002
    %4896 = vmatpush2.bf16.msra.mxu0 %v3001
    %4897 = vmatprep.subr.bf16.mxu0 %v2998
    %4898 = vmatpush2.bf16.msra.mxu0 %v2997
    %4899 = vmatprep.subr.bf16.mxu0 %v2994
    %4900 = vmatpush2.bf16.msra.mxu0 %v2993
    %4901 = vmatprep.subr.bf16.mxu0 %v2990
    %4902 = vmatpush2.bf16.msra.mxu0 %v2989
    %4903 = vmatprep.subr.bf16.mxu0 %v2986
    %4904 = vmatpush2.bf16.msra.mxu0 %v2985
    %4905 = vmatprep.subr.bf16.mxu0 %v2982
    %4906 = vmatpush2.bf16.msra.mxu0 %v2981
    %4907 = vmatprep.mubr.bf16.mxu0 %v1156
    %4908 = vmatmul.mubr.bf16.gmra.mxu0 %v1155
    %v4909 = vpop.f32.mrf.mxu0
    %v4910 = vadd.f32 %v762, %v4909
    %v4911 = vpop.f32.mrf.mxu0
    %v4912 = vadd.f32 %v766, %v4911
    %v4913 = vpop.f32.mrf.mxu0
    %v4914 = vadd.f32 %v762, %v4913
    %v4915 = vpop.f32.mrf.mxu0
    %v4916 = vadd.f32 %v766, %v4915
    %4917 = vmatprep.mubr.bf16.mxu0 %v1172
    %4918 = vmatmul.mubr.bf16.gmra.mxu0 %v1171
    %v4919 = vpop.f32.mrf.mxu0
    %v4920 = vadd.f32 %v762, %v4919
    %v4921 = vpop.f32.mrf.mxu0
    %v4922 = vadd.f32 %v766, %v4921
    %v4923 = vpop.f32.mrf.mxu0
    %v4924 = vadd.f32 %v762, %v4923
    %v4925 = vpop.f32.mrf.mxu0
    %v4926 = vadd.f32 %v766, %v4925
    %4927 = vmatprep.mubr.bf16.mxu0 %v1188
    %4928 = vmatmul.mubr.bf16.gmra.mxu0 %v1187
    %v4929 = vpop.f32.mrf.mxu0
    %v4930 = vadd.f32 %v762, %v4929
    %v4931 = vpop.f32.mrf.mxu0
    %v4932 = vadd.f32 %v766, %v4931
    %v4933 = vpop.f32.mrf.mxu0
    %v4934 = vadd.f32 %v762, %v4933
    %v4935 = vpop.f32.mrf.mxu0
    %v4936 = vadd.f32 %v766, %v4935
    %4937 = vmatprep.mubr.bf16.mxu0 %v1204
    %4938 = vmatmul.mubr.bf16.gmra.mxu0 %v1203
    %v4939 = vpop.f32.mrf.mxu0
    %v4940 = vadd.f32 %v762, %v4939
    %v4941 = vpop.f32.mrf.mxu0
    %v4942 = vadd.f32 %v766, %v4941
    %v4943 = vpop.f32.mrf.mxu0
    %v4944 = vadd.f32 %v762, %v4943
    %v4945 = vpop.f32.mrf.mxu0
    %v4946 = vadd.f32 %v766, %v4945
    %4947 = vmatprep.mubr.bf16.mxu0 %v1220
    %4948 = vmatmul.mubr.bf16.gmra.mxu0 %v1219
    %v4949 = vpop.f32.mrf.mxu0
    %v4950 = vadd.f32 %v762, %v4949
    %v4951 = vpop.f32.mrf.mxu0
    %v4952 = vadd.f32 %v766, %v4951
    %v4953 = vpop.f32.mrf.mxu0
    %v4954 = vadd.f32 %v762, %v4953
    %v4955 = vpop.f32.mrf.mxu0
    %v4956 = vadd.f32 %v766, %v4955
    %4957 = vmatprep.mubr.bf16.mxu0 %v1236
    %4958 = vmatmul.mubr.bf16.gmra.mxu0 %v1235
    %v4959 = vpop.f32.mrf.mxu0
    %v4960 = vadd.f32 %v762, %v4959
    %v4961 = vpop.f32.mrf.mxu0
    %v4962 = vadd.f32 %v766, %v4961
    %v4963 = vpop.f32.mrf.mxu0
    %v4964 = vadd.f32 %v762, %v4963
    %v4965 = vpop.f32.mrf.mxu0
    %v4966 = vadd.f32 %v766, %v4965
    %4967 = vmatprep.mubr.bf16.mxu0 %v1252
    %4968 = vmatmul.mubr.bf16.gmra.mxu0 %v1251
    %v4969 = vpop.f32.mrf.mxu0
    %v4970 = vadd.f32 %v762, %v4969
    %v4971 = vpop.f32.mrf.mxu0
    %v4972 = vadd.f32 %v766, %v4971
    %v4973 = vpop.f32.mrf.mxu0
    %v4974 = vadd.f32 %v762, %v4973
    %v4975 = vpop.f32.mrf.mxu0
    %v4976 = vadd.f32 %v766, %v4975
    %4977 = vmatprep.mubr.bf16.mxu0 %v1268
    %4978 = vmatmul.mubr.bf16.gmra.mxu0 %v1267
    %v4979 = vpop.f32.mrf.mxu0
    %v4980 = vadd.f32 %v762, %v4979
    %v4981 = vpop.f32.mrf.mxu0
    %v4982 = vadd.f32 %v766, %v4981
    %v4983 = vpop.f32.mrf.mxu0
    %v4984 = vadd.f32 %v762, %v4983
    %v4985 = vpop.f32.mrf.mxu0
    %v4986 = vadd.f32 %v766, %v4985
    %4987 = vdwg.mxu0
    %4988 = vmatprep.subr.bf16.mxu0 %v3042
    %4989 = vmatpush1.bf16.msra.mxu0 %v3041
    %4990 = vmatprep.subr.bf16.mxu0 %v3038
    %4991 = vmatpush1.bf16.msra.mxu0 %v3037
    %4992 = vmatprep.subr.bf16.mxu0 %v3034
    %4993 = vmatpush1.bf16.msra.mxu0 %v3033
    %4994 = vmatprep.subr.bf16.mxu0 %v3030
    %4995 = vmatpush1.bf16.msra.mxu0 %v3029
    %4996 = vmatprep.subr.bf16.mxu0 %v3026
    %4997 = vmatpush1.bf16.msra.mxu0 %v3025
    %4998 = vmatprep.subr.bf16.mxu0 %v3022
    %4999 = vmatpush1.bf16.msra.mxu0 %v3021
    %5000 = vmatprep.subr.bf16.mxu0 %v3018
    %5001 = vmatpush1.bf16.msra.mxu0 %v3017
    %5002 = vmatprep.subr.bf16.mxu0 %v3014
    %5003 = vmatpush1.bf16.msra.mxu0 %v3013
    %5004 = vmatprep.subr.bf16.mxu0 %v3074
    %5005 = vmatpush2.bf16.msra.mxu0 %v3073
    %5006 = vmatprep.subr.bf16.mxu0 %v3070
    %5007 = vmatpush2.bf16.msra.mxu0 %v3069
    %5008 = vmatprep.subr.bf16.mxu0 %v3066
    %5009 = vmatpush2.bf16.msra.mxu0 %v3065
    %5010 = vmatprep.subr.bf16.mxu0 %v3062
    %5011 = vmatpush2.bf16.msra.mxu0 %v3061
    %5012 = vmatprep.subr.bf16.mxu0 %v3058
    %5013 = vmatpush2.bf16.msra.mxu0 %v3057
    %5014 = vmatprep.subr.bf16.mxu0 %v3054
    %5015 = vmatpush2.bf16.msra.mxu0 %v3053
    %5016 = vmatprep.subr.bf16.mxu0 %v3050
    %5017 = vmatpush2.bf16.msra.mxu0 %v3049
    %5018 = vmatprep.subr.bf16.mxu0 %v3046
    %5019 = vmatpush2.bf16.msra.mxu0 %v3045
    %5020 = vmatprep.mubr.bf16.mxu0 %v1158
    %5021 = vmatmul.mubr.bf16.gmra.mxu0 %v1157
    %v5022 = vpop.f32.mrf.mxu0
    %v5023 = vadd.f32 %v4910, %v5022
    %v5024 = vpop.f32.mrf.mxu0
    %v5025 = vadd.f32 %v4912, %v5024
    %v5026 = vpop.f32.mrf.mxu0
    %v5027 = vadd.f32 %v4914, %v5026
    %v5028 = vpop.f32.mrf.mxu0
    %v5029 = vadd.f32 %v4916, %v5028
    %5030 = vmatprep.mubr.bf16.mxu0 %v1174
    %5031 = vmatmul.mubr.bf16.gmra.mxu0 %v1173
    %v5032 = vpop.f32.mrf.mxu0
    %v5033 = vadd.f32 %v4920, %v5032
    %v5034 = vpop.f32.mrf.mxu0
    %v5035 = vadd.f32 %v4922, %v5034
    %v5036 = vpop.f32.mrf.mxu0
    %v5037 = vadd.f32 %v4924, %v5036
    %v5038 = vpop.f32.mrf.mxu0
    %v5039 = vadd.f32 %v4926, %v5038
    %5040 = vmatprep.mubr.bf16.mxu0 %v1190
    %5041 = vmatmul.mubr.bf16.gmra.mxu0 %v1189
    %v5042 = vpop.f32.mrf.mxu0
    %v5043 = vadd.f32 %v4930, %v5042
    %v5044 = vpop.f32.mrf.mxu0
    %v5045 = vadd.f32 %v4932, %v5044
    %v5046 = vpop.f32.mrf.mxu0
    %v5047 = vadd.f32 %v4934, %v5046
    %v5048 = vpop.f32.mrf.mxu0
    %v5049 = vadd.f32 %v4936, %v5048
    %5050 = vmatprep.mubr.bf16.mxu0 %v1206
    %5051 = vmatmul.mubr.bf16.gmra.mxu0 %v1205
    %v5052 = vpop.f32.mrf.mxu0
    %v5053 = vadd.f32 %v4940, %v5052
    %v5054 = vpop.f32.mrf.mxu0
    %v5055 = vadd.f32 %v4942, %v5054
    %v5056 = vpop.f32.mrf.mxu0
    %v5057 = vadd.f32 %v4944, %v5056
    %v5058 = vpop.f32.mrf.mxu0
    %v5059 = vadd.f32 %v4946, %v5058
    %5060 = vmatprep.mubr.bf16.mxu0 %v1222
    %5061 = vmatmul.mubr.bf16.gmra.mxu0 %v1221
    %v5062 = vpop.f32.mrf.mxu0
    %v5063 = vadd.f32 %v4950, %v5062
    %v5064 = vpop.f32.mrf.mxu0
    %v5065 = vadd.f32 %v4952, %v5064
    %v5066 = vpop.f32.mrf.mxu0
    %v5067 = vadd.f32 %v4954, %v5066
    %v5068 = vpop.f32.mrf.mxu0
    %v5069 = vadd.f32 %v4956, %v5068
    %5070 = vmatprep.mubr.bf16.mxu0 %v1238
    %5071 = vmatmul.mubr.bf16.gmra.mxu0 %v1237
    %v5072 = vpop.f32.mrf.mxu0
    %v5073 = vadd.f32 %v4960, %v5072
    %v5074 = vpop.f32.mrf.mxu0
    %v5075 = vadd.f32 %v4962, %v5074
    %v5076 = vpop.f32.mrf.mxu0
    %v5077 = vadd.f32 %v4964, %v5076
    %v5078 = vpop.f32.mrf.mxu0
    %v5079 = vadd.f32 %v4966, %v5078
    %5080 = vmatprep.mubr.bf16.mxu0 %v1254
    %5081 = vmatmul.mubr.bf16.gmra.mxu0 %v1253
    %v5082 = vpop.f32.mrf.mxu0
    %v5083 = vadd.f32 %v4970, %v5082
    %v5084 = vpop.f32.mrf.mxu0
    %v5085 = vadd.f32 %v4972, %v5084
    %v5086 = vpop.f32.mrf.mxu0
    %v5087 = vadd.f32 %v4974, %v5086
    %v5088 = vpop.f32.mrf.mxu0
    %v5089 = vadd.f32 %v4976, %v5088
    %5090 = vmatprep.mubr.bf16.mxu0 %v1270
    %5091 = vmatmul.mubr.bf16.gmra.mxu0 %v1269
    %v5092 = vpop.f32.mrf.mxu0
    %v5093 = vadd.f32 %v4980, %v5092
    %v5094 = vpop.f32.mrf.mxu0
    %v5095 = vadd.f32 %v4982, %v5094
    %v5096 = vpop.f32.mrf.mxu0
    %v5097 = vadd.f32 %v4984, %v5096
    %v5098 = vpop.f32.mrf.mxu0
    %v5099 = vadd.f32 %v4986, %v5098
    %5100 = vdwg.mxu0
    %5101 = vmatprep.subr.bf16.mxu0 %v3106
    %5102 = vmatpush1.bf16.msra.mxu0 %v3105
    %5103 = vmatprep.subr.bf16.mxu0 %v3102
    %5104 = vmatpush1.bf16.msra.mxu0 %v3101
    %5105 = vmatprep.subr.bf16.mxu0 %v3098
    %5106 = vmatpush1.bf16.msra.mxu0 %v3097
    %5107 = vmatprep.subr.bf16.mxu0 %v3094
    %5108 = vmatpush1.bf16.msra.mxu0 %v3093
    %5109 = vmatprep.subr.bf16.mxu0 %v3090
    %5110 = vmatpush1.bf16.msra.mxu0 %v3089
    %5111 = vmatprep.subr.bf16.mxu0 %v3086
    %5112 = vmatpush1.bf16.msra.mxu0 %v3085
    %5113 = vmatprep.subr.bf16.mxu0 %v3082
    %5114 = vmatpush1.bf16.msra.mxu0 %v3081
    %5115 = vmatprep.subr.bf16.mxu0 %v3078
    %5116 = vmatpush1.bf16.msra.mxu0 %v3077
    %5117 = vmatprep.subr.bf16.mxu0 %v3138
    %5118 = vmatpush2.bf16.msra.mxu0 %v3137
    %5119 = vmatprep.subr.bf16.mxu0 %v3134
    %5120 = vmatpush2.bf16.msra.mxu0 %v3133
    %5121 = vmatprep.subr.bf16.mxu0 %v3130
    %5122 = vmatpush2.bf16.msra.mxu0 %v3129
    %5123 = vmatprep.subr.bf16.mxu0 %v3126
    %5124 = vmatpush2.bf16.msra.mxu0 %v3125
    %5125 = vmatprep.subr.bf16.mxu0 %v3122
    %5126 = vmatpush2.bf16.msra.mxu0 %v3121
    %5127 = vmatprep.subr.bf16.mxu0 %v3118
    %5128 = vmatpush2.bf16.msra.mxu0 %v3117
    %5129 = vmatprep.subr.bf16.mxu0 %v3114
    %5130 = vmatpush2.bf16.msra.mxu0 %v3113
    %5131 = vmatprep.subr.bf16.mxu0 %v3110
    %5132 = vmatpush2.bf16.msra.mxu0 %v3109
    %5133 = vmatprep.mubr.bf16.mxu0 %v1160
    %5134 = vmatmul.mubr.bf16.gmra.mxu0 %v1159
    %v5135 = vpop.f32.mrf.mxu0
    %v5136 = vadd.f32 %v5023, %v5135
    %v5137 = vpop.f32.mrf.mxu0
    %v5138 = vadd.f32 %v5025, %v5137
    %v5139 = vpop.f32.mrf.mxu0
    %v5140 = vadd.f32 %v5027, %v5139
    %v5141 = vpop.f32.mrf.mxu0
    %v5142 = vadd.f32 %v5029, %v5141
    %5143 = vmatprep.mubr.bf16.mxu0 %v1176
    %5144 = vmatmul.mubr.bf16.gmra.mxu0 %v1175
    %v5145 = vpop.f32.mrf.mxu0
    %v5146 = vadd.f32 %v5033, %v5145
    %v5147 = vpop.f32.mrf.mxu0
    %v5148 = vadd.f32 %v5035, %v5147
    %v5149 = vpop.f32.mrf.mxu0
    %v5150 = vadd.f32 %v5037, %v5149
    %v5151 = vpop.f32.mrf.mxu0
    %v5152 = vadd.f32 %v5039, %v5151
    %5153 = vmatprep.mubr.bf16.mxu0 %v1192
    %5154 = vmatmul.mubr.bf16.gmra.mxu0 %v1191
    %v5155 = vpop.f32.mrf.mxu0
    %v5156 = vadd.f32 %v5043, %v5155
    %v5157 = vpop.f32.mrf.mxu0
    %v5158 = vadd.f32 %v5045, %v5157
    %v5159 = vpop.f32.mrf.mxu0
    %v5160 = vadd.f32 %v5047, %v5159
    %v5161 = vpop.f32.mrf.mxu0
    %v5162 = vadd.f32 %v5049, %v5161
    %5163 = vmatprep.mubr.bf16.mxu0 %v1208
    %5164 = vmatmul.mubr.bf16.gmra.mxu0 %v1207
    %v5165 = vpop.f32.mrf.mxu0
    %v5166 = vadd.f32 %v5053, %v5165
    %v5167 = vpop.f32.mrf.mxu0
    %v5168 = vadd.f32 %v5055, %v5167
    %v5169 = vpop.f32.mrf.mxu0
    %v5170 = vadd.f32 %v5057, %v5169
    %v5171 = vpop.f32.mrf.mxu0
    %v5172 = vadd.f32 %v5059, %v5171
    %5173 = vmatprep.mubr.bf16.mxu0 %v1224
    %5174 = vmatmul.mubr.bf16.gmra.mxu0 %v1223
    %v5175 = vpop.f32.mrf.mxu0
    %v5176 = vadd.f32 %v5063, %v5175
    %v5177 = vpop.f32.mrf.mxu0
    %v5178 = vadd.f32 %v5065, %v5177
    %v5179 = vpop.f32.mrf.mxu0
    %v5180 = vadd.f32 %v5067, %v5179
    %v5181 = vpop.f32.mrf.mxu0
    %v5182 = vadd.f32 %v5069, %v5181
    %5183 = vmatprep.mubr.bf16.mxu0 %v1240
    %5184 = vmatmul.mubr.bf16.gmra.mxu0 %v1239
    %v5185 = vpop.f32.mrf.mxu0
    %v5186 = vadd.f32 %v5073, %v5185
    %v5187 = vpop.f32.mrf.mxu0
    %v5188 = vadd.f32 %v5075, %v5187
    %v5189 = vpop.f32.mrf.mxu0
    %v5190 = vadd.f32 %v5077, %v5189
    %v5191 = vpop.f32.mrf.mxu0
    %v5192 = vadd.f32 %v5079, %v5191
    %5193 = vmatprep.mubr.bf16.mxu0 %v1256
    %5194 = vmatmul.mubr.bf16.gmra.mxu0 %v1255
    %v5195 = vpop.f32.mrf.mxu0
    %v5196 = vadd.f32 %v5083, %v5195
    %v5197 = vpop.f32.mrf.mxu0
    %v5198 = vadd.f32 %v5085, %v5197
    %v5199 = vpop.f32.mrf.mxu0
    %v5200 = vadd.f32 %v5087, %v5199
    %v5201 = vpop.f32.mrf.mxu0
    %v5202 = vadd.f32 %v5089, %v5201
    %5203 = vmatprep.mubr.bf16.mxu0 %v1272
    %5204 = vmatmul.mubr.bf16.gmra.mxu0 %v1271
    %v5205 = vpop.f32.mrf.mxu0
    %v5206 = vadd.f32 %v5093, %v5205
    %v5207 = vpop.f32.mrf.mxu0
    %v5208 = vadd.f32 %v5095, %v5207
    %v5209 = vpop.f32.mrf.mxu0
    %v5210 = vadd.f32 %v5097, %v5209
    %v5211 = vpop.f32.mrf.mxu0
    %v5212 = vadd.f32 %v5099, %v5211
    %5213 = vdwg.mxu0
    %5214 = vmatprep.subr.bf16.mxu0 %v3170
    %5215 = vmatpush1.bf16.msra.mxu0 %v3169
    %5216 = vmatprep.subr.bf16.mxu0 %v3166
    %5217 = vmatpush1.bf16.msra.mxu0 %v3165
    %5218 = vmatprep.subr.bf16.mxu0 %v3162
    %5219 = vmatpush1.bf16.msra.mxu0 %v3161
    %5220 = vmatprep.subr.bf16.mxu0 %v3158
    %5221 = vmatpush1.bf16.msra.mxu0 %v3157
    %5222 = vmatprep.subr.bf16.mxu0 %v3154
    %5223 = vmatpush1.bf16.msra.mxu0 %v3153
    %5224 = vmatprep.subr.bf16.mxu0 %v3150
    %5225 = vmatpush1.bf16.msra.mxu0 %v3149
    %5226 = vmatprep.subr.bf16.mxu0 %v3146
    %5227 = vmatpush1.bf16.msra.mxu0 %v3145
    %5228 = vmatprep.subr.bf16.mxu0 %v3142
    %5229 = vmatpush1.bf16.msra.mxu0 %v3141
    %5230 = vmatprep.subr.bf16.mxu0 %v3202
    %5231 = vmatpush2.bf16.msra.mxu0 %v3201
    %5232 = vmatprep.subr.bf16.mxu0 %v3198
    %5233 = vmatpush2.bf16.msra.mxu0 %v3197
    %5234 = vmatprep.subr.bf16.mxu0 %v3194
    %5235 = vmatpush2.bf16.msra.mxu0 %v3193
    %5236 = vmatprep.subr.bf16.mxu0 %v3190
    %5237 = vmatpush2.bf16.msra.mxu0 %v3189
    %5238 = vmatprep.subr.bf16.mxu0 %v3186
    %5239 = vmatpush2.bf16.msra.mxu0 %v3185
    %5240 = vmatprep.subr.bf16.mxu0 %v3182
    %5241 = vmatpush2.bf16.msra.mxu0 %v3181
    %5242 = vmatprep.subr.bf16.mxu0 %v3178
    %5243 = vmatpush2.bf16.msra.mxu0 %v3177
    %5244 = vmatprep.subr.bf16.mxu0 %v3174
    %5245 = vmatpush2.bf16.msra.mxu0 %v3173
    %5246 = vmatprep.mubr.bf16.mxu0 %v1162
    %5247 = vmatmul.mubr.bf16.gmra.mxu0 %v1161
    %v5248 = vpop.f32.mrf.mxu0
    %v5249 = vadd.f32 %v5136, %v5248
    %v5250 = vpop.f32.mrf.mxu0
    %v5251 = vadd.f32 %v5138, %v5250
    %v5252 = vpop.f32.mrf.mxu0
    %v5253 = vadd.f32 %v5140, %v5252
    %v5254 = vpop.f32.mrf.mxu0
    %v5255 = vadd.f32 %v5142, %v5254
    %5256 = vmatprep.mubr.bf16.mxu0 %v1178
    %5257 = vmatmul.mubr.bf16.gmra.mxu0 %v1177
    %v5258 = vpop.f32.mrf.mxu0
    %v5259 = vadd.f32 %v5146, %v5258
    %v5260 = vpop.f32.mrf.mxu0
    %v5261 = vadd.f32 %v5148, %v5260
    %v5262 = vpop.f32.mrf.mxu0
    %v5263 = vadd.f32 %v5150, %v5262
    %v5264 = vpop.f32.mrf.mxu0
    %v5265 = vadd.f32 %v5152, %v5264
    %5266 = vmatprep.mubr.bf16.mxu0 %v1194
    %5267 = vmatmul.mubr.bf16.gmra.mxu0 %v1193
    %v5268 = vpop.f32.mrf.mxu0
    %v5269 = vadd.f32 %v5156, %v5268
    %v5270 = vpop.f32.mrf.mxu0
    %v5271 = vadd.f32 %v5158, %v5270
    %v5272 = vpop.f32.mrf.mxu0
    %v5273 = vadd.f32 %v5160, %v5272
    %v5274 = vpop.f32.mrf.mxu0
    %v5275 = vadd.f32 %v5162, %v5274
    %5276 = vmatprep.mubr.bf16.mxu0 %v1210
    %5277 = vmatmul.mubr.bf16.gmra.mxu0 %v1209
    %v5278 = vpop.f32.mrf.mxu0
    %v5279 = vadd.f32 %v5166, %v5278
    %v5280 = vpop.f32.mrf.mxu0
    %v5281 = vadd.f32 %v5168, %v5280
    %v5282 = vpop.f32.mrf.mxu0
    %v5283 = vadd.f32 %v5170, %v5282
    %v5284 = vpop.f32.mrf.mxu0
    %v5285 = vadd.f32 %v5172, %v5284
    %5286 = vmatprep.mubr.bf16.mxu0 %v1226
    %5287 = vmatmul.mubr.bf16.gmra.mxu0 %v1225
    %v5288 = vpop.f32.mrf.mxu0
    %v5289 = vadd.f32 %v5176, %v5288
    %v5290 = vpop.f32.mrf.mxu0
    %v5291 = vadd.f32 %v5178, %v5290
    %v5292 = vpop.f32.mrf.mxu0
    %v5293 = vadd.f32 %v5180, %v5292
    %v5294 = vpop.f32.mrf.mxu0
    %v5295 = vadd.f32 %v5182, %v5294
    %5296 = vmatprep.mubr.bf16.mxu0 %v1242
    %5297 = vmatmul.mubr.bf16.gmra.mxu0 %v1241
    %v5298 = vpop.f32.mrf.mxu0
    %v5299 = vadd.f32 %v5186, %v5298
    %v5300 = vpop.f32.mrf.mxu0
    %v5301 = vadd.f32 %v5188, %v5300
    %v5302 = vpop.f32.mrf.mxu0
    %v5303 = vadd.f32 %v5190, %v5302
    %v5304 = vpop.f32.mrf.mxu0
    %v5305 = vadd.f32 %v5192, %v5304
    %5306 = vmatprep.mubr.bf16.mxu0 %v1258
    %5307 = vmatmul.mubr.bf16.gmra.mxu0 %v1257
    %v5308 = vpop.f32.mrf.mxu0
    %v5309 = vadd.f32 %v5196, %v5308
    %v5310 = vpop.f32.mrf.mxu0
    %v5311 = vadd.f32 %v5198, %v5310
    %v5312 = vpop.f32.mrf.mxu0
    %v5313 = vadd.f32 %v5200, %v5312
    %v5314 = vpop.f32.mrf.mxu0
    %v5315 = vadd.f32 %v5202, %v5314
    %5316 = vmatprep.mubr.bf16.mxu0 %v1274
    %5317 = vmatmul.mubr.bf16.gmra.mxu0 %v1273
    %v5318 = vpop.f32.mrf.mxu0
    %v5319 = vadd.f32 %v5206, %v5318
    %v5320 = vpop.f32.mrf.mxu0
    %v5321 = vadd.f32 %v5208, %v5320
    %v5322 = vpop.f32.mrf.mxu0
    %v5323 = vadd.f32 %v5210, %v5322
    %v5324 = vpop.f32.mrf.mxu0
    %v5325 = vadd.f32 %v5212, %v5324
    %5326 = vdwg.mxu0
    %5327 = vmatprep.subr.bf16.mxu0 %v3234
    %5328 = vmatpush1.bf16.msra.mxu0 %v3233
    %5329 = vmatprep.subr.bf16.mxu0 %v3230
    %5330 = vmatpush1.bf16.msra.mxu0 %v3229
    %5331 = vmatprep.subr.bf16.mxu0 %v3226
    %5332 = vmatpush1.bf16.msra.mxu0 %v3225
    %5333 = vmatprep.subr.bf16.mxu0 %v3222
    %5334 = vmatpush1.bf16.msra.mxu0 %v3221
    %5335 = vmatprep.subr.bf16.mxu0 %v3218
    %5336 = vmatpush1.bf16.msra.mxu0 %v3217
    %5337 = vmatprep.subr.bf16.mxu0 %v3214
    %5338 = vmatpush1.bf16.msra.mxu0 %v3213
    %5339 = vmatprep.subr.bf16.mxu0 %v3210
    %5340 = vmatpush1.bf16.msra.mxu0 %v3209
    %5341 = vmatprep.subr.bf16.mxu0 %v3206
    %5342 = vmatpush1.bf16.msra.mxu0 %v3205
    %5343 = vmatprep.subr.bf16.mxu0 %v3266
    %5344 = vmatpush2.bf16.msra.mxu0 %v3265
    %5345 = vmatprep.subr.bf16.mxu0 %v3262
    %5346 = vmatpush2.bf16.msra.mxu0 %v3261
    %5347 = vmatprep.subr.bf16.mxu0 %v3258
    %5348 = vmatpush2.bf16.msra.mxu0 %v3257
    %5349 = vmatprep.subr.bf16.mxu0 %v3254
    %5350 = vmatpush2.bf16.msra.mxu0 %v3253
    %5351 = vmatprep.subr.bf16.mxu0 %v3250
    %5352 = vmatpush2.bf16.msra.mxu0 %v3249
    %5353 = vmatprep.subr.bf16.mxu0 %v3246
    %5354 = vmatpush2.bf16.msra.mxu0 %v3245
    %5355 = vmatprep.subr.bf16.mxu0 %v3242
    %5356 = vmatpush2.bf16.msra.mxu0 %v3241
    %5357 = vmatprep.subr.bf16.mxu0 %v3238
    %5358 = vmatpush2.bf16.msra.mxu0 %v3237
    %5359 = vmatprep.mubr.bf16.mxu0 %v1164
    %5360 = vmatmul.mubr.bf16.gmra.mxu0 %v1163
    %v5361 = vpop.f32.mrf.mxu0
    %v5362 = vadd.f32 %v5249, %v5361
    %v5363 = vpop.f32.mrf.mxu0
    %v5364 = vadd.f32 %v5251, %v5363
    %v5365 = vpop.f32.mrf.mxu0
    %v5366 = vadd.f32 %v5253, %v5365
    %v5367 = vpop.f32.mrf.mxu0
    %v5368 = vadd.f32 %v5255, %v5367
    %5369 = vmatprep.mubr.bf16.mxu0 %v1180
    %5370 = vmatmul.mubr.bf16.gmra.mxu0 %v1179
    %v5371 = vpop.f32.mrf.mxu0
    %v5372 = vadd.f32 %v5259, %v5371
    %v5373 = vpop.f32.mrf.mxu0
    %v5374 = vadd.f32 %v5261, %v5373
    %v5375 = vpop.f32.mrf.mxu0
    %v5376 = vadd.f32 %v5263, %v5375
    %v5377 = vpop.f32.mrf.mxu0
    %v5378 = vadd.f32 %v5265, %v5377
    %5379 = vmatprep.mubr.bf16.mxu0 %v1196
    %5380 = vmatmul.mubr.bf16.gmra.mxu0 %v1195
    %v5381 = vpop.f32.mrf.mxu0
    %v5382 = vadd.f32 %v5269, %v5381
    %v5383 = vpop.f32.mrf.mxu0
    %v5384 = vadd.f32 %v5271, %v5383
    %v5385 = vpop.f32.mrf.mxu0
    %v5386 = vadd.f32 %v5273, %v5385
    %v5387 = vpop.f32.mrf.mxu0
    %v5388 = vadd.f32 %v5275, %v5387
    %5389 = vmatprep.mubr.bf16.mxu0 %v1212
    %5390 = vmatmul.mubr.bf16.gmra.mxu0 %v1211
    %v5391 = vpop.f32.mrf.mxu0
    %v5392 = vadd.f32 %v5279, %v5391
    %v5393 = vpop.f32.mrf.mxu0
    %v5394 = vadd.f32 %v5281, %v5393
    %v5395 = vpop.f32.mrf.mxu0
    %v5396 = vadd.f32 %v5283, %v5395
    %v5397 = vpop.f32.mrf.mxu0
    %v5398 = vadd.f32 %v5285, %v5397
    %5399 = vmatprep.mubr.bf16.mxu0 %v1228
    %5400 = vmatmul.mubr.bf16.gmra.mxu0 %v1227
    %v5401 = vpop.f32.mrf.mxu0
    %v5402 = vadd.f32 %v5289, %v5401
    %v5403 = vpop.f32.mrf.mxu0
    %v5404 = vadd.f32 %v5291, %v5403
    %v5405 = vpop.f32.mrf.mxu0
    %v5406 = vadd.f32 %v5293, %v5405
    %v5407 = vpop.f32.mrf.mxu0
    %v5408 = vadd.f32 %v5295, %v5407
    %5409 = vmatprep.mubr.bf16.mxu0 %v1244
    %5410 = vmatmul.mubr.bf16.gmra.mxu0 %v1243
    %v5411 = vpop.f32.mrf.mxu0
    %v5412 = vadd.f32 %v5299, %v5411
    %v5413 = vpop.f32.mrf.mxu0
    %v5414 = vadd.f32 %v5301, %v5413
    %v5415 = vpop.f32.mrf.mxu0
    %v5416 = vadd.f32 %v5303, %v5415
    %v5417 = vpop.f32.mrf.mxu0
    %v5418 = vadd.f32 %v5305, %v5417
    %5419 = vmatprep.mubr.bf16.mxu0 %v1260
    %5420 = vmatmul.mubr.bf16.gmra.mxu0 %v1259
    %v5421 = vpop.f32.mrf.mxu0
    %v5422 = vadd.f32 %v5309, %v5421
    %v5423 = vpop.f32.mrf.mxu0
    %v5424 = vadd.f32 %v5311, %v5423
    %v5425 = vpop.f32.mrf.mxu0
    %v5426 = vadd.f32 %v5313, %v5425
    %v5427 = vpop.f32.mrf.mxu0
    %v5428 = vadd.f32 %v5315, %v5427
    %5429 = vmatprep.mubr.bf16.mxu0 %v1276
    %5430 = vmatmul.mubr.bf16.gmra.mxu0 %v1275
    %v5431 = vpop.f32.mrf.mxu0
    %v5432 = vadd.f32 %v5319, %v5431
    %v5433 = vpop.f32.mrf.mxu0
    %v5434 = vadd.f32 %v5321, %v5433
    %v5435 = vpop.f32.mrf.mxu0
    %v5436 = vadd.f32 %v5323, %v5435
    %v5437 = vpop.f32.mrf.mxu0
    %v5438 = vadd.f32 %v5325, %v5437
    %5439 = vdwg.mxu0
    %5440 = vmatprep.subr.bf16.mxu0 %v3298
    %5441 = vmatpush1.bf16.msra.mxu0 %v3297
    %5442 = vmatprep.subr.bf16.mxu0 %v3294
    %5443 = vmatpush1.bf16.msra.mxu0 %v3293
    %5444 = vmatprep.subr.bf16.mxu0 %v3290
    %5445 = vmatpush1.bf16.msra.mxu0 %v3289
    %5446 = vmatprep.subr.bf16.mxu0 %v3286
    %5447 = vmatpush1.bf16.msra.mxu0 %v3285
    %5448 = vmatprep.subr.bf16.mxu0 %v3282
    %5449 = vmatpush1.bf16.msra.mxu0 %v3281
    %5450 = vmatprep.subr.bf16.mxu0 %v3278
    %5451 = vmatpush1.bf16.msra.mxu0 %v3277
    %5452 = vmatprep.subr.bf16.mxu0 %v3274
    %5453 = vmatpush1.bf16.msra.mxu0 %v3273
    %5454 = vmatprep.subr.bf16.mxu0 %v3270
    %5455 = vmatpush1.bf16.msra.mxu0 %v3269
    %5456 = vmatprep.subr.bf16.mxu0 %v3330
    %5457 = vmatpush2.bf16.msra.mxu0 %v3329
    %5458 = vmatprep.subr.bf16.mxu0 %v3326
    %5459 = vmatpush2.bf16.msra.mxu0 %v3325
    %5460 = vmatprep.subr.bf16.mxu0 %v3322
    %5461 = vmatpush2.bf16.msra.mxu0 %v3321
    %5462 = vmatprep.subr.bf16.mxu0 %v3318
    %5463 = vmatpush2.bf16.msra.mxu0 %v3317
    %5464 = vmatprep.subr.bf16.mxu0 %v3314
    %5465 = vmatpush2.bf16.msra.mxu0 %v3313
    %5466 = vmatprep.subr.bf16.mxu0 %v3310
    %5467 = vmatpush2.bf16.msra.mxu0 %v3309
    %5468 = vmatprep.subr.bf16.mxu0 %v3306
    %5469 = vmatpush2.bf16.msra.mxu0 %v3305
    %5470 = vmatprep.subr.bf16.mxu0 %v3302
    %5471 = vmatpush2.bf16.msra.mxu0 %v3301
    %5472 = vmatprep.mubr.bf16.mxu0 %v1166
    %5473 = vmatmul.mubr.bf16.gmra.mxu0 %v1165
    %v5474 = vpop.f32.mrf.mxu0
    %v5475 = vadd.f32 %v5362, %v5474
    %v5476 = vpop.f32.mrf.mxu0
    %v5477 = vadd.f32 %v5364, %v5476
    %v5478 = vpop.f32.mrf.mxu0
    %v5479 = vadd.f32 %v5366, %v5478
    %v5480 = vpop.f32.mrf.mxu0
    %v5481 = vadd.f32 %v5368, %v5480
    %5482 = vmatprep.mubr.bf16.mxu0 %v1182
    %5483 = vmatmul.mubr.bf16.gmra.mxu0 %v1181
    %v5484 = vpop.f32.mrf.mxu0
    %v5485 = vadd.f32 %v5372, %v5484
    %v5486 = vpop.f32.mrf.mxu0
    %v5487 = vadd.f32 %v5374, %v5486
    %v5488 = vpop.f32.mrf.mxu0
    %v5489 = vadd.f32 %v5376, %v5488
    %v5490 = vpop.f32.mrf.mxu0
    %v5491 = vadd.f32 %v5378, %v5490
    %5492 = vmatprep.mubr.bf16.mxu0 %v1198
    %5493 = vmatmul.mubr.bf16.gmra.mxu0 %v1197
    %v5494 = vpop.f32.mrf.mxu0
    %v5495 = vadd.f32 %v5382, %v5494
    %v5496 = vpop.f32.mrf.mxu0
    %v5497 = vadd.f32 %v5384, %v5496
    %v5498 = vpop.f32.mrf.mxu0
    %v5499 = vadd.f32 %v5386, %v5498
    %v5500 = vpop.f32.mrf.mxu0
    %v5501 = vadd.f32 %v5388, %v5500
    %5502 = vmatprep.mubr.bf16.mxu0 %v1214
    %5503 = vmatmul.mubr.bf16.gmra.mxu0 %v1213
    %v5504 = vpop.f32.mrf.mxu0
    %v5505 = vadd.f32 %v5392, %v5504
    %v5506 = vpop.f32.mrf.mxu0
    %v5507 = vadd.f32 %v5394, %v5506
    %v5508 = vpop.f32.mrf.mxu0
    %v5509 = vadd.f32 %v5396, %v5508
    %v5510 = vpop.f32.mrf.mxu0
    %v5511 = vadd.f32 %v5398, %v5510
    %5512 = vmatprep.mubr.bf16.mxu0 %v1230
    %5513 = vmatmul.mubr.bf16.gmra.mxu0 %v1229
    %v5514 = vpop.f32.mrf.mxu0
    %v5515 = vadd.f32 %v5402, %v5514
    %v5516 = vpop.f32.mrf.mxu0
    %v5517 = vadd.f32 %v5404, %v5516
    %v5518 = vpop.f32.mrf.mxu0
    %v5519 = vadd.f32 %v5406, %v5518
    %v5520 = vpop.f32.mrf.mxu0
    %v5521 = vadd.f32 %v5408, %v5520
    %5522 = vmatprep.mubr.bf16.mxu0 %v1246
    %5523 = vmatmul.mubr.bf16.gmra.mxu0 %v1245
    %v5524 = vpop.f32.mrf.mxu0
    %v5525 = vadd.f32 %v5412, %v5524
    %v5526 = vpop.f32.mrf.mxu0
    %v5527 = vadd.f32 %v5414, %v5526
    %v5528 = vpop.f32.mrf.mxu0
    %v5529 = vadd.f32 %v5416, %v5528
    %v5530 = vpop.f32.mrf.mxu0
    %v5531 = vadd.f32 %v5418, %v5530
    %5532 = vmatprep.mubr.bf16.mxu0 %v1262
    %5533 = vmatmul.mubr.bf16.gmra.mxu0 %v1261
    %v5534 = vpop.f32.mrf.mxu0
    %v5535 = vadd.f32 %v5422, %v5534
    %v5536 = vpop.f32.mrf.mxu0
    %v5537 = vadd.f32 %v5424, %v5536
    %v5538 = vpop.f32.mrf.mxu0
    %v5539 = vadd.f32 %v5426, %v5538
    %v5540 = vpop.f32.mrf.mxu0
    %v5541 = vadd.f32 %v5428, %v5540
    %5542 = vmatprep.mubr.bf16.mxu0 %v1278
    %5543 = vmatmul.mubr.bf16.gmra.mxu0 %v1277
    %v5544 = vpop.f32.mrf.mxu0
    %v5545 = vadd.f32 %v5432, %v5544
    %v5546 = vpop.f32.mrf.mxu0
    %v5547 = vadd.f32 %v5434, %v5546
    %v5548 = vpop.f32.mrf.mxu0
    %v5549 = vadd.f32 %v5436, %v5548
    %v5550 = vpop.f32.mrf.mxu0
    %v5551 = vadd.f32 %v5438, %v5550
    %5552 = vdwg.mxu0
    %5553 = vmatprep.subr.bf16.mxu0 %v3362
    %5554 = vmatpush1.bf16.msra.mxu0 %v3361
    %5555 = vmatprep.subr.bf16.mxu0 %v3358
    %5556 = vmatpush1.bf16.msra.mxu0 %v3357
    %5557 = vmatprep.subr.bf16.mxu0 %v3354
    %5558 = vmatpush1.bf16.msra.mxu0 %v3353
    %5559 = vmatprep.subr.bf16.mxu0 %v3350
    %5560 = vmatpush1.bf16.msra.mxu0 %v3349
    %5561 = vmatprep.subr.bf16.mxu0 %v3346
    %5562 = vmatpush1.bf16.msra.mxu0 %v3345
    %5563 = vmatprep.subr.bf16.mxu0 %v3342
    %5564 = vmatpush1.bf16.msra.mxu0 %v3341
    %5565 = vmatprep.subr.bf16.mxu0 %v3338
    %5566 = vmatpush1.bf16.msra.mxu0 %v3337
    %5567 = vmatprep.subr.bf16.mxu0 %v3334
    %5568 = vmatpush1.bf16.msra.mxu0 %v3333
    %5569 = vmatprep.subr.bf16.mxu0 %v3394
    %5570 = vmatpush2.bf16.msra.mxu0 %v3393
    %5571 = vmatprep.subr.bf16.mxu0 %v3390
    %5572 = vmatpush2.bf16.msra.mxu0 %v3389
    %5573 = vmatprep.subr.bf16.mxu0 %v3386
    %5574 = vmatpush2.bf16.msra.mxu0 %v3385
    %5575 = vmatprep.subr.bf16.mxu0 %v3382
    %5576 = vmatpush2.bf16.msra.mxu0 %v3381
    %5577 = vmatprep.subr.bf16.mxu0 %v3378
    %5578 = vmatpush2.bf16.msra.mxu0 %v3377
    %5579 = vmatprep.subr.bf16.mxu0 %v3374
    %5580 = vmatpush2.bf16.msra.mxu0 %v3373
    %5581 = vmatprep.subr.bf16.mxu0 %v3370
    %5582 = vmatpush2.bf16.msra.mxu0 %v3369
    %5583 = vmatprep.subr.bf16.mxu0 %v3366
    %5584 = vmatpush2.bf16.msra.mxu0 %v3365
    %5585 = vmatprep.mubr.bf16.mxu0 %v1168
    %5586 = vmatmul.mubr.bf16.gmra.mxu0 %v1167
    %v5587 = vpop.f32.mrf.mxu0
    %v5588 = vadd.f32 %v5475, %v5587
    %v5589 = vpop.f32.mrf.mxu0
    %v5590 = vadd.f32 %v5477, %v5589
    %v5591 = vpop.f32.mrf.mxu0
    %v5592 = vadd.f32 %v5479, %v5591
    %v5593 = vpop.f32.mrf.mxu0
    %v5594 = vadd.f32 %v5481, %v5593
    %5595 = vmatprep.mubr.bf16.mxu0 %v1184
    %5596 = vmatmul.mubr.bf16.gmra.mxu0 %v1183
    %v5597 = vpop.f32.mrf.mxu0
    %v5598 = vadd.f32 %v5485, %v5597
    %v5599 = vpop.f32.mrf.mxu0
    %v5600 = vadd.f32 %v5487, %v5599
    %v5601 = vpop.f32.mrf.mxu0
    %v5602 = vadd.f32 %v5489, %v5601
    %v5603 = vpop.f32.mrf.mxu0
    %v5604 = vadd.f32 %v5491, %v5603
    %5605 = vmatprep.mubr.bf16.mxu0 %v1200
    %5606 = vmatmul.mubr.bf16.gmra.mxu0 %v1199
    %v5607 = vpop.f32.mrf.mxu0
    %v5608 = vadd.f32 %v5495, %v5607
    %v5609 = vpop.f32.mrf.mxu0
    %v5610 = vadd.f32 %v5497, %v5609
    %v5611 = vpop.f32.mrf.mxu0
    %v5612 = vadd.f32 %v5499, %v5611
    %v5613 = vpop.f32.mrf.mxu0
    %v5614 = vadd.f32 %v5501, %v5613
    %5615 = vmatprep.mubr.bf16.mxu0 %v1216
    %5616 = vmatmul.mubr.bf16.gmra.mxu0 %v1215
    %v5617 = vpop.f32.mrf.mxu0
    %v5618 = vadd.f32 %v5505, %v5617
    %v5619 = vpop.f32.mrf.mxu0
    %v5620 = vadd.f32 %v5507, %v5619
    %v5621 = vpop.f32.mrf.mxu0
    %v5622 = vadd.f32 %v5509, %v5621
    %v5623 = vpop.f32.mrf.mxu0
    %v5624 = vadd.f32 %v5511, %v5623
    %5625 = vmatprep.mubr.bf16.mxu0 %v1232
    %5626 = vmatmul.mubr.bf16.gmra.mxu0 %v1231
    %v5627 = vpop.f32.mrf.mxu0
    %v5628 = vadd.f32 %v5515, %v5627
    %v5629 = vpop.f32.mrf.mxu0
    %v5630 = vadd.f32 %v5517, %v5629
    %v5631 = vpop.f32.mrf.mxu0
    %v5632 = vadd.f32 %v5519, %v5631
    %v5633 = vpop.f32.mrf.mxu0
    %v5634 = vadd.f32 %v5521, %v5633
    %5635 = vmatprep.mubr.bf16.mxu0 %v1248
    %5636 = vmatmul.mubr.bf16.gmra.mxu0 %v1247
    %v5637 = vpop.f32.mrf.mxu0
    %v5638 = vadd.f32 %v5525, %v5637
    %v5639 = vpop.f32.mrf.mxu0
    %v5640 = vadd.f32 %v5527, %v5639
    %v5641 = vpop.f32.mrf.mxu0
    %v5642 = vadd.f32 %v5529, %v5641
    %v5643 = vpop.f32.mrf.mxu0
    %v5644 = vadd.f32 %v5531, %v5643
    %5645 = vmatprep.mubr.bf16.mxu0 %v1264
    %5646 = vmatmul.mubr.bf16.gmra.mxu0 %v1263
    %v5647 = vpop.f32.mrf.mxu0
    %v5648 = vadd.f32 %v5535, %v5647
    %v5649 = vpop.f32.mrf.mxu0
    %v5650 = vadd.f32 %v5537, %v5649
    %v5651 = vpop.f32.mrf.mxu0
    %v5652 = vadd.f32 %v5539, %v5651
    %v5653 = vpop.f32.mrf.mxu0
    %v5654 = vadd.f32 %v5541, %v5653
    %5655 = vmatprep.mubr.bf16.mxu0 %v1280
    %5656 = vmatmul.mubr.bf16.gmra.mxu0 %v1279
    %v5657 = vpop.f32.mrf.mxu0
    %v5658 = vadd.f32 %v5545, %v5657
    %v5659 = vpop.f32.mrf.mxu0
    %v5660 = vadd.f32 %v5547, %v5659
    %v5661 = vpop.f32.mrf.mxu0
    %v5662 = vadd.f32 %v5549, %v5661
    %v5663 = vpop.f32.mrf.mxu0
    %v5664 = vadd.f32 %v5551, %v5663
    %5665 = vdwg.mxu0
    %5666 = vmatprep.subr.bf16.mxu0 %v3426
    %5667 = vmatpush1.bf16.msra.mxu0 %v3425
    %5668 = vmatprep.subr.bf16.mxu0 %v3422
    %5669 = vmatpush1.bf16.msra.mxu0 %v3421
    %5670 = vmatprep.subr.bf16.mxu0 %v3418
    %5671 = vmatpush1.bf16.msra.mxu0 %v3417
    %5672 = vmatprep.subr.bf16.mxu0 %v3414
    %5673 = vmatpush1.bf16.msra.mxu0 %v3413
    %5674 = vmatprep.subr.bf16.mxu0 %v3410
    %5675 = vmatpush1.bf16.msra.mxu0 %v3409
    %5676 = vmatprep.subr.bf16.mxu0 %v3406
    %5677 = vmatpush1.bf16.msra.mxu0 %v3405
    %5678 = vmatprep.subr.bf16.mxu0 %v3402
    %5679 = vmatpush1.bf16.msra.mxu0 %v3401
    %5680 = vmatprep.subr.bf16.mxu0 %v3398
    %5681 = vmatpush1.bf16.msra.mxu0 %v3397
    %5682 = vmatprep.subr.bf16.mxu0 %v3458
    %5683 = vmatpush2.bf16.msra.mxu0 %v3457
    %5684 = vmatprep.subr.bf16.mxu0 %v3454
    %5685 = vmatpush2.bf16.msra.mxu0 %v3453
    %5686 = vmatprep.subr.bf16.mxu0 %v3450
    %5687 = vmatpush2.bf16.msra.mxu0 %v3449
    %5688 = vmatprep.subr.bf16.mxu0 %v3446
    %5689 = vmatpush2.bf16.msra.mxu0 %v3445
    %5690 = vmatprep.subr.bf16.mxu0 %v3442
    %5691 = vmatpush2.bf16.msra.mxu0 %v3441
    %5692 = vmatprep.subr.bf16.mxu0 %v3438
    %5693 = vmatpush2.bf16.msra.mxu0 %v3437
    %5694 = vmatprep.subr.bf16.mxu0 %v3434
    %5695 = vmatpush2.bf16.msra.mxu0 %v3433
    %5696 = vmatprep.subr.bf16.mxu0 %v3430
    %5697 = vmatpush2.bf16.msra.mxu0 %v3429
    %5698 = vmatprep.mubr.bf16.mxu0 %v1170
    %5699 = vmatmul.mubr.bf16.gmra.mxu0 %v1169
    %v5700 = vpop.f32.mrf.mxu0
    %v5701 = vadd.f32 %v5588, %v5700
    %v5702 = vpop.f32.mrf.mxu0
    %v5703 = vadd.f32 %v5590, %v5702
    %v5704 = vpop.f32.mrf.mxu0
    %v5705 = vadd.f32 %v5592, %v5704
    %v5706 = vpop.f32.mrf.mxu0
    %v5707 = vadd.f32 %v5594, %v5706
    %5708 = vmatprep.mubr.bf16.mxu0 %v1186
    %5709 = vmatmul.mubr.bf16.gmra.mxu0 %v1185
    %v5710 = vpop.f32.mrf.mxu0
    %v5711 = vadd.f32 %v5598, %v5710
    %v5712 = vpop.f32.mrf.mxu0
    %v5713 = vadd.f32 %v5600, %v5712
    %v5714 = vpop.f32.mrf.mxu0
    %v5715 = vadd.f32 %v5602, %v5714
    %v5716 = vpop.f32.mrf.mxu0
    %v5717 = vadd.f32 %v5604, %v5716
    %5718 = vmatprep.mubr.bf16.mxu0 %v1202
    %5719 = vmatmul.mubr.bf16.gmra.mxu0 %v1201
    %v5720 = vpop.f32.mrf.mxu0
    %v5721 = vadd.f32 %v5608, %v5720
    %v5722 = vpop.f32.mrf.mxu0
    %v5723 = vadd.f32 %v5610, %v5722
    %v5724 = vpop.f32.mrf.mxu0
    %v5725 = vadd.f32 %v5612, %v5724
    %v5726 = vpop.f32.mrf.mxu0
    %v5727 = vadd.f32 %v5614, %v5726
    %5728 = vmatprep.mubr.bf16.mxu0 %v1218
    %5729 = vmatmul.mubr.bf16.gmra.mxu0 %v1217
    %v5730 = vpop.f32.mrf.mxu0
    %v5731 = vadd.f32 %v5618, %v5730
    %v5732 = vpop.f32.mrf.mxu0
    %v5733 = vadd.f32 %v5620, %v5732
    %v5734 = vpop.f32.mrf.mxu0
    %v5735 = vadd.f32 %v5622, %v5734
    %v5736 = vpop.f32.mrf.mxu0
    %v5737 = vadd.f32 %v5624, %v5736
    %5738 = vmatprep.mubr.bf16.mxu0 %v1234
    %5739 = vmatmul.mubr.bf16.gmra.mxu0 %v1233
    %v5740 = vpop.f32.mrf.mxu0
    %v5741 = vadd.f32 %v5628, %v5740
    %v5742 = vpop.f32.mrf.mxu0
    %v5743 = vadd.f32 %v5630, %v5742
    %v5744 = vpop.f32.mrf.mxu0
    %v5745 = vadd.f32 %v5632, %v5744
    %v5746 = vpop.f32.mrf.mxu0
    %v5747 = vadd.f32 %v5634, %v5746
    %5748 = vmatprep.mubr.bf16.mxu0 %v1250
    %5749 = vmatmul.mubr.bf16.gmra.mxu0 %v1249
    %v5750 = vpop.f32.mrf.mxu0
    %v5751 = vadd.f32 %v5638, %v5750
    %v5752 = vpop.f32.mrf.mxu0
    %v5753 = vadd.f32 %v5640, %v5752
    %v5754 = vpop.f32.mrf.mxu0
    %v5755 = vadd.f32 %v5642, %v5754
    %v5756 = vpop.f32.mrf.mxu0
    %v5757 = vadd.f32 %v5644, %v5756
    %5758 = vmatprep.mubr.bf16.mxu0 %v1266
    %5759 = vmatmul.mubr.bf16.gmra.mxu0 %v1265
    %v5760 = vpop.f32.mrf.mxu0
    %v5761 = vadd.f32 %v5648, %v5760
    %v5762 = vpop.f32.mrf.mxu0
    %v5763 = vadd.f32 %v5650, %v5762
    %v5764 = vpop.f32.mrf.mxu0
    %v5765 = vadd.f32 %v5652, %v5764
    %v5766 = vpop.f32.mrf.mxu0
    %v5767 = vadd.f32 %v5654, %v5766
    %5768 = vmatprep.mubr.bf16.mxu0 %v1282
    %5769 = vmatmul.mubr.bf16.gmra.mxu0 %v1281
    %v5770 = vpop.f32.mrf.mxu0
    %v5771 = vadd.f32 %v5658, %v5770
    %v5772 = vpop.f32.mrf.mxu0
    %v5773 = vadd.f32 %v5660, %v5772
    %v5774 = vpop.f32.mrf.mxu0
    %v5775 = vadd.f32 %v5662, %v5774
    %v5776 = vpop.f32.mrf.mxu0
    %v5777 = vadd.f32 %v5664, %v5776
    %5778 = vdwg.mxu0
    %v5779 = vmax.f32 %v4797, 0.0
    %v5780 = vmax.f32 %v4799, 0.0
    %v5781 = vmax.f32 %v5701, 0.0
    %v5782 = vmax.f32 %v5703, 0.0
    %v5783 = vmax.f32 %v4801, 0.0
    %v5784 = vmax.f32 %v4803, 0.0
    %v5785 = vmax.f32 %v5705, 0.0
    %v5786 = vmax.f32 %v5707, 0.0
    %v5787 = vmax.f32 %v4807, 0.0
    %v5788 = vmax.f32 %v4809, 0.0
    %v5789 = vmax.f32 %v5711, 0.0
    %v5790 = vmax.f32 %v5713, 0.0
    %v5791 = vmax.f32 %v4811, 0.0
    %v5792 = vmax.f32 %v4813, 0.0
    %v5793 = vmax.f32 %v5715, 0.0
    %v5794 = vmax.f32 %v5717, 0.0
    %v5795 = vmax.f32 %v4817, 0.0
    %v5796 = vmax.f32 %v4819, 0.0
    %v5797 = vmax.f32 %v5721, 0.0
    %v5798 = vmax.f32 %v5723, 0.0
    %v5799 = vmax.f32 %v4821, 0.0
    %v5800 = vmax.f32 %v4823, 0.0
    %v5801 = vmax.f32 %v5725, 0.0
    %v5802 = vmax.f32 %v5727, 0.0
    %v5803 = vmax.f32 %v4827, 0.0
    %v5804 = vmax.f32 %v4829, 0.0
    %v5805 = vmax.f32 %v5731, 0.0
    %v5806 = vmax.f32 %v5733, 0.0
    %v5807 = vmax.f32 %v4831, 0.0
    %v5808 = vmax.f32 %v4833, 0.0
    %v5809 = vmax.f32 %v5735, 0.0
    %v5810 = vmax.f32 %v5737, 0.0
    %v5811 = vmax.f32 %v4837, 0.0
    %v5812 = vmax.f32 %v4839, 0.0
    %v5813 = vmax.f32 %v5741, 0.0
    %v5814 = vmax.f32 %v5743, 0.0
    %v5815 = vmax.f32 %v4841, 0.0
    %v5816 = vmax.f32 %v4843, 0.0
    %v5817 = vmax.f32 %v5745, 0.0
    %v5818 = vmax.f32 %v5747, 0.0
    %v5819 = vmax.f32 %v4847, 0.0
    %v5820 = vmax.f32 %v4849, 0.0
    %v5821 = vmax.f32 %v5751, 0.0
    %v5822 = vmax.f32 %v5753, 0.0
    %v5823 = vmax.f32 %v4851, 0.0
    %v5824 = vmax.f32 %v4853, 0.0
    %v5825 = vmax.f32 %v5755, 0.0
    %v5826 = vmax.f32 %v5757, 0.0
    %v5827 = vmax.f32 %v4857, 0.0
    %v5828 = vmax.f32 %v4859, 0.0
    %v5829 = vmax.f32 %v5761, 0.0
    %v5830 = vmax.f32 %v5763, 0.0
    %v5831 = vmax.f32 %v4861, 0.0
    %v5832 = vmax.f32 %v4863, 0.0
    %v5833 = vmax.f32 %v5765, 0.0
    %v5834 = vmax.f32 %v5767, 0.0
    %v5835 = vmax.f32 %v4867, 0.0
    %v5836 = vmax.f32 %v4869, 0.0
    %v5837 = vmax.f32 %v5771, 0.0
    %v5838 = vmax.f32 %v5773, 0.0
    %v5839 = vmax.f32 %v4871, 0.0
    %v5840 = vmax.f32 %v4873, 0.0
    %v5841 = vmax.f32 %v5775, 0.0
    %v5842 = vmax.f32 %v5777, 0.0
    %v5843 = vpack.c.bf16 %v5783, %v5779
    %v5844 = vpack.c.bf16 %v5784, %v5780
    %v5845 = vpack.c.bf16 %v5785, %v5781
    %v5846 = vpack.c.bf16 %v5786, %v5782
    %v5847 = vpack.c.bf16 %v5791, %v5787
    %v5848 = vpack.c.bf16 %v5792, %v5788
    %v5849 = vpack.c.bf16 %v5793, %v5789
    %v5850 = vpack.c.bf16 %v5794, %v5790
    %v5851 = vpack.c.bf16 %v5799, %v5795
    %v5852 = vpack.c.bf16 %v5800, %v5796
    %v5853 = vpack.c.bf16 %v5801, %v5797
    %v5854 = vpack.c.bf16 %v5802, %v5798
    %v5855 = vpack.c.bf16 %v5807, %v5803
    %v5856 = vpack.c.bf16 %v5808, %v5804
    %v5857 = vpack.c.bf16 %v5809, %v5805
    %v5858 = vpack.c.bf16 %v5810, %v5806
    %v5859 = vpack.c.bf16 %v5815, %v5811
    %v5860 = vpack.c.bf16 %v5816, %v5812
    %v5861 = vpack.c.bf16 %v5817, %v5813
    %v5862 = vpack.c.bf16 %v5818, %v5814
    %v5863 = vpack.c.bf16 %v5823, %v5819
    %v5864 = vpack.c.bf16 %v5824, %v5820
    %v5865 = vpack.c.bf16 %v5825, %v5821
    %v5866 = vpack.c.bf16 %v5826, %v5822
    %v5867 = vpack.c.bf16 %v5831, %v5827
    %v5868 = vpack.c.bf16 %v5832, %v5828
    %v5869 = vpack.c.bf16 %v5833, %v5829
    %v5870 = vpack.c.bf16 %v5834, %v5830
    %v5871 = vpack.c.bf16 %v5839, %v5835
    %v5872 = vpack.c.bf16 %v5840, %v5836
    %v5873 = vpack.c.bf16 %v5841, %v5837
    %v5874 = vpack.c.bf16 %v5842, %v5838
    %v5875 = vld [vmem:[#allocation7] sm:$0xf]
    %v5876 = vld [vmem:[#allocation7 + $0x4] sm:$0xf]
    %v5877 = vld [vmem:[#allocation7 + $0x8] sm:$0xf]
    %v5878 = vld [vmem:[#allocation7 + $0xc] sm:$0xf]
    %v5879 = vld [vmem:[#allocation7 + $0x10] sm:$0xf]
    %v5880 = vld [vmem:[#allocation7 + $0x14] sm:$0xf]
    %v5881 = vld [vmem:[#allocation7 + $0x18] sm:$0xf]
    %v5882 = vld [vmem:[#allocation7 + $0x1c] sm:$0xf]
    %v5883 = vld [vmem:[#allocation7 + $0x20] sm:$0xf]
    %v5884 = vld [vmem:[#allocation7 + $0x24] sm:$0xf]
    %v5885 = vld [vmem:[#allocation7 + $0x28] sm:$0xf]
    %v5886 = vld [vmem:[#allocation7 + $0x2c] sm:$0xf]
    %v5887 = vld [vmem:[#allocation7 + $0x30] sm:$0xf]
    %v5888 = vld [vmem:[#allocation7 + $0x34] sm:$0xf]
    %v5889 = vld [vmem:[#allocation7 + $0x38] sm:$0xf]
    %v5890 = vld [vmem:[#allocation7 + $0x3c] sm:$0xf]
    %v5891 = vld [vmem:[#allocation7 + $0x40] sm:$0xf]
    %v5892 = vld [vmem:[#allocation7 + $0x44] sm:$0xf]
    %v5893 = vld [vmem:[#allocation7 + $0x48] sm:$0xf]
    %v5894 = vld [vmem:[#allocation7 + $0x4c] sm:$0xf]
    %v5895 = vld [vmem:[#allocation7 + $0x50] sm:$0xf]
    %v5896 = vld [vmem:[#allocation7 + $0x54] sm:$0xf]
    %v5897 = vld [vmem:[#allocation7 + $0x58] sm:$0xf]
    %v5898 = vld [vmem:[#allocation7 + $0x5c] sm:$0xf]
    %v5899 = vld [vmem:[#allocation7 + $0x60] sm:$0xf]
    %v5900 = vld [vmem:[#allocation7 + $0x64] sm:$0xf]
    %v5901 = vld [vmem:[#allocation7 + $0x68] sm:$0xf]
    %v5902 = vld [vmem:[#allocation7 + $0x6c] sm:$0xf]
    %v5903 = vld [vmem:[#allocation7 + $0x70] sm:$0xf]
    %v5904 = vld [vmem:[#allocation7 + $0x74] sm:$0xf]
    %v5905 = vld [vmem:[#allocation7 + $0x78] sm:$0xf]
    %v5906 = vld [vmem:[#allocation7 + $0x7c] sm:$0xf]
    %v5907 = vld [vmem:[#allocation7 + $0x80] sm:$0xf]
    %v5908 = vld [vmem:[#allocation7 + $0x84] sm:$0xf]
    %v5909 = vld [vmem:[#allocation7 + $0x88] sm:$0xf]
    %v5910 = vld [vmem:[#allocation7 + $0x8c] sm:$0xf]
    %v5911 = vld [vmem:[#allocation7 + $0x90] sm:$0xf]
    %v5912 = vld [vmem:[#allocation7 + $0x94] sm:$0xf]
    %v5913 = vld [vmem:[#allocation7 + $0x98] sm:$0xf]
    %v5914 = vld [vmem:[#allocation7 + $0x9c] sm:$0xf]
    %v5915 = vld [vmem:[#allocation7 + $0xa0] sm:$0xf]
    %v5916 = vld [vmem:[#allocation7 + $0xa4] sm:$0xf]
    %v5917 = vld [vmem:[#allocation7 + $0xa8] sm:$0xf]
    %v5918 = vld [vmem:[#allocation7 + $0xac] sm:$0xf]
    %v5919 = vld [vmem:[#allocation7 + $0xb0] sm:$0xf]
    %v5920 = vld [vmem:[#allocation7 + $0xb4] sm:$0xf]
    %v5921 = vld [vmem:[#allocation7 + $0xb8] sm:$0xf]
    %v5922 = vld [vmem:[#allocation7 + $0xbc] sm:$0xf]
    %v5923 = vld [vmem:[#allocation7 + $0xc0] sm:$0xf]
    %v5924 = vld [vmem:[#allocation7 + $0xc4] sm:$0xf]
    %v5925 = vld [vmem:[#allocation7 + $0xc8] sm:$0xf]
    %v5926 = vld [vmem:[#allocation7 + $0xcc] sm:$0xf]
    %v5927 = vld [vmem:[#allocation7 + $0xd0] sm:$0xf]
    %v5928 = vld [vmem:[#allocation7 + $0xd4] sm:$0xf]
    %v5929 = vld [vmem:[#allocation7 + $0xd8] sm:$0xf]
    %v5930 = vld [vmem:[#allocation7 + $0xdc] sm:$0xf]
    %v5931 = vld [vmem:[#allocation7 + $0xe0] sm:$0xf]
    %v5932 = vld [vmem:[#allocation7 + $0xe4] sm:$0xf]
    %v5933 = vld [vmem:[#allocation7 + $0xe8] sm:$0xf]
    %v5934 = vld [vmem:[#allocation7 + $0xec] sm:$0xf]
    %v5935 = vld [vmem:[#allocation7 + $0xf0] sm:$0xf]
    %v5936 = vld [vmem:[#allocation7 + $0xf4] sm:$0xf]
    %v5937 = vld [vmem:[#allocation7 + $0xf8] sm:$0xf]
    %v5938 = vld [vmem:[#allocation7 + $0xfc] sm:$0xf]
    %v5939 = vld [vmem:[#allocation9] sm:$0x1]
    %v5941 = vlaneseq
    %v5942 = vshrl.u32 %v5941, 7
    %v5943 = vsub.s32 0, %v5942
    %v5944 = vrot.slane %v5939, %v5943
    %v6010 = vunpack.c.l.b16 %v5875
    %v6011 = vunpack.c.l.b16 %v5876
    %v6012 = vunpack.c.l.b16 %v5877
    %v6013 = vunpack.c.l.b16 %v5878
    %v6014 = vunpack.c.l.b16 %v5879
    %v6015 = vunpack.c.l.b16 %v5880
    %v6016 = vunpack.c.l.b16 %v5881
    %v6017 = vunpack.c.l.b16 %v5882
    %v6018 = vunpack.c.l.b16 %v5883
    %v6019 = vunpack.c.l.b16 %v5884
    %v6020 = vunpack.c.l.b16 %v5885
    %v6021 = vunpack.c.l.b16 %v5886
    %v6022 = vunpack.c.l.b16 %v5887
    %v6023 = vunpack.c.l.b16 %v5888
    %v6024 = vunpack.c.l.b16 %v5889
    %v6025 = vunpack.c.l.b16 %v5890
    %v6026 = vunpack.c.l.b16 %v5891
    %v6027 = vunpack.c.l.b16 %v5892
    %v6028 = vunpack.c.l.b16 %v5893
    %v6029 = vunpack.c.l.b16 %v5894
    %v6030 = vunpack.c.l.b16 %v5895
    %v6031 = vunpack.c.l.b16 %v5896
    %v6032 = vunpack.c.l.b16 %v5897
    %v6033 = vunpack.c.l.b16 %v5898
    %v6034 = vunpack.c.l.b16 %v5899
    %v6035 = vunpack.c.l.b16 %v5900
    %v6036 = vunpack.c.l.b16 %v5901
    %v6037 = vunpack.c.l.b16 %v5902
    %v6038 = vunpack.c.l.b16 %v5903
    %v6039 = vunpack.c.l.b16 %v5904
    %v6040 = vunpack.c.l.b16 %v5905
    %v6041 = vunpack.c.l.b16 %v5906
    %v6042 = vunpack.c.l.b16 %v5907
    %v6043 = vunpack.c.l.b16 %v5908
    %v6044 = vunpack.c.l.b16 %v5909
    %v6045 = vunpack.c.l.b16 %v5910
    %v6046 = vunpack.c.l.b16 %v5911
    %v6047 = vunpack.c.l.b16 %v5912
    %v6048 = vunpack.c.l.b16 %v5913
    %v6049 = vunpack.c.l.b16 %v5914
    %v6050 = vunpack.c.l.b16 %v5915
    %v6051 = vunpack.c.l.b16 %v5916
    %v6052 = vunpack.c.l.b16 %v5917
    %v6053 = vunpack.c.l.b16 %v5918
    %v6054 = vunpack.c.l.b16 %v5919
    %v6055 = vunpack.c.l.b16 %v5920
    %v6056 = vunpack.c.l.b16 %v5921
    %v6057 = vunpack.c.l.b16 %v5922
    %v6058 = vunpack.c.l.b16 %v5923
    %v6059 = vunpack.c.l.b16 %v5924
    %v6060 = vunpack.c.l.b16 %v5925
    %v6061 = vunpack.c.l.b16 %v5926
    %v6062 = vunpack.c.l.b16 %v5927
    %v6063 = vunpack.c.l.b16 %v5928
    %v6064 = vunpack.c.l.b16 %v5929
    %v6065 = vunpack.c.l.b16 %v5930
    %v6066 = vunpack.c.l.b16 %v5931
    %v6067 = vunpack.c.l.b16 %v5932
    %v6068 = vunpack.c.l.b16 %v5933
    %v6069 = vunpack.c.l.b16 %v5934
    %v6070 = vunpack.c.l.b16 %v5935
    %v6071 = vunpack.c.l.b16 %v5936
    %v6072 = vunpack.c.l.b16 %v5937
    %v6073 = vunpack.c.l.b16 %v5938
    %v6074 = vpack.c.b16 %v6011, %v6010
    %v6075 = vpack.c.b16 %v6013, %v6012
    %v6076 = vpack.c.b16 %v6015, %v6014
    %v6077 = vpack.c.b16 %v6017, %v6016
    %v6078 = vpack.c.b16 %v6019, %v6018
    %v6079 = vpack.c.b16 %v6021, %v6020
    %v6080 = vpack.c.b16 %v6023, %v6022
    %v6081 = vpack.c.b16 %v6025, %v6024
    %v6082 = vpack.c.b16 %v6027, %v6026
    %v6083 = vpack.c.b16 %v6029, %v6028
    %v6084 = vpack.c.b16 %v6031, %v6030
    %v6085 = vpack.c.b16 %v6033, %v6032
    %v6086 = vpack.c.b16 %v6035, %v6034
    %v6087 = vpack.c.b16 %v6037, %v6036
    %v6088 = vpack.c.b16 %v6039, %v6038
    %v6089 = vpack.c.b16 %v6041, %v6040
    %v6090 = vpack.c.b16 %v6043, %v6042
    %v6091 = vpack.c.b16 %v6045, %v6044
    %v6092 = vpack.c.b16 %v6047, %v6046
    %v6093 = vpack.c.b16 %v6049, %v6048
    %v6094 = vpack.c.b16 %v6051, %v6050
    %v6095 = vpack.c.b16 %v6053, %v6052
    %v6096 = vpack.c.b16 %v6055, %v6054
    %v6097 = vpack.c.b16 %v6057, %v6056
    %v6098 = vpack.c.b16 %v6059, %v6058
    %v6099 = vpack.c.b16 %v6061, %v6060
    %v6100 = vpack.c.b16 %v6063, %v6062
    %v6101 = vpack.c.b16 %v6065, %v6064
    %v6102 = vpack.c.b16 %v6067, %v6066
    %v6103 = vpack.c.b16 %v6069, %v6068
    %v6104 = vpack.c.b16 %v6071, %v6070
    %v6105 = vpack.c.b16 %v6073, %v6072
    %6138 = vmatprep.subr.bf16.mxu0 0
    %6139 = vmatpush1.bf16.msra.mxu0 %v6081
    %6140 = vmatprep.subr.bf16.mxu0 0
    %6141 = vmatpush1.bf16.msra.mxu0 %v6080
    %6142 = vmatprep.subr.bf16.mxu0 0
    %6143 = vmatpush1.bf16.msra.mxu0 %v6079
    %6144 = vmatprep.subr.bf16.mxu0 0
    %6145 = vmatpush1.bf16.msra.mxu0 %v6078
    %6146 = vmatprep.subr.bf16.mxu0 0
    %6147 = vmatpush1.bf16.msra.mxu0 %v6077
    %6148 = vmatprep.subr.bf16.mxu0 0
    %6149 = vmatpush1.bf16.msra.mxu0 %v6076
    %6150 = vmatprep.subr.bf16.mxu0 0
    %6151 = vmatpush1.bf16.msra.mxu0 %v6075
    %6152 = vmatprep.subr.bf16.mxu0 0
    %6153 = vmatpush1.bf16.msra.mxu0 %v6074
    %6154 = vmatprep.subr.bf16.mxu0 0
    %6155 = vmatpush2.bf16.msra.mxu0 %v6089
    %6156 = vmatprep.subr.bf16.mxu0 0
    %6157 = vmatpush2.bf16.msra.mxu0 %v6088
    %6158 = vmatprep.subr.bf16.mxu0 0
    %6159 = vmatpush2.bf16.msra.mxu0 %v6087
    %6160 = vmatprep.subr.bf16.mxu0 0
    %6161 = vmatpush2.bf16.msra.mxu0 %v6086
    %6162 = vmatprep.subr.bf16.mxu0 0
    %6163 = vmatpush2.bf16.msra.mxu0 %v6085
    %6164 = vmatprep.subr.bf16.mxu0 0
    %6165 = vmatpush2.bf16.msra.mxu0 %v6084
    %6166 = vmatprep.subr.bf16.mxu0 0
    %6167 = vmatpush2.bf16.msra.mxu0 %v6083
    %6168 = vmatprep.subr.bf16.mxu0 0
    %6169 = vmatpush2.bf16.msra.mxu0 %v6082
    %6170 = vmatprep.mubr.bf16.mxu0 %v5844
    %6171 = vmatmul.mubr.bf16.gmra.mxu0 %v5843
    %v6172 = vpop.f32.mrf.mxu0
    %v6173 = vadd.f32 %v5944, %v6172
    %v6174 = vpop.f32.mrf.mxu0
    %v6175 = vpop.f32.mrf.mxu0
    %v6176 = vadd.f32 %v5944, %v6175
    %v6177 = vpop.f32.mrf.mxu0
    %6178 = vmatprep.mubr.bf16.mxu0 %v5848
    %6179 = vmatmul.mubr.bf16.gmra.mxu0 %v5847
    %v6180 = vpop.f32.mrf.mxu0
    %v6181 = vadd.f32 %v5944, %v6180
    %v6182 = vpop.f32.mrf.mxu0
    %v6183 = vpop.f32.mrf.mxu0
    %v6184 = vadd.f32 %v5944, %v6183
    %v6185 = vpop.f32.mrf.mxu0
    %6186 = vmatprep.mubr.bf16.mxu0 %v5852
    %6187 = vmatmul.mubr.bf16.gmra.mxu0 %v5851
    %v6188 = vpop.f32.mrf.mxu0
    %v6189 = vadd.f32 %v5944, %v6188
    %v6190 = vpop.f32.mrf.mxu0
    %v6191 = vpop.f32.mrf.mxu0
    %v6192 = vadd.f32 %v5944, %v6191
    %v6193 = vpop.f32.mrf.mxu0
    %6194 = vmatprep.mubr.bf16.mxu0 %v5856
    %6195 = vmatmul.mubr.bf16.gmra.mxu0 %v5855
    %v6196 = vpop.f32.mrf.mxu0
    %v6197 = vadd.f32 %v5944, %v6196
    %v6198 = vpop.f32.mrf.mxu0
    %v6199 = vpop.f32.mrf.mxu0
    %v6200 = vadd.f32 %v5944, %v6199
    %v6201 = vpop.f32.mrf.mxu0
    %6202 = vmatprep.mubr.bf16.mxu0 %v5860
    %6203 = vmatmul.mubr.bf16.gmra.mxu0 %v5859
    %v6204 = vpop.f32.mrf.mxu0
    %v6205 = vadd.f32 %v5944, %v6204
    %v6206 = vpop.f32.mrf.mxu0
    %v6207 = vpop.f32.mrf.mxu0
    %v6208 = vadd.f32 %v5944, %v6207
    %v6209 = vpop.f32.mrf.mxu0
    %6210 = vmatprep.mubr.bf16.mxu0 %v5864
    %6211 = vmatmul.mubr.bf16.gmra.mxu0 %v5863
    %v6212 = vpop.f32.mrf.mxu0
    %v6213 = vadd.f32 %v5944, %v6212
    %v6214 = vpop.f32.mrf.mxu0
    %v6215 = vpop.f32.mrf.mxu0
    %v6216 = vadd.f32 %v5944, %v6215
    %v6217 = vpop.f32.mrf.mxu0
    %6218 = vmatprep.mubr.bf16.mxu0 %v5868
    %6219 = vmatmul.mubr.bf16.gmra.mxu0 %v5867
    %v6220 = vpop.f32.mrf.mxu0
    %v6221 = vadd.f32 %v5944, %v6220
    %v6222 = vpop.f32.mrf.mxu0
    %v6223 = vpop.f32.mrf.mxu0
    %v6224 = vadd.f32 %v5944, %v6223
    %v6225 = vpop.f32.mrf.mxu0
    %6226 = vmatprep.mubr.bf16.mxu0 %v5872
    %6227 = vmatmul.mubr.bf16.gmra.mxu0 %v5871
    %v6228 = vpop.f32.mrf.mxu0
    %v6229 = vadd.f32 %v5944, %v6228
    %v6230 = vpop.f32.mrf.mxu0
    %v6231 = vpop.f32.mrf.mxu0
    %v6232 = vadd.f32 %v5944, %v6231
    %v6233 = vpop.f32.mrf.mxu0
    %6234 = vdwg.mxu0
    %6235 = vmatprep.subr.bf16.mxu0 0
    %6236 = vmatpush1.bf16.msra.mxu0 %v6097
    %6237 = vmatprep.subr.bf16.mxu0 0
    %6238 = vmatpush1.bf16.msra.mxu0 %v6096
    %6239 = vmatprep.subr.bf16.mxu0 0
    %6240 = vmatpush1.bf16.msra.mxu0 %v6095
    %6241 = vmatprep.subr.bf16.mxu0 0
    %6242 = vmatpush1.bf16.msra.mxu0 %v6094
    %6243 = vmatprep.subr.bf16.mxu0 0
    %6244 = vmatpush1.bf16.msra.mxu0 %v6093
    %6245 = vmatprep.subr.bf16.mxu0 0
    %6246 = vmatpush1.bf16.msra.mxu0 %v6092
    %6247 = vmatprep.subr.bf16.mxu0 0
    %6248 = vmatpush1.bf16.msra.mxu0 %v6091
    %6249 = vmatprep.subr.bf16.mxu0 0
    %6250 = vmatpush1.bf16.msra.mxu0 %v6090
    %6251 = vmatprep.subr.bf16.mxu0 0
    %6252 = vmatpush2.bf16.msra.mxu0 %v6105
    %6253 = vmatprep.subr.bf16.mxu0 0
    %6254 = vmatpush2.bf16.msra.mxu0 %v6104
    %6255 = vmatprep.subr.bf16.mxu0 0
    %6256 = vmatpush2.bf16.msra.mxu0 %v6103
    %6257 = vmatprep.subr.bf16.mxu0 0
    %6258 = vmatpush2.bf16.msra.mxu0 %v6102
    %6259 = vmatprep.subr.bf16.mxu0 0
    %6260 = vmatpush2.bf16.msra.mxu0 %v6101
    %6261 = vmatprep.subr.bf16.mxu0 0
    %6262 = vmatpush2.bf16.msra.mxu0 %v6100
    %6263 = vmatprep.subr.bf16.mxu0 0
    %6264 = vmatpush2.bf16.msra.mxu0 %v6099
    %6265 = vmatprep.subr.bf16.mxu0 0
    %6266 = vmatpush2.bf16.msra.mxu0 %v6098
    %6267 = vmatprep.mubr.bf16.mxu0 %v5846
    %6268 = vmatmul.mubr.bf16.gmra.mxu0 %v5845
    %v6269 = vpop.f32.mrf.mxu0
    %v6270 = vadd.f32 %v6173, %v6269
    %v6271 = vpop.f32.mrf.mxu0
    %v6272 = vpop.f32.mrf.mxu0
    %v6273 = vadd.f32 %v6176, %v6272
    %v6274 = vpop.f32.mrf.mxu0
    %6275 = vmatprep.mubr.bf16.mxu0 %v5850
    %6276 = vmatmul.mubr.bf16.gmra.mxu0 %v5849
    %v6277 = vpop.f32.mrf.mxu0
    %v6278 = vadd.f32 %v6181, %v6277
    %v6279 = vpop.f32.mrf.mxu0
    %v6280 = vpop.f32.mrf.mxu0
    %v6281 = vadd.f32 %v6184, %v6280
    %v6282 = vpop.f32.mrf.mxu0
    %6283 = vmatprep.mubr.bf16.mxu0 %v5854
    %6284 = vmatmul.mubr.bf16.gmra.mxu0 %v5853
    %v6285 = vpop.f32.mrf.mxu0
    %v6286 = vadd.f32 %v6189, %v6285
    %v6287 = vpop.f32.mrf.mxu0
    %v6288 = vpop.f32.mrf.mxu0
    %v6289 = vadd.f32 %v6192, %v6288
    %v6290 = vpop.f32.mrf.mxu0
    %6291 = vmatprep.mubr.bf16.mxu0 %v5858
    %6292 = vmatmul.mubr.bf16.gmra.mxu0 %v5857
    %v6293 = vpop.f32.mrf.mxu0
    %v6294 = vadd.f32 %v6197, %v6293
    %v6295 = vpop.f32.mrf.mxu0
    %v6296 = vpop.f32.mrf.mxu0
    %v6297 = vadd.f32 %v6200, %v6296
    %v6298 = vpop.f32.mrf.mxu0
    %6299 = vmatprep.mubr.bf16.mxu0 %v5862
    %6300 = vmatmul.mubr.bf16.gmra.mxu0 %v5861
    %v6301 = vpop.f32.mrf.mxu0
    %v6302 = vadd.f32 %v6205, %v6301
    %v6303 = vpop.f32.mrf.mxu0
    %v6304 = vpop.f32.mrf.mxu0
    %v6305 = vadd.f32 %v6208, %v6304
    %v6306 = vpop.f32.mrf.mxu0
    %6307 = vmatprep.mubr.bf16.mxu0 %v5866
    %6308 = vmatmul.mubr.bf16.gmra.mxu0 %v5865
    %v6309 = vpop.f32.mrf.mxu0
    %v6310 = vadd.f32 %v6213, %v6309
    %v6311 = vpop.f32.mrf.mxu0
    %v6312 = vpop.f32.mrf.mxu0
    %v6313 = vadd.f32 %v6216, %v6312
    %v6314 = vpop.f32.mrf.mxu0
    %6315 = vmatprep.mubr.bf16.mxu0 %v5870
    %6316 = vmatmul.mubr.bf16.gmra.mxu0 %v5869
    %v6317 = vpop.f32.mrf.mxu0
    %v6318 = vadd.f32 %v6221, %v6317
    %v6319 = vpop.f32.mrf.mxu0
    %v6320 = vpop.f32.mrf.mxu0
    %v6321 = vadd.f32 %v6224, %v6320
    %v6322 = vpop.f32.mrf.mxu0
    %6323 = vmatprep.mubr.bf16.mxu0 %v5874
    %6324 = vmatmul.mubr.bf16.gmra.mxu0 %v5873
    %v6325 = vpop.f32.mrf.mxu0
    %v6326 = vadd.f32 %v6229, %v6325
    %v6327 = vpop.f32.mrf.mxu0
    %v6328 = vpop.f32.mrf.mxu0
    %v6329 = vadd.f32 %v6232, %v6328
    %v6330 = vpop.f32.mrf.mxu0
    %6331 = vdwg.mxu0
    %v6332 = vmax.f32 %v6270, 0.0
    %v6333 = vmax.f32 %v6273, 0.0
    %v6334 = vmax.f32 %v6278, 0.0
    %v6335 = vmax.f32 %v6281, 0.0
    %v6336 = vmax.f32 %v6286, 0.0
    %v6337 = vmax.f32 %v6289, 0.0
    %v6338 = vmax.f32 %v6294, 0.0
    %v6339 = vmax.f32 %v6297, 0.0
    %v6340 = vmax.f32 %v6302, 0.0
    %v6341 = vmax.f32 %v6305, 0.0
    %v6342 = vmax.f32 %v6310, 0.0
    %v6343 = vmax.f32 %v6313, 0.0
    %v6344 = vmax.f32 %v6318, 0.0
    %v6345 = vmax.f32 %v6321, 0.0
    %v6346 = vmax.f32 %v6326, 0.0
    %v6347 = vmax.f32 %v6329, 0.0
    %v6348 = vpack.c.bf16 %v6333, %v6332
    %v6349 = vpack.c.bf16 %v6335, %v6334
    %v6350 = vpack.c.bf16 %v6337, %v6336
    %v6351 = vpack.c.bf16 %v6339, %v6338
    %v6352 = vpack.c.bf16 %v6341, %v6340
    %v6353 = vpack.c.bf16 %v6343, %v6342
    %v6354 = vpack.c.bf16 %v6345, %v6344
    %v6355 = vpack.c.bf16 %v6347, %v6346
    %v6356 = vld [vmem:[%s5] sm:$0xf]
    %v6357 = vld [vmem:[%s5 + $0x4] sm:$0xf]
    %v6358 = vld [vmem:[%s5 + $0x8] sm:$0xf]
    %v6359 = vld [vmem:[%s5 + $0xc] sm:$0xf]
    %v6360 = vld [vmem:[%s5 + $0x10] sm:$0xf]
    %v6361 = vld [vmem:[%s5 + $0x14] sm:$0xf]
    %v6362 = vld [vmem:[%s5 + $0x18] sm:$0xf]
    %v6363 = vld [vmem:[%s5 + $0x1c] sm:$0xf]
    %v6364 = vld [vmem:[%s5 + $0x20] sm:$0xf]
    %v6365 = vld [vmem:[%s5 + $0x24] sm:$0xf]
    %v6366 = vld [vmem:[%s5 + $0x28] sm:$0xf]
    %v6367 = vld [vmem:[%s5 + $0x2c] sm:$0xf]
    %v6368 = vld [vmem:[%s5 + $0x30] sm:$0xf]
    %v6369 = vld [vmem:[%s5 + $0x34] sm:$0xf]
    %v6370 = vld [vmem:[%s5 + $0x38] sm:$0xf]
    %v6371 = vld [vmem:[%s5 + $0x3c] sm:$0xf]
    %v6372 = vld [vmem:[#allocation10] sm:$0x1]
    %v6374 = vlaneseq
    %v6375 = vshrl.u32 %v6374, 7
    %v6376 = vsub.s32 0, %v6375
    %v6377 = vrot.slane %v6372, %v6376
    %v6395 = vunpack.c.l.b16 %v6356
    %v6396 = vunpack.c.l.b16 %v6357
    %v6397 = vunpack.c.l.b16 %v6358
    %v6398 = vunpack.c.l.b16 %v6359
    %v6399 = vunpack.c.l.b16 %v6360
    %v6400 = vunpack.c.l.b16 %v6361
    %v6401 = vunpack.c.l.b16 %v6362
    %v6402 = vunpack.c.l.b16 %v6363
    %v6403 = vunpack.c.l.b16 %v6364
    %v6404 = vunpack.c.l.b16 %v6365
    %v6405 = vunpack.c.l.b16 %v6366
    %v6406 = vunpack.c.l.b16 %v6367
    %v6407 = vunpack.c.l.b16 %v6368
    %v6408 = vunpack.c.l.b16 %v6369
    %v6409 = vunpack.c.l.b16 %v6370
    %v6410 = vunpack.c.l.b16 %v6371
    %v6411 = vpack.c.b16 %v6396, %v6395
    %v6412 = vpack.c.b16 %v6398, %v6397
    %v6413 = vpack.c.b16 %v6400, %v6399
    %v6414 = vpack.c.b16 %v6402, %v6401
    %v6415 = vpack.c.b16 %v6404, %v6403
    %v6416 = vpack.c.b16 %v6406, %v6405
    %v6417 = vpack.c.b16 %v6408, %v6407
    %v6418 = vpack.c.b16 %v6410, %v6409
    %6427 = vmatprep.subr.bf16.mxu0 0
    %6428 = vmatpush1.bf16.msra.mxu0 %v6418
    %6429 = vmatprep.subr.bf16.mxu0 0
    %6430 = vmatpush1.bf16.msra.mxu0 %v6417
    %6431 = vmatprep.subr.bf16.mxu0 0
    %6432 = vmatpush1.bf16.msra.mxu0 %v6416
    %6433 = vmatprep.subr.bf16.mxu0 0
    %6434 = vmatpush1.bf16.msra.mxu0 %v6415
    %6435 = vmatprep.subr.bf16.mxu0 0
    %6436 = vmatpush1.bf16.msra.mxu0 %v6414
    %6437 = vmatprep.subr.bf16.mxu0 0
    %6438 = vmatpush1.bf16.msra.mxu0 %v6413
    %6439 = vmatprep.subr.bf16.mxu0 0
    %6440 = vmatpush1.bf16.msra.mxu0 %v6412
    %6441 = vmatprep.subr.bf16.mxu0 0
    %6442 = vmatpush1.bf16.msra.mxu0 %v6411
    %6443 = vmatprep.subr.bf16.mxu0 0
    %6444 = vmatpush2.bf16.msra.mxu0 0
    %6445 = vmatprep.subr.bf16.mxu0 0
    %6446 = vmatpush2.bf16.msra.mxu0 0
    %6447 = vmatprep.subr.bf16.mxu0 0
    %6448 = vmatpush2.bf16.msra.mxu0 0
    %6449 = vmatprep.subr.bf16.mxu0 0
    %6450 = vmatpush2.bf16.msra.mxu0 0
    %6451 = vmatprep.subr.bf16.mxu0 0
    %6452 = vmatpush2.bf16.msra.mxu0 0
    %6453 = vmatprep.subr.bf16.mxu0 0
    %6454 = vmatpush2.bf16.msra.mxu0 0
    %6455 = vmatprep.subr.bf16.mxu0 0
    %6456 = vmatpush2.bf16.msra.mxu0 0
    %6457 = vmatprep.subr.bf16.mxu0 0
    %6458 = vmatpush2.bf16.msra.mxu0 0
    %6459 = vmatprep.mubr.bf16.mxu0 0
    %6460 = vmatmul.mubr.bf16.gmra.mxu0 %v6348
    %v6461 = vpop.f32.mrf.mxu0
    %v6462 = vadd.f32 %v6377, %v6461
    %v6463 = vpop.f32.mrf.mxu0
    %v6464 = vpop.f32.mrf.mxu0
    %v6465 = vadd.f32 %v6377, %v6464
    %v6466 = vpop.f32.mrf.mxu0
    %6467 = vmatprep.mubr.bf16.mxu0 0
    %6468 = vmatmul.mubr.bf16.gmra.mxu0 %v6349
    %v6469 = vpop.f32.mrf.mxu0
    %v6470 = vadd.f32 %v6377, %v6469
    %v6471 = vpop.f32.mrf.mxu0
    %v6472 = vpop.f32.mrf.mxu0
    %v6473 = vadd.f32 %v6377, %v6472
    %v6474 = vpop.f32.mrf.mxu0
    %6475 = vmatprep.mubr.bf16.mxu0 0
    %6476 = vmatmul.mubr.bf16.gmra.mxu0 %v6350
    %v6477 = vpop.f32.mrf.mxu0
    %v6478 = vadd.f32 %v6377, %v6477
    %v6479 = vpop.f32.mrf.mxu0
    %v6480 = vpop.f32.mrf.mxu0
    %v6481 = vadd.f32 %v6377, %v6480
    %v6482 = vpop.f32.mrf.mxu0
    %6483 = vmatprep.mubr.bf16.mxu0 0
    %6484 = vmatmul.mubr.bf16.gmra.mxu0 %v6351
    %v6485 = vpop.f32.mrf.mxu0
    %v6486 = vadd.f32 %v6377, %v6485
    %v6487 = vpop.f32.mrf.mxu0
    %v6488 = vpop.f32.mrf.mxu0
    %v6489 = vadd.f32 %v6377, %v6488
    %v6490 = vpop.f32.mrf.mxu0
    %6491 = vmatprep.mubr.bf16.mxu0 0
    %6492 = vmatmul.mubr.bf16.gmra.mxu0 %v6352
    %v6493 = vpop.f32.mrf.mxu0
    %v6494 = vadd.f32 %v6377, %v6493
    %v6495 = vpop.f32.mrf.mxu0
    %v6496 = vpop.f32.mrf.mxu0
    %v6497 = vadd.f32 %v6377, %v6496
    %v6498 = vpop.f32.mrf.mxu0
    %6499 = vmatprep.mubr.bf16.mxu0 0
    %6500 = vmatmul.mubr.bf16.gmra.mxu0 %v6353
    %v6501 = vpop.f32.mrf.mxu0
    %v6502 = vadd.f32 %v6377, %v6501
    %v6503 = vpop.f32.mrf.mxu0
    %v6504 = vpop.f32.mrf.mxu0
    %v6505 = vadd.f32 %v6377, %v6504
    %v6506 = vpop.f32.mrf.mxu0
    %6507 = vmatprep.mubr.bf16.mxu0 0
    %6508 = vmatmul.mubr.bf16.gmra.mxu0 %v6354
    %v6509 = vpop.f32.mrf.mxu0
    %v6510 = vadd.f32 %v6377, %v6509
    %v6511 = vpop.f32.mrf.mxu0
    %v6512 = vpop.f32.mrf.mxu0
    %v6513 = vadd.f32 %v6377, %v6512
    %v6514 = vpop.f32.mrf.mxu0
    %6515 = vmatprep.mubr.bf16.mxu0 0
    %6516 = vmatmul.mubr.bf16.gmra.mxu0 %v6355
    %v6517 = vpop.f32.mrf.mxu0
    %v6518 = vadd.f32 %v6377, %v6517
    %v6519 = vpop.f32.mrf.mxu0
    %v6520 = vpop.f32.mrf.mxu0
    %v6521 = vadd.f32 %v6377, %v6520
    %v6522 = vpop.f32.mrf.mxu0
    %6523 = vdwg.mxu0
    %v6524 = vmax.f32 %v6462, 0.0
    %v6525 = vmax.f32 %v6465, 0.0
    %v6526 = vmax.f32 %v6470, 0.0
    %v6527 = vmax.f32 %v6473, 0.0
    %v6528 = vmax.f32 %v6478, 0.0
    %v6529 = vmax.f32 %v6481, 0.0
    %v6530 = vmax.f32 %v6486, 0.0
    %v6531 = vmax.f32 %v6489, 0.0
    %v6532 = vmax.f32 %v6494, 0.0
    %v6533 = vmax.f32 %v6497, 0.0
    %v6534 = vmax.f32 %v6502, 0.0
    %v6535 = vmax.f32 %v6505, 0.0
    %v6536 = vmax.f32 %v6510, 0.0
    %v6537 = vmax.f32 %v6513, 0.0
    %v6538 = vmax.f32 %v6518, 0.0
    %v6539 = vmax.f32 %v6521, 0.0
    %v6540 = vld [vmem:[%s7] sm:$0xff]
    %v6541 = vld [vmem:[%s7 + $0x8] sm:$0xff]
    %v6542 = vld [vmem:[%s7 + $0x10] sm:$0xff]
    %v6543 = vld [vmem:[%s7 + $0x18] sm:$0xff]
    %v6544 = vld [vmem:[%s7 + $0x20] sm:$0xff]
    %v6545 = vld [vmem:[%s7 + $0x28] sm:$0xff]
    %v6546 = vld [vmem:[%s7 + $0x30] sm:$0xff]
    %v6547 = vld [vmem:[%s7 + $0x38] sm:$0xff]
    %v6548 = vld [vmem:[%s7 + $0x40] sm:$0xff]
    %v6549 = vld [vmem:[%s7 + $0x48] sm:$0xff]
    %v6550 = vld [vmem:[%s7 + $0x50] sm:$0xff]
    %v6551 = vld [vmem:[%s7 + $0x58] sm:$0xff]
    %v6552 = vld [vmem:[%s7 + $0x60] sm:$0xff]
    %v6553 = vld [vmem:[%s7 + $0x68] sm:$0xff]
    %v6554 = vld [vmem:[%s7 + $0x70] sm:$0xff]
    %v6555 = vld [vmem:[%s7 + $0x78] sm:$0xff]
    %v6556 = vmul.f32 %v6524, %v6540
    %v6557 = vmul.f32 %v6525, %v6541
    %v6558 = vmul.f32 %v6526, %v6542
    %v6559 = vmul.f32 %v6527, %v6543
    %v6560 = vmul.f32 %v6528, %v6544
    %v6561 = vmul.f32 %v6529, %v6545
    %v6562 = vmul.f32 %v6530, %v6546
    %v6563 = vmul.f32 %v6531, %v6547
    %v6564 = vmul.f32 %v6532, %v6548
    %v6565 = vmul.f32 %v6533, %v6549
    %v6566 = vmul.f32 %v6534, %v6550
    %v6567 = vmul.f32 %v6535, %v6551
    %v6568 = vmul.f32 %v6536, %v6552
    %v6569 = vmul.f32 %v6537, %v6553
    %v6570 = vmul.f32 %v6538, %v6554
    %v6571 = vmul.f32 %v6539, %v6555
    %vm6572 = vcmask 261120
    %v6573 = vsel %vm6572, %v6556, 0.0
    %6574 = vadd.xlane.f32.xlu0 %v6573
    %v6575 = vpop.xlane.xlu0 %6574
    %v6576 = vsel %vm6572, %v6557, 0.0
    %6577 = vadd.xlane.f32.xlu0 %v6576
    %v6578 = vpop.xlane.xlu0 %6577
    %v6579 = vsel %vm6572, %v6558, 0.0
    %6580 = vadd.xlane.f32.xlu0 %v6579
    %v6581 = vpop.xlane.xlu0 %6580
    %v6582 = vsel %vm6572, %v6559, 0.0
    %6583 = vadd.xlane.f32.xlu0 %v6582
    %v6584 = vpop.xlane.xlu0 %6583
    %v6585 = vsel %vm6572, %v6560, 0.0
    %6586 = vadd.xlane.f32.xlu0 %v6585
    %v6587 = vpop.xlane.xlu0 %6586
    %v6588 = vsel %vm6572, %v6561, 0.0
    %6589 = vadd.xlane.f32.xlu0 %v6588
    %v6590 = vpop.xlane.xlu0 %6589
    %v6591 = vsel %vm6572, %v6562, 0.0
    %6592 = vadd.xlane.f32.xlu0 %v6591
    %v6593 = vpop.xlane.xlu0 %6592
    %v6594 = vsel %vm6572, %v6563, 0.0
    %6595 = vadd.xlane.f32.xlu0 %v6594
    %v6596 = vpop.xlane.xlu0 %6595
    %v6597 = vsel %vm6572, %v6564, 0.0
    %6598 = vadd.xlane.f32.xlu0 %v6597
    %v6599 = vpop.xlane.xlu0 %6598
    %v6600 = vsel %vm6572, %v6565, 0.0
    %6601 = vadd.xlane.f32.xlu0 %v6600
    %v6602 = vpop.xlane.xlu0 %6601
    %v6603 = vsel %vm6572, %v6566, 0.0
    %6604 = vadd.xlane.f32.xlu0 %v6603
    %v6605 = vpop.xlane.xlu0 %6604
    %v6606 = vsel %vm6572, %v6567, 0.0
    %6607 = vadd.xlane.f32.xlu0 %v6606
    %v6608 = vpop.xlane.xlu0 %6607
    %v6609 = vsel %vm6572, %v6568, 0.0
    %6610 = vadd.xlane.f32.xlu0 %v6609
    %v6611 = vpop.xlane.xlu0 %6610
    %v6612 = vsel %vm6572, %v6569, 0.0
    %6613 = vadd.xlane.f32.xlu0 %v6612
    %v6614 = vpop.xlane.xlu0 %6613
    %v6615 = vsel %vm6572, %v6570, 0.0
    %6616 = vadd.xlane.f32.xlu0 %v6615
    %v6617 = vpop.xlane.xlu0 %6616
    %v6618 = vsel %vm6572, %v6571, 0.0
    %6619 = vadd.xlane.f32.xlu0 %v6618
    %v6620 = vpop.xlane.xlu0 %6619
    %v6621 = vld [vmem:[%s8] sm:$0xff]
    %v6622 = vld [vmem:[%s8 + $0x8] sm:$0xff]
    %v6623 = vld [vmem:[%s8 + $0x10] sm:$0xff]
    %v6624 = vld [vmem:[%s8 + $0x18] sm:$0xff]
    %v6625 = vld [vmem:[%s8 + $0x20] sm:$0xff]
    %v6626 = vld [vmem:[%s8 + $0x28] sm:$0xff]
    %v6627 = vld [vmem:[%s8 + $0x30] sm:$0xff]
    %v6628 = vld [vmem:[%s8 + $0x38] sm:$0xff]
    %v6629 = vld [vmem:[%s8 + $0x40] sm:$0xff]
    %v6630 = vld [vmem:[%s8 + $0x48] sm:$0xff]
    %v6631 = vld [vmem:[%s8 + $0x50] sm:$0xff]
    %v6632 = vld [vmem:[%s8 + $0x58] sm:$0xff]
    %v6633 = vld [vmem:[%s8 + $0x60] sm:$0xff]
    %v6634 = vld [vmem:[%s8 + $0x68] sm:$0xff]
    %v6635 = vld [vmem:[%s8 + $0x70] sm:$0xff]
    %v6636 = vld [vmem:[%s8 + $0x78] sm:$0xff]
    %v6637 = vmul.f32 %v6524, %v6621
    %v6638 = vmul.f32 %v6525, %v6622
    %v6639 = vmul.f32 %v6526, %v6623
    %v6640 = vmul.f32 %v6527, %v6624
    %v6641 = vmul.f32 %v6528, %v6625
    %v6642 = vmul.f32 %v6529, %v6626
    %v6643 = vmul.f32 %v6530, %v6627
    %v6644 = vmul.f32 %v6531, %v6628
    %v6645 = vmul.f32 %v6532, %v6629
    %v6646 = vmul.f32 %v6533, %v6630
    %v6647 = vmul.f32 %v6534, %v6631
    %v6648 = vmul.f32 %v6535, %v6632
    %v6649 = vmul.f32 %v6536, %v6633
    %v6650 = vmul.f32 %v6537, %v6634
    %v6651 = vmul.f32 %v6538, %v6635
    %v6652 = vmul.f32 %v6539, %v6636
    %v6653 = vsel %vm6572, %v6637, 0.0
    %6654 = vadd.xlane.f32.xlu0 %v6653
    %v6655 = vpop.xlane.xlu0 %6654
    %v6656 = vsel %vm6572, %v6638, 0.0
    %6657 = vadd.xlane.f32.xlu0 %v6656
    %v6658 = vpop.xlane.xlu0 %6657
    %v6659 = vsel %vm6572, %v6639, 0.0
    %6660 = vadd.xlane.f32.xlu0 %v6659
    %v6661 = vpop.xlane.xlu0 %6660
    %v6662 = vsel %vm6572, %v6640, 0.0
    %6663 = vadd.xlane.f32.xlu0 %v6662
    %v6664 = vpop.xlane.xlu0 %6663
    %v6665 = vsel %vm6572, %v6641, 0.0
    %6666 = vadd.xlane.f32.xlu0 %v6665
    %v6667 = vpop.xlane.xlu0 %6666
    %v6668 = vsel %vm6572, %v6642, 0.0
    %6669 = vadd.xlane.f32.xlu0 %v6668
    %v6670 = vpop.xlane.xlu0 %6669
    %v6671 = vsel %vm6572, %v6643, 0.0
    %6672 = vadd.xlane.f32.xlu0 %v6671
    %v6673 = vpop.xlane.xlu0 %6672
    %v6674 = vsel %vm6572, %v6644, 0.0
    %6675 = vadd.xlane.f32.xlu0 %v6674
    %v6676 = vpop.xlane.xlu0 %6675
    %v6677 = vsel %vm6572, %v6645, 0.0
    %6678 = vadd.xlane.f32.xlu0 %v6677
    %v6679 = vpop.xlane.xlu0 %6678
    %v6680 = vsel %vm6572, %v6646, 0.0
    %6681 = vadd.xlane.f32.xlu0 %v6680
    %v6682 = vpop.xlane.xlu0 %6681
    %v6683 = vsel %vm6572, %v6647, 0.0
    %6684 = vadd.xlane.f32.xlu0 %v6683
    %v6685 = vpop.xlane.xlu0 %6684
    %v6686 = vsel %vm6572, %v6648, 0.0
    %6687 = vadd.xlane.f32.xlu0 %v6686
    %v6688 = vpop.xlane.xlu0 %6687
    %v6689 = vsel %vm6572, %v6649, 0.0
    %6690 = vadd.xlane.f32.xlu0 %v6689
    %v6691 = vpop.xlane.xlu0 %6690
    %v6692 = vsel %vm6572, %v6650, 0.0
    %6693 = vadd.xlane.f32.xlu0 %v6692
    %v6694 = vpop.xlane.xlu0 %6693
    %v6695 = vsel %vm6572, %v6651, 0.0
    %6696 = vadd.xlane.f32.xlu0 %v6695
    %v6697 = vpop.xlane.xlu0 %6696
    %v6698 = vsel %vm6572, %v6652, 0.0
    %6699 = vadd.xlane.f32.xlu0 %v6698
    %v6700 = vpop.xlane.xlu0 %6699
    %v6701 = vlaneseq
    %v6702 = vand.u32 %v6701, 127
    %vm6703 = vcmp.eq.s32.totalorder %v6702, 0
    %v6704 = vsel %vm6703, %v6575, %v6655
    %v6705 = vsel %vm6703, %v6578, %v6658
    %v6706 = vsel %vm6703, %v6581, %v6661
    %v6707 = vsel %vm6703, %v6584, %v6664
    %v6708 = vsel %vm6703, %v6587, %v6667
    %v6709 = vsel %vm6703, %v6590, %v6670
    %v6710 = vsel %vm6703, %v6593, %v6673
    %v6711 = vsel %vm6703, %v6596, %v6676
    %v6712 = vsel %vm6703, %v6599, %v6679
    %v6713 = vsel %vm6703, %v6602, %v6682
    %v6714 = vsel %vm6703, %v6605, %v6685
    %v6715 = vsel %vm6703, %v6608, %v6688
    %v6716 = vsel %vm6703, %v6611, %v6691
    %v6717 = vsel %vm6703, %v6614, %v6694
    %v6718 = vsel %vm6703, %v6617, %v6697
    %v6719 = vsel %vm6703, %v6620, %v6700
    %vm6720 = vcmask 15360
    %6721 = vst.msk [vmem:[%s9] sm:$0xff] %vm6720, %v6704
    %6722 = vst.msk [vmem:[%s9 + $0x8] sm:$0xff] %vm6720, %v6705
    %6723 = vst.msk [vmem:[%s9 + $0x10] sm:$0xff] %vm6720, %v6706
    %6724 = vst.msk [vmem:[%s9 + $0x18] sm:$0xff] %vm6720, %v6707
    %6725 = vst.msk [vmem:[%s9 + $0x20] sm:$0xff] %vm6720, %v6708
    %6726 = vst.msk [vmem:[%s9 + $0x28] sm:$0xff] %vm6720, %v6709
    %6727 = vst.msk [vmem:[%s9 + $0x30] sm:$0xff] %vm6720, %v6710
    %6728 = vst.msk [vmem:[%s9 + $0x38] sm:$0xff] %vm6720, %v6711
    %6729 = vst.msk [vmem:[%s9 + $0x40] sm:$0xff] %vm6720, %v6712
    %6730 = vst.msk [vmem:[%s9 + $0x48] sm:$0xff] %vm6720, %v6713
    %6731 = vst.msk [vmem:[%s9 + $0x50] sm:$0xff] %vm6720, %v6714
    %6732 = vst.msk [vmem:[%s9 + $0x58] sm:$0xff] %vm6720, %v6715
    %6733 = vst.msk [vmem:[%s9 + $0x60] sm:$0xff] %vm6720, %v6716
    %6734 = vst.msk [vmem:[%s9 + $0x68] sm:$0xff] %vm6720, %v6717
    %6735 = vst.msk [vmem:[%s9 + $0x70] sm:$0xff] %vm6720, %v6718
    %6736 = vst.msk [vmem:[%s9 + $0x78] sm:$0xff] %vm6720, %v6719
    // Predicated region
    $region62: #{tpu_custom_call.1} parent=1 // pred_check
      _
    $region63: #{tpu_custom_call.1} parent=1 // pred_check_branch
      %6738 = sbr.rel (0) target = $region65
    $region64: #{tpu_custom_call.1} parent=1 // pred_region
      _
    $region65: #{tpu_custom_call.1} parent=1 // pred_fallthru
      _
    // Predicated region
    $region66: #{tpu_custom_call.1} parent=1 // pred_check
      _
    $region67: #{tpu_custom_call.1} parent=1 // pred_check_branch
      %6740 = sbr.rel (0) target = $region69
    $region68: #{tpu_custom_call.1} parent=1 // pred_region
      _
    $region69: #{tpu_custom_call.1} parent=1 // pred_fallthru
      _
    %6741 = vsyncpa [#allocation3], 1
    %6742 = vsyncpa [#allocation5], 1
    %6743 = vsyncpa [#allocation8], 1
    %6744 = vsyncpa [#allocation11], 1

</llo_original>
